<compile_context>
chip_gen: v7x
topology: tpu7x:2x2x1
jax: 0.10.0
libtpu: 0.0.40
codegen_flags: <defaults>
</compile_context>

<pallas_src>
import functools

import jax
import jax.numpy as jnp
from jax.experimental import pallas as pl
from jax.experimental.pallas import tpu as pltpu

BN_EPS = 1e-5
LRELU_SLOPE = 0.1


# ---------------------------------------------------------------------------
# Small helpers
# ---------------------------------------------------------------------------
def _round_up(v, m):
  return ((v + m - 1) // m) * m


def _pick_k_tile(k):
  """K tile: full extent (rounded to 32) for small K, else a <=512 multiple
  of 128 that divides round_up(K, 128)."""
  if k <= 512:
    return _round_up(k, 32)
  kp = _round_up(k, 128)
  best = 128
  for t in range(128, 513, 128):
    if kp % t == 0:
      best = t
  return best


def _pick_hw_tile(hw):
  if hw <= 2048:
    return hw
  for t in range(2048, 0, -8):
    if hw % t == 0:
      return t
  return hw


# ---------------------------------------------------------------------------
# Pallas kernels
# ---------------------------------------------------------------------------
def _fused_matmul_kernel(x_ref, w_ref, bias_ref, o_ref, acc_ref, *,
                         negative_slope, apply_act):
  """acc += x @ w over the K grid axis; epilogue (+bias, LeakyReLU) at last K."""
  @pl.when(pl.program_id(2) == 0)
  def _init():
    acc_ref[...] = jnp.zeros_like(acc_ref)

  acc_ref[...] += jnp.dot(x_ref[...], w_ref[...],
                          preferred_element_type=jnp.float32)

  @pl.when(pl.program_id(2) == pl.num_programs(2) - 1)
  def _epilogue():
    y = acc_ref[...] + bias_ref[...]          # f32 epilogue (v5e-safe)
    if apply_act:
      y = jnp.where(y >= 0, y, negative_slope * y)
    o_ref[...] = y.astype(o_ref.dtype)


def _head_kernel(x_ref, w1_ref, b1_ref, w2_ref, b2_ref, o_ref, acc_ref, *,
                 inv_hw, slope):
  """Global average pool (over the HW grid axis) fused with the 2-layer MLP."""
  @pl.when(pl.program_id(0) == 0)
  def _init():
    acc_ref[...] = jnp.zeros_like(acc_ref)

  acc_ref[...] += jnp.sum(x_ref[...].astype(jnp.float32), axis=1)

  @pl.when(pl.program_id(0) == pl.num_programs(0) - 1)
  def _epilogue():
    fea = acc_ref[...] * inv_hw                                   # (N, C)
    h = jnp.dot(fea, w1_ref[...], preferred_element_type=jnp.float32)
    h = h + b1_ref[...]
    h = jnp.where(h >= 0, h, slope * h)
    out = jnp.dot(h, w2_ref[...], preferred_element_type=jnp.float32)
    o_ref[...] = (out + b2_ref[...]).astype(o_ref.dtype)


# ---------------------------------------------------------------------------
# Wrappers around pallas_call
# ---------------------------------------------------------------------------
def fused_matmul(x, w, bias, *, apply_act=True, out_dtype=jnp.bfloat16,
                 slope=LRELU_SLOPE):
  """act((x @ w) + bias). x: (M, K) bf16, w: (K, N) bf16, bias: (N,) f32."""
  M, K = x.shape
  _, N = w.shape

  tm = min(256, _round_up(M, 16))
  tn = 128
  tk = _pick_k_tile(K)

  Mp = _round_up(M, tm)
  Np = _round_up(N, tn)
  Kp = _round_up(K, tk)

  if (Mp, Kp) != (M, K):
    x = jnp.pad(x, ((0, Mp - M), (0, Kp - K)))
  if (Kp, Np) != (K, N):
    w = jnp.pad(w, ((0, Kp - K), (0, Np - N)))   # zero rows along K (fixes bug)
  if Np != N:
    bias = jnp.pad(bias, (0, Np - N))
  bias2d = bias.astype(jnp.float32).reshape(1, Np)

  grid = (Mp // tm, Np // tn, Kp // tk)
  kernel = functools.partial(_fused_matmul_kernel,
                             negative_slope=slope, apply_act=apply_act)

  flops = 2 * Mp * Np * Kp
  bytes_accessed = ((Mp * Kp + Kp * Np) * x.dtype.itemsize
                    + Mp * Np * jnp.dtype(out_dtype).itemsize
                    + Np * 4)

  y = pl.pallas_call(
      kernel,
      out_shape=jax.ShapeDtypeStruct((Mp, Np), out_dtype),
      grid_spec=pltpu.PrefetchScalarGridSpec(
          num_scalar_prefetch=0,
          grid=grid,
          in_specs=[
              pl.BlockSpec((tm, tk), lambda i, j, k: (i, k)),
              pl.BlockSpec((tk, tn), lambda i, j, k: (k, j)),
              pl.BlockSpec((1, tn), lambda i, j, k: (0, j)),
          ],
          out_specs=pl.BlockSpec((tm, tn), lambda i, j, k: (i, j)),
          scratch_shapes=[pltpu.VMEM((tm, tn), jnp.float32)],
      ),
      compiler_params=pltpu.CompilerParams(
          dimension_semantics=("parallel", "parallel", "arbitrary"),
          vmem_limit_bytes=32 * 1024 * 1024,
      ),
      cost_estimate=pl.CostEstimate(flops=flops, transcendentals=0,
                                    bytes_accessed=bytes_accessed),
  )(x, w, bias2d)

  if (Mp, Np) != (M, N):
    y = y[:M, :N]
  return y


def head_forward(x_nhwc, mlp_params):
  """AdaptiveAvgPool2d(1) + Linear(256,256) + LeakyReLU + Linear(256,256)."""
  Nb, H, W, C = x_nhwc.shape
  HW = H * W
  x3 = x_nhwc.reshape(Nb, HW, C)
  thw = _pick_hw_tile(HW)
  (w1, b1), (w2, b2) = mlp_params
  kernel = functools.partial(_head_kernel, inv_hw=1.0 / HW, slope=LRELU_SLOPE)
  return pl.pallas_call(
      kernel,
      out_shape=jax.ShapeDtypeStruct((Nb, C), jnp.float32),
      grid_spec=pltpu.PrefetchScalarGridSpec(
          num_scalar_prefetch=0,
          grid=(HW // thw,),
          in_specs=[
              pl.BlockSpec((Nb, thw, C), lambda i: (0, i, 0)),
              pl.BlockSpec((C, C), lambda i: (0, 0)),
              pl.BlockSpec((1, C), lambda i: (0, 0)),
              pl.BlockSpec((C, C), lambda i: (0, 0)),
              pl.BlockSpec((1, C), lambda i: (0, 0)),
          ],
          out_specs=pl.BlockSpec((Nb, C), lambda i: (0, 0)),
          scratch_shapes=[pltpu.VMEM((Nb, C), jnp.float32)],
      ),
      compiler_params=pltpu.CompilerParams(
          dimension_semantics=("arbitrary",),
          vmem_limit_bytes=32 * 1024 * 1024,
      ),
  )(x3,
    w1.astype(jnp.float32), b1.astype(jnp.float32).reshape(1, C),
    w2.astype(jnp.float32), b2.astype(jnp.float32).reshape(1, C))


# ---------------------------------------------------------------------------
# Glue: im2col, parameter folding
# ---------------------------------------------------------------------------
def im2col_3x3(x_nhwc, stride):
  """3x3, padding=1 patch extraction. Returns ((M, 9*C), (N, Ho, Wo))."""
  N, H, W, C = x_nhwc.shape
  xp = jnp.pad(x_nhwc, ((0, 0), (1, 1), (1, 1), (0, 0)))
  Ho = (H + 2 - 3) // stride + 1
  Wo = (W + 2 - 3) // stride + 1
  cols = []
  for ky in range(3):
    for kx in range(3):
      cols.append(xp[:, ky:ky + stride * Ho:stride,
                     kx:kx + stride * Wo:stride, :])
  patches = jnp.concatenate(cols, axis=-1)          # (N, Ho, Wo, 9*C)
  return patches.reshape(N * Ho * Wo, 9 * C), (N, Ho, Wo)


def fold_conv_bn(conv_w, conv_b, gamma, beta, mean, var, *, cin_pad, cout_pad):
  """Fold Conv bias + BN(eval) into (w_mat, bias), BN scale folded into w.

  conv_w: (Cout, Cin, 3, 3) PyTorch layout -> w_mat: (9*cin_pad, cout_pad)
  matching the im2col [ky, kx, cin] row ordering; extra rows/cols are zero.
  """
  cout, cin, kh, kw = conv_w.shape
  scale = gamma / jnp.sqrt(var + BN_EPS)                 # (cout,)
  bias = beta + (conv_b - mean) * scale                  # (cout,)
  # (Cout, Cin, KH, KW) -> (KH, KW, Cin, Cout), scale folded into weights.
  w = jnp.transpose(conv_w, (2, 3, 1, 0)) * scale
  w_pad = jnp.zeros((kh, kw, cin_pad, cout_pad), jnp.float32)
  w_pad = w_pad.at[:, :, :cin, :cout].set(w.astype(jnp.float32))
  w_mat = w_pad.reshape(kh * kw * cin_pad, cout_pad)
  bias_pad = jnp.zeros((cout_pad,), jnp.float32).at[:cout].set(
      bias.astype(jnp.float32))
  return w_mat, bias_pad


def conv_bn_lrelu(x_nhwc, params, *, stride, cout_pad):
  cin_pad = x_nhwc.shape[-1]
  patches, (Nb, Ho, Wo) = im2col_3x3(x_nhwc, stride)     # (M, 9*cin_pad) bf16
  w_mat, bias = fold_conv_bn(*params, cin_pad=cin_pad, cout_pad=cout_pad)
  y = fused_matmul(patches, w_mat.astype(jnp.bfloat16), bias,
                   apply_act=True, out_dtype=jnp.bfloat16)
  return y.reshape(Nb, Ho, Wo, cout_pad)


# ---------------------------------------------------------------------------
# Parameter construction (deterministic, synthetic)
# ---------------------------------------------------------------------------
CONV_CFG = [  # (cin, cout, stride) — matches the PyTorch Encoder_hr
    (3, 64, 1), (64, 64, 1), (64, 128, 2),
    (128, 128, 1), (128, 256, 2), (256, 256, 1),
]


def init_params(key):
  params = {"convs": [], "mlp": []}
  for (cin, cout, _stride) in CONV_CFG:
    key, k1, k2, k3, k4, k5, k6 = jax.random.split(key, 7)
    w = jax.random.normal(k1, (cout, cin, 3, 3), jnp.float32) * 0.05
    b = jax.random.normal(k2, (cout,), jnp.float32) * 0.05
    gamma = 1.0 + 0.1 * jax.random.normal(k3, (cout,), jnp.float32)
    beta = 0.1 * jax.random.normal(k4, (cout,), jnp.float32)
    mean = 0.1 * jax.random.normal(k5, (cout,), jnp.float32)
    var = 0.5 + jax.random.uniform(k6, (cout,), jnp.float32)
    params["convs"].append((w, b, gamma, beta, mean, var))
  for _ in range(2):
    key, k1, k2 = jax.random.split(key, 3)
    w = jax.random.normal(k1, (256, 256), jnp.float32) * 0.05  # (in, out)
    b = jax.random.normal(k2, (256,), jnp.float32) * 0.05
    params["mlp"].append((w, b))
  return params


# ---------------------------------------------------------------------------
# Forward pass
# ---------------------------------------------------------------------------
def encoder_hr_forward(x_nchw, params):
  # NCHW -> NHWC, bf16 activations for the conv path.
  x = jnp.transpose(x_nchw, (0, 2, 3, 1)).astype(jnp.bfloat16)
  for (cin, cout, stride), p in zip(CONV_CFG, params["convs"]):
    # 64-channel outputs are padded to 128 (zero channels) and carried
    # through so every Pallas output store is lane-dense.
    x = conv_bn_lrelu(x, p, stride=stride, cout_pad=_round_up(cout, 128))
  # Fused global-average-pool + MLP head.
  return head_forward(x, params["mlp"])


# ---------------------------------------------------------------------------
if __name__ == "__main__":
  key = jax.random.PRNGKey(0)
  key_x, key_p = jax.random.split(key)
  x = jax.random.normal(key_x, (2, 3, 16, 16), jnp.float32)   # NCHW input
  params = init_params(key_p)

  out = jax.jit(encoder_hr_forward)(x, params)
  jax.block_until_ready(out)
  assert out.shape == (2, 256), out.shape
  print("KERNEL_OK")
</pallas_src>

<mosaic_0001>
module attributes {stable_mosaic.version = 11 : i64} {
  func.func @_fused_matmul_kernel(%arg0: i32, %arg1: i32, %arg2: i32, %arg3: memref<256x32xbf16, #tpu.memory_space<vmem>>, %arg4: memref<32x128xbf16, #tpu.memory_space<vmem>>, %arg5: memref<1x128xf32, #tpu.memory_space<vmem>>, %arg6: memref<256x128xbf16, #tpu.memory_space<vmem>>, %arg7: memref<256x128xf32, #tpu.memory_space<vmem>>) attributes {dimension_semantics = [#tpu.dimension_semantics<parallel>, #tpu.dimension_semantics<parallel>, #tpu.dimension_semantics<arbitrary>], iteration_bounds = array<i64: 2, 1, 1>, scalar_prefetch = 0 : i64, scratch_operands = 1 : i64, tpu.core_type = #tpu.core_type<tc>, window_params = [{transform_indices = @transform_0, window_bounds = array<i64: 256, 32>}, {transform_indices = @transform_1, window_bounds = array<i64: 32, 128>}, {transform_indices = @transform_2, window_bounds = array<i64: 1, 128>}, {transform_indices = @transform_3, window_bounds = array<i64: 256, 128>}]} {
    %c0_i32 = arith.constant 0 : i32
    %0 = arith.cmpi eq, %arg2, %c0_i32 : i32
    %1 = arith.extui %0 : i1 to i32
    %c0_i32_0 = arith.constant 0 : i32
    %2 = arith.cmpi ne, %1, %c0_i32_0 : i32
    scf.if %2 {
      %cst_10 = arith.constant 0.000000e+00 : f32
      %12 = vector.broadcast %cst_10 : f32 to vector<256x128xf32>
      %c0_11 = arith.constant 0 : index
      %c0_12 = arith.constant 0 : index
      %13 = vector.load %arg7[%c0_11, %c0_12] : memref<256x128xf32, #tpu.memory_space<vmem>>, vector<256x128xf32>
      tpu.vector_store %arg7[%c0_11, %c0_12], %12 {strides = array<i32>} : memref<256x128xf32, #tpu.memory_space<vmem>>, vector<256x128xf32>,
    } else {
    }
    %c0 = arith.constant 0 : index
    %c0_1 = arith.constant 0 : index
    %3 = vector.load %arg7[%c0, %c0_1] : memref<256x128xf32, #tpu.memory_space<vmem>>, vector<256x128xf32>
    %c0_2 = arith.constant 0 : index
    %c0_3 = arith.constant 0 : index
    %4 = vector.load %arg3[%c0_2, %c0_3] : memref<256x32xbf16, #tpu.memory_space<vmem>>, vector<256x32xbf16>
    %c0_4 = arith.constant 0 : index
    %c0_5 = arith.constant 0 : index
    %5 = vector.load %arg4[%c0_4, %c0_5] : memref<32x128xbf16, #tpu.memory_space<vmem>>, vector<32x128xbf16>
    %cst = arith.constant dense<0.000000e+00> : vector<256x128xf32>
    %6 = tpu.matmul %4, %5, %cst {dimension_numbers = #tpu.dot_dimension_numbers<[1], [0], [0], [1], [0, 0, 1, 1], [], []>} : vector<256x32xbf16>, vector<32x128xbf16>, vector<256x128xf32> -> vector<256x128xf32>
    %7 = arith.addf %3, %6 : vector<256x128xf32>
    %c0_6 = arith.constant 0 : index
    %c0_7 = arith.constant 0 : index
    %8 = vector.load %arg7[%c0_6, %c0_7] : memref<256x128xf32, #tpu.memory_space<vmem>>, vector<256x128xf32>
    tpu.vector_store %arg7[%c0_6, %c0_7], %7 {strides = array<i32>} : memref<256x128xf32, #tpu.memory_space<vmem>>, vector<256x128xf32>,
    %c0_i32_8 = arith.constant 0 : i32
    %9 = arith.cmpi eq, %arg2, %c0_i32_8 : i32
    %10 = arith.extui %9 : i1 to i32
    %c0_i32_9 = arith.constant 0 : i32
    %11 = arith.cmpi ne, %10, %c0_i32_9 : i32
    scf.if %11 {
      %c0_10 = arith.constant 0 : index
      %c0_11 = arith.constant 0 : index
      %12 = vector.load %arg7[%c0_10, %c0_11] : memref<256x128xf32, #tpu.memory_space<vmem>>, vector<256x128xf32>
      %c0_12 = arith.constant 0 : index
      %c0_13 = arith.constant 0 : index
      %13 = vector.load %arg5[%c0_12, %c0_13] : memref<1x128xf32, #tpu.memory_space<vmem>>, vector<1x128xf32>
      %14 = vector.broadcast %13 : vector<1x128xf32> to vector<256x128xf32>
      %15 = arith.addf %12, %14 : vector<256x128xf32>
      %cst_14 = arith.constant 0.000000e+00 : f32
      %16 = vector.broadcast %cst_14 : f32 to vector<256x128xf32>
      %17 = arith.cmpf oge, %15, %16 : vector<256x128xf32>
      %cst_15 = arith.constant 1.000000e-01 : f32
      %18 = vector.broadcast %cst_15 : f32 to vector<256x128xf32>
      %19 = arith.mulf %18, %15 : vector<256x128xf32>
      %20 = arith.select %17, %15, %19 : vector<256x128xi1>, vector<256x128xf32>
      %21 = arith.truncf %20 : vector<256x128xf32> to vector<256x128xbf16>
      %c0_16 = arith.constant 0 : index
      %c0_17 = arith.constant 0 : index
      %22 = vector.load %arg6[%c0_16, %c0_17] : memref<256x128xbf16, #tpu.memory_space<vmem>>, vector<256x128xbf16>
      tpu.vector_store %arg6[%c0_16, %c0_17], %21 {strides = array<i32>} : memref<256x128xbf16, #tpu.memory_space<vmem>>, vector<256x128xbf16>,
    } else {
    }
    return
  }
  func.func @transform_0(%arg0: i32, %arg1: i32, %arg2: i32) -> (i32, i32) {
    %c0_i32 = arith.constant 0 : i32
    return %arg0, %arg2 : i32, i32
  }
  func.func @transform_1(%arg0: i32, %arg1: i32, %arg2: i32) -> (i32, i32) {
    %c0_i32 = arith.constant 0 : i32
    return %arg2, %arg1 : i32, i32
  }
  func.func @transform_2(%arg0: i32, %arg1: i32, %arg2: i32) -> (i32, i32) {
    %c0_i32 = arith.constant 0 : i32
    %c0_i32_0 = arith.constant 0 : i32
    return %c0_i32, %arg1 : i32, i32
  }
  func.func @transform_3(%arg0: i32, %arg1: i32, %arg2: i32) -> (i32, i32) {
    %c0_i32 = arith.constant 0 : i32
    return %arg0, %arg1 : i32, i32
  }
}

module attributes {stable_mosaic.version = 11 : i64} {
  func.func @_fused_matmul_kernel(%arg0: i32, %arg1: i32, %arg2: i32, %arg3: memref<256x384xbf16, #tpu.memory_space<vmem>>, %arg4: memref<384x128xbf16, #tpu.memory_space<vmem>>, %arg5: memref<1x128xf32, #tpu.memory_space<vmem>>, %arg6: memref<256x128xbf16, #tpu.memory_space<vmem>>, %arg7: memref<256x128xf32, #tpu.memory_space<vmem>>) attributes {dimension_semantics = [#tpu.dimension_semantics<parallel>, #tpu.dimension_semantics<parallel>, #tpu.dimension_semantics<arbitrary>], iteration_bounds = array<i64: 2, 1, 3>, scalar_prefetch = 0 : i64, scratch_operands = 1 : i64, tpu.core_type = #tpu.core_type<tc>, window_params = [{transform_indices = @transform_0, window_bounds = array<i64: 256, 384>}, {transform_indices = @transform_1, window_bounds = array<i64: 384, 128>}, {transform_indices = @transform_2, window_bounds = array<i64: 1, 128>}, {transform_indices = @transform_3, window_bounds = array<i64: 256, 128>}]} {
    %c0_i32 = arith.constant 0 : i32
    %0 = arith.cmpi eq, %arg2, %c0_i32 : i32
    %1 = arith.extui %0 : i1 to i32
    %c0_i32_0 = arith.constant 0 : i32
    %2 = arith.cmpi ne, %1, %c0_i32_0 : i32
    scf.if %2 {
      %cst_9 = arith.constant 0.000000e+00 : f32
      %12 = vector.broadcast %cst_9 : f32 to vector<256x128xf32>
      %c0_10 = arith.constant 0 : index
      %c0_11 = arith.constant 0 : index
      %13 = vector.load %arg7[%c0_10, %c0_11] : memref<256x128xf32, #tpu.memory_space<vmem>>, vector<256x128xf32>
      tpu.vector_store %arg7[%c0_10, %c0_11], %12 {strides = array<i32>} : memref<256x128xf32, #tpu.memory_space<vmem>>, vector<256x128xf32>,
    } else {
    }
    %c0 = arith.constant 0 : index
    %c0_1 = arith.constant 0 : index
    %3 = vector.load %arg7[%c0, %c0_1] : memref<256x128xf32, #tpu.memory_space<vmem>>, vector<256x128xf32>
    %c0_2 = arith.constant 0 : index
    %c0_3 = arith.constant 0 : index
    %4 = vector.load %arg3[%c0_2, %c0_3] : memref<256x384xbf16, #tpu.memory_space<vmem>>, vector<256x384xbf16>
    %c0_4 = arith.constant 0 : index
    %c0_5 = arith.constant 0 : index
    %5 = vector.load %arg4[%c0_4, %c0_5] : memref<384x128xbf16, #tpu.memory_space<vmem>>, vector<384x128xbf16>
    %cst = arith.constant dense<0.000000e+00> : vector<256x128xf32>
    %6 = tpu.matmul %4, %5, %cst {dimension_numbers = #tpu.dot_dimension_numbers<[1], [0], [0], [1], [0, 0, 1, 1], [], []>} : vector<256x384xbf16>, vector<384x128xbf16>, vector<256x128xf32> -> vector<256x128xf32>
    %7 = arith.addf %3, %6 : vector<256x128xf32>
    %c0_6 = arith.constant 0 : index
    %c0_7 = arith.constant 0 : index
    %8 = vector.load %arg7[%c0_6, %c0_7] : memref<256x128xf32, #tpu.memory_space<vmem>>, vector<256x128xf32>
    tpu.vector_store %arg7[%c0_6, %c0_7], %7 {strides = array<i32>} : memref<256x128xf32, #tpu.memory_space<vmem>>, vector<256x128xf32>,
    %c2_i32 = arith.constant 2 : i32
    %9 = arith.cmpi eq, %arg2, %c2_i32 : i32
    %10 = arith.extui %9 : i1 to i32
    %c0_i32_8 = arith.constant 0 : i32
    %11 = arith.cmpi ne, %10, %c0_i32_8 : i32
    scf.if %11 {
      %c0_9 = arith.constant 0 : index
      %c0_10 = arith.constant 0 : index
      %12 = vector.load %arg7[%c0_9, %c0_10] : memref<256x128xf32, #tpu.memory_space<vmem>>, vector<256x128xf32>
      %c0_11 = arith.constant 0 : index
      %c0_12 = arith.constant 0 : index
      %13 = vector.load %arg5[%c0_11, %c0_12] : memref<1x128xf32, #tpu.memory_space<vmem>>, vector<1x128xf32>
      %14 = vector.broadcast %13 : vector<1x128xf32> to vector<256x128xf32>
      %15 = arith.addf %12, %14 : vector<256x128xf32>
      %cst_13 = arith.constant 0.000000e+00 : f32
      %16 = vector.broadcast %cst_13 : f32 to vector<256x128xf32>
      %17 = arith.cmpf oge, %15, %16 : vector<256x128xf32>
      %cst_14 = arith.constant 1.000000e-01 : f32
      %18 = vector.broadcast %cst_14 : f32 to vector<256x128xf32>
      %19 = arith.mulf %18, %15 : vector<256x128xf32>
      %20 = arith.select %17, %15, %19 : vector<256x128xi1>, vector<256x128xf32>
      %21 = arith.truncf %20 : vector<256x128xf32> to vector<256x128xbf16>
      %c0_15 = arith.constant 0 : index
      %c0_16 = arith.constant 0 : index
      %22 = vector.load %arg6[%c0_15, %c0_16] : memref<256x128xbf16, #tpu.memory_space<vmem>>, vector<256x128xbf16>
      tpu.vector_store %arg6[%c0_15, %c0_16], %21 {strides = array<i32>} : memref<256x128xbf16, #tpu.memory_space<vmem>>, vector<256x128xbf16>,
    } else {
    }
    return
  }
  func.func @transform_0(%arg0: i32, %arg1: i32, %arg2: i32) -> (i32, i32) {
    %c0_i32 = arith.constant 0 : i32
    return %arg0, %arg2 : i32, i32
  }
  func.func @transform_1(%arg0: i32, %arg1: i32, %arg2: i32) -> (i32, i32) {
    %c0_i32 = arith.constant 0 : i32
    return %arg2, %arg1 : i32, i32
  }
  func.func @transform_2(%arg0: i32, %arg1: i32, %arg2: i32) -> (i32, i32) {
    %c0_i32 = arith.constant 0 : i32
    %c0_i32_0 = arith.constant 0 : i32
    return %c0_i32, %arg1 : i32, i32
  }
  func.func @transform_3(%arg0: i32, %arg1: i32, %arg2: i32) -> (i32, i32) {
    %c0_i32 = arith.constant 0 : i32
    return %arg0, %arg1 : i32, i32
  }
}

module attributes {stable_mosaic.version = 11 : i64} {
  func.func @_fused_matmul_kernel(%arg0: i32, %arg1: i32, %arg2: i32, %arg3: memref<128x384xbf16, #tpu.memory_space<vmem>>, %arg4: memref<384x128xbf16, #tpu.memory_space<vmem>>, %arg5: memref<1x128xf32, #tpu.memory_space<vmem>>, %arg6: memref<128x128xbf16, #tpu.memory_space<vmem>>, %arg7: memref<128x128xf32, #tpu.memory_space<vmem>>) attributes {dimension_semantics = [#tpu.dimension_semantics<parallel>, #tpu.dimension_semantics<parallel>, #tpu.dimension_semantics<arbitrary>], iteration_bounds = array<i64: 1, 1, 3>, scalar_prefetch = 0 : i64, scratch_operands = 1 : i64, tpu.core_type = #tpu.core_type<tc>, window_params = [{transform_indices = @transform_0, window_bounds = array<i64: 128, 384>}, {transform_indices = @transform_1, window_bounds = array<i64: 384, 128>}, {transform_indices = @transform_2, window_bounds = array<i64: 1, 128>}, {transform_indices = @transform_3, window_bounds = array<i64: 128, 128>}]} {
    %c0_i32 = arith.constant 0 : i32
    %0 = arith.cmpi eq, %arg2, %c0_i32 : i32
    %1 = arith.extui %0 : i1 to i32
    %c0_i32_0 = arith.constant 0 : i32
    %2 = arith.cmpi ne, %1, %c0_i32_0 : i32
    scf.if %2 {
      %cst_9 = arith.constant 0.000000e+00 : f32
      %12 = vector.broadcast %cst_9 : f32 to vector<128x128xf32>
      %c0_10 = arith.constant 0 : index
      %c0_11 = arith.constant 0 : index
      %13 = vector.load %arg7[%c0_10, %c0_11] : memref<128x128xf32, #tpu.memory_space<vmem>>, vector<128x128xf32>
      tpu.vector_store %arg7[%c0_10, %c0_11], %12 {strides = array<i32>} : memref<128x128xf32, #tpu.memory_space<vmem>>, vector<128x128xf32>,
    } else {
    }
    %c0 = arith.constant 0 : index
    %c0_1 = arith.constant 0 : index
    %3 = vector.load %arg7[%c0, %c0_1] : memref<128x128xf32, #tpu.memory_space<vmem>>, vector<128x128xf32>
    %c0_2 = arith.constant 0 : index
    %c0_3 = arith.constant 0 : index
    %4 = vector.load %arg3[%c0_2, %c0_3] : memref<128x384xbf16, #tpu.memory_space<vmem>>, vector<128x384xbf16>
    %c0_4 = arith.constant 0 : index
    %c0_5 = arith.constant 0 : index
    %5 = vector.load %arg4[%c0_4, %c0_5] : memref<384x128xbf16, #tpu.memory_space<vmem>>, vector<384x128xbf16>
    %cst = arith.constant dense<0.000000e+00> : vector<128x128xf32>
    %6 = tpu.matmul %4, %5, %cst {dimension_numbers = #tpu.dot_dimension_numbers<[1], [0], [0], [1], [0, 0, 1, 1], [], []>} : vector<128x384xbf16>, vector<384x128xbf16>, vector<128x128xf32> -> vector<128x128xf32>
    %7 = arith.addf %3, %6 : vector<128x128xf32>
    %c0_6 = arith.constant 0 : index
    %c0_7 = arith.constant 0 : index
    %8 = vector.load %arg7[%c0_6, %c0_7] : memref<128x128xf32, #tpu.memory_space<vmem>>, vector<128x128xf32>
    tpu.vector_store %arg7[%c0_6, %c0_7], %7 {strides = array<i32>} : memref<128x128xf32, #tpu.memory_space<vmem>>, vector<128x128xf32>,
    %c2_i32 = arith.constant 2 : i32
    %9 = arith.cmpi eq, %arg2, %c2_i32 : i32
    %10 = arith.extui %9 : i1 to i32
    %c0_i32_8 = arith.constant 0 : i32
    %11 = arith.cmpi ne, %10, %c0_i32_8 : i32
    scf.if %11 {
      %c0_9 = arith.constant 0 : index
      %c0_10 = arith.constant 0 : index
      %12 = vector.load %arg7[%c0_9, %c0_10] : memref<128x128xf32, #tpu.memory_space<vmem>>, vector<128x128xf32>
      %c0_11 = arith.constant 0 : index
      %c0_12 = arith.constant 0 : index
      %13 = vector.load %arg5[%c0_11, %c0_12] : memref<1x128xf32, #tpu.memory_space<vmem>>, vector<1x128xf32>
      %14 = vector.broadcast %13 : vector<1x128xf32> to vector<128x128xf32>
      %15 = arith.addf %12, %14 : vector<128x128xf32>
      %cst_13 = arith.constant 0.000000e+00 : f32
      %16 = vector.broadcast %cst_13 : f32 to vector<128x128xf32>
      %17 = arith.cmpf oge, %15, %16 : vector<128x128xf32>
      %cst_14 = arith.constant 1.000000e-01 : f32
      %18 = vector.broadcast %cst_14 : f32 to vector<128x128xf32>
      %19 = arith.mulf %18, %15 : vector<128x128xf32>
      %20 = arith.select %17, %15, %19 : vector<128x128xi1>, vector<128x128xf32>
      %21 = arith.truncf %20 : vector<128x128xf32> to vector<128x128xbf16>
      %c0_15 = arith.constant 0 : index
      %c0_16 = arith.constant 0 : index
      %22 = vector.load %arg6[%c0_15, %c0_16] : memref<128x128xbf16, #tpu.memory_space<vmem>>, vector<128x128xbf16>
      tpu.vector_store %arg6[%c0_15, %c0_16], %21 {strides = array<i32>} : memref<128x128xbf16, #tpu.memory_space<vmem>>, vector<128x128xbf16>,
    } else {
    }
    return
  }
  func.func @transform_0(%arg0: i32, %arg1: i32, %arg2: i32) -> (i32, i32) {
    %c0_i32 = arith.constant 0 : i32
    return %arg0, %arg2 : i32, i32
  }
  func.func @transform_1(%arg0: i32, %arg1: i32, %arg2: i32) -> (i32, i32) {
    %c0_i32 = arith.constant 0 : i32
    return %arg2, %arg1 : i32, i32
  }
  func.func @transform_2(%arg0: i32, %arg1: i32, %arg2: i32) -> (i32, i32) {
    %c0_i32 = arith.constant 0 : i32
    %c0_i32_0 = arith.constant 0 : i32
    return %c0_i32, %arg1 : i32, i32
  }
  func.func @transform_3(%arg0: i32, %arg1: i32, %arg2: i32) -> (i32, i32) {
    %c0_i32 = arith.constant 0 : i32
    return %arg0, %arg1 : i32, i32
  }
}

module attributes {stable_mosaic.version = 11 : i64} {
  func.func @_fused_matmul_kernel(%arg0: i32, %arg1: i32, %arg2: i32, %arg3: memref<32x384xbf16, #tpu.memory_space<vmem>>, %arg4: memref<384x128xbf16, #tpu.memory_space<vmem>>, %arg5: memref<1x128xf32, #tpu.memory_space<vmem>>, %arg6: memref<32x128xbf16, #tpu.memory_space<vmem>>, %arg7: memref<32x128xf32, #tpu.memory_space<vmem>>) attributes {dimension_semantics = [#tpu.dimension_semantics<parallel>, #tpu.dimension_semantics<parallel>, #tpu.dimension_semantics<arbitrary>], iteration_bounds = array<i64: 1, 2, 3>, scalar_prefetch = 0 : i64, scratch_operands = 1 : i64, tpu.core_type = #tpu.core_type<tc>, window_params = [{transform_indices = @transform_0, window_bounds = array<i64: 32, 384>}, {transform_indices = @transform_1, window_bounds = array<i64: 384, 128>}, {transform_indices = @transform_2, window_bounds = array<i64: 1, 128>}, {transform_indices = @transform_3, window_bounds = array<i64: 32, 128>}]} {
    %c0_i32 = arith.constant 0 : i32
    %0 = arith.cmpi eq, %arg2, %c0_i32 : i32
    %1 = arith.extui %0 : i1 to i32
    %c0_i32_0 = arith.constant 0 : i32
    %2 = arith.cmpi ne, %1, %c0_i32_0 : i32
    scf.if %2 {
      %cst_9 = arith.constant 0.000000e+00 : f32
      %12 = vector.broadcast %cst_9 : f32 to vector<32x128xf32>
      %c0_10 = arith.constant 0 : index
      %c0_11 = arith.constant 0 : index
      %13 = vector.load %arg7[%c0_10, %c0_11] : memref<32x128xf32, #tpu.memory_space<vmem>>, vector<32x128xf32>
      tpu.vector_store %arg7[%c0_10, %c0_11], %12 {strides = array<i32>} : memref<32x128xf32, #tpu.memory_space<vmem>>, vector<32x128xf32>,
    } else {
    }
    %c0 = arith.constant 0 : index
    %c0_1 = arith.constant 0 : index
    %3 = vector.load %arg7[%c0, %c0_1] : memref<32x128xf32, #tpu.memory_space<vmem>>, vector<32x128xf32>
    %c0_2 = arith.constant 0 : index
    %c0_3 = arith.constant 0 : index
    %4 = vector.load %arg3[%c0_2, %c0_3] : memref<32x384xbf16, #tpu.memory_space<vmem>>, vector<32x384xbf16>
    %c0_4 = arith.constant 0 : index
    %c0_5 = arith.constant 0 : index
    %5 = vector.load %arg4[%c0_4, %c0_5] : memref<384x128xbf16, #tpu.memory_space<vmem>>, vector<384x128xbf16>
    %cst = arith.constant dense<0.000000e+00> : vector<32x128xf32>
    %6 = tpu.matmul %4, %5, %cst {dimension_numbers = #tpu.dot_dimension_numbers<[1], [0], [0], [1], [0, 0, 1, 1], [], []>} : vector<32x384xbf16>, vector<384x128xbf16>, vector<32x128xf32> -> vector<32x128xf32>
    %7 = arith.addf %3, %6 : vector<32x128xf32>
    %c0_6 = arith.constant 0 : index
    %c0_7 = arith.constant 0 : index
    %8 = vector.load %arg7[%c0_6, %c0_7] : memref<32x128xf32, #tpu.memory_space<vmem>>, vector<32x128xf32>
    tpu.vector_store %arg7[%c0_6, %c0_7], %7 {strides = array<i32>} : memref<32x128xf32, #tpu.memory_space<vmem>>, vector<32x128xf32>,
    %c2_i32 = arith.constant 2 : i32
    %9 = arith.cmpi eq, %arg2, %c2_i32 : i32
    %10 = arith.extui %9 : i1 to i32
    %c0_i32_8 = arith.constant 0 : i32
    %11 = arith.cmpi ne, %10, %c0_i32_8 : i32
    scf.if %11 {
      %c0_9 = arith.constant 0 : index
      %c0_10 = arith.constant 0 : index
      %12 = vector.load %arg7[%c0_9, %c0_10] : memref<32x128xf32, #tpu.memory_space<vmem>>, vector<32x128xf32>
      %c0_11 = arith.constant 0 : index
      %c0_12 = arith.constant 0 : index
      %13 = vector.load %arg5[%c0_11, %c0_12] : memref<1x128xf32, #tpu.memory_space<vmem>>, vector<1x128xf32>
      %14 = vector.broadcast %13 : vector<1x128xf32> to vector<32x128xf32>
      %15 = arith.addf %12, %14 : vector<32x128xf32>
      %cst_13 = arith.constant 0.000000e+00 : f32
      %16 = vector.broadcast %cst_13 : f32 to vector<32x128xf32>
      %17 = arith.cmpf oge, %15, %16 : vector<32x128xf32>
      %cst_14 = arith.constant 1.000000e-01 : f32
      %18 = vector.broadcast %cst_14 : f32 to vector<32x128xf32>
      %19 = arith.mulf %18, %15 : vector<32x128xf32>
      %20 = arith.select %17, %15, %19 : vector<32x128xi1>, vector<32x128xf32>
      %21 = arith.truncf %20 : vector<32x128xf32> to vector<32x128xbf16>
      %c0_15 = arith.constant 0 : index
      %c0_16 = arith.constant 0 : index
      %22 = vector.load %arg6[%c0_15, %c0_16] : memref<32x128xbf16, #tpu.memory_space<vmem>>, vector<32x128xbf16>
      tpu.vector_store %arg6[%c0_15, %c0_16], %21 {strides = array<i32>} : memref<32x128xbf16, #tpu.memory_space<vmem>>, vector<32x128xbf16>,
    } else {
    }
    return
  }
  func.func @transform_0(%arg0: i32, %arg1: i32, %arg2: i32) -> (i32, i32) {
    %c0_i32 = arith.constant 0 : i32
    return %arg0, %arg2 : i32, i32
  }
  func.func @transform_1(%arg0: i32, %arg1: i32, %arg2: i32) -> (i32, i32) {
    %c0_i32 = arith.constant 0 : i32
    return %arg2, %arg1 : i32, i32
  }
  func.func @transform_2(%arg0: i32, %arg1: i32, %arg2: i32) -> (i32, i32) {
    %c0_i32 = arith.constant 0 : i32
    %c0_i32_0 = arith.constant 0 : i32
    return %c0_i32, %arg1 : i32, i32
  }
  func.func @transform_3(%arg0: i32, %arg1: i32, %arg2: i32) -> (i32, i32) {
    %c0_i32 = arith.constant 0 : i32
    return %arg0, %arg1 : i32, i32
  }
}

module attributes {stable_mosaic.version = 11 : i64} {
  func.func @_fused_matmul_kernel(%arg0: i32, %arg1: i32, %arg2: i32, %arg3: memref<32x384xbf16, #tpu.memory_space<vmem>>, %arg4: memref<384x128xbf16, #tpu.memory_space<vmem>>, %arg5: memref<1x128xf32, #tpu.memory_space<vmem>>, %arg6: memref<32x128xbf16, #tpu.memory_space<vmem>>, %arg7: memref<32x128xf32, #tpu.memory_space<vmem>>) attributes {dimension_semantics = [#tpu.dimension_semantics<parallel>, #tpu.dimension_semantics<parallel>, #tpu.dimension_semantics<arbitrary>], iteration_bounds = array<i64: 1, 2, 6>, scalar_prefetch = 0 : i64, scratch_operands = 1 : i64, tpu.core_type = #tpu.core_type<tc>, window_params = [{transform_indices = @transform_0, window_bounds = array<i64: 32, 384>}, {transform_indices = @transform_1, window_bounds = array<i64: 384, 128>}, {transform_indices = @transform_2, window_bounds = array<i64: 1, 128>}, {transform_indices = @transform_3, window_bounds = array<i64: 32, 128>}]} {
    %c0_i32 = arith.constant 0 : i32
    %0 = arith.cmpi eq, %arg2, %c0_i32 : i32
    %1 = arith.extui %0 : i1 to i32
    %c0_i32_0 = arith.constant 0 : i32
    %2 = arith.cmpi ne, %1, %c0_i32_0 : i32
    scf.if %2 {
      %cst_9 = arith.constant 0.000000e+00 : f32
      %12 = vector.broadcast %cst_9 : f32 to vector<32x128xf32>
      %c0_10 = arith.constant 0 : index
      %c0_11 = arith.constant 0 : index
      %13 = vector.load %arg7[%c0_10, %c0_11] : memref<32x128xf32, #tpu.memory_space<vmem>>, vector<32x128xf32>
      tpu.vector_store %arg7[%c0_10, %c0_11], %12 {strides = array<i32>} : memref<32x128xf32, #tpu.memory_space<vmem>>, vector<32x128xf32>,
    } else {
    }
    %c0 = arith.constant 0 : index
    %c0_1 = arith.constant 0 : index
    %3 = vector.load %arg7[%c0, %c0_1] : memref<32x128xf32, #tpu.memory_space<vmem>>, vector<32x128xf32>
    %c0_2 = arith.constant 0 : index
    %c0_3 = arith.constant 0 : index
    %4 = vector.load %arg3[%c0_2, %c0_3] : memref<32x384xbf16, #tpu.memory_space<vmem>>, vector<32x384xbf16>
    %c0_4 = arith.constant 0 : index
    %c0_5 = arith.constant 0 : index
    %5 = vector.load %arg4[%c0_4, %c0_5] : memref<384x128xbf16, #tpu.memory_space<vmem>>, vector<384x128xbf16>
    %cst = arith.constant dense<0.000000e+00> : vector<32x128xf32>
    %6 = tpu.matmul %4, %5, %cst {dimension_numbers = #tpu.dot_dimension_numbers<[1], [0], [0], [1], [0, 0, 1, 1], [], []>} : vector<32x384xbf16>, vector<384x128xbf16>, vector<32x128xf32> -> vector<32x128xf32>
    %7 = arith.addf %3, %6 : vector<32x128xf32>
    %c0_6 = arith.constant 0 : index
    %c0_7 = arith.constant 0 : index
    %8 = vector.load %arg7[%c0_6, %c0_7] : memref<32x128xf32, #tpu.memory_space<vmem>>, vector<32x128xf32>
    tpu.vector_store %arg7[%c0_6, %c0_7], %7 {strides = array<i32>} : memref<32x128xf32, #tpu.memory_space<vmem>>, vector<32x128xf32>,
    %c5_i32 = arith.constant 5 : i32
    %9 = arith.cmpi eq, %arg2, %c5_i32 : i32
    %10 = arith.extui %9 : i1 to i32
    %c0_i32_8 = arith.constant 0 : i32
    %11 = arith.cmpi ne, %10, %c0_i32_8 : i32
    scf.if %11 {
      %c0_9 = arith.constant 0 : index
      %c0_10 = arith.constant 0 : index
      %12 = vector.load %arg7[%c0_9, %c0_10] : memref<32x128xf32, #tpu.memory_space<vmem>>, vector<32x128xf32>
      %c0_11 = arith.constant 0 : index
      %c0_12 = arith.constant 0 : index
      %13 = vector.load %arg5[%c0_11, %c0_12] : memref<1x128xf32, #tpu.memory_space<vmem>>, vector<1x128xf32>
      %14 = vector.broadcast %13 : vector<1x128xf32> to vector<32x128xf32>
      %15 = arith.addf %12, %14 : vector<32x128xf32>
      %cst_13 = arith.constant 0.000000e+00 : f32
      %16 = vector.broadcast %cst_13 : f32 to vector<32x128xf32>
      %17 = arith.cmpf oge, %15, %16 : vector<32x128xf32>
      %cst_14 = arith.constant 1.000000e-01 : f32
      %18 = vector.broadcast %cst_14 : f32 to vector<32x128xf32>
      %19 = arith.mulf %18, %15 : vector<32x128xf32>
      %20 = arith.select %17, %15, %19 : vector<32x128xi1>, vector<32x128xf32>
      %21 = arith.truncf %20 : vector<32x128xf32> to vector<32x128xbf16>
      %c0_15 = arith.constant 0 : index
      %c0_16 = arith.constant 0 : index
      %22 = vector.load %arg6[%c0_15, %c0_16] : memref<32x128xbf16, #tpu.memory_space<vmem>>, vector<32x128xbf16>
      tpu.vector_store %arg6[%c0_15, %c0_16], %21 {strides = array<i32>} : memref<32x128xbf16, #tpu.memory_space<vmem>>, vector<32x128xbf16>,
    } else {
    }
    return
  }
  func.func @transform_0(%arg0: i32, %arg1: i32, %arg2: i32) -> (i32, i32) {
    %c0_i32 = arith.constant 0 : i32
    return %arg0, %arg2 : i32, i32
  }
  func.func @transform_1(%arg0: i32, %arg1: i32, %arg2: i32) -> (i32, i32) {
    %c0_i32 = arith.constant 0 : i32
    return %arg2, %arg1 : i32, i32
  }
  func.func @transform_2(%arg0: i32, %arg1: i32, %arg2: i32) -> (i32, i32) {
    %c0_i32 = arith.constant 0 : i32
    %c0_i32_0 = arith.constant 0 : i32
    return %c0_i32, %arg1 : i32, i32
  }
  func.func @transform_3(%arg0: i32, %arg1: i32, %arg2: i32) -> (i32, i32) {
    %c0_i32 = arith.constant 0 : i32
    return %arg0, %arg1 : i32, i32
  }
}

module attributes {stable_mosaic.version = 11 : i64} {
  func.func @_head_kernel(%arg0: i32, %arg1: memref<2x16x256xbf16, #tpu.memory_space<vmem>>, %arg2: memref<256x256xf32, #tpu.memory_space<vmem>>, %arg3: memref<1x256xf32, #tpu.memory_space<vmem>>, %arg4: memref<256x256xf32, #tpu.memory_space<vmem>>, %arg5: memref<1x256xf32, #tpu.memory_space<vmem>>, %arg6: memref<2x256xf32, #tpu.memory_space<vmem>>, %arg7: memref<2x256xf32, #tpu.memory_space<vmem>>) attributes {dimension_semantics = [#tpu.dimension_semantics<arbitrary>], iteration_bounds = array<i64: 1>, scalar_prefetch = 0 : i64, scratch_operands = 1 : i64, tpu.core_type = #tpu.core_type<tc>, window_params = [{transform_indices = @transform_0, window_bounds = array<i64: 2, 16, 256>}, {pipeline_mode = #tpu.pipeline_mode<synchronous>, transform_indices = @transform_1, window_bounds = array<i64: 256, 256>}, {pipeline_mode = #tpu.pipeline_mode<synchronous>, transform_indices = @transform_2, window_bounds = array<i64: 1, 256>}, {pipeline_mode = #tpu.pipeline_mode<synchronous>, transform_indices = @transform_3, window_bounds = array<i64: 256, 256>}, {pipeline_mode = #tpu.pipeline_mode<synchronous>, transform_indices = @transform_4, window_bounds = array<i64: 1, 256>}, {pipeline_mode = #tpu.pipeline_mode<synchronous>, transform_indices = @transform_5, window_bounds = array<i64: 2, 256>}]} {
    %c0_i32 = arith.constant 0 : i32
    %0 = arith.cmpi eq, %arg0, %c0_i32 : i32
    %1 = arith.extui %0 : i1 to i32
    %c0_i32_0 = arith.constant 0 : i32
    %2 = arith.cmpi ne, %1, %c0_i32_0 : i32
    scf.if %2 {
      %cst_9 = arith.constant 0.000000e+00 : f32
      %12 = vector.broadcast %cst_9 : f32 to vector<2x256xf32>
      %c0_10 = arith.constant 0 : index
      %c0_11 = arith.constant 0 : index
      %13 = vector.load %arg7[%c0_10, %c0_11] : memref<2x256xf32, #tpu.memory_space<vmem>>, vector<2x256xf32>
      tpu.vector_store %arg7[%c0_10, %c0_11], %12 {strides = array<i32>} : memref<2x256xf32, #tpu.memory_space<vmem>>, vector<2x256xf32>,
    } else {
    }
    %c0 = arith.constant 0 : index
    %c0_1 = arith.constant 0 : index
    %3 = vector.load %arg7[%c0, %c0_1] : memref<2x256xf32, #tpu.memory_space<vmem>>, vector<2x256xf32>
    %c0_2 = arith.constant 0 : index
    %c0_3 = arith.constant 0 : index
    %c0_4 = arith.constant 0 : index
    %4 = vector.load %arg1[%c0_2, %c0_3, %c0_4] : memref<2x16x256xbf16, #tpu.memory_space<vmem>>, vector<2x16x256xbf16>
    %5 = arith.extf %4 : vector<2x16x256xbf16> to vector<2x16x256xf32>
    %cst = arith.constant dense<0.000000e+00> : vector<2x256xf32>
    %6 = vector.multi_reduction <add>, %5, %cst [1] : vector<2x16x256xf32> to vector<2x256xf32>
    %7 = arith.addf %3, %6 : vector<2x256xf32>
    %c0_5 = arith.constant 0 : index
    %c0_6 = arith.constant 0 : index
    %8 = vector.load %arg7[%c0_5, %c0_6] : memref<2x256xf32, #tpu.memory_space<vmem>>, vector<2x256xf32>
    tpu.vector_store %arg7[%c0_5, %c0_6], %7 {strides = array<i32>} : memref<2x256xf32, #tpu.memory_space<vmem>>, vector<2x256xf32>,
    %c0_i32_7 = arith.constant 0 : i32
    %9 = arith.cmpi eq, %arg0, %c0_i32_7 : i32
    %10 = arith.extui %9 : i1 to i32
    %c0_i32_8 = arith.constant 0 : i32
    %11 = arith.cmpi ne, %10, %c0_i32_8 : i32
    scf.if %11 {
      %c0_9 = arith.constant 0 : index
      %c0_10 = arith.constant 0 : index
      %12 = vector.load %arg7[%c0_9, %c0_10] : memref<2x256xf32, #tpu.memory_space<vmem>>, vector<2x256xf32>
      %cst_11 = arith.constant 6.250000e-02 : f32
      %13 = vector.broadcast %cst_11 : f32 to vector<2x256xf32>
      %14 = arith.mulf %12, %13 : vector<2x256xf32>
      %c0_12 = arith.constant 0 : index
      %c0_13 = arith.constant 0 : index
      %15 = vector.load %arg2[%c0_12, %c0_13] : memref<256x256xf32, #tpu.memory_space<vmem>>, vector<256x256xf32>
      %cst_14 = arith.constant dense<0.000000e+00> : vector<2x256xf32>
      %16 = tpu.matmul %14, %15, %cst_14 {dimension_numbers = #tpu.dot_dimension_numbers<[1], [0], [0], [1], [0, 0, 1, 1], [], []>} : vector<2x256xf32>, vector<256x256xf32>, vector<2x256xf32> -> vector<2x256xf32>
      %c0_15 = arith.constant 0 : index
      %c0_16 = arith.constant 0 : index
      %17 = vector.load %arg3[%c0_15, %c0_16] : memref<1x256xf32, #tpu.memory_space<vmem>>, vector<1x256xf32>
      %18 = vector.broadcast %17 : vector<1x256xf32> to vector<2x256xf32>
      %19 = arith.addf %16, %18 : vector<2x256xf32>
      %cst_17 = arith.constant 0.000000e+00 : f32
      %20 = vector.broadcast %cst_17 : f32 to vector<2x256xf32>
      %21 = arith.cmpf oge, %19, %20 : vector<2x256xf32>
      %cst_18 = arith.constant 1.000000e-01 : f32
      %22 = vector.broadcast %cst_18 : f32 to vector<2x256xf32>
      %23 = arith.mulf %22, %19 : vector<2x256xf32>
      %24 = arith.select %21, %19, %23 : vector<2x256xi1>, vector<2x256xf32>
      %c0_19 = arith.constant 0 : index
      %c0_20 = arith.constant 0 : index
      %25 = vector.load %arg4[%c0_19, %c0_20] : memref<256x256xf32, #tpu.memory_space<vmem>>, vector<256x256xf32>
      %cst_21 = arith.constant dense<0.000000e+00> : vector<2x256xf32>
      %26 = tpu.matmul %24, %25, %cst_21 {dimension_numbers = #tpu.dot_dimension_numbers<[1], [0], [0], [1], [0, 0, 1, 1], [], []>} : vector<2x256xf32>, vector<256x256xf32>, vector<2x256xf32> -> vector<2x256xf32>
      %c0_22 = arith.constant 0 : index
      %c0_23 = arith.constant 0 : index
      %27 = vector.load %arg5[%c0_22, %c0_23] : memref<1x256xf32, #tpu.memory_space<vmem>>, vector<1x256xf32>
      %28 = vector.broadcast %27 : vector<1x256xf32> to vector<2x256xf32>
      %29 = arith.addf %26, %28 : vector<2x256xf32>
      %c0_24 = arith.constant 0 : index
      %c0_25 = arith.constant 0 : index
      %30 = vector.load %arg6[%c0_24, %c0_25] : memref<2x256xf32, #tpu.memory_space<vmem>>, vector<2x256xf32>
      tpu.vector_store %arg6[%c0_24, %c0_25], %29 {strides = array<i32>} : memref<2x256xf32, #tpu.memory_space<vmem>>, vector<2x256xf32>,
    } else {
    }
    return
  }
  func.func @transform_0(%arg0: i32) -> (i32, i32, i32) {
    %c0_i32 = arith.constant 0 : i32
    %c0_i32_0 = arith.constant 0 : i32
    %c0_i32_1 = arith.constant 0 : i32
    return %c0_i32, %arg0, %c0_i32_0 : i32, i32, i32
  }
  func.func @transform_1(%arg0: i32) -> (i32, i32) {
    %c0_i32 = arith.constant 0 : i32
    %c0_i32_0 = arith.constant 0 : i32
    %c0_i32_1 = arith.constant 0 : i32
    return %c0_i32, %c0_i32_0 : i32, i32
  }
  func.func @transform_2(%arg0: i32) -> (i32, i32) {
    %c0_i32 = arith.constant 0 : i32
    %c0_i32_0 = arith.constant 0 : i32
    %c0_i32_1 = arith.constant 0 : i32
    return %c0_i32, %c0_i32_0 : i32, i32
  }
  func.func @transform_3(%arg0: i32) -> (i32, i32) {
    %c0_i32 = arith.constant 0 : i32
    %c0_i32_0 = arith.constant 0 : i32
    %c0_i32_1 = arith.constant 0 : i32
    return %c0_i32, %c0_i32_0 : i32, i32
  }
  func.func @transform_4(%arg0: i32) -> (i32, i32) {
    %c0_i32 = arith.constant 0 : i32
    %c0_i32_0 = arith.constant 0 : i32
    %c0_i32_1 = arith.constant 0 : i32
    return %c0_i32, %c0_i32_0 : i32, i32
  }
  func.func @transform_5(%arg0: i32) -> (i32, i32) {
    %c0_i32 = arith.constant 0 : i32
    %c0_i32_0 = arith.constant 0 : i32
    %c0_i32_1 = arith.constant 0 : i32
    return %c0_i32, %c0_i32_0 : i32, i32
  }
}

</mosaic_0001>

<llo_original>
// kernel: encoder_hr_forward.7
$region0: #{encoder_hr_forward.7}
  #allocation0 [shape = 'u32[]', space=smem, size = 0x4, offset = 0x4, fixed_abs, tag = 'smem constant byte address 0x4 - core index']
  #allocation1 [shape = 'u32[144,128]{1,0:T(1,128)}', space=vmem, size = 0x12000, scoped, tag = 'internal scratch']
  #allocation2 [shape = 'f32[256,128]{1,0:T(8,128)}', space=vmem, size = 0x20000, scoped, tag = 'scratch operand']
  %s0 = inlined_call_operand.vmem [shape: bf16[512,32], index: 0, kind: input, shape index: {}]
  %s1 = inlined_call_operand.vmem [shape: bf16[32,128], index: 1, kind: input, shape index: {}]
  %s2 = inlined_call_operand.vmem [shape: f32[1,128], index: 2, kind: input, shape index: {}]
  %s3 = inlined_call_operand.vmem [shape: bf16[512,128], index: 3, kind: output, shape index: {}]
  %s4 = sld [smem:[#allocation0]]
  $region53: #{encoder_hr_forward.7} parent=0
    _
  %s6 = ssub.s32 1, %s4
  %s7 = scalar_select 0, %s6, %s4
  loop: start=0, step=1, limit=4
  $region2: #{encoder_hr_forward.7} parent=0 // loop_pre_header
    _
  $region3: #{encoder_hr_forward.7} parent=0 // loop_header
    %s9 = sphi 0, %s13
    %p10 = scmp.ge.s32.totalorder %s9, 4
    %s16 = sphi 0, %s35
    %s17 = sphi 0, %s31
    %s18 = sphi 0, %s27
    %s19 = sphi 0, %s16
    %s20 = sphi 0, %s17
    %s21 = sphi 0, %s18
    %s22 = sphi 0, %s19
    %s23 = sphi 0, %s20
    %s24 = sphi 0, %s21
    %s40 = sphi 0, %s42
    %s43 = sphi 0, %s40
    %s44 = sphi 0, %s43
    %s60 = sphi 0, %s44
    %s68 = sphi 0, %s70
    %s71 = sphi 0, %s68
    %s72 = sphi 0, %s71
    %s88 = sphi 0, %s72
    %s94 = sphi 0, %s96
    %s97 = sphi 0, %s94
    %s98 = sphi 0, %s97
    %s114 = sphi 0, %s98
    %s122 = sphi 0, %s124
    %s125 = sphi 0, %s122
    %s126 = sphi 0, %s125
    %s142 = sphi 0, %s126
  $region4: #{encoder_hr_forward.7} parent=0 // loop_header_branch
    %12 = sbr.rel (%p10) target = $region8
  $region5: #{encoder_hr_forward.7} parent=0 // loop_body
    %s14 = ssub.s32 %s9, 1
    %s15 = ssub.s32 %s9, 2
    %s25 = sadd.s32 1, %s18
    %p26 = scmp.ge.s32.totalorder %s25, 1
    %s27 = scalar_select %p26, 0, %s25
    %s28 = sadd.s32 1, %s17
    %s29 = scalar_select %p26, %s28, %s17
    %p30 = scmp.ge.s32.totalorder %s29, 1
    %s31 = scalar_select %p30, 0, %s29
    %s32 = sadd.s32 1, %s16
    %s33 = scalar_select %p30, %s32, %s16
    %p34 = scmp.ge.s32.totalorder %s33, 2
    %s35 = scalar_select %p34, 0, %s33
    %s36 = ssub.s32 %s16, %s35
    %s37 = ssub.s32 %s18, %s27
    %s38 = sor.u32 %s36, %s37
    %p39 = scmp.eq.s32.totalorder %s38, 0
    %s41 = sadd.s32 %s40, 1
    %s42 = scalar_select %p39, %s40, %s41
    %p45 = pneg %p39
    %p46 = scmp.eq.s32.totalorder %s9, 1
    %p47 = por %p45, %p46
    %p48 = scmp.ne.s32.totalorder %s40, %s43
    %p49 = scmp.eq.s32.totalorder %s9, 0
    %p50 = por %p48, %p49
    %p51 = scmp.ne.s32.totalorder %s40, %s43
    %p52 = scmp.eq.s32.totalorder %s14, 1
    %p53 = por %p51, %p52
    %p54 = scmp.ne.s32.totalorder %s43, %s44
    %p55 = scmp.eq.s32.totalorder %s14, 0
    %p56 = por %p54, %p55
    %p57 = scmp.ne.s32.totalorder %s43, %s44
    %p58 = scmp.eq.s32.totalorder %s15, 1
    %p59 = por %p57, %p58
    %p61 = scmp.ne.s32.totalorder %s44, %s60
    %p62 = scmp.eq.s32.totalorder %s15, 0
    %p63 = por %p61, %p62
    %s64 = ssub.s32 %s18, %s27
    %s65 = ssub.s32 %s17, %s31
    %s66 = sor.u32 %s64, %s65
    %p67 = scmp.eq.s32.totalorder %s66, 0
    %s69 = sadd.s32 %s68, 1
    %s70 = scalar_select %p67, %s68, %s69
    %p73 = pneg %p67
    %p74 = scmp.eq.s32.totalorder %s9, 1
    %p75 = por %p73, %p74
    %p76 = scmp.ne.s32.totalorder %s68, %s71
    %p77 = scmp.eq.s32.totalorder %s9, 0
    %p78 = por %p76, %p77
    %p79 = scmp.ne.s32.totalorder %s68, %s71
    %p80 = scmp.eq.s32.totalorder %s14, 1
    %p81 = por %p79, %p80
    %p82 = scmp.ne.s32.totalorder %s71, %s72
    %p83 = scmp.eq.s32.totalorder %s14, 0
    %p84 = por %p82, %p83
    %p85 = scmp.ne.s32.totalorder %s71, %s72
    %p86 = scmp.eq.s32.totalorder %s15, 1
    %p87 = por %p85, %p86
    %p89 = scmp.ne.s32.totalorder %s72, %s88
    %p90 = scmp.eq.s32.totalorder %s15, 0
    %p91 = por %p89, %p90
    %s92 = ssub.s32 %s17, %s31
    %p93 = scmp.eq.s32.totalorder %s92, 0
    %s95 = sadd.s32 %s94, 1
    %s96 = scalar_select %p93, %s94, %s95
    %p99 = pneg %p93
    %p100 = scmp.eq.s32.totalorder %s9, 1
    %p101 = por %p99, %p100
    %p102 = scmp.ne.s32.totalorder %s94, %s97
    %p103 = scmp.eq.s32.totalorder %s9, 0
    %p104 = por %p102, %p103
    %p105 = scmp.ne.s32.totalorder %s94, %s97
    %p106 = scmp.eq.s32.totalorder %s14, 1
    %p107 = por %p105, %p106
    %p108 = scmp.ne.s32.totalorder %s97, %s98
    %p109 = scmp.eq.s32.totalorder %s14, 0
    %p110 = por %p108, %p109
    %p111 = scmp.ne.s32.totalorder %s97, %s98
    %p112 = scmp.eq.s32.totalorder %s15, 1
    %p113 = por %p111, %p112
    %p115 = scmp.ne.s32.totalorder %s98, %s114
    %p116 = scmp.eq.s32.totalorder %s15, 0
    %p117 = por %p115, %p116
    %s118 = ssub.s32 %s16, %s35
    %s119 = ssub.s32 %s17, %s31
    %s120 = sor.u32 %s118, %s119
    %p121 = scmp.eq.s32.totalorder %s120, 0
    %s123 = sadd.s32 %s122, 1
    %s124 = scalar_select %p121, %s122, %s123
    %p127 = pneg %p121
    %p128 = scmp.eq.s32.totalorder %s9, 1
    %p129 = por %p127, %p128
    %p130 = scmp.ne.s32.totalorder %s122, %s125
    %p131 = scmp.eq.s32.totalorder %s9, 0
    %p132 = por %p130, %p131
    %p133 = scmp.ne.s32.totalorder %s122, %s125
    %p134 = scmp.eq.s32.totalorder %s14, 1
    %p135 = por %p133, %p134
    %p136 = scmp.ne.s32.totalorder %s125, %s126
    %p137 = scmp.eq.s32.totalorder %s14, 0
    %p138 = por %p136, %p137
    %p139 = scmp.ne.s32.totalorder %s125, %s126
    %p140 = scmp.eq.s32.totalorder %s15, 1
    %p141 = por %p139, %p140
    %p143 = scmp.ne.s32.totalorder %s126, %s142
    %p144 = scmp.eq.s32.totalorder %s15, 0
    %p145 = por %p143, %p144
    %p146 = scmp.le.s32.totalorder 1, %s9
    %p147 = scmp.lt.s32.totalorder %s9, 3
    %p148 = pnand %p146, %p147
    %p149 = pneg %p148
    // Predicated region
    $region9: #{encoder_hr_forward.7} parent=5 // pred_check
      _
    $region10: #{encoder_hr_forward.7} parent=5 // pred_check_branch
      %151 = sbr.rel (%p148) target = $region12
    $region11: #{encoder_hr_forward.7} parent=5 // pred_region
      %s152 = ssub.s32 %s9, 1
      // Predicated region
      $region13: #{encoder_hr_forward.7} parent=11 // pred_check
        %p153 = pneg %p84
      $region14: #{encoder_hr_forward.7} parent=11 // pred_check_branch
        %155 = sbr.rel (%p153) target = $region16
      $region15: #{encoder_hr_forward.7} parent=11 // pred_region
        %s156 = smul.u32 4, %s21
        %p157 = scmp.lt.s32.totalorder %s156, 3
        %s158 = scalar_select %p157, %s156, 3
        %p159 = scmp.lt.s32.totalorder %s20, 0
        %s160 = scalar_select %p159, %s20, 0
        %s161 = sadd.s32 %s160, %s158
        %s162 = smul.addr %s161, 4
        %s163 = scalar_lea.vmem %s1, %s162
        %s164 = smul.u32 4, %s21
      $region16: #{encoder_hr_forward.7} parent=11 // pred_fallthru
        _
      // Predicated region
      $region17: #{encoder_hr_forward.7} parent=11 // pred_check
        %p165 = pneg %p110
      $region18: #{encoder_hr_forward.7} parent=11 // pred_check_branch
        %167 = sbr.rel (%p165) target = $region20
      $region19: #{encoder_hr_forward.7} parent=11 // pred_region
        %p168 = scmp.lt.s32.totalorder %s20, 0
        %s169 = scalar_select %p168, %s20, 0
        %s170 = scalar_lea.vmem %s2, %s169
      $region20: #{encoder_hr_forward.7} parent=11 // pred_fallthru
        _
    $region12: #{encoder_hr_forward.7} parent=5 // pred_fallthru
      _
    %p171 = scmp.lt.s32.totalorder %s9, 2
    // Predicated region
    $region21: #{encoder_hr_forward.7} parent=5 // pred_check
      %p172 = pneg %p171
    $region22: #{encoder_hr_forward.7} parent=5 // pred_check_branch
      %174 = sbr.rel (%p172) target = $region24
    $region23: #{encoder_hr_forward.7} parent=5 // pred_region
      // Predicated region
      $region25: #{encoder_hr_forward.7} parent=23 // pred_check
        %p175 = pneg %p50
      $region26: #{encoder_hr_forward.7} parent=23 // pred_check_branch
        %177 = sbr.rel (%p175) target = $region28
      $region27: #{encoder_hr_forward.7} parent=23 // pred_region
        %s178 = smul.u32 32, %s16
        %p179 = scmp.lt.s32.totalorder %s178, 63
        %s180 = scalar_select %p179, %s178, 63
        %p181 = scmp.lt.s32.totalorder %s18, 0
        %s182 = scalar_select %p181, %s18, 0
        %s183 = sadd.s32 %s182, %s180
        %s184 = smul.addr %s183, 4
        %s185 = scalar_lea.vmem %s0, %s184
        %s186 = smul.u32 32, %s16
      $region28: #{encoder_hr_forward.7} parent=23 // pred_fallthru
        _
    $region24: #{encoder_hr_forward.7} parent=5 // pred_fallthru
      _
    %p187 = scmp.le.s32.totalorder 1, %s9
    %p188 = scmp.lt.s32.totalorder %s9, 3
    %p189 = pnand %p187, %p188
    %p190 = pneg %p189
    // Predicated region
    $region29: #{encoder_hr_forward.7} parent=5 // pred_check
      _
    $region30: #{encoder_hr_forward.7} parent=5 // pred_check_branch
      %192 = sbr.rel (%p189) target = $region32
    $region31: #{encoder_hr_forward.7} parent=5 // pred_region
      %s193 = ssub.s32 %s9, 1
      %s194 = smul.u32 32, %s19
      %p195 = scmp.lt.s32.totalorder %s194, 63
      %s196 = scalar_select %p195, %s194, 63
      %p197 = scmp.lt.s32.totalorder %s21, 0
      %s198 = scalar_select %p197, %s21, 0
      %s199 = sadd.s32 %s198, %s196
      %s200 = smul.addr %s199, 4
      %s201 = scalar_lea.vmem %s0, %s200
      %p202 = pneg %p56
      %p203 = pneg %p53
      %s204 = smul.u32 4, %s21
      %p205 = scmp.lt.s32.totalorder %s204, 3
      %s206 = scalar_select %p205, %s204, 3
      %p207 = scmp.lt.s32.totalorder %s20, 0
      %s208 = scalar_select %p207, %s20, 0
      %s209 = sadd.s32 %s208, %s206
      %s210 = smul.addr %s209, 4
      %s211 = scalar_lea.vmem %s1, %s210
      %p212 = pneg %p84
      %p213 = pneg %p81
      %p214 = scmp.lt.s32.totalorder %s20, 0
      %s215 = scalar_select %p214, %s20, 0
      %s216 = scalar_lea.vmem %s2, %s215
      %p217 = pneg %p110
      %p218 = pneg %p107
      %p219 = pneg %p138
      %p220 = pneg %p135
      %s221 = smul.u32 32, %s19
      %p222 = scmp.lt.s32.totalorder %s221, 63
      %s223 = scalar_select %p222, %s221, 63
      %p224 = scmp.lt.s32.totalorder %s20, 0
      %s225 = scalar_select %p224, %s20, 0
      %s226 = sadd.s32 %s225, %s223
      %s227 = smul.addr %s226, 4
      %s228 = scalar_lea.vmem %s3, %s227
      %s229 = smul.u32 32, %s19
      %p230 = scmp.lt.s32.totalorder %s229, 63
      %s231 = scalar_select %p230, %s229, 63
      %p232 = scmp.lt.s32.totalorder %s21, 0
      %s233 = scalar_select %p232, %s21, 0
      %s234 = sadd.s32 %s233, %s231
      %s235 = smul.addr %s234, 4
      %s236 = scalar_lea.vmem %s0, %s235
      %s237 = smul.u32 32, %s19
      %s238 = smul.u32 4, %s21
      %p239 = scmp.lt.s32.totalorder %s238, 3
      %s240 = scalar_select %p239, %s238, 3
      %p241 = scmp.lt.s32.totalorder %s20, 0
      %s242 = scalar_select %p241, %s20, 0
      %s243 = sadd.s32 %s242, %s240
      %s244 = smul.addr %s243, 4
      %s245 = scalar_lea.vmem %s1, %s244
      %s246 = smul.u32 4, %s21
      %p247 = scmp.lt.s32.totalorder %s20, 0
      %s248 = scalar_select %p247, %s20, 0
      %s249 = scalar_lea.vmem %s2, %s248
      %s250 = smul.u32 32, %s19
      %p251 = scmp.lt.s32.totalorder %s250, 63
      %s252 = scalar_select %p251, %s250, 63
      %p253 = scmp.lt.s32.totalorder %s20, 0
      %s254 = scalar_select %p253, %s20, 0
      %s255 = sadd.s32 %s254, %s252
      %s256 = smul.addr %s255, 4
      %s257 = scalar_lea.vmem %s3, %s256
      %s258 = smul.u32 32, %s19
      %p260 = scmp.eq.s32.totalorder %s21, 0
      // Predicated region
      $region33: #{encoder_hr_forward.7} parent=31 // pred_check
        %p261 = pneg %p260
      $region34: #{encoder_hr_forward.7} parent=31 // pred_check_branch
        %263 = sbr.rel (%p261) target = $region36
      $region35: #{encoder_hr_forward.7} parent=31 // pred_region
        %264 = vst [vmem:[#allocation2] sm:$0xff] 0.0
        %265 = vst [vmem:[#allocation2 + $0x8] sm:$0xff] 0.0
        %266 = vst [vmem:[#allocation2 + $0x10] sm:$0xff] 0.0
        %267 = vst [vmem:[#allocation2 + $0x18] sm:$0xff] 0.0
        %268 = vst [vmem:[#allocation2 + $0x20] sm:$0xff] 0.0
        %269 = vst [vmem:[#allocation2 + $0x28] sm:$0xff] 0.0
        %270 = vst [vmem:[#allocation2 + $0x30] sm:$0xff] 0.0
        %271 = vst [vmem:[#allocation2 + $0x38] sm:$0xff] 0.0
        %272 = vst [vmem:[#allocation2 + $0x40] sm:$0xff] 0.0
        %273 = vst [vmem:[#allocation2 + $0x48] sm:$0xff] 0.0
        %274 = vst [vmem:[#allocation2 + $0x50] sm:$0xff] 0.0
        %275 = vst [vmem:[#allocation2 + $0x58] sm:$0xff] 0.0
        %276 = vst [vmem:[#allocation2 + $0x60] sm:$0xff] 0.0
        %277 = vst [vmem:[#allocation2 + $0x68] sm:$0xff] 0.0
        %278 = vst [vmem:[#allocation2 + $0x70] sm:$0xff] 0.0
        %279 = vst [vmem:[#allocation2 + $0x78] sm:$0xff] 0.0
        %280 = vst [vmem:[#allocation2 + $0x80] sm:$0xff] 0.0
        %281 = vst [vmem:[#allocation2 + $0x88] sm:$0xff] 0.0
        %282 = vst [vmem:[#allocation2 + $0x90] sm:$0xff] 0.0
        %283 = vst [vmem:[#allocation2 + $0x98] sm:$0xff] 0.0
        %284 = vst [vmem:[#allocation2 + $0xa0] sm:$0xff] 0.0
        %285 = vst [vmem:[#allocation2 + $0xa8] sm:$0xff] 0.0
        %286 = vst [vmem:[#allocation2 + $0xb0] sm:$0xff] 0.0
        %287 = vst [vmem:[#allocation2 + $0xb8] sm:$0xff] 0.0
        %288 = vst [vmem:[#allocation2 + $0xc0] sm:$0xff] 0.0
        %289 = vst [vmem:[#allocation2 + $0xc8] sm:$0xff] 0.0
        %290 = vst [vmem:[#allocation2 + $0xd0] sm:$0xff] 0.0
        %291 = vst [vmem:[#allocation2 + $0xd8] sm:$0xff] 0.0
        %292 = vst [vmem:[#allocation2 + $0xe0] sm:$0xff] 0.0
        %293 = vst [vmem:[#allocation2 + $0xe8] sm:$0xff] 0.0
        %294 = vst [vmem:[#allocation2 + $0xf0] sm:$0xff] 0.0
        %295 = vst [vmem:[#allocation2 + $0xf8] sm:$0xff] 0.0
      $region36: #{encoder_hr_forward.7} parent=31 // pred_fallthru
        _
      %v296 = vld [vmem:[#allocation2] sm:$0xff]
      %v297 = vld [vmem:[#allocation2 + $0x8] sm:$0xff]
      %v298 = vld [vmem:[#allocation2 + $0x10] sm:$0xff]
      %v299 = vld [vmem:[#allocation2 + $0x18] sm:$0xff]
      %v300 = vld [vmem:[#allocation2 + $0x20] sm:$0xff]
      %v301 = vld [vmem:[#allocation2 + $0x28] sm:$0xff]
      %v302 = vld [vmem:[#allocation2 + $0x30] sm:$0xff]
      %v303 = vld [vmem:[#allocation2 + $0x38] sm:$0xff]
      %v304 = vld [vmem:[#allocation2 + $0x40] sm:$0xff]
      %v305 = vld [vmem:[#allocation2 + $0x48] sm:$0xff]
      %v306 = vld [vmem:[#allocation2 + $0x50] sm:$0xff]
      %v307 = vld [vmem:[#allocation2 + $0x58] sm:$0xff]
      %v308 = vld [vmem:[#allocation2 + $0x60] sm:$0xff]
      %v309 = vld [vmem:[#allocation2 + $0x68] sm:$0xff]
      %v310 = vld [vmem:[#allocation2 + $0x70] sm:$0xff]
      %v311 = vld [vmem:[#allocation2 + $0x78] sm:$0xff]
      %v312 = vld [vmem:[#allocation2 + $0x80] sm:$0xff]
      %v313 = vld [vmem:[#allocation2 + $0x88] sm:$0xff]
      %v314 = vld [vmem:[#allocation2 + $0x90] sm:$0xff]
      %v315 = vld [vmem:[#allocation2 + $0x98] sm:$0xff]
      %v316 = vld [vmem:[#allocation2 + $0xa0] sm:$0xff]
      %v317 = vld [vmem:[#allocation2 + $0xa8] sm:$0xff]
      %v318 = vld [vmem:[#allocation2 + $0xb0] sm:$0xff]
      %v319 = vld [vmem:[#allocation2 + $0xb8] sm:$0xff]
      %v320 = vld [vmem:[#allocation2 + $0xc0] sm:$0xff]
      %v321 = vld [vmem:[#allocation2 + $0xc8] sm:$0xff]
      %v322 = vld [vmem:[#allocation2 + $0xd0] sm:$0xff]
      %v323 = vld [vmem:[#allocation2 + $0xd8] sm:$0xff]
      %v324 = vld [vmem:[#allocation2 + $0xe0] sm:$0xff]
      %v325 = vld [vmem:[#allocation2 + $0xe8] sm:$0xff]
      %v326 = vld [vmem:[#allocation2 + $0xf0] sm:$0xff]
      %v327 = vld [vmem:[#allocation2 + $0xf8] sm:$0xff]
      %v328 = vld [vmem:[%s236] sm:$0xf]
      %v329 = vld [vmem:[%s236 + $0x4] sm:$0xf]
      %v330 = vld [vmem:[%s236 + $0x8] sm:$0xf]
      %v331 = vld [vmem:[%s236 + $0xc] sm:$0xf]
      %v332 = vld [vmem:[%s236 + $0x10] sm:$0xf]
      %v333 = vld [vmem:[%s236 + $0x14] sm:$0xf]
      %v334 = vld [vmem:[%s236 + $0x18] sm:$0xf]
      %v335 = vld [vmem:[%s236 + $0x1c] sm:$0xf]
      %v336 = vld [vmem:[%s236 + $0x20] sm:$0xf]
      %v337 = vld [vmem:[%s236 + $0x24] sm:$0xf]
      %v338 = vld [vmem:[%s236 + $0x28] sm:$0xf]
      %v339 = vld [vmem:[%s236 + $0x2c] sm:$0xf]
      %v340 = vld [vmem:[%s236 + $0x30] sm:$0xf]
      %v341 = vld [vmem:[%s236 + $0x34] sm:$0xf]
      %v342 = vld [vmem:[%s236 + $0x38] sm:$0xf]
      %v343 = vld [vmem:[%s236 + $0x3c] sm:$0xf]
      %v344 = vld [vmem:[%s236 + $0x40] sm:$0xf]
      %v345 = vld [vmem:[%s236 + $0x44] sm:$0xf]
      %v346 = vld [vmem:[%s236 + $0x48] sm:$0xf]
      %v347 = vld [vmem:[%s236 + $0x4c] sm:$0xf]
      %v348 = vld [vmem:[%s236 + $0x50] sm:$0xf]
      %v349 = vld [vmem:[%s236 + $0x54] sm:$0xf]
      %v350 = vld [vmem:[%s236 + $0x58] sm:$0xf]
      %v351 = vld [vmem:[%s236 + $0x5c] sm:$0xf]
      %v352 = vld [vmem:[%s236 + $0x60] sm:$0xf]
      %v353 = vld [vmem:[%s236 + $0x64] sm:$0xf]
      %v354 = vld [vmem:[%s236 + $0x68] sm:$0xf]
      %v355 = vld [vmem:[%s236 + $0x6c] sm:$0xf]
      %v356 = vld [vmem:[%s236 + $0x70] sm:$0xf]
      %v357 = vld [vmem:[%s236 + $0x74] sm:$0xf]
      %v358 = vld [vmem:[%s236 + $0x78] sm:$0xf]
      %v359 = vld [vmem:[%s236 + $0x7c] sm:$0xf]
      %v360 = vld [vmem:[%s245] sm:$0xf]
      %v361 = vld [vmem:[%s245 + $0x4] sm:$0xf]
      %v362 = vld [vmem:[%s245 + $0x8] sm:$0xf]
      %v363 = vld [vmem:[%s245 + $0xc] sm:$0xf]
      %v396 = vunpack.c.l.b16 %v328
      %v397 = vunpack.c.l.b16 %v329
      %v398 = vunpack.c.l.b16 %v330
      %v399 = vunpack.c.l.b16 %v331
      %v400 = vunpack.c.l.b16 %v332
      %v401 = vunpack.c.l.b16 %v333
      %v402 = vunpack.c.l.b16 %v334
      %v403 = vunpack.c.l.b16 %v335
      %v404 = vunpack.c.l.b16 %v336
      %v405 = vunpack.c.l.b16 %v337
      %v406 = vunpack.c.l.b16 %v338
      %v407 = vunpack.c.l.b16 %v339
      %v408 = vunpack.c.l.b16 %v340
      %v409 = vunpack.c.l.b16 %v341
      %v410 = vunpack.c.l.b16 %v342
      %v411 = vunpack.c.l.b16 %v343
      %v412 = vunpack.c.l.b16 %v344
      %v413 = vunpack.c.l.b16 %v345
      %v414 = vunpack.c.l.b16 %v346
      %v415 = vunpack.c.l.b16 %v347
      %v416 = vunpack.c.l.b16 %v348
      %v417 = vunpack.c.l.b16 %v349
      %v418 = vunpack.c.l.b16 %v350
      %v419 = vunpack.c.l.b16 %v351
      %v420 = vunpack.c.l.b16 %v352
      %v421 = vunpack.c.l.b16 %v353
      %v422 = vunpack.c.l.b16 %v354
      %v423 = vunpack.c.l.b16 %v355
      %v424 = vunpack.c.l.b16 %v356
      %v425 = vunpack.c.l.b16 %v357
      %v426 = vunpack.c.l.b16 %v358
      %v427 = vunpack.c.l.b16 %v359
      %v428 = vpack.c.b16 %v397, %v396
      %v429 = vpack.c.b16 %v399, %v398
      %v430 = vpack.c.b16 %v401, %v400
      %v431 = vpack.c.b16 %v403, %v402
      %v432 = vpack.c.b16 %v405, %v404
      %v433 = vpack.c.b16 %v407, %v406
      %v434 = vpack.c.b16 %v409, %v408
      %v435 = vpack.c.b16 %v411, %v410
      %v436 = vpack.c.b16 %v413, %v412
      %v437 = vpack.c.b16 %v415, %v414
      %v438 = vpack.c.b16 %v417, %v416
      %v439 = vpack.c.b16 %v419, %v418
      %v440 = vpack.c.b16 %v421, %v420
      %v441 = vpack.c.b16 %v423, %v422
      %v442 = vpack.c.b16 %v425, %v424
      %v443 = vpack.c.b16 %v427, %v426
      %v448 = vunpack.c.l.b16 %v360
      %v449 = vunpack.c.l.b16 %v361
      %v450 = vunpack.c.l.b16 %v362
      %v451 = vunpack.c.l.b16 %v363
      %v452 = vpack.c.b16 %v449, %v448
      %v453 = vpack.c.b16 %v451, %v450
      %vm456 = vcmask 261120
      %v458 = vsel %vm456, %v428, 0
      %v461 = vsel %vm456, %v429, 0
      %v464 = vsel %vm456, %v430, 0
      %v467 = vsel %vm456, %v431, 0
      %v470 = vsel %vm456, %v432, 0
      %v473 = vsel %vm456, %v433, 0
      %v476 = vsel %vm456, %v434, 0
      %v479 = vsel %vm456, %v435, 0
      %v482 = vsel %vm456, %v436, 0
      %v485 = vsel %vm456, %v437, 0
      %v488 = vsel %vm456, %v438, 0
      %v491 = vsel %vm456, %v439, 0
      %v494 = vsel %vm456, %v440, 0
      %v497 = vsel %vm456, %v441, 0
      %v500 = vsel %vm456, %v442, 0
      %v503 = vsel %vm456, %v443, 0
      %505 = vmatprep.subr.bf16.mxu0 0
      %506 = vmatpush1.bf16.msra.mxu0 %v452
      %507 = vmatprep.subr.bf16.mxu0 0
      %508 = vmatpush1.bf16.msra.mxu0 %v453
      %509 = vmatprep.subr.bf16.mxu0 0
      %510 = vmatpush1.bf16.msra.mxu0 0
      %511 = vmatprep.subr.bf16.mxu0 0
      %512 = vmatpush1.bf16.msra.mxu0 0
      %513 = vmatprep.subr.bf16.mxu0 0
      %514 = vmatpush1.bf16.msra.mxu0 0
      %515 = vmatprep.subr.bf16.mxu0 0
      %516 = vmatpush1.bf16.msra.mxu0 0
      %517 = vmatprep.subr.bf16.mxu0 0
      %518 = vmatpush1.bf16.msra.mxu0 0
      %519 = vmatprep.subr.bf16.mxu0 0
      %520 = vmatpush1.bf16.msra.mxu0 0
      %521 = vmatprep.subr.bf16.mxu0 0
      %522 = vmatpush1.bf16.msra.mxu0 0
      %523 = vmatprep.subr.bf16.mxu0 0
      %524 = vmatpush1.bf16.msra.mxu0 0
      %525 = vmatprep.subr.bf16.mxu0 0
      %526 = vmatpush1.bf16.msra.mxu0 0
      %527 = vmatprep.subr.bf16.mxu0 0
      %528 = vmatpush1.bf16.msra.mxu0 0
      %529 = vmatprep.subr.bf16.mxu0 0
      %530 = vmatpush1.bf16.msra.mxu0 0
      %531 = vmatprep.subr.bf16.mxu0 0
      %532 = vmatpush1.bf16.msra.mxu0 0
      %533 = vmatprep.subr.bf16.mxu0 0
      %534 = vmatpush1.bf16.msra.mxu0 0
      %535 = vmatprep.subr.bf16.mxu0 0
      %536 = vmatpush1.bf16.msra.mxu0 0
      %537 = vmatprep.mubr.bf16.mxu0 0
      %538 = vmatmul.mubr.bf16.gmra.mrb[0].mxu0 %v458
      %v539 = vpop.f32.mrb[0].mxu0
      %v540 = vadd.f32 0.0, %v539
      %v541 = vpop.f32.mrb[0].mxu0
      %v542 = vpop.f32.mrb[0].mxu0
      %v543 = vadd.f32 0.0, %v542
      %v544 = vpop.f32.mrb[0].mxu0
      %545 = vmatprep.mubr.bf16.mxu0 0
      %546 = vmatmul.mubr.bf16.gmra.mrb[0].mxu0 %v461
      %v547 = vpop.f32.mrb[0].mxu0
      %v548 = vadd.f32 0.0, %v547
      %v549 = vpop.f32.mrb[0].mxu0
      %v550 = vpop.f32.mrb[0].mxu0
      %v551 = vadd.f32 0.0, %v550
      %v552 = vpop.f32.mrb[0].mxu0
      %553 = vmatprep.mubr.bf16.mxu0 0
      %554 = vmatmul.mubr.bf16.gmra.mrb[0].mxu0 %v464
      %v555 = vpop.f32.mrb[0].mxu0
      %v556 = vadd.f32 0.0, %v555
      %v557 = vpop.f32.mrb[0].mxu0
      %v558 = vpop.f32.mrb[0].mxu0
      %v559 = vadd.f32 0.0, %v558
      %v560 = vpop.f32.mrb[0].mxu0
      %561 = vmatprep.mubr.bf16.mxu0 0
      %562 = vmatmul.mubr.bf16.gmra.mrb[0].mxu0 %v467
      %v563 = vpop.f32.mrb[0].mxu0
      %v564 = vadd.f32 0.0, %v563
      %v565 = vpop.f32.mrb[0].mxu0
      %v566 = vpop.f32.mrb[0].mxu0
      %v567 = vadd.f32 0.0, %v566
      %v568 = vpop.f32.mrb[0].mxu0
      %569 = vmatprep.mubr.bf16.mxu0 0
      %570 = vmatmul.mubr.bf16.gmra.mrb[0].mxu0 %v470
      %v571 = vpop.f32.mrb[0].mxu0
      %v572 = vadd.f32 0.0, %v571
      %v573 = vpop.f32.mrb[0].mxu0
      %v574 = vpop.f32.mrb[0].mxu0
      %v575 = vadd.f32 0.0, %v574
      %v576 = vpop.f32.mrb[0].mxu0
      %577 = vmatprep.mubr.bf16.mxu0 0
      %578 = vmatmul.mubr.bf16.gmra.mrb[0].mxu0 %v473
      %v579 = vpop.f32.mrb[0].mxu0
      %v580 = vadd.f32 0.0, %v579
      %v581 = vpop.f32.mrb[0].mxu0
      %v582 = vpop.f32.mrb[0].mxu0
      %v583 = vadd.f32 0.0, %v582
      %v584 = vpop.f32.mrb[0].mxu0
      %585 = vmatprep.mubr.bf16.mxu0 0
      %586 = vmatmul.mubr.bf16.gmra.mrb[0].mxu0 %v476
      %v587 = vpop.f32.mrb[0].mxu0
      %v588 = vadd.f32 0.0, %v587
      %v589 = vpop.f32.mrb[0].mxu0
      %v590 = vpop.f32.mrb[0].mxu0
      %v591 = vadd.f32 0.0, %v590
      %v592 = vpop.f32.mrb[0].mxu0
      %593 = vmatprep.mubr.bf16.mxu0 0
      %594 = vmatmul.mubr.bf16.gmra.mrb[0].mxu0 %v479
      %v595 = vpop.f32.mrb[0].mxu0
      %v596 = vadd.f32 0.0, %v595
      %v597 = vpop.f32.mrb[0].mxu0
      %v598 = vpop.f32.mrb[0].mxu0
      %v599 = vadd.f32 0.0, %v598
      %v600 = vpop.f32.mrb[0].mxu0
      %601 = vmatprep.mubr.bf16.mxu0 0
      %602 = vmatmul.mubr.bf16.gmra.mrb[0].mxu0 %v482
      %v603 = vpop.f32.mrb[0].mxu0
      %v604 = vadd.f32 0.0, %v603
      %v605 = vpop.f32.mrb[0].mxu0
      %v606 = vpop.f32.mrb[0].mxu0
      %v607 = vadd.f32 0.0, %v606
      %v608 = vpop.f32.mrb[0].mxu0
      %609 = vmatprep.mubr.bf16.mxu0 0
      %610 = vmatmul.mubr.bf16.gmra.mrb[0].mxu0 %v485
      %v611 = vpop.f32.mrb[0].mxu0
      %v612 = vadd.f32 0.0, %v611
      %v613 = vpop.f32.mrb[0].mxu0
      %v614 = vpop.f32.mrb[0].mxu0
      %v615 = vadd.f32 0.0, %v614
      %v616 = vpop.f32.mrb[0].mxu0
      %617 = vmatprep.mubr.bf16.mxu0 0
      %618 = vmatmul.mubr.bf16.gmra.mrb[0].mxu0 %v488
      %v619 = vpop.f32.mrb[0].mxu0
      %v620 = vadd.f32 0.0, %v619
      %v621 = vpop.f32.mrb[0].mxu0
      %v622 = vpop.f32.mrb[0].mxu0
      %v623 = vadd.f32 0.0, %v622
      %v624 = vpop.f32.mrb[0].mxu0
      %625 = vmatprep.mubr.bf16.mxu0 0
      %626 = vmatmul.mubr.bf16.gmra.mrb[0].mxu0 %v491
      %v627 = vpop.f32.mrb[0].mxu0
      %v628 = vadd.f32 0.0, %v627
      %v629 = vpop.f32.mrb[0].mxu0
      %v630 = vpop.f32.mrb[0].mxu0
      %v631 = vadd.f32 0.0, %v630
      %v632 = vpop.f32.mrb[0].mxu0
      %633 = vmatprep.mubr.bf16.mxu0 0
      %634 = vmatmul.mubr.bf16.gmra.mrb[0].mxu0 %v494
      %v635 = vpop.f32.mrb[0].mxu0
      %v636 = vadd.f32 0.0, %v635
      %v637 = vpop.f32.mrb[0].mxu0
      %v638 = vpop.f32.mrb[0].mxu0
      %v639 = vadd.f32 0.0, %v638
      %v640 = vpop.f32.mrb[0].mxu0
      %641 = vmatprep.mubr.bf16.mxu0 0
      %642 = vmatmul.mubr.bf16.gmra.mrb[0].mxu0 %v497
      %v643 = vpop.f32.mrb[0].mxu0
      %v644 = vadd.f32 0.0, %v643
      %v645 = vpop.f32.mrb[0].mxu0
      %v646 = vpop.f32.mrb[0].mxu0
      %v647 = vadd.f32 0.0, %v646
      %v648 = vpop.f32.mrb[0].mxu0
      %649 = vmatprep.mubr.bf16.mxu0 0
      %650 = vmatmul.mubr.bf16.gmra.mrb[0].mxu0 %v500
      %v651 = vpop.f32.mrb[0].mxu0
      %v652 = vadd.f32 0.0, %v651
      %v653 = vpop.f32.mrb[0].mxu0
      %v654 = vpop.f32.mrb[0].mxu0
      %v655 = vadd.f32 0.0, %v654
      %v656 = vpop.f32.mrb[0].mxu0
      %657 = vmatprep.mubr.bf16.mxu0 0
      %658 = vmatmul.mubr.bf16.gmra.mrb[0].mxu0 %v503
      %v659 = vpop.f32.mrb[0].mxu0
      %v660 = vadd.f32 0.0, %v659
      %v661 = vpop.f32.mrb[0].mxu0
      %v662 = vpop.f32.mrb[0].mxu0
      %v663 = vadd.f32 0.0, %v662
      %v664 = vpop.f32.mrb[0].mxu0
      %665 = vdwg.mxu0
      %v666 = vadd.f32 %v296, %v540
      %v667 = vadd.f32 %v297, %v543
      %v668 = vadd.f32 %v298, %v548
      %v669 = vadd.f32 %v299, %v551
      %v670 = vadd.f32 %v300, %v556
      %v671 = vadd.f32 %v301, %v559
      %v672 = vadd.f32 %v302, %v564
      %v673 = vadd.f32 %v303, %v567
      %v674 = vadd.f32 %v304, %v572
      %v675 = vadd.f32 %v305, %v575
      %v676 = vadd.f32 %v306, %v580
      %v677 = vadd.f32 %v307, %v583
      %v678 = vadd.f32 %v308, %v588
      %v679 = vadd.f32 %v309, %v591
      %v680 = vadd.f32 %v310, %v596
      %v681 = vadd.f32 %v311, %v599
      %v682 = vadd.f32 %v312, %v604
      %v683 = vadd.f32 %v313, %v607
      %v684 = vadd.f32 %v314, %v612
      %v685 = vadd.f32 %v315, %v615
      %v686 = vadd.f32 %v316, %v620
      %v687 = vadd.f32 %v317, %v623
      %v688 = vadd.f32 %v318, %v628
      %v689 = vadd.f32 %v319, %v631
      %v690 = vadd.f32 %v320, %v636
      %v691 = vadd.f32 %v321, %v639
      %v692 = vadd.f32 %v322, %v644
      %v693 = vadd.f32 %v323, %v647
      %v694 = vadd.f32 %v324, %v652
      %v695 = vadd.f32 %v325, %v655
      %v696 = vadd.f32 %v326, %v660
      %v697 = vadd.f32 %v327, %v663
      %698 = vst [vmem:[#allocation2] sm:$0xff] %v666
      %699 = vst [vmem:[#allocation2 + $0x8] sm:$0xff] %v667
      %700 = vst [vmem:[#allocation2 + $0x10] sm:$0xff] %v668
      %701 = vst [vmem:[#allocation2 + $0x18] sm:$0xff] %v669
      %702 = vst [vmem:[#allocation2 + $0x20] sm:$0xff] %v670
      %703 = vst [vmem:[#allocation2 + $0x28] sm:$0xff] %v671
      %704 = vst [vmem:[#allocation2 + $0x30] sm:$0xff] %v672
      %705 = vst [vmem:[#allocation2 + $0x38] sm:$0xff] %v673
      %706 = vst [vmem:[#allocation2 + $0x40] sm:$0xff] %v674
      %707 = vst [vmem:[#allocation2 + $0x48] sm:$0xff] %v675
      %708 = vst [vmem:[#allocation2 + $0x50] sm:$0xff] %v676
      %709 = vst [vmem:[#allocation2 + $0x58] sm:$0xff] %v677
      %710 = vst [vmem:[#allocation2 + $0x60] sm:$0xff] %v678
      %711 = vst [vmem:[#allocation2 + $0x68] sm:$0xff] %v679
      %712 = vst [vmem:[#allocation2 + $0x70] sm:$0xff] %v680
      %713 = vst [vmem:[#allocation2 + $0x78] sm:$0xff] %v681
      %714 = vst [vmem:[#allocation2 + $0x80] sm:$0xff] %v682
      %715 = vst [vmem:[#allocation2 + $0x88] sm:$0xff] %v683
      %716 = vst [vmem:[#allocation2 + $0x90] sm:$0xff] %v684
      %717 = vst [vmem:[#allocation2 + $0x98] sm:$0xff] %v685
      %718 = vst [vmem:[#allocation2 + $0xa0] sm:$0xff] %v686
      %719 = vst [vmem:[#allocation2 + $0xa8] sm:$0xff] %v687
      %720 = vst [vmem:[#allocation2 + $0xb0] sm:$0xff] %v688
      %721 = vst [vmem:[#allocation2 + $0xb8] sm:$0xff] %v689
      %722 = vst [vmem:[#allocation2 + $0xc0] sm:$0xff] %v690
      %723 = vst [vmem:[#allocation2 + $0xc8] sm:$0xff] %v691
      %724 = vst [vmem:[#allocation2 + $0xd0] sm:$0xff] %v692
      %725 = vst [vmem:[#allocation2 + $0xd8] sm:$0xff] %v693
      %726 = vst [vmem:[#allocation2 + $0xe0] sm:$0xff] %v694
      %727 = vst [vmem:[#allocation2 + $0xe8] sm:$0xff] %v695
      %728 = vst [vmem:[#allocation2 + $0xf0] sm:$0xff] %v696
      %729 = vst [vmem:[#allocation2 + $0xf8] sm:$0xff] %v697
      // Predicated region
      $region37: #{encoder_hr_forward.7} parent=31 // pred_check
        %p730 = pneg %p260
      $region38: #{encoder_hr_forward.7} parent=31 // pred_check_branch
        %732 = sbr.rel (%p730) target = $region40
      $region39: #{encoder_hr_forward.7} parent=31 // pred_region
        %v733 = vld [vmem:[#allocation2] sm:$0xff]
        %v734 = vld [vmem:[#allocation2 + $0x8] sm:$0xff]
        %v735 = vld [vmem:[#allocation2 + $0x10] sm:$0xff]
        %v736 = vld [vmem:[#allocation2 + $0x18] sm:$0xff]
        %v737 = vld [vmem:[#allocation2 + $0x20] sm:$0xff]
        %v738 = vld [vmem:[#allocation2 + $0x28] sm:$0xff]
        %v739 = vld [vmem:[#allocation2 + $0x30] sm:$0xff]
        %v740 = vld [vmem:[#allocation2 + $0x38] sm:$0xff]
        %v741 = vld [vmem:[#allocation2 + $0x40] sm:$0xff]
        %v742 = vld [vmem:[#allocation2 + $0x48] sm:$0xff]
        %v743 = vld [vmem:[#allocation2 + $0x50] sm:$0xff]
        %v744 = vld [vmem:[#allocation2 + $0x58] sm:$0xff]
        %v745 = vld [vmem:[#allocation2 + $0x60] sm:$0xff]
        %v746 = vld [vmem:[#allocation2 + $0x68] sm:$0xff]
        %v747 = vld [vmem:[#allocation2 + $0x70] sm:$0xff]
        %v748 = vld [vmem:[#allocation2 + $0x78] sm:$0xff]
        %v749 = vld [vmem:[#allocation2 + $0x80] sm:$0xff]
        %v750 = vld [vmem:[#allocation2 + $0x88] sm:$0xff]
        %v751 = vld [vmem:[#allocation2 + $0x90] sm:$0xff]
        %v752 = vld [vmem:[#allocation2 + $0x98] sm:$0xff]
        %v753 = vld [vmem:[#allocation2 + $0xa0] sm:$0xff]
        %v754 = vld [vmem:[#allocation2 + $0xa8] sm:$0xff]
        %v755 = vld [vmem:[#allocation2 + $0xb0] sm:$0xff]
        %v756 = vld [vmem:[#allocation2 + $0xb8] sm:$0xff]
        %v757 = vld [vmem:[#allocation2 + $0xc0] sm:$0xff]
        %v758 = vld [vmem:[#allocation2 + $0xc8] sm:$0xff]
        %v759 = vld [vmem:[#allocation2 + $0xd0] sm:$0xff]
        %v760 = vld [vmem:[#allocation2 + $0xd8] sm:$0xff]
        %v761 = vld [vmem:[#allocation2 + $0xe0] sm:$0xff]
        %v762 = vld [vmem:[#allocation2 + $0xe8] sm:$0xff]
        %v763 = vld [vmem:[#allocation2 + $0xf0] sm:$0xff]
        %v764 = vld [vmem:[#allocation2 + $0xf8] sm:$0xff]
        %v765 = vld [vmem:[%s249] sm:$0x1]
        %v767 = vlaneseq
        %v768 = vshrl.u32 %v767, 7
        %v769 = vsub.s32 0, %v768
        %v770 = vrot.slane %v765, %v769
        %v772 = vadd.f32 %v733, %v770
        %v773 = vadd.f32 %v734, %v770
        %v774 = vadd.f32 %v735, %v770
        %v775 = vadd.f32 %v736, %v770
        %v776 = vadd.f32 %v737, %v770
        %v777 = vadd.f32 %v738, %v770
        %v778 = vadd.f32 %v739, %v770
        %v779 = vadd.f32 %v740, %v770
        %v780 = vadd.f32 %v741, %v770
        %v781 = vadd.f32 %v742, %v770
        %v782 = vadd.f32 %v743, %v770
        %v783 = vadd.f32 %v744, %v770
        %v784 = vadd.f32 %v745, %v770
        %v785 = vadd.f32 %v746, %v770
        %v786 = vadd.f32 %v747, %v770
        %v787 = vadd.f32 %v748, %v770
        %v788 = vadd.f32 %v749, %v770
        %v789 = vadd.f32 %v750, %v770
        %v790 = vadd.f32 %v751, %v770
        %v791 = vadd.f32 %v752, %v770
        %v792 = vadd.f32 %v753, %v770
        %v793 = vadd.f32 %v754, %v770
        %v794 = vadd.f32 %v755, %v770
        %v795 = vadd.f32 %v756, %v770
        %v796 = vadd.f32 %v757, %v770
        %v797 = vadd.f32 %v758, %v770
        %v798 = vadd.f32 %v759, %v770
        %v799 = vadd.f32 %v760, %v770
        %v800 = vadd.f32 %v761, %v770
        %v801 = vadd.f32 %v762, %v770
        %v802 = vadd.f32 %v763, %v770
        %v803 = vadd.f32 %v764, %v770
        %vm804 = vcmp.ge.f32.partialorder %v772, 0.0
        %vm805 = vcmp.ge.f32.partialorder %v773, 0.0
        %vm806 = vcmp.ge.f32.partialorder %v774, 0.0
        %vm807 = vcmp.ge.f32.partialorder %v775, 0.0
        %vm808 = vcmp.ge.f32.partialorder %v776, 0.0
        %vm809 = vcmp.ge.f32.partialorder %v777, 0.0
        %vm810 = vcmp.ge.f32.partialorder %v778, 0.0
        %vm811 = vcmp.ge.f32.partialorder %v779, 0.0
        %vm812 = vcmp.ge.f32.partialorder %v780, 0.0
        %vm813 = vcmp.ge.f32.partialorder %v781, 0.0
        %vm814 = vcmp.ge.f32.partialorder %v782, 0.0
        %vm815 = vcmp.ge.f32.partialorder %v783, 0.0
        %vm816 = vcmp.ge.f32.partialorder %v784, 0.0
        %vm817 = vcmp.ge.f32.partialorder %v785, 0.0
        %vm818 = vcmp.ge.f32.partialorder %v786, 0.0
        %vm819 = vcmp.ge.f32.partialorder %v787, 0.0
        %vm820 = vcmp.ge.f32.partialorder %v788, 0.0
        %vm821 = vcmp.ge.f32.partialorder %v789, 0.0
        %vm822 = vcmp.ge.f32.partialorder %v790, 0.0
        %vm823 = vcmp.ge.f32.partialorder %v791, 0.0
        %vm824 = vcmp.ge.f32.partialorder %v792, 0.0
        %vm825 = vcmp.ge.f32.partialorder %v793, 0.0
        %vm826 = vcmp.ge.f32.partialorder %v794, 0.0
        %vm827 = vcmp.ge.f32.partialorder %v795, 0.0
        %vm828 = vcmp.ge.f32.partialorder %v796, 0.0
        %vm829 = vcmp.ge.f32.partialorder %v797, 0.0
        %vm830 = vcmp.ge.f32.partialorder %v798, 0.0
        %vm831 = vcmp.ge.f32.partialorder %v799, 0.0
        %vm832 = vcmp.ge.f32.partialorder %v800, 0.0
        %vm833 = vcmp.ge.f32.partialorder %v801, 0.0
        %vm834 = vcmp.ge.f32.partialorder %v802, 0.0
        %vm835 = vcmp.ge.f32.partialorder %v803, 0.0
        %v836 = vmul.f32 %v772, 0.1
        %v837 = vmul.f32 %v773, 0.1
        %v838 = vmul.f32 %v774, 0.1
        %v839 = vmul.f32 %v775, 0.1
        %v840 = vmul.f32 %v776, 0.1
        %v841 = vmul.f32 %v777, 0.1
        %v842 = vmul.f32 %v778, 0.1
        %v843 = vmul.f32 %v779, 0.1
        %v844 = vmul.f32 %v780, 0.1
        %v845 = vmul.f32 %v781, 0.1
        %v846 = vmul.f32 %v782, 0.1
        %v847 = vmul.f32 %v783, 0.1
        %v848 = vmul.f32 %v784, 0.1
        %v849 = vmul.f32 %v785, 0.1
        %v850 = vmul.f32 %v786, 0.1
        %v851 = vmul.f32 %v787, 0.1
        %v852 = vmul.f32 %v788, 0.1
        %v853 = vmul.f32 %v789, 0.1
        %v854 = vmul.f32 %v790, 0.1
        %v855 = vmul.f32 %v791, 0.1
        %v856 = vmul.f32 %v792, 0.1
        %v857 = vmul.f32 %v793, 0.1
        %v858 = vmul.f32 %v794, 0.1
        %v859 = vmul.f32 %v795, 0.1
        %v860 = vmul.f32 %v796, 0.1
        %v861 = vmul.f32 %v797, 0.1
        %v862 = vmul.f32 %v798, 0.1
        %v863 = vmul.f32 %v799, 0.1
        %v864 = vmul.f32 %v800, 0.1
        %v865 = vmul.f32 %v801, 0.1
        %v866 = vmul.f32 %v802, 0.1
        %v867 = vmul.f32 %v803, 0.1
        %v868 = vsel %vm804, %v772, %v836
        %v869 = vsel %vm805, %v773, %v837
        %v870 = vsel %vm806, %v774, %v838
        %v871 = vsel %vm807, %v775, %v839
        %v872 = vsel %vm808, %v776, %v840
        %v873 = vsel %vm809, %v777, %v841
        %v874 = vsel %vm810, %v778, %v842
        %v875 = vsel %vm811, %v779, %v843
        %v876 = vsel %vm812, %v780, %v844
        %v877 = vsel %vm813, %v781, %v845
        %v878 = vsel %vm814, %v782, %v846
        %v879 = vsel %vm815, %v783, %v847
        %v880 = vsel %vm816, %v784, %v848
        %v881 = vsel %vm817, %v785, %v849
        %v882 = vsel %vm818, %v786, %v850
        %v883 = vsel %vm819, %v787, %v851
        %v884 = vsel %vm820, %v788, %v852
        %v885 = vsel %vm821, %v789, %v853
        %v886 = vsel %vm822, %v790, %v854
        %v887 = vsel %vm823, %v791, %v855
        %v888 = vsel %vm824, %v792, %v856
        %v889 = vsel %vm825, %v793, %v857
        %v890 = vsel %vm826, %v794, %v858
        %v891 = vsel %vm827, %v795, %v859
        %v892 = vsel %vm828, %v796, %v860
        %v893 = vsel %vm829, %v797, %v861
        %v894 = vsel %vm830, %v798, %v862
        %v895 = vsel %vm831, %v799, %v863
        %v896 = vsel %vm832, %v800, %v864
        %v897 = vsel %vm833, %v801, %v865
        %v898 = vsel %vm834, %v802, %v866
        %v899 = vsel %vm835, %v803, %v867
        %v900 = vpack.c.bf16 %v869, %v868
        %v901 = vpack.c.bf16 %v871, %v870
        %v902 = vpack.c.bf16 %v873, %v872
        %v903 = vpack.c.bf16 %v875, %v874
        %v904 = vpack.c.bf16 %v877, %v876
        %v905 = vpack.c.bf16 %v879, %v878
        %v906 = vpack.c.bf16 %v881, %v880
        %v907 = vpack.c.bf16 %v883, %v882
        %v908 = vpack.c.bf16 %v885, %v884
        %v909 = vpack.c.bf16 %v887, %v886
        %v910 = vpack.c.bf16 %v889, %v888
        %v911 = vpack.c.bf16 %v891, %v890
        %v912 = vpack.c.bf16 %v893, %v892
        %v913 = vpack.c.bf16 %v895, %v894
        %v914 = vpack.c.bf16 %v897, %v896
        %v915 = vpack.c.bf16 %v899, %v898
        %v932 = vunpack.c.l.b16 %v900
        %v933 = vunpack.c.h.b16 %v900
        %v934 = vunpack.c.l.b16 %v901
        %v935 = vunpack.c.h.b16 %v901
        %v936 = vunpack.c.l.b16 %v902
        %v937 = vunpack.c.h.b16 %v902
        %v938 = vunpack.c.l.b16 %v903
        %v939 = vunpack.c.h.b16 %v903
        %v940 = vunpack.c.l.b16 %v904
        %v941 = vunpack.c.h.b16 %v904
        %v942 = vunpack.c.l.b16 %v905
        %v943 = vunpack.c.h.b16 %v905
        %v944 = vunpack.c.l.b16 %v906
        %v945 = vunpack.c.h.b16 %v906
        %v946 = vunpack.c.l.b16 %v907
        %v947 = vunpack.c.h.b16 %v907
        %v948 = vunpack.c.l.b16 %v908
        %v949 = vunpack.c.h.b16 %v908
        %v950 = vunpack.c.l.b16 %v909
        %v951 = vunpack.c.h.b16 %v909
        %v952 = vunpack.c.l.b16 %v910
        %v953 = vunpack.c.h.b16 %v910
        %v954 = vunpack.c.l.b16 %v911
        %v955 = vunpack.c.h.b16 %v911
        %v956 = vunpack.c.l.b16 %v912
        %v957 = vunpack.c.h.b16 %v912
        %v958 = vunpack.c.l.b16 %v913
        %v959 = vunpack.c.h.b16 %v913
        %v960 = vunpack.c.l.b16 %v914
        %v961 = vunpack.c.h.b16 %v914
        %v962 = vunpack.c.l.b16 %v915
        %v963 = vunpack.c.h.b16 %v915
        %v964 = vpack.c.b16 %v932, %v932
        %v965 = vpack.c.b16 %v933, %v933
        %v966 = vpack.c.b16 %v934, %v934
        %v967 = vpack.c.b16 %v935, %v935
        %v968 = vpack.c.b16 %v936, %v936
        %v969 = vpack.c.b16 %v937, %v937
        %v970 = vpack.c.b16 %v938, %v938
        %v971 = vpack.c.b16 %v939, %v939
        %v972 = vpack.c.b16 %v940, %v940
        %v973 = vpack.c.b16 %v941, %v941
        %v974 = vpack.c.b16 %v942, %v942
        %v975 = vpack.c.b16 %v943, %v943
        %v976 = vpack.c.b16 %v944, %v944
        %v977 = vpack.c.b16 %v945, %v945
        %v978 = vpack.c.b16 %v946, %v946
        %v979 = vpack.c.b16 %v947, %v947
        %v980 = vpack.c.b16 %v948, %v948
        %v981 = vpack.c.b16 %v949, %v949
        %v982 = vpack.c.b16 %v950, %v950
        %v983 = vpack.c.b16 %v951, %v951
        %v984 = vpack.c.b16 %v952, %v952
        %v985 = vpack.c.b16 %v953, %v953
        %v986 = vpack.c.b16 %v954, %v954
        %v987 = vpack.c.b16 %v955, %v955
        %v988 = vpack.c.b16 %v956, %v956
        %v989 = vpack.c.b16 %v957, %v957
        %v990 = vpack.c.b16 %v958, %v958
        %v991 = vpack.c.b16 %v959, %v959
        %v992 = vpack.c.b16 %v960, %v960
        %v993 = vpack.c.b16 %v961, %v961
        %v994 = vpack.c.b16 %v962, %v962
        %v995 = vpack.c.b16 %v963, %v963
        %1028 = vst [vmem:[%s257] sm:$0xf] %v964
        %1029 = vst [vmem:[%s257 + $0x4] sm:$0xf] %v965
        %1030 = vst [vmem:[%s257 + $0x8] sm:$0xf] %v966
        %1031 = vst [vmem:[%s257 + $0xc] sm:$0xf] %v967
        %1032 = vst [vmem:[%s257 + $0x10] sm:$0xf] %v968
        %1033 = vst [vmem:[%s257 + $0x14] sm:$0xf] %v969
        %1034 = vst [vmem:[%s257 + $0x18] sm:$0xf] %v970
        %1035 = vst [vmem:[%s257 + $0x1c] sm:$0xf] %v971
        %1036 = vst [vmem:[%s257 + $0x20] sm:$0xf] %v972
        %1037 = vst [vmem:[%s257 + $0x24] sm:$0xf] %v973
        %1038 = vst [vmem:[%s257 + $0x28] sm:$0xf] %v974
        %1039 = vst [vmem:[%s257 + $0x2c] sm:$0xf] %v975
        %1040 = vst [vmem:[%s257 + $0x30] sm:$0xf] %v976
        %1041 = vst [vmem:[%s257 + $0x34] sm:$0xf] %v977
        %1042 = vst [vmem:[%s257 + $0x38] sm:$0xf] %v978
        %1043 = vst [vmem:[%s257 + $0x3c] sm:$0xf] %v979
        %1044 = vst [vmem:[%s257 + $0x40] sm:$0xf] %v980
        %1045 = vst [vmem:[%s257 + $0x44] sm:$0xf] %v981
        %1046 = vst [vmem:[%s257 + $0x48] sm:$0xf] %v982
        %1047 = vst [vmem:[%s257 + $0x4c] sm:$0xf] %v983
        %1048 = vst [vmem:[%s257 + $0x50] sm:$0xf] %v984
        %1049 = vst [vmem:[%s257 + $0x54] sm:$0xf] %v985
        %1050 = vst [vmem:[%s257 + $0x58] sm:$0xf] %v986
        %1051 = vst [vmem:[%s257 + $0x5c] sm:$0xf] %v987
        %1052 = vst [vmem:[%s257 + $0x60] sm:$0xf] %v988
        %1053 = vst [vmem:[%s257 + $0x64] sm:$0xf] %v989
        %1054 = vst [vmem:[%s257 + $0x68] sm:$0xf] %v990
        %1055 = vst [vmem:[%s257 + $0x6c] sm:$0xf] %v991
        %1056 = vst [vmem:[%s257 + $0x70] sm:$0xf] %v992
        %1057 = vst [vmem:[%s257 + $0x74] sm:$0xf] %v993
        %1058 = vst [vmem:[%s257 + $0x78] sm:$0xf] %v994
        %1059 = vst [vmem:[%s257 + $0x7c] sm:$0xf] %v995
      $region40: #{encoder_hr_forward.7} parent=31 // pred_fallthru
        _
      %s1060 = smul.u32 32, %s19
      %p1061 = scmp.lt.s32.totalorder %s1060, 63
      %s1062 = scalar_select %p1061, %s1060, 63
      %p1063 = scmp.lt.s32.totalorder %s20, 0
      %s1064 = scalar_select %p1063, %s20, 0
      %s1065 = sadd.s32 %s1064, %s1062
      %s1066 = smul.addr %s1065, 4
      %s1067 = scalar_lea.vmem %s3, %s1066
      // Predicated region
      $region41: #{encoder_hr_forward.7} parent=31 // pred_check
        %p1068 = pneg %p135
      $region42: #{encoder_hr_forward.7} parent=31 // pred_check_branch
        %1070 = sbr.rel (%p1068) target = $region44
      $region43: #{encoder_hr_forward.7} parent=31 // pred_region
        %s1071 = smul.u32 32, %s19
      $region44: #{encoder_hr_forward.7} parent=31 // pred_fallthru
        _
    $region32: #{encoder_hr_forward.7} parent=5 // pred_fallthru
      _
    %p1072 = scmp.le.s32.totalorder 2, %s9
    // Predicated region
    $region45: #{encoder_hr_forward.7} parent=5 // pred_check
      %p1073 = pneg %p1072
    $region46: #{encoder_hr_forward.7} parent=5 // pred_check_branch
      %1075 = sbr.rel (%p1073) target = $region48
    $region47: #{encoder_hr_forward.7} parent=5 // pred_region
      %s1076 = ssub.s32 %s9, 2
      // Predicated region
      $region49: #{encoder_hr_forward.7} parent=47 // pred_check
        %p1077 = pneg %p141
      $region50: #{encoder_hr_forward.7} parent=47 // pred_check_branch
        %1079 = sbr.rel (%p1077) target = $region52
      $region51: #{encoder_hr_forward.7} parent=47 // pred_region
        %s1080 = smul.u32 32, %s22
        %p1081 = scmp.lt.s32.totalorder %s1080, 63
        %s1082 = scalar_select %p1081, %s1080, 63
        %p1083 = scmp.lt.s32.totalorder %s23, 0
        %s1084 = scalar_select %p1083, %s23, 0
        %s1085 = sadd.s32 %s1084, %s1082
        %s1086 = smul.addr %s1085, 4
        %s1087 = scalar_lea.vmem %s3, %s1086
      $region52: #{encoder_hr_forward.7} parent=47 // pred_fallthru
        _
    $region48: #{encoder_hr_forward.7} parent=5 // pred_fallthru
      _
  $region6: #{encoder_hr_forward.7} parent=0 // loop_footer
    %s13 = sadd.s32 1, %s9
  $region7: #{encoder_hr_forward.7} parent=0 // loop_footer_branch
    %8 = sbr.rel target = $region3
  $region8: #{encoder_hr_forward.7} parent=0 // loop_exit
    _

// kernel: encoder_hr_forward.8
$region0: #{encoder_hr_forward.8}
  #allocation0 [shape = 'u32[]', space=smem, size = 0x4, offset = 0x4, fixed_abs, tag = 'smem constant byte address 0x4 - core index']
  #allocation1 [shape = 'u32[144,128]{1,0:T(1,128)}', space=vmem, size = 0x12000, scoped, tag = 'internal scratch']
  #allocation2 [shape = 'f32[256,128]{1,0:T(8,128)}', space=vmem, size = 0x20000, scoped, tag = 'scratch operand']
  %s0 = inlined_call_operand.vmem [shape: bf16[512,1152], index: 0, kind: input, shape index: {}]
  %s1 = inlined_call_operand.vmem [shape: bf16[1152,128], index: 1, kind: input, shape index: {}]
  %s2 = inlined_call_operand.vmem [shape: f32[1,128], index: 2, kind: input, shape index: {}]
  %s3 = inlined_call_operand.vmem [shape: bf16[512,128], index: 3, kind: output, shape index: {}]
  %s4 = sld [smem:[#allocation0]]
  $region79: #{encoder_hr_forward.8} parent=0
    _
  %s6 = ssub.s32 1, %s4
  %s7 = scalar_select 0, %s6, %s4
  $region1: #{encoder_hr_forward.8} parent=0
    #allocation3 [shape = 'u8[393216]{0}', space=vmem, size = 0x60000, scoped, tag = 'input window, operand 0']
    loop: start=0, step=1, limit=8
    $region2: #{encoder_hr_forward.8} parent=1 // loop_pre_header
      _
    $region3: #{encoder_hr_forward.8} parent=1 // loop_header
      %s9 = sphi 0, %s13
      %p10 = scmp.ge.s32.totalorder %s9, 8
      %s16 = sphi 0, %s35
      %s17 = sphi 0, %s31
      %s18 = sphi 0, %s27
      %s19 = sphi 0, %s16
      %s20 = sphi 0, %s17
      %s21 = sphi 0, %s18
      %s22 = sphi 0, %s19
      %s23 = sphi 0, %s20
      %s24 = sphi 0, %s21
      %s40 = sphi 0, %s42
      %s43 = sphi 0, %s40
      %s44 = sphi 0, %s43
      %s60 = sphi 0, %s44
      %s68 = sphi 0, %s70
      %s71 = sphi 0, %s68
      %s72 = sphi 0, %s71
      %s88 = sphi 0, %s72
      %s94 = sphi 0, %s96
      %s97 = sphi 0, %s94
      %s98 = sphi 0, %s97
      %s114 = sphi 0, %s98
      %s122 = sphi 0, %s124
      %s125 = sphi 0, %s122
      %s126 = sphi 0, %s125
      %s142 = sphi 0, %s126
    $region4: #{encoder_hr_forward.8} parent=1 // loop_header_branch
      %12 = sbr.rel (%p10) target = $region8
    $region5: #{encoder_hr_forward.8} parent=1 // loop_body
      %s14 = ssub.s32 %s9, 1
      %s15 = ssub.s32 %s9, 2
      %s25 = sadd.s32 1, %s18
      %p26 = scmp.ge.s32.totalorder %s25, 3
      %s27 = scalar_select %p26, 0, %s25
      %s28 = sadd.s32 1, %s17
      %s29 = scalar_select %p26, %s28, %s17
      %p30 = scmp.ge.s32.totalorder %s29, 1
      %s31 = scalar_select %p30, 0, %s29
      %s32 = sadd.s32 1, %s16
      %s33 = scalar_select %p30, %s32, %s16
      %p34 = scmp.ge.s32.totalorder %s33, 2
      %s35 = scalar_select %p34, 0, %s33
      %s36 = ssub.s32 %s16, %s35
      %s37 = ssub.s32 %s18, %s27
      %s38 = sor.u32 %s36, %s37
      %p39 = scmp.eq.s32.totalorder %s38, 0
      %s41 = sadd.s32 %s40, 1
      %s42 = scalar_select %p39, %s40, %s41
      %p45 = pneg %p39
      %p46 = scmp.eq.s32.totalorder %s9, 5
      %p47 = por %p45, %p46
      %p48 = scmp.ne.s32.totalorder %s40, %s43
      %p49 = scmp.eq.s32.totalorder %s9, 0
      %p50 = por %p48, %p49
      %p51 = scmp.ne.s32.totalorder %s40, %s43
      %p52 = scmp.eq.s32.totalorder %s14, 5
      %p53 = por %p51, %p52
      %p54 = scmp.ne.s32.totalorder %s43, %s44
      %p55 = scmp.eq.s32.totalorder %s14, 0
      %p56 = por %p54, %p55
      %p57 = scmp.ne.s32.totalorder %s43, %s44
      %p58 = scmp.eq.s32.totalorder %s15, 5
      %p59 = por %p57, %p58
      %p61 = scmp.ne.s32.totalorder %s44, %s60
      %p62 = scmp.eq.s32.totalorder %s15, 0
      %p63 = por %p61, %p62
      %s64 = ssub.s32 %s18, %s27
      %s65 = ssub.s32 %s17, %s31
      %s66 = sor.u32 %s64, %s65
      %p67 = scmp.eq.s32.totalorder %s66, 0
      %s69 = sadd.s32 %s68, 1
      %s70 = scalar_select %p67, %s68, %s69
      %p73 = pneg %p67
      %p74 = scmp.eq.s32.totalorder %s9, 5
      %p75 = por %p73, %p74
      %p76 = scmp.ne.s32.totalorder %s68, %s71
      %p77 = scmp.eq.s32.totalorder %s9, 0
      %p78 = por %p76, %p77
      %p79 = scmp.ne.s32.totalorder %s68, %s71
      %p80 = scmp.eq.s32.totalorder %s14, 5
      %p81 = por %p79, %p80
      %p82 = scmp.ne.s32.totalorder %s71, %s72
      %p83 = scmp.eq.s32.totalorder %s14, 0
      %p84 = por %p82, %p83
      %p85 = scmp.ne.s32.totalorder %s71, %s72
      %p86 = scmp.eq.s32.totalorder %s15, 5
      %p87 = por %p85, %p86
      %p89 = scmp.ne.s32.totalorder %s72, %s88
      %p90 = scmp.eq.s32.totalorder %s15, 0
      %p91 = por %p89, %p90
      %s92 = ssub.s32 %s17, %s31
      %p93 = scmp.eq.s32.totalorder %s92, 0
      %s95 = sadd.s32 %s94, 1
      %s96 = scalar_select %p93, %s94, %s95
      %p99 = pneg %p93
      %p100 = scmp.eq.s32.totalorder %s9, 5
      %p101 = por %p99, %p100
      %p102 = scmp.ne.s32.totalorder %s94, %s97
      %p103 = scmp.eq.s32.totalorder %s9, 0
      %p104 = por %p102, %p103
      %p105 = scmp.ne.s32.totalorder %s94, %s97
      %p106 = scmp.eq.s32.totalorder %s14, 5
      %p107 = por %p105, %p106
      %p108 = scmp.ne.s32.totalorder %s97, %s98
      %p109 = scmp.eq.s32.totalorder %s14, 0
      %p110 = por %p108, %p109
      %p111 = scmp.ne.s32.totalorder %s97, %s98
      %p112 = scmp.eq.s32.totalorder %s15, 5
      %p113 = por %p111, %p112
      %p115 = scmp.ne.s32.totalorder %s98, %s114
      %p116 = scmp.eq.s32.totalorder %s15, 0
      %p117 = por %p115, %p116
      %s118 = ssub.s32 %s16, %s35
      %s119 = ssub.s32 %s17, %s31
      %s120 = sor.u32 %s118, %s119
      %p121 = scmp.eq.s32.totalorder %s120, 0
      %s123 = sadd.s32 %s122, 1
      %s124 = scalar_select %p121, %s122, %s123
      %p127 = pneg %p121
      %p128 = scmp.eq.s32.totalorder %s9, 5
      %p129 = por %p127, %p128
      %p130 = scmp.ne.s32.totalorder %s122, %s125
      %p131 = scmp.eq.s32.totalorder %s9, 0
      %p132 = por %p130, %p131
      %p133 = scmp.ne.s32.totalorder %s122, %s125
      %p134 = scmp.eq.s32.totalorder %s14, 5
      %p135 = por %p133, %p134
      %p136 = scmp.ne.s32.totalorder %s125, %s126
      %p137 = scmp.eq.s32.totalorder %s14, 0
      %p138 = por %p136, %p137
      %p139 = scmp.ne.s32.totalorder %s125, %s126
      %p140 = scmp.eq.s32.totalorder %s15, 5
      %p141 = por %p139, %p140
      %p143 = scmp.ne.s32.totalorder %s126, %s142
      %p144 = scmp.eq.s32.totalorder %s15, 0
      %p145 = por %p143, %p144
      %p146 = scmp.le.s32.totalorder 1, %s9
      %p147 = scmp.lt.s32.totalorder %s9, 7
      %p148 = pnand %p146, %p147
      %p149 = pneg %p148
      // Predicated region
      $region9: #{encoder_hr_forward.8} parent=5 // pred_check
        _
      $region10: #{encoder_hr_forward.8} parent=5 // pred_check_branch
        %151 = sbr.rel (%p148) target = $region12
      $region11: #{encoder_hr_forward.8} parent=5 // pred_region
        %s152 = ssub.s32 %s9, 1
        // Predicated region
        $region13: #{encoder_hr_forward.8} parent=11 // pred_check
          %p153 = pneg %p110
        $region14: #{encoder_hr_forward.8} parent=11 // pred_check_branch
          %155 = sbr.rel (%p153) target = $region16
        $region15: #{encoder_hr_forward.8} parent=11 // pred_region
          %p156 = scmp.lt.s32.totalorder %s20, 0
          %s157 = scalar_select %p156, %s20, 0
          %s158 = scalar_lea.vmem %s2, %s157
        $region16: #{encoder_hr_forward.8} parent=11 // pred_fallthru
          _
      $region12: #{encoder_hr_forward.8} parent=5 // pred_fallthru
        _
      %p159 = scmp.lt.s32.totalorder %s9, 6
      // Predicated region
      $region17: #{encoder_hr_forward.8} parent=5 // pred_check
        %p160 = pneg %p159
      $region18: #{encoder_hr_forward.8} parent=5 // pred_check_branch
        %162 = sbr.rel (%p160) target = $region20
      $region19: #{encoder_hr_forward.8} parent=5 // pred_region
        // Predicated region
        $region21: #{encoder_hr_forward.8} parent=19 // pred_check
          %p163 = pneg %p50
        $region22: #{encoder_hr_forward.8} parent=19 // pred_check_branch
          %165 = sbr.rel (%p163) target = $region24
        $region23: #{encoder_hr_forward.8} parent=19 // pred_region
          %s166 = sand.u32 %s40, 1
          %s167 = sand.u32 %s40, 1
          %s168 = smul.addr %s167, 384
          %s169 = scalar_lea.vmem [#allocation3], %s168
          %s170 = smul.u32 32, %s16
          %s171 = smul.u32 3, %s18
          %s172 = smul.addr %s170, 9
          %s173 = sadd.s32 %s171, %s172
          %s174 = smul.addr %s173, 4
          %s175 = scalar_lea.vmem %s0, %s174
          // Predicated region
          $region25: #{encoder_hr_forward.8} parent=23 // pred_check
            _
          $region26: #{encoder_hr_forward.8} parent=23 // pred_check_branch
            %177 = sbr.rel (0) target = $region28
          $region27: #{encoder_hr_forward.8} parent=23 // pred_region
            // Predicated region
            $region29: #{encoder_hr_forward.8} parent=27 // pred_check
              _
            $region30: #{encoder_hr_forward.8} parent=27 // pred_check_branch
              %179 = sbr.rel (0) target = $region32
            $region31: #{encoder_hr_forward.8} parent=27 // pred_region
              %s180 = scalar_lea.vmem %s175, 8
              %s181 = scalar_lea.vmem %s169, 8 [#allocation3]
              loop: start=0, step=1, limit=1
              $region33: #{encoder_hr_forward.8} parent=31 // loop_pre_header
                _
              $region34: #{encoder_hr_forward.8} parent=31 // loop_header
                %s183 = sphi 0, %s187
                %p184 = scmp.ge.s32.totalorder %s183, 1
                %s188 = sphi %s175, %s175
                %s189 = sphi %s169, %s169
              $region35: #{encoder_hr_forward.8} parent=31 // loop_header_branch
                %186 = sbr.rel (%p184) target = $region39
              $region36: #{encoder_hr_forward.8} parent=31 // loop_body
                %v190 = vld [vmem:[%s188] sm:$0xff]
                %191 = vst [vmem:[%s189] sm:$0xff] %v190
                %v192 = vld [vmem:[%s188 + $0x24] sm:$0xff]
                %193 = vst [vmem:[%s189 + $0xc] sm:$0xff] %v192
                %v194 = vld [vmem:[%s188 + $0x48] sm:$0xff]
                %195 = vst [vmem:[%s189 + $0x18] sm:$0xff] %v194
                %v196 = vld [vmem:[%s188 + $0x6c] sm:$0xff]
                %197 = vst [vmem:[%s189 + $0x24] sm:$0xff] %v196
                %v198 = vld [vmem:[%s188 + $0x90] sm:$0xff]
                %199 = vst [vmem:[%s189 + $0x30] sm:$0xff] %v198
                %v200 = vld [vmem:[%s188 + $0xb4] sm:$0xff]
                %201 = vst [vmem:[%s189 + $0x3c] sm:$0xff] %v200
                %v202 = vld [vmem:[%s188 + $0xd8] sm:$0xff]
                %203 = vst [vmem:[%s189 + $0x48] sm:$0xff] %v202
                %v204 = vld [vmem:[%s188 + $0xfc] sm:$0xff]
                %205 = vst [vmem:[%s189 + $0x54] sm:$0xff] %v204
                %v206 = vld [vmem:[%s188 + $0x120] sm:$0xff]
                %207 = vst [vmem:[%s189 + $0x60] sm:$0xff] %v206
                %v208 = vld [vmem:[%s188 + $0x144] sm:$0xff]
                %209 = vst [vmem:[%s189 + $0x6c] sm:$0xff] %v208
                %v210 = vld [vmem:[%s188 + $0x168] sm:$0xff]
                %211 = vst [vmem:[%s189 + $0x78] sm:$0xff] %v210
                %v212 = vld [vmem:[%s188 + $0x18c] sm:$0xff]
                %213 = vst [vmem:[%s189 + $0x84] sm:$0xff] %v212
                %v214 = vld [vmem:[%s188 + $0x1b0] sm:$0xff]
                %215 = vst [vmem:[%s189 + $0x90] sm:$0xff] %v214
                %v216 = vld [vmem:[%s188 + $0x1d4] sm:$0xff]
                %217 = vst [vmem:[%s189 + $0x9c] sm:$0xff] %v216
                %v218 = vld [vmem:[%s188 + $0x1f8] sm:$0xff]
                %219 = vst [vmem:[%s189 + $0xa8] sm:$0xff] %v218
                %v220 = vld [vmem:[%s188 + $0x21c] sm:$0xff]
                %221 = vst [vmem:[%s189 + $0xb4] sm:$0xff] %v220
                %v222 = vld [vmem:[%s188 + $0x240] sm:$0xff]
                %223 = vst [vmem:[%s189 + $0xc0] sm:$0xff] %v222
                %v224 = vld [vmem:[%s188 + $0x264] sm:$0xff]
                %225 = vst [vmem:[%s189 + $0xcc] sm:$0xff] %v224
                %v226 = vld [vmem:[%s188 + $0x288] sm:$0xff]
                %227 = vst [vmem:[%s189 + $0xd8] sm:$0xff] %v226
                %v228 = vld [vmem:[%s188 + $0x2ac] sm:$0xff]
                %229 = vst [vmem:[%s189 + $0xe4] sm:$0xff] %v228
                %v230 = vld [vmem:[%s188 + $0x2d0] sm:$0xff]
                %231 = vst [vmem:[%s189 + $0xf0] sm:$0xff] %v230
                %v232 = vld [vmem:[%s188 + $0x2f4] sm:$0xff]
                %233 = vst [vmem:[%s189 + $0xfc] sm:$0xff] %v232
                %v234 = vld [vmem:[%s188 + $0x318] sm:$0xff]
                %235 = vst [vmem:[%s189 + $0x108] sm:$0xff] %v234
                %v236 = vld [vmem:[%s188 + $0x33c] sm:$0xff]
                %237 = vst [vmem:[%s189 + $0x114] sm:$0xff] %v236
                %v238 = vld [vmem:[%s188 + $0x360] sm:$0xff]
                %239 = vst [vmem:[%s189 + $0x120] sm:$0xff] %v238
                %v240 = vld [vmem:[%s188 + $0x384] sm:$0xff]
                %241 = vst [vmem:[%s189 + $0x12c] sm:$0xff] %v240
                %v242 = vld [vmem:[%s188 + $0x3a8] sm:$0xff]
                %243 = vst [vmem:[%s189 + $0x138] sm:$0xff] %v242
                %v244 = vld [vmem:[%s188 + $0x3cc] sm:$0xff]
                %245 = vst [vmem:[%s189 + $0x144] sm:$0xff] %v244
                %v246 = vld [vmem:[%s188 + $0x3f0] sm:$0xff]
                %247 = vst [vmem:[%s189 + $0x150] sm:$0xff] %v246
                %v248 = vld [vmem:[%s188 + $0x414] sm:$0xff]
                %249 = vst [vmem:[%s189 + $0x15c] sm:$0xff] %v248
                %v250 = vld [vmem:[%s188 + $0x438] sm:$0xff]
                %251 = vst [vmem:[%s189 + $0x168] sm:$0xff] %v250
                %v252 = vld [vmem:[%s188 + $0x45c] sm:$0xff]
                %253 = vst [vmem:[%s189 + $0x174] sm:$0xff] %v252
              $region37: #{encoder_hr_forward.8} parent=31 // loop_footer
                %s187 = sadd.s32 1, %s183
              $region38: #{encoder_hr_forward.8} parent=31 // loop_footer_branch
                %182 = sbr.rel target = $region34
              $region39: #{encoder_hr_forward.8} parent=31 // loop_exit
                _
              loop: start=0, step=1, limit=1
              $region40: #{encoder_hr_forward.8} parent=31 // loop_pre_header
                _
              $region41: #{encoder_hr_forward.8} parent=31 // loop_header
                %s256 = sphi 0, %s260
                %p257 = scmp.ge.s32.totalorder %s256, 1
                %s261 = sphi %s180, %s180
                %s262 = sphi %s181, %s181
              $region42: #{encoder_hr_forward.8} parent=31 // loop_header_branch
                %259 = sbr.rel (%p257) target = $region46
              $region43: #{encoder_hr_forward.8} parent=31 // loop_body
                %v263 = vld [vmem:[%s261] sm:$0xf]
                %264 = vst [vmem:[%s262] sm:$0xf] %v263
                %v265 = vld [vmem:[%s261 + $0x24] sm:$0xf]
                %266 = vst [vmem:[%s262 + $0xc] sm:$0xf] %v265
                %v267 = vld [vmem:[%s261 + $0x48] sm:$0xf]
                %268 = vst [vmem:[%s262 + $0x18] sm:$0xf] %v267
                %v269 = vld [vmem:[%s261 + $0x6c] sm:$0xf]
                %270 = vst [vmem:[%s262 + $0x24] sm:$0xf] %v269
                %v271 = vld [vmem:[%s261 + $0x90] sm:$0xf]
                %272 = vst [vmem:[%s262 + $0x30] sm:$0xf] %v271
                %v273 = vld [vmem:[%s261 + $0xb4] sm:$0xf]
                %274 = vst [vmem:[%s262 + $0x3c] sm:$0xf] %v273
                %v275 = vld [vmem:[%s261 + $0xd8] sm:$0xf]
                %276 = vst [vmem:[%s262 + $0x48] sm:$0xf] %v275
                %v277 = vld [vmem:[%s261 + $0xfc] sm:$0xf]
                %278 = vst [vmem:[%s262 + $0x54] sm:$0xf] %v277
                %v279 = vld [vmem:[%s261 + $0x120] sm:$0xf]
                %280 = vst [vmem:[%s262 + $0x60] sm:$0xf] %v279
                %v281 = vld [vmem:[%s261 + $0x144] sm:$0xf]
                %282 = vst [vmem:[%s262 + $0x6c] sm:$0xf] %v281
                %v283 = vld [vmem:[%s261 + $0x168] sm:$0xf]
                %284 = vst [vmem:[%s262 + $0x78] sm:$0xf] %v283
                %v285 = vld [vmem:[%s261 + $0x18c] sm:$0xf]
                %286 = vst [vmem:[%s262 + $0x84] sm:$0xf] %v285
                %v287 = vld [vmem:[%s261 + $0x1b0] sm:$0xf]
                %288 = vst [vmem:[%s262 + $0x90] sm:$0xf] %v287
                %v289 = vld [vmem:[%s261 + $0x1d4] sm:$0xf]
                %290 = vst [vmem:[%s262 + $0x9c] sm:$0xf] %v289
                %v291 = vld [vmem:[%s261 + $0x1f8] sm:$0xf]
                %292 = vst [vmem:[%s262 + $0xa8] sm:$0xf] %v291
                %v293 = vld [vmem:[%s261 + $0x21c] sm:$0xf]
                %294 = vst [vmem:[%s262 + $0xb4] sm:$0xf] %v293
                %v295 = vld [vmem:[%s261 + $0x240] sm:$0xf]
                %296 = vst [vmem:[%s262 + $0xc0] sm:$0xf] %v295
                %v297 = vld [vmem:[%s261 + $0x264] sm:$0xf]
                %298 = vst [vmem:[%s262 + $0xcc] sm:$0xf] %v297
                %v299 = vld [vmem:[%s261 + $0x288] sm:$0xf]
                %300 = vst [vmem:[%s262 + $0xd8] sm:$0xf] %v299
                %v301 = vld [vmem:[%s261 + $0x2ac] sm:$0xf]
                %302 = vst [vmem:[%s262 + $0xe4] sm:$0xf] %v301
                %v303 = vld [vmem:[%s261 + $0x2d0] sm:$0xf]
                %304 = vst [vmem:[%s262 + $0xf0] sm:$0xf] %v303
                %v305 = vld [vmem:[%s261 + $0x2f4] sm:$0xf]
                %306 = vst [vmem:[%s262 + $0xfc] sm:$0xf] %v305
                %v307 = vld [vmem:[%s261 + $0x318] sm:$0xf]
                %308 = vst [vmem:[%s262 + $0x108] sm:$0xf] %v307
                %v309 = vld [vmem:[%s261 + $0x33c] sm:$0xf]
                %310 = vst [vmem:[%s262 + $0x114] sm:$0xf] %v309
                %v311 = vld [vmem:[%s261 + $0x360] sm:$0xf]
                %312 = vst [vmem:[%s262 + $0x120] sm:$0xf] %v311
                %v313 = vld [vmem:[%s261 + $0x384] sm:$0xf]
                %314 = vst [vmem:[%s262 + $0x12c] sm:$0xf] %v313
                %v315 = vld [vmem:[%s261 + $0x3a8] sm:$0xf]
                %316 = vst [vmem:[%s262 + $0x138] sm:$0xf] %v315
                %v317 = vld [vmem:[%s261 + $0x3cc] sm:$0xf]
                %318 = vst [vmem:[%s262 + $0x144] sm:$0xf] %v317
                %v319 = vld [vmem:[%s261 + $0x3f0] sm:$0xf]
                %320 = vst [vmem:[%s262 + $0x150] sm:$0xf] %v319
                %v321 = vld [vmem:[%s261 + $0x414] sm:$0xf]
                %322 = vst [vmem:[%s262 + $0x15c] sm:$0xf] %v321
                %v323 = vld [vmem:[%s261 + $0x438] sm:$0xf]
                %324 = vst [vmem:[%s262 + $0x168] sm:$0xf] %v323
                %v325 = vld [vmem:[%s261 + $0x45c] sm:$0xf]
                %326 = vst [vmem:[%s262 + $0x174] sm:$0xf] %v325
              $region44: #{encoder_hr_forward.8} parent=31 // loop_footer
                %s260 = sadd.s32 1, %s256
              $region45: #{encoder_hr_forward.8} parent=31 // loop_footer_branch
                %255 = sbr.rel target = $region41
              $region46: #{encoder_hr_forward.8} parent=31 // loop_exit
                _
            $region32: #{encoder_hr_forward.8} parent=27 // pred_fallthru
              _
          $region28: #{encoder_hr_forward.8} parent=23 // pred_fallthru
            _
          %327 = vnop
        $region24: #{encoder_hr_forward.8} parent=19 // pred_fallthru
          _
        // Predicated region
        $region47: #{encoder_hr_forward.8} parent=19 // pred_check
          %p328 = pneg %p78
        $region48: #{encoder_hr_forward.8} parent=19 // pred_check_branch
          %330 = sbr.rel (%p328) target = $region50
        $region49: #{encoder_hr_forward.8} parent=19 // pred_region
          %s331 = smul.u32 48, %s18
          %p332 = scmp.lt.s32.totalorder %s331, 143
          %s333 = scalar_select %p332, %s331, 143
          %p334 = scmp.lt.s32.totalorder %s17, 0
          %s335 = scalar_select %p334, %s17, 0
          %s336 = sadd.s32 %s335, %s333
          %s337 = smul.addr %s336, 4
          %s338 = scalar_lea.vmem %s1, %s337
          %s339 = smul.u32 48, %s18
        $region50: #{encoder_hr_forward.8} parent=19 // pred_fallthru
          _
      $region20: #{encoder_hr_forward.8} parent=5 // pred_fallthru
        _
      %p340 = scmp.le.s32.totalorder 1, %s9
      %p341 = scmp.lt.s32.totalorder %s9, 7
      %p342 = pnand %p340, %p341
      %p343 = pneg %p342
      // Predicated region
      $region51: #{encoder_hr_forward.8} parent=5 // pred_check
        _
      $region52: #{encoder_hr_forward.8} parent=5 // pred_check_branch
        %345 = sbr.rel (%p342) target = $region54
      $region53: #{encoder_hr_forward.8} parent=5 // pred_region
        %s346 = ssub.s32 %s9, 1
        %s347 = sand.u32 %s43, 1
        %s348 = sand.u32 %s43, 1
        %s349 = smul.addr %s348, 384
        %s350 = scalar_lea.vmem [#allocation3], %s349
        // Predicated region
        $region55: #{encoder_hr_forward.8} parent=53 // pred_check
          %p351 = pneg %p56
        $region56: #{encoder_hr_forward.8} parent=53 // pred_check_branch
          %353 = sbr.rel (%p351) target = $region58
        $region57: #{encoder_hr_forward.8} parent=53 // pred_region
          _
        $region58: #{encoder_hr_forward.8} parent=53 // pred_fallthru
          _
        %s354 = sand.u32 %s43, 1
        %s355 = sand.u32 %s43, 1
        %s356 = smul.addr %s355, 384
        %s357 = scalar_lea.vmem [#allocation3], %s356
        %p358 = pneg %p56
        %p359 = pneg %p53
        %s360 = smul.u32 48, %s21
        %p361 = scmp.lt.s32.totalorder %s360, 143
        %s362 = scalar_select %p361, %s360, 143
        %p363 = scmp.lt.s32.totalorder %s20, 0
        %s364 = scalar_select %p363, %s20, 0
        %s365 = sadd.s32 %s364, %s362
        %s366 = smul.addr %s365, 4
        %s367 = scalar_lea.vmem %s1, %s366
        %p368 = pneg %p84
        %p369 = pneg %p81
        %p370 = scmp.lt.s32.totalorder %s20, 0
        %s371 = scalar_select %p370, %s20, 0
        %s372 = scalar_lea.vmem %s2, %s371
        %p373 = pneg %p110
        %p374 = pneg %p107
        %p375 = pneg %p138
        %p376 = pneg %p135
        %s377 = smul.u32 32, %s19
        %p378 = scmp.lt.s32.totalorder %s377, 63
        %s379 = scalar_select %p378, %s377, 63
        %p380 = scmp.lt.s32.totalorder %s20, 0
        %s381 = scalar_select %p380, %s20, 0
        %s382 = sadd.s32 %s381, %s379
        %s383 = smul.addr %s382, 4
        %s384 = scalar_lea.vmem %s3, %s383
        %s385 = smul.u32 32, %s19
        %s386 = smul.u32 3, %s21
        %s387 = smul.u32 48, %s21
        %p388 = scmp.lt.s32.totalorder %s387, 143
        %s389 = scalar_select %p388, %s387, 143
        %p390 = scmp.lt.s32.totalorder %s20, 0
        %s391 = scalar_select %p390, %s20, 0
        %s392 = sadd.s32 %s391, %s389
        %s393 = smul.addr %s392, 4
        %s394 = scalar_lea.vmem %s1, %s393
        %s395 = smul.u32 48, %s21
        %p396 = scmp.lt.s32.totalorder %s20, 0
        %s397 = scalar_select %p396, %s20, 0
        %s398 = scalar_lea.vmem %s2, %s397
        %s399 = smul.u32 32, %s19
        %p400 = scmp.lt.s32.totalorder %s399, 63
        %s401 = scalar_select %p400, %s399, 63
        %p402 = scmp.lt.s32.totalorder %s20, 0
        %s403 = scalar_select %p402, %s20, 0
        %s404 = sadd.s32 %s403, %s401
        %s405 = smul.addr %s404, 4
        %s406 = scalar_lea.vmem %s3, %s405
        %s407 = smul.u32 32, %s19
        %p409 = scmp.eq.s32.totalorder %s21, 0
        // Predicated region
        $region59: #{encoder_hr_forward.8} parent=53 // pred_check
          %p410 = pneg %p409
        $region60: #{encoder_hr_forward.8} parent=53 // pred_check_branch
          %412 = sbr.rel (%p410) target = $region62
        $region61: #{encoder_hr_forward.8} parent=53 // pred_region
          %413 = vst [vmem:[#allocation2] sm:$0xff] 0.0
          %414 = vst [vmem:[#allocation2 + $0x8] sm:$0xff] 0.0
          %415 = vst [vmem:[#allocation2 + $0x10] sm:$0xff] 0.0
          %416 = vst [vmem:[#allocation2 + $0x18] sm:$0xff] 0.0
          %417 = vst [vmem:[#allocation2 + $0x20] sm:$0xff] 0.0
          %418 = vst [vmem:[#allocation2 + $0x28] sm:$0xff] 0.0
          %419 = vst [vmem:[#allocation2 + $0x30] sm:$0xff] 0.0
          %420 = vst [vmem:[#allocation2 + $0x38] sm:$0xff] 0.0
          %421 = vst [vmem:[#allocation2 + $0x40] sm:$0xff] 0.0
          %422 = vst [vmem:[#allocation2 + $0x48] sm:$0xff] 0.0
          %423 = vst [vmem:[#allocation2 + $0x50] sm:$0xff] 0.0
          %424 = vst [vmem:[#allocation2 + $0x58] sm:$0xff] 0.0
          %425 = vst [vmem:[#allocation2 + $0x60] sm:$0xff] 0.0
          %426 = vst [vmem:[#allocation2 + $0x68] sm:$0xff] 0.0
          %427 = vst [vmem:[#allocation2 + $0x70] sm:$0xff] 0.0
          %428 = vst [vmem:[#allocation2 + $0x78] sm:$0xff] 0.0
          %429 = vst [vmem:[#allocation2 + $0x80] sm:$0xff] 0.0
          %430 = vst [vmem:[#allocation2 + $0x88] sm:$0xff] 0.0
          %431 = vst [vmem:[#allocation2 + $0x90] sm:$0xff] 0.0
          %432 = vst [vmem:[#allocation2 + $0x98] sm:$0xff] 0.0
          %433 = vst [vmem:[#allocation2 + $0xa0] sm:$0xff] 0.0
          %434 = vst [vmem:[#allocation2 + $0xa8] sm:$0xff] 0.0
          %435 = vst [vmem:[#allocation2 + $0xb0] sm:$0xff] 0.0
          %436 = vst [vmem:[#allocation2 + $0xb8] sm:$0xff] 0.0
          %437 = vst [vmem:[#allocation2 + $0xc0] sm:$0xff] 0.0
          %438 = vst [vmem:[#allocation2 + $0xc8] sm:$0xff] 0.0
          %439 = vst [vmem:[#allocation2 + $0xd0] sm:$0xff] 0.0
          %440 = vst [vmem:[#allocation2 + $0xd8] sm:$0xff] 0.0
          %441 = vst [vmem:[#allocation2 + $0xe0] sm:$0xff] 0.0
          %442 = vst [vmem:[#allocation2 + $0xe8] sm:$0xff] 0.0
          %443 = vst [vmem:[#allocation2 + $0xf0] sm:$0xff] 0.0
          %444 = vst [vmem:[#allocation2 + $0xf8] sm:$0xff] 0.0
        $region62: #{encoder_hr_forward.8} parent=53 // pred_fallthru
          _
        %v445 = vld [vmem:[#allocation2] sm:$0xff]
        %v446 = vld [vmem:[#allocation2 + $0x8] sm:$0xff]
        %v447 = vld [vmem:[#allocation2 + $0x10] sm:$0xff]
        %v448 = vld [vmem:[#allocation2 + $0x18] sm:$0xff]
        %v449 = vld [vmem:[#allocation2 + $0x20] sm:$0xff]
        %v450 = vld [vmem:[#allocation2 + $0x28] sm:$0xff]
        %v451 = vld [vmem:[#allocation2 + $0x30] sm:$0xff]
        %v452 = vld [vmem:[#allocation2 + $0x38] sm:$0xff]
        %v453 = vld [vmem:[#allocation2 + $0x40] sm:$0xff]
        %v454 = vld [vmem:[#allocation2 + $0x48] sm:$0xff]
        %v455 = vld [vmem:[#allocation2 + $0x50] sm:$0xff]
        %v456 = vld [vmem:[#allocation2 + $0x58] sm:$0xff]
        %v457 = vld [vmem:[#allocation2 + $0x60] sm:$0xff]
        %v458 = vld [vmem:[#allocation2 + $0x68] sm:$0xff]
        %v459 = vld [vmem:[#allocation2 + $0x70] sm:$0xff]
        %v460 = vld [vmem:[#allocation2 + $0x78] sm:$0xff]
        %v461 = vld [vmem:[#allocation2 + $0x80] sm:$0xff]
        %v462 = vld [vmem:[#allocation2 + $0x88] sm:$0xff]
        %v463 = vld [vmem:[#allocation2 + $0x90] sm:$0xff]
        %v464 = vld [vmem:[#allocation2 + $0x98] sm:$0xff]
        %v465 = vld [vmem:[#allocation2 + $0xa0] sm:$0xff]
        %v466 = vld [vmem:[#allocation2 + $0xa8] sm:$0xff]
        %v467 = vld [vmem:[#allocation2 + $0xb0] sm:$0xff]
        %v468 = vld [vmem:[#allocation2 + $0xb8] sm:$0xff]
        %v469 = vld [vmem:[#allocation2 + $0xc0] sm:$0xff]
        %v470 = vld [vmem:[#allocation2 + $0xc8] sm:$0xff]
        %v471 = vld [vmem:[#allocation2 + $0xd0] sm:$0xff]
        %v472 = vld [vmem:[#allocation2 + $0xd8] sm:$0xff]
        %v473 = vld [vmem:[#allocation2 + $0xe0] sm:$0xff]
        %v474 = vld [vmem:[#allocation2 + $0xe8] sm:$0xff]
        %v475 = vld [vmem:[#allocation2 + $0xf0] sm:$0xff]
        %v476 = vld [vmem:[#allocation2 + $0xf8] sm:$0xff]
        %v477 = vld [vmem:[%s350] sm:$0xff]
        %v478 = vld [vmem:[%s350 + $0x8] sm:$0xf]
        %v479 = vld [vmem:[%s350 + $0xc] sm:$0xff]
        %v480 = vld [vmem:[%s350 + $0x14] sm:$0xf]
        %v481 = vld [vmem:[%s350 + $0x18] sm:$0xff]
        %v482 = vld [vmem:[%s350 + $0x20] sm:$0xf]
        %v483 = vld [vmem:[%s350 + $0x24] sm:$0xff]
        %v484 = vld [vmem:[%s350 + $0x2c] sm:$0xf]
        %v485 = vld [vmem:[%s350 + $0x30] sm:$0xff]
        %v486 = vld [vmem:[%s350 + $0x38] sm:$0xf]
        %v487 = vld [vmem:[%s350 + $0x3c] sm:$0xff]
        %v488 = vld [vmem:[%s350 + $0x44] sm:$0xf]
        %v489 = vld [vmem:[%s350 + $0x48] sm:$0xff]
        %v490 = vld [vmem:[%s350 + $0x50] sm:$0xf]
        %v491 = vld [vmem:[%s350 + $0x54] sm:$0xff]
        %v492 = vld [vmem:[%s350 + $0x5c] sm:$0xf]
        %v493 = vld [vmem:[%s350 + $0x60] sm:$0xff]
        %v494 = vld [vmem:[%s350 + $0x68] sm:$0xf]
        %v495 = vld [vmem:[%s350 + $0x6c] sm:$0xff]
        %v496 = vld [vmem:[%s350 + $0x74] sm:$0xf]
        %v497 = vld [vmem:[%s350 + $0x78] sm:$0xff]
        %v498 = vld [vmem:[%s350 + $0x80] sm:$0xf]
        %v499 = vld [vmem:[%s350 + $0x84] sm:$0xff]
        %v500 = vld [vmem:[%s350 + $0x8c] sm:$0xf]
        %v501 = vld [vmem:[%s350 + $0x90] sm:$0xff]
        %v502 = vld [vmem:[%s350 + $0x98] sm:$0xf]
        %v503 = vld [vmem:[%s350 + $0x9c] sm:$0xff]
        %v504 = vld [vmem:[%s350 + $0xa4] sm:$0xf]
        %v505 = vld [vmem:[%s350 + $0xa8] sm:$0xff]
        %v506 = vld [vmem:[%s350 + $0xb0] sm:$0xf]
        %v507 = vld [vmem:[%s350 + $0xb4] sm:$0xff]
        %v508 = vld [vmem:[%s350 + $0xbc] sm:$0xf]
        %v509 = vld [vmem:[%s350 + $0xc0] sm:$0xff]
        %v510 = vld [vmem:[%s350 + $0xc8] sm:$0xf]
        %v511 = vld [vmem:[%s350 + $0xcc] sm:$0xff]
        %v512 = vld [vmem:[%s350 + $0xd4] sm:$0xf]
        %v513 = vld [vmem:[%s350 + $0xd8] sm:$0xff]
        %v514 = vld [vmem:[%s350 + $0xe0] sm:$0xf]
        %v515 = vld [vmem:[%s350 + $0xe4] sm:$0xff]
        %v516 = vld [vmem:[%s350 + $0xec] sm:$0xf]
        %v517 = vld [vmem:[%s350 + $0xf0] sm:$0xff]
        %v518 = vld [vmem:[%s350 + $0xf8] sm:$0xf]
        %v519 = vld [vmem:[%s350 + $0xfc] sm:$0xff]
        %v520 = vld [vmem:[%s350 + $0x104] sm:$0xf]
        %v521 = vld [vmem:[%s350 + $0x108] sm:$0xff]
        %v522 = vld [vmem:[%s350 + $0x110] sm:$0xf]
        %v523 = vld [vmem:[%s350 + $0x114] sm:$0xff]
        %v524 = vld [vmem:[%s350 + $0x11c] sm:$0xf]
        %v525 = vld [vmem:[%s350 + $0x120] sm:$0xff]
        %v526 = vld [vmem:[%s350 + $0x128] sm:$0xf]
        %v527 = vld [vmem:[%s350 + $0x12c] sm:$0xff]
        %v528 = vld [vmem:[%s350 + $0x134] sm:$0xf]
        %v529 = vld [vmem:[%s350 + $0x138] sm:$0xff]
        %v530 = vld [vmem:[%s350 + $0x140] sm:$0xf]
        %v531 = vld [vmem:[%s350 + $0x144] sm:$0xff]
        %v532 = vld [vmem:[%s350 + $0x14c] sm:$0xf]
        %v533 = vld [vmem:[%s350 + $0x150] sm:$0xff]
        %v534 = vld [vmem:[%s350 + $0x158] sm:$0xf]
        %v535 = vld [vmem:[%s350 + $0x15c] sm:$0xff]
        %v536 = vld [vmem:[%s350 + $0x164] sm:$0xf]
        %v537 = vld [vmem:[%s350 + $0x168] sm:$0xff]
        %v538 = vld [vmem:[%s350 + $0x170] sm:$0xf]
        %v539 = vld [vmem:[%s350 + $0x174] sm:$0xff]
        %v540 = vld [vmem:[%s350 + $0x17c] sm:$0xf]
        %v541 = vld [vmem:[%s394] sm:$0xf]
        %v542 = vld [vmem:[%s394 + $0x4] sm:$0xf]
        %v543 = vld [vmem:[%s394 + $0x8] sm:$0xf]
        %v544 = vld [vmem:[%s394 + $0xc] sm:$0xf]
        %v545 = vld [vmem:[%s394 + $0x10] sm:$0xf]
        %v546 = vld [vmem:[%s394 + $0x14] sm:$0xf]
        %v547 = vld [vmem:[%s394 + $0x18] sm:$0xf]
        %v548 = vld [vmem:[%s394 + $0x1c] sm:$0xf]
        %v549 = vld [vmem:[%s394 + $0x20] sm:$0xf]
        %v550 = vld [vmem:[%s394 + $0x24] sm:$0xf]
        %v551 = vld [vmem:[%s394 + $0x28] sm:$0xf]
        %v552 = vld [vmem:[%s394 + $0x2c] sm:$0xf]
        %v553 = vld [vmem:[%s394 + $0x30] sm:$0xf]
        %v554 = vld [vmem:[%s394 + $0x34] sm:$0xf]
        %v555 = vld [vmem:[%s394 + $0x38] sm:$0xf]
        %v556 = vld [vmem:[%s394 + $0x3c] sm:$0xf]
        %v557 = vld [vmem:[%s394 + $0x40] sm:$0xf]
        %v558 = vld [vmem:[%s394 + $0x44] sm:$0xf]
        %v559 = vld [vmem:[%s394 + $0x48] sm:$0xf]
        %v560 = vld [vmem:[%s394 + $0x4c] sm:$0xf]
        %v561 = vld [vmem:[%s394 + $0x50] sm:$0xf]
        %v562 = vld [vmem:[%s394 + $0x54] sm:$0xf]
        %v563 = vld [vmem:[%s394 + $0x58] sm:$0xf]
        %v564 = vld [vmem:[%s394 + $0x5c] sm:$0xf]
        %v565 = vld [vmem:[%s394 + $0x60] sm:$0xf]
        %v566 = vld [vmem:[%s394 + $0x64] sm:$0xf]
        %v567 = vld [vmem:[%s394 + $0x68] sm:$0xf]
        %v568 = vld [vmem:[%s394 + $0x6c] sm:$0xf]
        %v569 = vld [vmem:[%s394 + $0x70] sm:$0xf]
        %v570 = vld [vmem:[%s394 + $0x74] sm:$0xf]
        %v571 = vld [vmem:[%s394 + $0x78] sm:$0xf]
        %v572 = vld [vmem:[%s394 + $0x7c] sm:$0xf]
        %v573 = vld [vmem:[%s394 + $0x80] sm:$0xf]
        %v574 = vld [vmem:[%s394 + $0x84] sm:$0xf]
        %v575 = vld [vmem:[%s394 + $0x88] sm:$0xf]
        %v576 = vld [vmem:[%s394 + $0x8c] sm:$0xf]
        %v577 = vld [vmem:[%s394 + $0x90] sm:$0xf]
        %v578 = vld [vmem:[%s394 + $0x94] sm:$0xf]
        %v579 = vld [vmem:[%s394 + $0x98] sm:$0xf]
        %v580 = vld [vmem:[%s394 + $0x9c] sm:$0xf]
        %v581 = vld [vmem:[%s394 + $0xa0] sm:$0xf]
        %v582 = vld [vmem:[%s394 + $0xa4] sm:$0xf]
        %v583 = vld [vmem:[%s394 + $0xa8] sm:$0xf]
        %v584 = vld [vmem:[%s394 + $0xac] sm:$0xf]
        %v585 = vld [vmem:[%s394 + $0xb0] sm:$0xf]
        %v586 = vld [vmem:[%s394 + $0xb4] sm:$0xf]
        %v587 = vld [vmem:[%s394 + $0xb8] sm:$0xf]
        %v588 = vld [vmem:[%s394 + $0xbc] sm:$0xf]
        %v653 = vunpack.c.l.b16 %v477
        %v654 = vunpack.c.h.b16 %v477
        %v655 = vunpack.c.l.b16 %v478
        %v656 = vunpack.c.l.b16 %v479
        %v657 = vunpack.c.h.b16 %v479
        %v658 = vunpack.c.l.b16 %v480
        %v659 = vunpack.c.l.b16 %v481
        %v660 = vunpack.c.h.b16 %v481
        %v661 = vunpack.c.l.b16 %v482
        %v662 = vunpack.c.l.b16 %v483
        %v663 = vunpack.c.h.b16 %v483
        %v664 = vunpack.c.l.b16 %v484
        %v665 = vunpack.c.l.b16 %v485
        %v666 = vunpack.c.h.b16 %v485
        %v667 = vunpack.c.l.b16 %v486
        %v668 = vunpack.c.l.b16 %v487
        %v669 = vunpack.c.h.b16 %v487
        %v670 = vunpack.c.l.b16 %v488
        %v671 = vunpack.c.l.b16 %v489
        %v672 = vunpack.c.h.b16 %v489
        %v673 = vunpack.c.l.b16 %v490
        %v674 = vunpack.c.l.b16 %v491
        %v675 = vunpack.c.h.b16 %v491
        %v676 = vunpack.c.l.b16 %v492
        %v677 = vunpack.c.l.b16 %v493
        %v678 = vunpack.c.h.b16 %v493
        %v679 = vunpack.c.l.b16 %v494
        %v680 = vunpack.c.l.b16 %v495
        %v681 = vunpack.c.h.b16 %v495
        %v682 = vunpack.c.l.b16 %v496
        %v683 = vunpack.c.l.b16 %v497
        %v684 = vunpack.c.h.b16 %v497
        %v685 = vunpack.c.l.b16 %v498
        %v686 = vunpack.c.l.b16 %v499
        %v687 = vunpack.c.h.b16 %v499
        %v688 = vunpack.c.l.b16 %v500
        %v689 = vunpack.c.l.b16 %v501
        %v690 = vunpack.c.h.b16 %v501
        %v691 = vunpack.c.l.b16 %v502
        %v692 = vunpack.c.l.b16 %v503
        %v693 = vunpack.c.h.b16 %v503
        %v694 = vunpack.c.l.b16 %v504
        %v695 = vunpack.c.l.b16 %v505
        %v696 = vunpack.c.h.b16 %v505
        %v697 = vunpack.c.l.b16 %v506
        %v698 = vunpack.c.l.b16 %v507
        %v699 = vunpack.c.h.b16 %v507
        %v700 = vunpack.c.l.b16 %v508
        %v701 = vunpack.c.l.b16 %v509
        %v702 = vunpack.c.h.b16 %v509
        %v703 = vunpack.c.l.b16 %v510
        %v704 = vunpack.c.l.b16 %v511
        %v705 = vunpack.c.h.b16 %v511
        %v706 = vunpack.c.l.b16 %v512
        %v707 = vunpack.c.l.b16 %v513
        %v708 = vunpack.c.h.b16 %v513
        %v709 = vunpack.c.l.b16 %v514
        %v710 = vunpack.c.l.b16 %v515
        %v711 = vunpack.c.h.b16 %v515
        %v712 = vunpack.c.l.b16 %v516
        %v713 = vunpack.c.l.b16 %v517
        %v714 = vunpack.c.h.b16 %v517
        %v715 = vunpack.c.l.b16 %v518
        %v716 = vunpack.c.l.b16 %v519
        %v717 = vunpack.c.h.b16 %v519
        %v718 = vunpack.c.l.b16 %v520
        %v719 = vunpack.c.l.b16 %v521
        %v720 = vunpack.c.h.b16 %v521
        %v721 = vunpack.c.l.b16 %v522
        %v722 = vunpack.c.l.b16 %v523
        %v723 = vunpack.c.h.b16 %v523
        %v724 = vunpack.c.l.b16 %v524
        %v725 = vunpack.c.l.b16 %v525
        %v726 = vunpack.c.h.b16 %v525
        %v727 = vunpack.c.l.b16 %v526
        %v728 = vunpack.c.l.b16 %v527
        %v729 = vunpack.c.h.b16 %v527
        %v730 = vunpack.c.l.b16 %v528
        %v731 = vunpack.c.l.b16 %v529
        %v732 = vunpack.c.h.b16 %v529
        %v733 = vunpack.c.l.b16 %v530
        %v734 = vunpack.c.l.b16 %v531
        %v735 = vunpack.c.h.b16 %v531
        %v736 = vunpack.c.l.b16 %v532
        %v737 = vunpack.c.l.b16 %v533
        %v738 = vunpack.c.h.b16 %v533
        %v739 = vunpack.c.l.b16 %v534
        %v740 = vunpack.c.l.b16 %v535
        %v741 = vunpack.c.h.b16 %v535
        %v742 = vunpack.c.l.b16 %v536
        %v743 = vunpack.c.l.b16 %v537
        %v744 = vunpack.c.h.b16 %v537
        %v745 = vunpack.c.l.b16 %v538
        %v746 = vunpack.c.l.b16 %v539
        %v747 = vunpack.c.h.b16 %v539
        %v748 = vunpack.c.l.b16 %v540
        %v749 = vpack.c.b16 %v656, %v653
        %v750 = vpack.c.b16 %v657, %v654
        %v751 = vpack.c.b16 %v658, %v655
        %v752 = vpack.c.b16 %v662, %v659
        %v753 = vpack.c.b16 %v663, %v660
        %v754 = vpack.c.b16 %v664, %v661
        %v755 = vpack.c.b16 %v668, %v665
        %v756 = vpack.c.b16 %v669, %v666
        %v757 = vpack.c.b16 %v670, %v667
        %v758 = vpack.c.b16 %v674, %v671
        %v759 = vpack.c.b16 %v675, %v672
        %v760 = vpack.c.b16 %v676, %v673
        %v761 = vpack.c.b16 %v680, %v677
        %v762 = vpack.c.b16 %v681, %v678
        %v763 = vpack.c.b16 %v682, %v679
        %v764 = vpack.c.b16 %v686, %v683
        %v765 = vpack.c.b16 %v687, %v684
        %v766 = vpack.c.b16 %v688, %v685
        %v767 = vpack.c.b16 %v692, %v689
        %v768 = vpack.c.b16 %v693, %v690
        %v769 = vpack.c.b16 %v694, %v691
        %v770 = vpack.c.b16 %v698, %v695
        %v771 = vpack.c.b16 %v699, %v696
        %v772 = vpack.c.b16 %v700, %v697
        %v773 = vpack.c.b16 %v704, %v701
        %v774 = vpack.c.b16 %v705, %v702
        %v775 = vpack.c.b16 %v706, %v703
        %v776 = vpack.c.b16 %v710, %v707
        %v777 = vpack.c.b16 %v711, %v708
        %v778 = vpack.c.b16 %v712, %v709
        %v779 = vpack.c.b16 %v716, %v713
        %v780 = vpack.c.b16 %v717, %v714
        %v781 = vpack.c.b16 %v718, %v715
        %v782 = vpack.c.b16 %v722, %v719
        %v783 = vpack.c.b16 %v723, %v720
        %v784 = vpack.c.b16 %v724, %v721
        %v785 = vpack.c.b16 %v728, %v725
        %v786 = vpack.c.b16 %v729, %v726
        %v787 = vpack.c.b16 %v730, %v727
        %v788 = vpack.c.b16 %v734, %v731
        %v789 = vpack.c.b16 %v735, %v732
        %v790 = vpack.c.b16 %v736, %v733
        %v791 = vpack.c.b16 %v740, %v737
        %v792 = vpack.c.b16 %v741, %v738
        %v793 = vpack.c.b16 %v742, %v739
        %v794 = vpack.c.b16 %v746, %v743
        %v795 = vpack.c.b16 %v747, %v744
        %v796 = vpack.c.b16 %v748, %v745
        %v893 = vunpack.c.l.b16 %v541
        %v894 = vunpack.c.l.b16 %v542
        %v895 = vunpack.c.l.b16 %v543
        %v896 = vunpack.c.l.b16 %v544
        %v897 = vunpack.c.l.b16 %v545
        %v898 = vunpack.c.l.b16 %v546
        %v899 = vunpack.c.l.b16 %v547
        %v900 = vunpack.c.l.b16 %v548
        %v901 = vunpack.c.l.b16 %v549
        %v902 = vunpack.c.l.b16 %v550
        %v903 = vunpack.c.l.b16 %v551
        %v904 = vunpack.c.l.b16 %v552
        %v905 = vunpack.c.l.b16 %v553
        %v906 = vunpack.c.l.b16 %v554
        %v907 = vunpack.c.l.b16 %v555
        %v908 = vunpack.c.l.b16 %v556
        %v909 = vunpack.c.l.b16 %v557
        %v910 = vunpack.c.l.b16 %v558
        %v911 = vunpack.c.l.b16 %v559
        %v912 = vunpack.c.l.b16 %v560
        %v913 = vunpack.c.l.b16 %v561
        %v914 = vunpack.c.l.b16 %v562
        %v915 = vunpack.c.l.b16 %v563
        %v916 = vunpack.c.l.b16 %v564
        %v917 = vunpack.c.l.b16 %v565
        %v918 = vunpack.c.l.b16 %v566
        %v919 = vunpack.c.l.b16 %v567
        %v920 = vunpack.c.l.b16 %v568
        %v921 = vunpack.c.l.b16 %v569
        %v922 = vunpack.c.l.b16 %v570
        %v923 = vunpack.c.l.b16 %v571
        %v924 = vunpack.c.l.b16 %v572
        %v925 = vunpack.c.l.b16 %v573
        %v926 = vunpack.c.l.b16 %v574
        %v927 = vunpack.c.l.b16 %v575
        %v928 = vunpack.c.l.b16 %v576
        %v929 = vunpack.c.l.b16 %v577
        %v930 = vunpack.c.l.b16 %v578
        %v931 = vunpack.c.l.b16 %v579
        %v932 = vunpack.c.l.b16 %v580
        %v933 = vunpack.c.l.b16 %v581
        %v934 = vunpack.c.l.b16 %v582
        %v935 = vunpack.c.l.b16 %v583
        %v936 = vunpack.c.l.b16 %v584
        %v937 = vunpack.c.l.b16 %v585
        %v938 = vunpack.c.l.b16 %v586
        %v939 = vunpack.c.l.b16 %v587
        %v940 = vunpack.c.l.b16 %v588
        %v941 = vpack.c.b16 %v894, %v893
        %v942 = vpack.c.b16 %v896, %v895
        %v943 = vpack.c.b16 %v898, %v897
        %v944 = vpack.c.b16 %v900, %v899
        %v945 = vpack.c.b16 %v902, %v901
        %v946 = vpack.c.b16 %v904, %v903
        %v947 = vpack.c.b16 %v906, %v905
        %v948 = vpack.c.b16 %v908, %v907
        %v949 = vpack.c.b16 %v910, %v909
        %v950 = vpack.c.b16 %v912, %v911
        %v951 = vpack.c.b16 %v914, %v913
        %v952 = vpack.c.b16 %v916, %v915
        %v953 = vpack.c.b16 %v918, %v917
        %v954 = vpack.c.b16 %v920, %v919
        %v955 = vpack.c.b16 %v922, %v921
        %v956 = vpack.c.b16 %v924, %v923
        %v957 = vpack.c.b16 %v926, %v925
        %v958 = vpack.c.b16 %v928, %v927
        %v959 = vpack.c.b16 %v930, %v929
        %v960 = vpack.c.b16 %v932, %v931
        %v961 = vpack.c.b16 %v934, %v933
        %v962 = vpack.c.b16 %v936, %v935
        %v963 = vpack.c.b16 %v938, %v937
        %v964 = vpack.c.b16 %v940, %v939
        %989 = vmatprep.subr.bf16.mxu0 0
        %990 = vmatpush1.bf16.msra.mxu0 %v941
        %991 = vmatprep.subr.bf16.mxu0 0
        %992 = vmatpush1.bf16.msra.mxu0 %v942
        %993 = vmatprep.subr.bf16.mxu0 0
        %994 = vmatpush1.bf16.msra.mxu0 %v943
        %995 = vmatprep.subr.bf16.mxu0 0
        %996 = vmatpush1.bf16.msra.mxu0 %v944
        %997 = vmatprep.subr.bf16.mxu0 0
        %998 = vmatpush1.bf16.msra.mxu0 %v945
        %999 = vmatprep.subr.bf16.mxu0 0
        %1000 = vmatpush1.bf16.msra.mxu0 %v946
        %1001 = vmatprep.subr.bf16.mxu0 0
        %1002 = vmatpush1.bf16.msra.mxu0 %v947
        %1003 = vmatprep.subr.bf16.mxu0 0
        %1004 = vmatpush1.bf16.msra.mxu0 %v948
        %1005 = vmatprep.subr.bf16.mxu0 0
        %1006 = vmatpush1.bf16.msra.mxu0 %v949
        %1007 = vmatprep.subr.bf16.mxu0 0
        %1008 = vmatpush1.bf16.msra.mxu0 %v950
        %1009 = vmatprep.subr.bf16.mxu0 0
        %1010 = vmatpush1.bf16.msra.mxu0 %v951
        %1011 = vmatprep.subr.bf16.mxu0 0
        %1012 = vmatpush1.bf16.msra.mxu0 %v952
        %1013 = vmatprep.subr.bf16.mxu0 0
        %1014 = vmatpush1.bf16.msra.mxu0 %v953
        %1015 = vmatprep.subr.bf16.mxu0 0
        %1016 = vmatpush1.bf16.msra.mxu0 %v954
        %1017 = vmatprep.subr.bf16.mxu0 0
        %1018 = vmatpush1.bf16.msra.mxu0 %v955
        %1019 = vmatprep.subr.bf16.mxu0 0
        %1020 = vmatpush1.bf16.msra.mxu0 %v956
        %1021 = vmatprep.mubr.bf16.mxu0 %v750
        %1022 = vmatmul.mubr.bf16.gmra.mrb[0].mxu0 %v749
        %v1023 = vpop.f32.mrb[0].mxu0
        %v1024 = vadd.f32 0.0, %v1023
        %v1025 = vpop.f32.mrb[0].mxu0
        %v1026 = vpop.f32.mrb[0].mxu0
        %v1027 = vadd.f32 0.0, %v1026
        %v1028 = vpop.f32.mrb[0].mxu0
        %1029 = vmatprep.mubr.bf16.mxu0 %v753
        %1030 = vmatmul.mubr.bf16.gmra.mrb[0].mxu0 %v752
        %v1031 = vpop.f32.mrb[0].mxu0
        %v1032 = vadd.f32 0.0, %v1031
        %v1033 = vpop.f32.mrb[0].mxu0
        %v1034 = vpop.f32.mrb[0].mxu0
        %v1035 = vadd.f32 0.0, %v1034
        %v1036 = vpop.f32.mrb[0].mxu0
        %1037 = vmatprep.mubr.bf16.mxu0 %v756
        %1038 = vmatmul.mubr.bf16.gmra.mrb[0].mxu0 %v755
        %v1039 = vpop.f32.mrb[0].mxu0
        %v1040 = vadd.f32 0.0, %v1039
        %v1041 = vpop.f32.mrb[0].mxu0
        %v1042 = vpop.f32.mrb[0].mxu0
        %v1043 = vadd.f32 0.0, %v1042
        %v1044 = vpop.f32.mrb[0].mxu0
        %1045 = vmatprep.mubr.bf16.mxu0 %v759
        %1046 = vmatmul.mubr.bf16.gmra.mrb[0].mxu0 %v758
        %v1047 = vpop.f32.mrb[0].mxu0
        %v1048 = vadd.f32 0.0, %v1047
        %v1049 = vpop.f32.mrb[0].mxu0
        %v1050 = vpop.f32.mrb[0].mxu0
        %v1051 = vadd.f32 0.0, %v1050
        %v1052 = vpop.f32.mrb[0].mxu0
        %1053 = vmatprep.mubr.bf16.mxu0 %v762
        %1054 = vmatmul.mubr.bf16.gmra.mrb[0].mxu0 %v761
        %v1055 = vpop.f32.mrb[0].mxu0
        %v1056 = vadd.f32 0.0, %v1055
        %v1057 = vpop.f32.mrb[0].mxu0
        %v1058 = vpop.f32.mrb[0].mxu0
        %v1059 = vadd.f32 0.0, %v1058
        %v1060 = vpop.f32.mrb[0].mxu0
        %1061 = vmatprep.mubr.bf16.mxu0 %v765
        %1062 = vmatmul.mubr.bf16.gmra.mrb[0].mxu0 %v764
        %v1063 = vpop.f32.mrb[0].mxu0
        %v1064 = vadd.f32 0.0, %v1063
        %v1065 = vpop.f32.mrb[0].mxu0
        %v1066 = vpop.f32.mrb[0].mxu0
        %v1067 = vadd.f32 0.0, %v1066
        %v1068 = vpop.f32.mrb[0].mxu0
        %1069 = vmatprep.mubr.bf16.mxu0 %v768
        %1070 = vmatmul.mubr.bf16.gmra.mrb[0].mxu0 %v767
        %v1071 = vpop.f32.mrb[0].mxu0
        %v1072 = vadd.f32 0.0, %v1071
        %v1073 = vpop.f32.mrb[0].mxu0
        %v1074 = vpop.f32.mrb[0].mxu0
        %v1075 = vadd.f32 0.0, %v1074
        %v1076 = vpop.f32.mrb[0].mxu0
        %1077 = vmatprep.mubr.bf16.mxu0 %v771
        %1078 = vmatmul.mubr.bf16.gmra.mrb[0].mxu0 %v770
        %v1079 = vpop.f32.mrb[0].mxu0
        %v1080 = vadd.f32 0.0, %v1079
        %v1081 = vpop.f32.mrb[0].mxu0
        %v1082 = vpop.f32.mrb[0].mxu0
        %v1083 = vadd.f32 0.0, %v1082
        %v1084 = vpop.f32.mrb[0].mxu0
        %1085 = vmatprep.mubr.bf16.mxu0 %v774
        %1086 = vmatmul.mubr.bf16.gmra.mrb[0].mxu0 %v773
        %v1087 = vpop.f32.mrb[0].mxu0
        %v1088 = vadd.f32 0.0, %v1087
        %v1089 = vpop.f32.mrb[0].mxu0
        %v1090 = vpop.f32.mrb[0].mxu0
        %v1091 = vadd.f32 0.0, %v1090
        %v1092 = vpop.f32.mrb[0].mxu0
        %1093 = vmatprep.mubr.bf16.mxu0 %v777
        %1094 = vmatmul.mubr.bf16.gmra.mrb[0].mxu0 %v776
        %v1095 = vpop.f32.mrb[0].mxu0
        %v1096 = vadd.f32 0.0, %v1095
        %v1097 = vpop.f32.mrb[0].mxu0
        %v1098 = vpop.f32.mrb[0].mxu0
        %v1099 = vadd.f32 0.0, %v1098
        %v1100 = vpop.f32.mrb[0].mxu0
        %1101 = vmatprep.mubr.bf16.mxu0 %v780
        %1102 = vmatmul.mubr.bf16.gmra.mrb[0].mxu0 %v779
        %v1103 = vpop.f32.mrb[0].mxu0
        %v1104 = vadd.f32 0.0, %v1103
        %v1105 = vpop.f32.mrb[0].mxu0
        %v1106 = vpop.f32.mrb[0].mxu0
        %v1107 = vadd.f32 0.0, %v1106
        %v1108 = vpop.f32.mrb[0].mxu0
        %1109 = vmatprep.mubr.bf16.mxu0 %v783
        %1110 = vmatmul.mubr.bf16.gmra.mrb[0].mxu0 %v782
        %v1111 = vpop.f32.mrb[0].mxu0
        %v1112 = vadd.f32 0.0, %v1111
        %v1113 = vpop.f32.mrb[0].mxu0
        %v1114 = vpop.f32.mrb[0].mxu0
        %v1115 = vadd.f32 0.0, %v1114
        %v1116 = vpop.f32.mrb[0].mxu0
        %1117 = vmatprep.mubr.bf16.mxu0 %v786
        %1118 = vmatmul.mubr.bf16.gmra.mrb[0].mxu0 %v785
        %v1119 = vpop.f32.mrb[0].mxu0
        %v1120 = vadd.f32 0.0, %v1119
        %v1121 = vpop.f32.mrb[0].mxu0
        %v1122 = vpop.f32.mrb[0].mxu0
        %v1123 = vadd.f32 0.0, %v1122
        %v1124 = vpop.f32.mrb[0].mxu0
        %1125 = vmatprep.mubr.bf16.mxu0 %v789
        %1126 = vmatmul.mubr.bf16.gmra.mrb[0].mxu0 %v788
        %v1127 = vpop.f32.mrb[0].mxu0
        %v1128 = vadd.f32 0.0, %v1127
        %v1129 = vpop.f32.mrb[0].mxu0
        %v1130 = vpop.f32.mrb[0].mxu0
        %v1131 = vadd.f32 0.0, %v1130
        %v1132 = vpop.f32.mrb[0].mxu0
        %1133 = vmatprep.mubr.bf16.mxu0 %v792
        %1134 = vmatmul.mubr.bf16.gmra.mrb[0].mxu0 %v791
        %v1135 = vpop.f32.mrb[0].mxu0
        %v1136 = vadd.f32 0.0, %v1135
        %v1137 = vpop.f32.mrb[0].mxu0
        %v1138 = vpop.f32.mrb[0].mxu0
        %v1139 = vadd.f32 0.0, %v1138
        %v1140 = vpop.f32.mrb[0].mxu0
        %1141 = vmatprep.mubr.bf16.mxu0 %v795
        %1142 = vmatmul.mubr.bf16.gmra.mrb[0].mxu0 %v794
        %v1143 = vpop.f32.mrb[0].mxu0
        %v1144 = vadd.f32 0.0, %v1143
        %v1145 = vpop.f32.mrb[0].mxu0
        %v1146 = vpop.f32.mrb[0].mxu0
        %v1147 = vadd.f32 0.0, %v1146
        %v1148 = vpop.f32.mrb[0].mxu0
        %1149 = vdwg.mxu0
        %1150 = vmatprep.subr.bf16.mxu0 0
        %1151 = vmatpush1.bf16.msra.mxu0 %v957
        %1152 = vmatprep.subr.bf16.mxu0 0
        %1153 = vmatpush1.bf16.msra.mxu0 %v958
        %1154 = vmatprep.subr.bf16.mxu0 0
        %1155 = vmatpush1.bf16.msra.mxu0 %v959
        %1156 = vmatprep.subr.bf16.mxu0 0
        %1157 = vmatpush1.bf16.msra.mxu0 %v960
        %1158 = vmatprep.subr.bf16.mxu0 0
        %1159 = vmatpush1.bf16.msra.mxu0 %v961
        %1160 = vmatprep.subr.bf16.mxu0 0
        %1161 = vmatpush1.bf16.msra.mxu0 %v962
        %1162 = vmatprep.subr.bf16.mxu0 0
        %1163 = vmatpush1.bf16.msra.mxu0 %v963
        %1164 = vmatprep.subr.bf16.mxu0 0
        %1165 = vmatpush1.bf16.msra.mxu0 %v964
        %1166 = vmatprep.subr.bf16.mxu0 0
        %1167 = vmatpush1.bf16.msra.mxu0 0
        %1168 = vmatprep.subr.bf16.mxu0 0
        %1169 = vmatpush1.bf16.msra.mxu0 0
        %1170 = vmatprep.subr.bf16.mxu0 0
        %1171 = vmatpush1.bf16.msra.mxu0 0
        %1172 = vmatprep.subr.bf16.mxu0 0
        %1173 = vmatpush1.bf16.msra.mxu0 0
        %1174 = vmatprep.subr.bf16.mxu0 0
        %1175 = vmatpush1.bf16.msra.mxu0 0
        %1176 = vmatprep.subr.bf16.mxu0 0
        %1177 = vmatpush1.bf16.msra.mxu0 0
        %1178 = vmatprep.subr.bf16.mxu0 0
        %1179 = vmatpush1.bf16.msra.mxu0 0
        %1180 = vmatprep.subr.bf16.mxu0 0
        %1181 = vmatpush1.bf16.msra.mxu0 0
        %1182 = vmatprep.mubr.bf16.mxu0 0
        %1183 = vmatmul.mubr.bf16.gmra.mrb[0].mxu0 %v751
        %v1184 = vpop.f32.mrb[0].mxu0
        %v1185 = vadd.f32 %v1024, %v1184
        %v1186 = vpop.f32.mrb[0].mxu0
        %v1187 = vpop.f32.mrb[0].mxu0
        %v1188 = vadd.f32 %v1027, %v1187
        %v1189 = vpop.f32.mrb[0].mxu0
        %1190 = vmatprep.mubr.bf16.mxu0 0
        %1191 = vmatmul.mubr.bf16.gmra.mrb[0].mxu0 %v754
        %v1192 = vpop.f32.mrb[0].mxu0
        %v1193 = vadd.f32 %v1032, %v1192
        %v1194 = vpop.f32.mrb[0].mxu0
        %v1195 = vpop.f32.mrb[0].mxu0
        %v1196 = vadd.f32 %v1035, %v1195
        %v1197 = vpop.f32.mrb[0].mxu0
        %1198 = vmatprep.mubr.bf16.mxu0 0
        %1199 = vmatmul.mubr.bf16.gmra.mrb[0].mxu0 %v757
        %v1200 = vpop.f32.mrb[0].mxu0
        %v1201 = vadd.f32 %v1040, %v1200
        %v1202 = vpop.f32.mrb[0].mxu0
        %v1203 = vpop.f32.mrb[0].mxu0
        %v1204 = vadd.f32 %v1043, %v1203
        %v1205 = vpop.f32.mrb[0].mxu0
        %1206 = vmatprep.mubr.bf16.mxu0 0
        %1207 = vmatmul.mubr.bf16.gmra.mrb[0].mxu0 %v760
        %v1208 = vpop.f32.mrb[0].mxu0
        %v1209 = vadd.f32 %v1048, %v1208
        %v1210 = vpop.f32.mrb[0].mxu0
        %v1211 = vpop.f32.mrb[0].mxu0
        %v1212 = vadd.f32 %v1051, %v1211
        %v1213 = vpop.f32.mrb[0].mxu0
        %1214 = vmatprep.mubr.bf16.mxu0 0
        %1215 = vmatmul.mubr.bf16.gmra.mrb[0].mxu0 %v763
        %v1216 = vpop.f32.mrb[0].mxu0
        %v1217 = vadd.f32 %v1056, %v1216
        %v1218 = vpop.f32.mrb[0].mxu0
        %v1219 = vpop.f32.mrb[0].mxu0
        %v1220 = vadd.f32 %v1059, %v1219
        %v1221 = vpop.f32.mrb[0].mxu0
        %1222 = vmatprep.mubr.bf16.mxu0 0
        %1223 = vmatmul.mubr.bf16.gmra.mrb[0].mxu0 %v766
        %v1224 = vpop.f32.mrb[0].mxu0
        %v1225 = vadd.f32 %v1064, %v1224
        %v1226 = vpop.f32.mrb[0].mxu0
        %v1227 = vpop.f32.mrb[0].mxu0
        %v1228 = vadd.f32 %v1067, %v1227
        %v1229 = vpop.f32.mrb[0].mxu0
        %1230 = vmatprep.mubr.bf16.mxu0 0
        %1231 = vmatmul.mubr.bf16.gmra.mrb[0].mxu0 %v769
        %v1232 = vpop.f32.mrb[0].mxu0
        %v1233 = vadd.f32 %v1072, %v1232
        %v1234 = vpop.f32.mrb[0].mxu0
        %v1235 = vpop.f32.mrb[0].mxu0
        %v1236 = vadd.f32 %v1075, %v1235
        %v1237 = vpop.f32.mrb[0].mxu0
        %1238 = vmatprep.mubr.bf16.mxu0 0
        %1239 = vmatmul.mubr.bf16.gmra.mrb[0].mxu0 %v772
        %v1240 = vpop.f32.mrb[0].mxu0
        %v1241 = vadd.f32 %v1080, %v1240
        %v1242 = vpop.f32.mrb[0].mxu0
        %v1243 = vpop.f32.mrb[0].mxu0
        %v1244 = vadd.f32 %v1083, %v1243
        %v1245 = vpop.f32.mrb[0].mxu0
        %1246 = vmatprep.mubr.bf16.mxu0 0
        %1247 = vmatmul.mubr.bf16.gmra.mrb[0].mxu0 %v775
        %v1248 = vpop.f32.mrb[0].mxu0
        %v1249 = vadd.f32 %v1088, %v1248
        %v1250 = vpop.f32.mrb[0].mxu0
        %v1251 = vpop.f32.mrb[0].mxu0
        %v1252 = vadd.f32 %v1091, %v1251
        %v1253 = vpop.f32.mrb[0].mxu0
        %1254 = vmatprep.mubr.bf16.mxu0 0
        %1255 = vmatmul.mubr.bf16.gmra.mrb[0].mxu0 %v778
        %v1256 = vpop.f32.mrb[0].mxu0
        %v1257 = vadd.f32 %v1096, %v1256
        %v1258 = vpop.f32.mrb[0].mxu0
        %v1259 = vpop.f32.mrb[0].mxu0
        %v1260 = vadd.f32 %v1099, %v1259
        %v1261 = vpop.f32.mrb[0].mxu0
        %1262 = vmatprep.mubr.bf16.mxu0 0
        %1263 = vmatmul.mubr.bf16.gmra.mrb[0].mxu0 %v781
        %v1264 = vpop.f32.mrb[0].mxu0
        %v1265 = vadd.f32 %v1104, %v1264
        %v1266 = vpop.f32.mrb[0].mxu0
        %v1267 = vpop.f32.mrb[0].mxu0
        %v1268 = vadd.f32 %v1107, %v1267
        %v1269 = vpop.f32.mrb[0].mxu0
        %1270 = vmatprep.mubr.bf16.mxu0 0
        %1271 = vmatmul.mubr.bf16.gmra.mrb[0].mxu0 %v784
        %v1272 = vpop.f32.mrb[0].mxu0
        %v1273 = vadd.f32 %v1112, %v1272
        %v1274 = vpop.f32.mrb[0].mxu0
        %v1275 = vpop.f32.mrb[0].mxu0
        %v1276 = vadd.f32 %v1115, %v1275
        %v1277 = vpop.f32.mrb[0].mxu0
        %1278 = vmatprep.mubr.bf16.mxu0 0
        %1279 = vmatmul.mubr.bf16.gmra.mrb[0].mxu0 %v787
        %v1280 = vpop.f32.mrb[0].mxu0
        %v1281 = vadd.f32 %v1120, %v1280
        %v1282 = vpop.f32.mrb[0].mxu0
        %v1283 = vpop.f32.mrb[0].mxu0
        %v1284 = vadd.f32 %v1123, %v1283
        %v1285 = vpop.f32.mrb[0].mxu0
        %1286 = vmatprep.mubr.bf16.mxu0 0
        %1287 = vmatmul.mubr.bf16.gmra.mrb[0].mxu0 %v790
        %v1288 = vpop.f32.mrb[0].mxu0
        %v1289 = vadd.f32 %v1128, %v1288
        %v1290 = vpop.f32.mrb[0].mxu0
        %v1291 = vpop.f32.mrb[0].mxu0
        %v1292 = vadd.f32 %v1131, %v1291
        %v1293 = vpop.f32.mrb[0].mxu0
        %1294 = vmatprep.mubr.bf16.mxu0 0
        %1295 = vmatmul.mubr.bf16.gmra.mrb[0].mxu0 %v793
        %v1296 = vpop.f32.mrb[0].mxu0
        %v1297 = vadd.f32 %v1136, %v1296
        %v1298 = vpop.f32.mrb[0].mxu0
        %v1299 = vpop.f32.mrb[0].mxu0
        %v1300 = vadd.f32 %v1139, %v1299
        %v1301 = vpop.f32.mrb[0].mxu0
        %1302 = vmatprep.mubr.bf16.mxu0 0
        %1303 = vmatmul.mubr.bf16.gmra.mrb[0].mxu0 %v796
        %v1304 = vpop.f32.mrb[0].mxu0
        %v1305 = vadd.f32 %v1144, %v1304
        %v1306 = vpop.f32.mrb[0].mxu0
        %v1307 = vpop.f32.mrb[0].mxu0
        %v1308 = vadd.f32 %v1147, %v1307
        %v1309 = vpop.f32.mrb[0].mxu0
        %1310 = vdwg.mxu0
        %v1311 = vadd.f32 %v445, %v1185
        %v1312 = vadd.f32 %v446, %v1188
        %v1313 = vadd.f32 %v447, %v1193
        %v1314 = vadd.f32 %v448, %v1196
        %v1315 = vadd.f32 %v449, %v1201
        %v1316 = vadd.f32 %v450, %v1204
        %v1317 = vadd.f32 %v451, %v1209
        %v1318 = vadd.f32 %v452, %v1212
        %v1319 = vadd.f32 %v453, %v1217
        %v1320 = vadd.f32 %v454, %v1220
        %v1321 = vadd.f32 %v455, %v1225
        %v1322 = vadd.f32 %v456, %v1228
        %v1323 = vadd.f32 %v457, %v1233
        %v1324 = vadd.f32 %v458, %v1236
        %v1325 = vadd.f32 %v459, %v1241
        %v1326 = vadd.f32 %v460, %v1244
        %v1327 = vadd.f32 %v461, %v1249
        %v1328 = vadd.f32 %v462, %v1252
        %v1329 = vadd.f32 %v463, %v1257
        %v1330 = vadd.f32 %v464, %v1260
        %v1331 = vadd.f32 %v465, %v1265
        %v1332 = vadd.f32 %v466, %v1268
        %v1333 = vadd.f32 %v467, %v1273
        %v1334 = vadd.f32 %v468, %v1276
        %v1335 = vadd.f32 %v469, %v1281
        %v1336 = vadd.f32 %v470, %v1284
        %v1337 = vadd.f32 %v471, %v1289
        %v1338 = vadd.f32 %v472, %v1292
        %v1339 = vadd.f32 %v473, %v1297
        %v1340 = vadd.f32 %v474, %v1300
        %v1341 = vadd.f32 %v475, %v1305
        %v1342 = vadd.f32 %v476, %v1308
        %1343 = vst [vmem:[#allocation2] sm:$0xff] %v1311
        %1344 = vst [vmem:[#allocation2 + $0x8] sm:$0xff] %v1312
        %1345 = vst [vmem:[#allocation2 + $0x10] sm:$0xff] %v1313
        %1346 = vst [vmem:[#allocation2 + $0x18] sm:$0xff] %v1314
        %1347 = vst [vmem:[#allocation2 + $0x20] sm:$0xff] %v1315
        %1348 = vst [vmem:[#allocation2 + $0x28] sm:$0xff] %v1316
        %1349 = vst [vmem:[#allocation2 + $0x30] sm:$0xff] %v1317
        %1350 = vst [vmem:[#allocation2 + $0x38] sm:$0xff] %v1318
        %1351 = vst [vmem:[#allocation2 + $0x40] sm:$0xff] %v1319
        %1352 = vst [vmem:[#allocation2 + $0x48] sm:$0xff] %v1320
        %1353 = vst [vmem:[#allocation2 + $0x50] sm:$0xff] %v1321
        %1354 = vst [vmem:[#allocation2 + $0x58] sm:$0xff] %v1322
        %1355 = vst [vmem:[#allocation2 + $0x60] sm:$0xff] %v1323
        %1356 = vst [vmem:[#allocation2 + $0x68] sm:$0xff] %v1324
        %1357 = vst [vmem:[#allocation2 + $0x70] sm:$0xff] %v1325
        %1358 = vst [vmem:[#allocation2 + $0x78] sm:$0xff] %v1326
        %1359 = vst [vmem:[#allocation2 + $0x80] sm:$0xff] %v1327
        %1360 = vst [vmem:[#allocation2 + $0x88] sm:$0xff] %v1328
        %1361 = vst [vmem:[#allocation2 + $0x90] sm:$0xff] %v1329
        %1362 = vst [vmem:[#allocation2 + $0x98] sm:$0xff] %v1330
        %1363 = vst [vmem:[#allocation2 + $0xa0] sm:$0xff] %v1331
        %1364 = vst [vmem:[#allocation2 + $0xa8] sm:$0xff] %v1332
        %1365 = vst [vmem:[#allocation2 + $0xb0] sm:$0xff] %v1333
        %1366 = vst [vmem:[#allocation2 + $0xb8] sm:$0xff] %v1334
        %1367 = vst [vmem:[#allocation2 + $0xc0] sm:$0xff] %v1335
        %1368 = vst [vmem:[#allocation2 + $0xc8] sm:$0xff] %v1336
        %1369 = vst [vmem:[#allocation2 + $0xd0] sm:$0xff] %v1337
        %1370 = vst [vmem:[#allocation2 + $0xd8] sm:$0xff] %v1338
        %1371 = vst [vmem:[#allocation2 + $0xe0] sm:$0xff] %v1339
        %1372 = vst [vmem:[#allocation2 + $0xe8] sm:$0xff] %v1340
        %1373 = vst [vmem:[#allocation2 + $0xf0] sm:$0xff] %v1341
        %1374 = vst [vmem:[#allocation2 + $0xf8] sm:$0xff] %v1342
        %p1375 = scmp.eq.s32.totalorder %s21, 2
        // Predicated region
        $region63: #{encoder_hr_forward.8} parent=53 // pred_check
          %p1376 = pneg %p1375
        $region64: #{encoder_hr_forward.8} parent=53 // pred_check_branch
          %1378 = sbr.rel (%p1376) target = $region66
        $region65: #{encoder_hr_forward.8} parent=53 // pred_region
          %v1379 = vld [vmem:[#allocation2] sm:$0xff]
          %v1380 = vld [vmem:[#allocation2 + $0x8] sm:$0xff]
          %v1381 = vld [vmem:[#allocation2 + $0x10] sm:$0xff]
          %v1382 = vld [vmem:[#allocation2 + $0x18] sm:$0xff]
          %v1383 = vld [vmem:[#allocation2 + $0x20] sm:$0xff]
          %v1384 = vld [vmem:[#allocation2 + $0x28] sm:$0xff]
          %v1385 = vld [vmem:[#allocation2 + $0x30] sm:$0xff]
          %v1386 = vld [vmem:[#allocation2 + $0x38] sm:$0xff]
          %v1387 = vld [vmem:[#allocation2 + $0x40] sm:$0xff]
          %v1388 = vld [vmem:[#allocation2 + $0x48] sm:$0xff]
          %v1389 = vld [vmem:[#allocation2 + $0x50] sm:$0xff]
          %v1390 = vld [vmem:[#allocation2 + $0x58] sm:$0xff]
          %v1391 = vld [vmem:[#allocation2 + $0x60] sm:$0xff]
          %v1392 = vld [vmem:[#allocation2 + $0x68] sm:$0xff]
          %v1393 = vld [vmem:[#allocation2 + $0x70] sm:$0xff]
          %v1394 = vld [vmem:[#allocation2 + $0x78] sm:$0xff]
          %v1395 = vld [vmem:[#allocation2 + $0x80] sm:$0xff]
          %v1396 = vld [vmem:[#allocation2 + $0x88] sm:$0xff]
          %v1397 = vld [vmem:[#allocation2 + $0x90] sm:$0xff]
          %v1398 = vld [vmem:[#allocation2 + $0x98] sm:$0xff]
          %v1399 = vld [vmem:[#allocation2 + $0xa0] sm:$0xff]
          %v1400 = vld [vmem:[#allocation2 + $0xa8] sm:$0xff]
          %v1401 = vld [vmem:[#allocation2 + $0xb0] sm:$0xff]
          %v1402 = vld [vmem:[#allocation2 + $0xb8] sm:$0xff]
          %v1403 = vld [vmem:[#allocation2 + $0xc0] sm:$0xff]
          %v1404 = vld [vmem:[#allocation2 + $0xc8] sm:$0xff]
          %v1405 = vld [vmem:[#allocation2 + $0xd0] sm:$0xff]
          %v1406 = vld [vmem:[#allocation2 + $0xd8] sm:$0xff]
          %v1407 = vld [vmem:[#allocation2 + $0xe0] sm:$0xff]
          %v1408 = vld [vmem:[#allocation2 + $0xe8] sm:$0xff]
          %v1409 = vld [vmem:[#allocation2 + $0xf0] sm:$0xff]
          %v1410 = vld [vmem:[#allocation2 + $0xf8] sm:$0xff]
          %v1411 = vld [vmem:[%s398] sm:$0x1]
          %v1413 = vlaneseq
          %v1414 = vshrl.u32 %v1413, 7
          %v1415 = vsub.s32 0, %v1414
          %v1416 = vrot.slane %v1411, %v1415
          %v1418 = vadd.f32 %v1379, %v1416
          %v1419 = vadd.f32 %v1380, %v1416
          %v1420 = vadd.f32 %v1381, %v1416
          %v1421 = vadd.f32 %v1382, %v1416
          %v1422 = vadd.f32 %v1383, %v1416
          %v1423 = vadd.f32 %v1384, %v1416
          %v1424 = vadd.f32 %v1385, %v1416
          %v1425 = vadd.f32 %v1386, %v1416
          %v1426 = vadd.f32 %v1387, %v1416
          %v1427 = vadd.f32 %v1388, %v1416
          %v1428 = vadd.f32 %v1389, %v1416
          %v1429 = vadd.f32 %v1390, %v1416
          %v1430 = vadd.f32 %v1391, %v1416
          %v1431 = vadd.f32 %v1392, %v1416
          %v1432 = vadd.f32 %v1393, %v1416
          %v1433 = vadd.f32 %v1394, %v1416
          %v1434 = vadd.f32 %v1395, %v1416
          %v1435 = vadd.f32 %v1396, %v1416
          %v1436 = vadd.f32 %v1397, %v1416
          %v1437 = vadd.f32 %v1398, %v1416
          %v1438 = vadd.f32 %v1399, %v1416
          %v1439 = vadd.f32 %v1400, %v1416
          %v1440 = vadd.f32 %v1401, %v1416
          %v1441 = vadd.f32 %v1402, %v1416
          %v1442 = vadd.f32 %v1403, %v1416
          %v1443 = vadd.f32 %v1404, %v1416
          %v1444 = vadd.f32 %v1405, %v1416
          %v1445 = vadd.f32 %v1406, %v1416
          %v1446 = vadd.f32 %v1407, %v1416
          %v1447 = vadd.f32 %v1408, %v1416
          %v1448 = vadd.f32 %v1409, %v1416
          %v1449 = vadd.f32 %v1410, %v1416
          %vm1450 = vcmp.ge.f32.partialorder %v1418, 0.0
          %vm1451 = vcmp.ge.f32.partialorder %v1419, 0.0
          %vm1452 = vcmp.ge.f32.partialorder %v1420, 0.0
          %vm1453 = vcmp.ge.f32.partialorder %v1421, 0.0
          %vm1454 = vcmp.ge.f32.partialorder %v1422, 0.0
          %vm1455 = vcmp.ge.f32.partialorder %v1423, 0.0
          %vm1456 = vcmp.ge.f32.partialorder %v1424, 0.0
          %vm1457 = vcmp.ge.f32.partialorder %v1425, 0.0
          %vm1458 = vcmp.ge.f32.partialorder %v1426, 0.0
          %vm1459 = vcmp.ge.f32.partialorder %v1427, 0.0
          %vm1460 = vcmp.ge.f32.partialorder %v1428, 0.0
          %vm1461 = vcmp.ge.f32.partialorder %v1429, 0.0
          %vm1462 = vcmp.ge.f32.partialorder %v1430, 0.0
          %vm1463 = vcmp.ge.f32.partialorder %v1431, 0.0
          %vm1464 = vcmp.ge.f32.partialorder %v1432, 0.0
          %vm1465 = vcmp.ge.f32.partialorder %v1433, 0.0
          %vm1466 = vcmp.ge.f32.partialorder %v1434, 0.0
          %vm1467 = vcmp.ge.f32.partialorder %v1435, 0.0
          %vm1468 = vcmp.ge.f32.partialorder %v1436, 0.0
          %vm1469 = vcmp.ge.f32.partialorder %v1437, 0.0
          %vm1470 = vcmp.ge.f32.partialorder %v1438, 0.0
          %vm1471 = vcmp.ge.f32.partialorder %v1439, 0.0
          %vm1472 = vcmp.ge.f32.partialorder %v1440, 0.0
          %vm1473 = vcmp.ge.f32.partialorder %v1441, 0.0
          %vm1474 = vcmp.ge.f32.partialorder %v1442, 0.0
          %vm1475 = vcmp.ge.f32.partialorder %v1443, 0.0
          %vm1476 = vcmp.ge.f32.partialorder %v1444, 0.0
          %vm1477 = vcmp.ge.f32.partialorder %v1445, 0.0
          %vm1478 = vcmp.ge.f32.partialorder %v1446, 0.0
          %vm1479 = vcmp.ge.f32.partialorder %v1447, 0.0
          %vm1480 = vcmp.ge.f32.partialorder %v1448, 0.0
          %vm1481 = vcmp.ge.f32.partialorder %v1449, 0.0
          %v1482 = vmul.f32 %v1418, 0.1
          %v1483 = vmul.f32 %v1419, 0.1
          %v1484 = vmul.f32 %v1420, 0.1
          %v1485 = vmul.f32 %v1421, 0.1
          %v1486 = vmul.f32 %v1422, 0.1
          %v1487 = vmul.f32 %v1423, 0.1
          %v1488 = vmul.f32 %v1424, 0.1
          %v1489 = vmul.f32 %v1425, 0.1
          %v1490 = vmul.f32 %v1426, 0.1
          %v1491 = vmul.f32 %v1427, 0.1
          %v1492 = vmul.f32 %v1428, 0.1
          %v1493 = vmul.f32 %v1429, 0.1
          %v1494 = vmul.f32 %v1430, 0.1
          %v1495 = vmul.f32 %v1431, 0.1
          %v1496 = vmul.f32 %v1432, 0.1
          %v1497 = vmul.f32 %v1433, 0.1
          %v1498 = vmul.f32 %v1434, 0.1
          %v1499 = vmul.f32 %v1435, 0.1
          %v1500 = vmul.f32 %v1436, 0.1
          %v1501 = vmul.f32 %v1437, 0.1
          %v1502 = vmul.f32 %v1438, 0.1
          %v1503 = vmul.f32 %v1439, 0.1
          %v1504 = vmul.f32 %v1440, 0.1
          %v1505 = vmul.f32 %v1441, 0.1
          %v1506 = vmul.f32 %v1442, 0.1
          %v1507 = vmul.f32 %v1443, 0.1
          %v1508 = vmul.f32 %v1444, 0.1
          %v1509 = vmul.f32 %v1445, 0.1
          %v1510 = vmul.f32 %v1446, 0.1
          %v1511 = vmul.f32 %v1447, 0.1
          %v1512 = vmul.f32 %v1448, 0.1
          %v1513 = vmul.f32 %v1449, 0.1
          %v1514 = vsel %vm1450, %v1418, %v1482
          %v1515 = vsel %vm1451, %v1419, %v1483
          %v1516 = vsel %vm1452, %v1420, %v1484
          %v1517 = vsel %vm1453, %v1421, %v1485
          %v1518 = vsel %vm1454, %v1422, %v1486
          %v1519 = vsel %vm1455, %v1423, %v1487
          %v1520 = vsel %vm1456, %v1424, %v1488
          %v1521 = vsel %vm1457, %v1425, %v1489
          %v1522 = vsel %vm1458, %v1426, %v1490
          %v1523 = vsel %vm1459, %v1427, %v1491
          %v1524 = vsel %vm1460, %v1428, %v1492
          %v1525 = vsel %vm1461, %v1429, %v1493
          %v1526 = vsel %vm1462, %v1430, %v1494
          %v1527 = vsel %vm1463, %v1431, %v1495
          %v1528 = vsel %vm1464, %v1432, %v1496
          %v1529 = vsel %vm1465, %v1433, %v1497
          %v1530 = vsel %vm1466, %v1434, %v1498
          %v1531 = vsel %vm1467, %v1435, %v1499
          %v1532 = vsel %vm1468, %v1436, %v1500
          %v1533 = vsel %vm1469, %v1437, %v1501
          %v1534 = vsel %vm1470, %v1438, %v1502
          %v1535 = vsel %vm1471, %v1439, %v1503
          %v1536 = vsel %vm1472, %v1440, %v1504
          %v1537 = vsel %vm1473, %v1441, %v1505
          %v1538 = vsel %vm1474, %v1442, %v1506
          %v1539 = vsel %vm1475, %v1443, %v1507
          %v1540 = vsel %vm1476, %v1444, %v1508
          %v1541 = vsel %vm1477, %v1445, %v1509
          %v1542 = vsel %vm1478, %v1446, %v1510
          %v1543 = vsel %vm1479, %v1447, %v1511
          %v1544 = vsel %vm1480, %v1448, %v1512
          %v1545 = vsel %vm1481, %v1449, %v1513
          %v1546 = vpack.c.bf16 %v1515, %v1514
          %v1547 = vpack.c.bf16 %v1517, %v1516
          %v1548 = vpack.c.bf16 %v1519, %v1518
          %v1549 = vpack.c.bf16 %v1521, %v1520
          %v1550 = vpack.c.bf16 %v1523, %v1522
          %v1551 = vpack.c.bf16 %v1525, %v1524
          %v1552 = vpack.c.bf16 %v1527, %v1526
          %v1553 = vpack.c.bf16 %v1529, %v1528
          %v1554 = vpack.c.bf16 %v1531, %v1530
          %v1555 = vpack.c.bf16 %v1533, %v1532
          %v1556 = vpack.c.bf16 %v1535, %v1534
          %v1557 = vpack.c.bf16 %v1537, %v1536
          %v1558 = vpack.c.bf16 %v1539, %v1538
          %v1559 = vpack.c.bf16 %v1541, %v1540
          %v1560 = vpack.c.bf16 %v1543, %v1542
          %v1561 = vpack.c.bf16 %v1545, %v1544
          %v1578 = vunpack.c.l.b16 %v1546
          %v1579 = vunpack.c.h.b16 %v1546
          %v1580 = vunpack.c.l.b16 %v1547
          %v1581 = vunpack.c.h.b16 %v1547
          %v1582 = vunpack.c.l.b16 %v1548
          %v1583 = vunpack.c.h.b16 %v1548
          %v1584 = vunpack.c.l.b16 %v1549
          %v1585 = vunpack.c.h.b16 %v1549
          %v1586 = vunpack.c.l.b16 %v1550
          %v1587 = vunpack.c.h.b16 %v1550
          %v1588 = vunpack.c.l.b16 %v1551
          %v1589 = vunpack.c.h.b16 %v1551
          %v1590 = vunpack.c.l.b16 %v1552
          %v1591 = vunpack.c.h.b16 %v1552
          %v1592 = vunpack.c.l.b16 %v1553
          %v1593 = vunpack.c.h.b16 %v1553
          %v1594 = vunpack.c.l.b16 %v1554
          %v1595 = vunpack.c.h.b16 %v1554
          %v1596 = vunpack.c.l.b16 %v1555
          %v1597 = vunpack.c.h.b16 %v1555
          %v1598 = vunpack.c.l.b16 %v1556
          %v1599 = vunpack.c.h.b16 %v1556
          %v1600 = vunpack.c.l.b16 %v1557
          %v1601 = vunpack.c.h.b16 %v1557
          %v1602 = vunpack.c.l.b16 %v1558
          %v1603 = vunpack.c.h.b16 %v1558
          %v1604 = vunpack.c.l.b16 %v1559
          %v1605 = vunpack.c.h.b16 %v1559
          %v1606 = vunpack.c.l.b16 %v1560
          %v1607 = vunpack.c.h.b16 %v1560
          %v1608 = vunpack.c.l.b16 %v1561
          %v1609 = vunpack.c.h.b16 %v1561
          %v1610 = vpack.c.b16 %v1578, %v1578
          %v1611 = vpack.c.b16 %v1579, %v1579
          %v1612 = vpack.c.b16 %v1580, %v1580
          %v1613 = vpack.c.b16 %v1581, %v1581
          %v1614 = vpack.c.b16 %v1582, %v1582
          %v1615 = vpack.c.b16 %v1583, %v1583
          %v1616 = vpack.c.b16 %v1584, %v1584
          %v1617 = vpack.c.b16 %v1585, %v1585
          %v1618 = vpack.c.b16 %v1586, %v1586
          %v1619 = vpack.c.b16 %v1587, %v1587
          %v1620 = vpack.c.b16 %v1588, %v1588
          %v1621 = vpack.c.b16 %v1589, %v1589
          %v1622 = vpack.c.b16 %v1590, %v1590
          %v1623 = vpack.c.b16 %v1591, %v1591
          %v1624 = vpack.c.b16 %v1592, %v1592
          %v1625 = vpack.c.b16 %v1593, %v1593
          %v1626 = vpack.c.b16 %v1594, %v1594
          %v1627 = vpack.c.b16 %v1595, %v1595
          %v1628 = vpack.c.b16 %v1596, %v1596
          %v1629 = vpack.c.b16 %v1597, %v1597
          %v1630 = vpack.c.b16 %v1598, %v1598
          %v1631 = vpack.c.b16 %v1599, %v1599
          %v1632 = vpack.c.b16 %v1600, %v1600
          %v1633 = vpack.c.b16 %v1601, %v1601
          %v1634 = vpack.c.b16 %v1602, %v1602
          %v1635 = vpack.c.b16 %v1603, %v1603
          %v1636 = vpack.c.b16 %v1604, %v1604
          %v1637 = vpack.c.b16 %v1605, %v1605
          %v1638 = vpack.c.b16 %v1606, %v1606
          %v1639 = vpack.c.b16 %v1607, %v1607
          %v1640 = vpack.c.b16 %v1608, %v1608
          %v1641 = vpack.c.b16 %v1609, %v1609
          %1674 = vst [vmem:[%s406] sm:$0xf] %v1610
          %1675 = vst [vmem:[%s406 + $0x4] sm:$0xf] %v1611
          %1676 = vst [vmem:[%s406 + $0x8] sm:$0xf] %v1612
          %1677 = vst [vmem:[%s406 + $0xc] sm:$0xf] %v1613
          %1678 = vst [vmem:[%s406 + $0x10] sm:$0xf] %v1614
          %1679 = vst [vmem:[%s406 + $0x14] sm:$0xf] %v1615
          %1680 = vst [vmem:[%s406 + $0x18] sm:$0xf] %v1616
          %1681 = vst [vmem:[%s406 + $0x1c] sm:$0xf] %v1617
          %1682 = vst [vmem:[%s406 + $0x20] sm:$0xf] %v1618
          %1683 = vst [vmem:[%s406 + $0x24] sm:$0xf] %v1619
          %1684 = vst [vmem:[%s406 + $0x28] sm:$0xf] %v1620
          %1685 = vst [vmem:[%s406 + $0x2c] sm:$0xf] %v1621
          %1686 = vst [vmem:[%s406 + $0x30] sm:$0xf] %v1622
          %1687 = vst [vmem:[%s406 + $0x34] sm:$0xf] %v1623
          %1688 = vst [vmem:[%s406 + $0x38] sm:$0xf] %v1624
          %1689 = vst [vmem:[%s406 + $0x3c] sm:$0xf] %v1625
          %1690 = vst [vmem:[%s406 + $0x40] sm:$0xf] %v1626
          %1691 = vst [vmem:[%s406 + $0x44] sm:$0xf] %v1627
          %1692 = vst [vmem:[%s406 + $0x48] sm:$0xf] %v1628
          %1693 = vst [vmem:[%s406 + $0x4c] sm:$0xf] %v1629
          %1694 = vst [vmem:[%s406 + $0x50] sm:$0xf] %v1630
          %1695 = vst [vmem:[%s406 + $0x54] sm:$0xf] %v1631
          %1696 = vst [vmem:[%s406 + $0x58] sm:$0xf] %v1632
          %1697 = vst [vmem:[%s406 + $0x5c] sm:$0xf] %v1633
          %1698 = vst [vmem:[%s406 + $0x60] sm:$0xf] %v1634
          %1699 = vst [vmem:[%s406 + $0x64] sm:$0xf] %v1635
          %1700 = vst [vmem:[%s406 + $0x68] sm:$0xf] %v1636
          %1701 = vst [vmem:[%s406 + $0x6c] sm:$0xf] %v1637
          %1702 = vst [vmem:[%s406 + $0x70] sm:$0xf] %v1638
          %1703 = vst [vmem:[%s406 + $0x74] sm:$0xf] %v1639
          %1704 = vst [vmem:[%s406 + $0x78] sm:$0xf] %v1640
          %1705 = vst [vmem:[%s406 + $0x7c] sm:$0xf] %v1641
        $region66: #{encoder_hr_forward.8} parent=53 // pred_fallthru
          _
        %s1706 = smul.u32 32, %s19
        %p1707 = scmp.lt.s32.totalorder %s1706, 63
        %s1708 = scalar_select %p1707, %s1706, 63
        %p1709 = scmp.lt.s32.totalorder %s20, 0
        %s1710 = scalar_select %p1709, %s20, 0
        %s1711 = sadd.s32 %s1710, %s1708
        %s1712 = smul.addr %s1711, 4
        %s1713 = scalar_lea.vmem %s3, %s1712
        // Predicated region
        $region67: #{encoder_hr_forward.8} parent=53 // pred_check
          %p1714 = pneg %p135
        $region68: #{encoder_hr_forward.8} parent=53 // pred_check_branch
          %1716 = sbr.rel (%p1714) target = $region70
        $region69: #{encoder_hr_forward.8} parent=53 // pred_region
          %s1717 = smul.u32 32, %s19
        $region70: #{encoder_hr_forward.8} parent=53 // pred_fallthru
          _
      $region54: #{encoder_hr_forward.8} parent=5 // pred_fallthru
        _
      %p1718 = scmp.le.s32.totalorder 2, %s9
      // Predicated region
      $region71: #{encoder_hr_forward.8} parent=5 // pred_check
        %p1719 = pneg %p1718
      $region72: #{encoder_hr_forward.8} parent=5 // pred_check_branch
        %1721 = sbr.rel (%p1719) target = $region74
      $region73: #{encoder_hr_forward.8} parent=5 // pred_region
        %s1722 = ssub.s32 %s9, 2
        // Predicated region
        $region75: #{encoder_hr_forward.8} parent=73 // pred_check
          %p1723 = pneg %p141
        $region76: #{encoder_hr_forward.8} parent=73 // pred_check_branch
          %1725 = sbr.rel (%p1723) target = $region78
        $region77: #{encoder_hr_forward.8} parent=73 // pred_region
          %s1726 = smul.u32 32, %s22
          %p1727 = scmp.lt.s32.totalorder %s1726, 63
          %s1728 = scalar_select %p1727, %s1726, 63
          %p1729 = scmp.lt.s32.totalorder %s23, 0
          %s1730 = scalar_select %p1729, %s23, 0
          %s1731 = sadd.s32 %s1730, %s1728
          %s1732 = smul.addr %s1731, 4
          %s1733 = scalar_lea.vmem %s3, %s1732
        $region78: #{encoder_hr_forward.8} parent=73 // pred_fallthru
          _
      $region74: #{encoder_hr_forward.8} parent=5 // pred_fallthru
        _
    $region6: #{encoder_hr_forward.8} parent=1 // loop_footer
      %s13 = sadd.s32 1, %s9
    $region7: #{encoder_hr_forward.8} parent=1 // loop_footer_branch
      %8 = sbr.rel target = $region3
    $region8: #{encoder_hr_forward.8} parent=1 // loop_exit
      _

// kernel: encoder_hr_forward.9
$region0: #{encoder_hr_forward.9}
  #allocation0 [shape = 'u32[]', space=smem, size = 0x4, offset = 0x4, fixed_abs, tag = 'smem constant byte address 0x4 - core index']
  #allocation1 [shape = 'u32[144,128]{1,0:T(1,128)}', space=vmem, size = 0x12000, scoped, tag = 'internal scratch']
  #allocation2 [shape = 'f32[128,128]{1,0:T(8,128)}', space=vmem, size = 0x10000, scoped, tag = 'scratch operand']
  %s0 = inlined_call_operand.vmem [shape: bf16[128,1152], index: 0, kind: input, shape index: {}]
  %s1 = inlined_call_operand.vmem [shape: bf16[1152,128], index: 1, kind: input, shape index: {}]
  %s2 = inlined_call_operand.vmem [shape: f32[1,128], index: 2, kind: input, shape index: {}]
  %s3 = inlined_call_operand.vmem [shape: bf16[128,128], index: 3, kind: output, shape index: {}]
  %s4 = sld [smem:[#allocation0]]
  $region79: #{encoder_hr_forward.9} parent=0
    _
  %s6 = ssub.s32 1, %s4
  %s7 = scalar_select 0, %s6, %s4
  $region1: #{encoder_hr_forward.9} parent=0
    #allocation3 [shape = 'u8[196608]{0}', space=vmem, size = 0x30000, scoped, tag = 'input window, operand 0']
    loop: start=0, step=1, limit=5
    $region2: #{encoder_hr_forward.9} parent=1 // loop_pre_header
      _
    $region3: #{encoder_hr_forward.9} parent=1 // loop_header
      %s9 = sphi 0, %s13
      %p10 = scmp.ge.s32.totalorder %s9, 5
      %s16 = sphi 0, %s35
      %s17 = sphi 0, %s31
      %s18 = sphi 0, %s27
      %s19 = sphi 0, %s16
      %s20 = sphi 0, %s17
      %s21 = sphi 0, %s18
      %s22 = sphi 0, %s19
      %s23 = sphi 0, %s20
      %s24 = sphi 0, %s21
      %s40 = sphi 0, %s42
      %s43 = sphi 0, %s40
      %s44 = sphi 0, %s43
      %s60 = sphi 0, %s44
      %s68 = sphi 0, %s70
      %s71 = sphi 0, %s68
      %s72 = sphi 0, %s71
      %s88 = sphi 0, %s72
      %s94 = sphi 0, %s96
      %s97 = sphi 0, %s94
      %s98 = sphi 0, %s97
      %s114 = sphi 0, %s98
      %s122 = sphi 0, %s124
      %s125 = sphi 0, %s122
      %s126 = sphi 0, %s125
      %s142 = sphi 0, %s126
    $region4: #{encoder_hr_forward.9} parent=1 // loop_header_branch
      %12 = sbr.rel (%p10) target = $region8
    $region5: #{encoder_hr_forward.9} parent=1 // loop_body
      %s14 = ssub.s32 %s9, 1
      %s15 = ssub.s32 %s9, 2
      %s25 = sadd.s32 1, %s18
      %p26 = scmp.ge.s32.totalorder %s25, 3
      %s27 = scalar_select %p26, 0, %s25
      %s28 = sadd.s32 1, %s17
      %s29 = scalar_select %p26, %s28, %s17
      %p30 = scmp.ge.s32.totalorder %s29, 1
      %s31 = scalar_select %p30, 0, %s29
      %s32 = sadd.s32 1, %s16
      %s33 = scalar_select %p30, %s32, %s16
      %p34 = scmp.ge.s32.totalorder %s33, 1
      %s35 = scalar_select %p34, 0, %s33
      %s36 = ssub.s32 %s16, %s35
      %s37 = ssub.s32 %s18, %s27
      %s38 = sor.u32 %s36, %s37
      %p39 = scmp.eq.s32.totalorder %s38, 0
      %s41 = sadd.s32 %s40, 1
      %s42 = scalar_select %p39, %s40, %s41
      %p45 = pneg %p39
      %p46 = scmp.eq.s32.totalorder %s9, 2
      %p47 = por %p45, %p46
      %p48 = scmp.ne.s32.totalorder %s40, %s43
      %p49 = scmp.eq.s32.totalorder %s9, 0
      %p50 = por %p48, %p49
      %p51 = scmp.ne.s32.totalorder %s40, %s43
      %p52 = scmp.eq.s32.totalorder %s14, 2
      %p53 = por %p51, %p52
      %p54 = scmp.ne.s32.totalorder %s43, %s44
      %p55 = scmp.eq.s32.totalorder %s14, 0
      %p56 = por %p54, %p55
      %p57 = scmp.ne.s32.totalorder %s43, %s44
      %p58 = scmp.eq.s32.totalorder %s15, 2
      %p59 = por %p57, %p58
      %p61 = scmp.ne.s32.totalorder %s44, %s60
      %p62 = scmp.eq.s32.totalorder %s15, 0
      %p63 = por %p61, %p62
      %s64 = ssub.s32 %s18, %s27
      %s65 = ssub.s32 %s17, %s31
      %s66 = sor.u32 %s64, %s65
      %p67 = scmp.eq.s32.totalorder %s66, 0
      %s69 = sadd.s32 %s68, 1
      %s70 = scalar_select %p67, %s68, %s69
      %p73 = pneg %p67
      %p74 = scmp.eq.s32.totalorder %s9, 2
      %p75 = por %p73, %p74
      %p76 = scmp.ne.s32.totalorder %s68, %s71
      %p77 = scmp.eq.s32.totalorder %s9, 0
      %p78 = por %p76, %p77
      %p79 = scmp.ne.s32.totalorder %s68, %s71
      %p80 = scmp.eq.s32.totalorder %s14, 2
      %p81 = por %p79, %p80
      %p82 = scmp.ne.s32.totalorder %s71, %s72
      %p83 = scmp.eq.s32.totalorder %s14, 0
      %p84 = por %p82, %p83
      %p85 = scmp.ne.s32.totalorder %s71, %s72
      %p86 = scmp.eq.s32.totalorder %s15, 2
      %p87 = por %p85, %p86
      %p89 = scmp.ne.s32.totalorder %s72, %s88
      %p90 = scmp.eq.s32.totalorder %s15, 0
      %p91 = por %p89, %p90
      %s92 = ssub.s32 %s17, %s31
      %p93 = scmp.eq.s32.totalorder %s92, 0
      %s95 = sadd.s32 %s94, 1
      %s96 = scalar_select %p93, %s94, %s95
      %p99 = pneg %p93
      %p100 = scmp.eq.s32.totalorder %s9, 2
      %p101 = por %p99, %p100
      %p102 = scmp.ne.s32.totalorder %s94, %s97
      %p103 = scmp.eq.s32.totalorder %s9, 0
      %p104 = por %p102, %p103
      %p105 = scmp.ne.s32.totalorder %s94, %s97
      %p106 = scmp.eq.s32.totalorder %s14, 2
      %p107 = por %p105, %p106
      %p108 = scmp.ne.s32.totalorder %s97, %s98
      %p109 = scmp.eq.s32.totalorder %s14, 0
      %p110 = por %p108, %p109
      %p111 = scmp.ne.s32.totalorder %s97, %s98
      %p112 = scmp.eq.s32.totalorder %s15, 2
      %p113 = por %p111, %p112
      %p115 = scmp.ne.s32.totalorder %s98, %s114
      %p116 = scmp.eq.s32.totalorder %s15, 0
      %p117 = por %p115, %p116
      %s118 = ssub.s32 %s16, %s35
      %s119 = ssub.s32 %s17, %s31
      %s120 = sor.u32 %s118, %s119
      %p121 = scmp.eq.s32.totalorder %s120, 0
      %s123 = sadd.s32 %s122, 1
      %s124 = scalar_select %p121, %s122, %s123
      %p127 = pneg %p121
      %p128 = scmp.eq.s32.totalorder %s9, 2
      %p129 = por %p127, %p128
      %p130 = scmp.ne.s32.totalorder %s122, %s125
      %p131 = scmp.eq.s32.totalorder %s9, 0
      %p132 = por %p130, %p131
      %p133 = scmp.ne.s32.totalorder %s122, %s125
      %p134 = scmp.eq.s32.totalorder %s14, 2
      %p135 = por %p133, %p134
      %p136 = scmp.ne.s32.totalorder %s125, %s126
      %p137 = scmp.eq.s32.totalorder %s14, 0
      %p138 = por %p136, %p137
      %p139 = scmp.ne.s32.totalorder %s125, %s126
      %p140 = scmp.eq.s32.totalorder %s15, 2
      %p141 = por %p139, %p140
      %p143 = scmp.ne.s32.totalorder %s126, %s142
      %p144 = scmp.eq.s32.totalorder %s15, 0
      %p145 = por %p143, %p144
      %p146 = scmp.le.s32.totalorder 1, %s9
      %p147 = scmp.lt.s32.totalorder %s9, 4
      %p148 = pnand %p146, %p147
      %p149 = pneg %p148
      // Predicated region
      $region9: #{encoder_hr_forward.9} parent=5 // pred_check
        _
      $region10: #{encoder_hr_forward.9} parent=5 // pred_check_branch
        %151 = sbr.rel (%p148) target = $region12
      $region11: #{encoder_hr_forward.9} parent=5 // pred_region
        %s152 = ssub.s32 %s9, 1
        // Predicated region
        $region13: #{encoder_hr_forward.9} parent=11 // pred_check
          %p153 = pneg %p110
        $region14: #{encoder_hr_forward.9} parent=11 // pred_check_branch
          %155 = sbr.rel (%p153) target = $region16
        $region15: #{encoder_hr_forward.9} parent=11 // pred_region
          %p156 = scmp.lt.s32.totalorder %s20, 0
          %s157 = scalar_select %p156, %s20, 0
          %s158 = scalar_lea.vmem %s2, %s157
        $region16: #{encoder_hr_forward.9} parent=11 // pred_fallthru
          _
      $region12: #{encoder_hr_forward.9} parent=5 // pred_fallthru
        _
      %p159 = scmp.lt.s32.totalorder %s9, 3
      // Predicated region
      $region17: #{encoder_hr_forward.9} parent=5 // pred_check
        %p160 = pneg %p159
      $region18: #{encoder_hr_forward.9} parent=5 // pred_check_branch
        %162 = sbr.rel (%p160) target = $region20
      $region19: #{encoder_hr_forward.9} parent=5 // pred_region
        // Predicated region
        $region21: #{encoder_hr_forward.9} parent=19 // pred_check
          %p163 = pneg %p50
        $region22: #{encoder_hr_forward.9} parent=19 // pred_check_branch
          %165 = sbr.rel (%p163) target = $region24
        $region23: #{encoder_hr_forward.9} parent=19 // pred_region
          %s166 = sand.u32 %s40, 1
          %s167 = sand.u32 %s40, 1
          %s168 = smul.addr %s167, 192
          %s169 = scalar_lea.vmem [#allocation3], %s168
          %s170 = smul.u32 16, %s16
          %s171 = smul.u32 3, %s18
          %s172 = smul.addr %s170, 9
          %s173 = sadd.s32 %s171, %s172
          %s174 = smul.addr %s173, 4
          %s175 = scalar_lea.vmem %s0, %s174
          // Predicated region
          $region25: #{encoder_hr_forward.9} parent=23 // pred_check
            _
          $region26: #{encoder_hr_forward.9} parent=23 // pred_check_branch
            %177 = sbr.rel (0) target = $region28
          $region27: #{encoder_hr_forward.9} parent=23 // pred_region
            // Predicated region
            $region29: #{encoder_hr_forward.9} parent=27 // pred_check
              _
            $region30: #{encoder_hr_forward.9} parent=27 // pred_check_branch
              %179 = sbr.rel (0) target = $region32
            $region31: #{encoder_hr_forward.9} parent=27 // pred_region
              %s180 = scalar_lea.vmem %s175, 8
              %s181 = scalar_lea.vmem %s169, 8 [#allocation3]
              loop: start=0, step=1, limit=1
              $region33: #{encoder_hr_forward.9} parent=31 // loop_pre_header
                _
              $region34: #{encoder_hr_forward.9} parent=31 // loop_header
                %s183 = sphi 0, %s187
                %p184 = scmp.ge.s32.totalorder %s183, 1
                %s188 = sphi %s175, %s175
                %s189 = sphi %s169, %s169
              $region35: #{encoder_hr_forward.9} parent=31 // loop_header_branch
                %186 = sbr.rel (%p184) target = $region39
              $region36: #{encoder_hr_forward.9} parent=31 // loop_body
                %v190 = vld [vmem:[%s188] sm:$0xff]
                %191 = vst [vmem:[%s189] sm:$0xff] %v190
                %v192 = vld [vmem:[%s188 + $0x24] sm:$0xff]
                %193 = vst [vmem:[%s189 + $0xc] sm:$0xff] %v192
                %v194 = vld [vmem:[%s188 + $0x48] sm:$0xff]
                %195 = vst [vmem:[%s189 + $0x18] sm:$0xff] %v194
                %v196 = vld [vmem:[%s188 + $0x6c] sm:$0xff]
                %197 = vst [vmem:[%s189 + $0x24] sm:$0xff] %v196
                %v198 = vld [vmem:[%s188 + $0x90] sm:$0xff]
                %199 = vst [vmem:[%s189 + $0x30] sm:$0xff] %v198
                %v200 = vld [vmem:[%s188 + $0xb4] sm:$0xff]
                %201 = vst [vmem:[%s189 + $0x3c] sm:$0xff] %v200
                %v202 = vld [vmem:[%s188 + $0xd8] sm:$0xff]
                %203 = vst [vmem:[%s189 + $0x48] sm:$0xff] %v202
                %v204 = vld [vmem:[%s188 + $0xfc] sm:$0xff]
                %205 = vst [vmem:[%s189 + $0x54] sm:$0xff] %v204
                %v206 = vld [vmem:[%s188 + $0x120] sm:$0xff]
                %207 = vst [vmem:[%s189 + $0x60] sm:$0xff] %v206
                %v208 = vld [vmem:[%s188 + $0x144] sm:$0xff]
                %209 = vst [vmem:[%s189 + $0x6c] sm:$0xff] %v208
                %v210 = vld [vmem:[%s188 + $0x168] sm:$0xff]
                %211 = vst [vmem:[%s189 + $0x78] sm:$0xff] %v210
                %v212 = vld [vmem:[%s188 + $0x18c] sm:$0xff]
                %213 = vst [vmem:[%s189 + $0x84] sm:$0xff] %v212
                %v214 = vld [vmem:[%s188 + $0x1b0] sm:$0xff]
                %215 = vst [vmem:[%s189 + $0x90] sm:$0xff] %v214
                %v216 = vld [vmem:[%s188 + $0x1d4] sm:$0xff]
                %217 = vst [vmem:[%s189 + $0x9c] sm:$0xff] %v216
                %v218 = vld [vmem:[%s188 + $0x1f8] sm:$0xff]
                %219 = vst [vmem:[%s189 + $0xa8] sm:$0xff] %v218
                %v220 = vld [vmem:[%s188 + $0x21c] sm:$0xff]
                %221 = vst [vmem:[%s189 + $0xb4] sm:$0xff] %v220
              $region37: #{encoder_hr_forward.9} parent=31 // loop_footer
                %s187 = sadd.s32 1, %s183
              $region38: #{encoder_hr_forward.9} parent=31 // loop_footer_branch
                %182 = sbr.rel target = $region34
              $region39: #{encoder_hr_forward.9} parent=31 // loop_exit
                _
              loop: start=0, step=1, limit=1
              $region40: #{encoder_hr_forward.9} parent=31 // loop_pre_header
                _
              $region41: #{encoder_hr_forward.9} parent=31 // loop_header
                %s224 = sphi 0, %s228
                %p225 = scmp.ge.s32.totalorder %s224, 1
                %s229 = sphi %s180, %s180
                %s230 = sphi %s181, %s181
              $region42: #{encoder_hr_forward.9} parent=31 // loop_header_branch
                %227 = sbr.rel (%p225) target = $region46
              $region43: #{encoder_hr_forward.9} parent=31 // loop_body
                %v231 = vld [vmem:[%s229] sm:$0xf]
                %232 = vst [vmem:[%s230] sm:$0xf] %v231
                %v233 = vld [vmem:[%s229 + $0x24] sm:$0xf]
                %234 = vst [vmem:[%s230 + $0xc] sm:$0xf] %v233
                %v235 = vld [vmem:[%s229 + $0x48] sm:$0xf]
                %236 = vst [vmem:[%s230 + $0x18] sm:$0xf] %v235
                %v237 = vld [vmem:[%s229 + $0x6c] sm:$0xf]
                %238 = vst [vmem:[%s230 + $0x24] sm:$0xf] %v237
                %v239 = vld [vmem:[%s229 + $0x90] sm:$0xf]
                %240 = vst [vmem:[%s230 + $0x30] sm:$0xf] %v239
                %v241 = vld [vmem:[%s229 + $0xb4] sm:$0xf]
                %242 = vst [vmem:[%s230 + $0x3c] sm:$0xf] %v241
                %v243 = vld [vmem:[%s229 + $0xd8] sm:$0xf]
                %244 = vst [vmem:[%s230 + $0x48] sm:$0xf] %v243
                %v245 = vld [vmem:[%s229 + $0xfc] sm:$0xf]
                %246 = vst [vmem:[%s230 + $0x54] sm:$0xf] %v245
                %v247 = vld [vmem:[%s229 + $0x120] sm:$0xf]
                %248 = vst [vmem:[%s230 + $0x60] sm:$0xf] %v247
                %v249 = vld [vmem:[%s229 + $0x144] sm:$0xf]
                %250 = vst [vmem:[%s230 + $0x6c] sm:$0xf] %v249
                %v251 = vld [vmem:[%s229 + $0x168] sm:$0xf]
                %252 = vst [vmem:[%s230 + $0x78] sm:$0xf] %v251
                %v253 = vld [vmem:[%s229 + $0x18c] sm:$0xf]
                %254 = vst [vmem:[%s230 + $0x84] sm:$0xf] %v253
                %v255 = vld [vmem:[%s229 + $0x1b0] sm:$0xf]
                %256 = vst [vmem:[%s230 + $0x90] sm:$0xf] %v255
                %v257 = vld [vmem:[%s229 + $0x1d4] sm:$0xf]
                %258 = vst [vmem:[%s230 + $0x9c] sm:$0xf] %v257
                %v259 = vld [vmem:[%s229 + $0x1f8] sm:$0xf]
                %260 = vst [vmem:[%s230 + $0xa8] sm:$0xf] %v259
                %v261 = vld [vmem:[%s229 + $0x21c] sm:$0xf]
                %262 = vst [vmem:[%s230 + $0xb4] sm:$0xf] %v261
              $region44: #{encoder_hr_forward.9} parent=31 // loop_footer
                %s228 = sadd.s32 1, %s224
              $region45: #{encoder_hr_forward.9} parent=31 // loop_footer_branch
                %223 = sbr.rel target = $region41
              $region46: #{encoder_hr_forward.9} parent=31 // loop_exit
                _
            $region32: #{encoder_hr_forward.9} parent=27 // pred_fallthru
              _
          $region28: #{encoder_hr_forward.9} parent=23 // pred_fallthru
            _
          %263 = vnop
        $region24: #{encoder_hr_forward.9} parent=19 // pred_fallthru
          _
        // Predicated region
        $region47: #{encoder_hr_forward.9} parent=19 // pred_check
          %p264 = pneg %p78
        $region48: #{encoder_hr_forward.9} parent=19 // pred_check_branch
          %266 = sbr.rel (%p264) target = $region50
        $region49: #{encoder_hr_forward.9} parent=19 // pred_region
          %s267 = smul.u32 48, %s18
          %p268 = scmp.lt.s32.totalorder %s267, 143
          %s269 = scalar_select %p268, %s267, 143
          %p270 = scmp.lt.s32.totalorder %s17, 0
          %s271 = scalar_select %p270, %s17, 0
          %s272 = sadd.s32 %s271, %s269
          %s273 = smul.addr %s272, 4
          %s274 = scalar_lea.vmem %s1, %s273
          %s275 = smul.u32 48, %s18
        $region50: #{encoder_hr_forward.9} parent=19 // pred_fallthru
          _
      $region20: #{encoder_hr_forward.9} parent=5 // pred_fallthru
        _
      %p276 = scmp.le.s32.totalorder 1, %s9
      %p277 = scmp.lt.s32.totalorder %s9, 4
      %p278 = pnand %p276, %p277
      %p279 = pneg %p278
      // Predicated region
      $region51: #{encoder_hr_forward.9} parent=5 // pred_check
        _
      $region52: #{encoder_hr_forward.9} parent=5 // pred_check_branch
        %281 = sbr.rel (%p278) target = $region54
      $region53: #{encoder_hr_forward.9} parent=5 // pred_region
        %s282 = ssub.s32 %s9, 1
        %s283 = sand.u32 %s43, 1
        %s284 = sand.u32 %s43, 1
        %s285 = smul.addr %s284, 192
        %s286 = scalar_lea.vmem [#allocation3], %s285
        // Predicated region
        $region55: #{encoder_hr_forward.9} parent=53 // pred_check
          %p287 = pneg %p56
        $region56: #{encoder_hr_forward.9} parent=53 // pred_check_branch
          %289 = sbr.rel (%p287) target = $region58
        $region57: #{encoder_hr_forward.9} parent=53 // pred_region
          _
        $region58: #{encoder_hr_forward.9} parent=53 // pred_fallthru
          _
        %s290 = sand.u32 %s43, 1
        %s291 = sand.u32 %s43, 1
        %s292 = smul.addr %s291, 192
        %s293 = scalar_lea.vmem [#allocation3], %s292
        %p294 = pneg %p56
        %p295 = pneg %p53
        %s296 = smul.u32 48, %s21
        %p297 = scmp.lt.s32.totalorder %s296, 143
        %s298 = scalar_select %p297, %s296, 143
        %p299 = scmp.lt.s32.totalorder %s20, 0
        %s300 = scalar_select %p299, %s20, 0
        %s301 = sadd.s32 %s300, %s298
        %s302 = smul.addr %s301, 4
        %s303 = scalar_lea.vmem %s1, %s302
        %p304 = pneg %p84
        %p305 = pneg %p81
        %p306 = scmp.lt.s32.totalorder %s20, 0
        %s307 = scalar_select %p306, %s20, 0
        %s308 = scalar_lea.vmem %s2, %s307
        %p309 = pneg %p110
        %p310 = pneg %p107
        %p311 = pneg %p138
        %p312 = pneg %p135
        %s313 = smul.u32 16, %s19
        %p314 = scmp.lt.s32.totalorder %s313, 15
        %s315 = scalar_select %p314, %s313, 15
        %p316 = scmp.lt.s32.totalorder %s20, 0
        %s317 = scalar_select %p316, %s20, 0
        %s318 = sadd.s32 %s317, %s315
        %s319 = smul.addr %s318, 4
        %s320 = scalar_lea.vmem %s3, %s319
        %s321 = smul.u32 16, %s19
        %s322 = smul.u32 3, %s21
        %s323 = smul.u32 48, %s21
        %p324 = scmp.lt.s32.totalorder %s323, 143
        %s325 = scalar_select %p324, %s323, 143
        %p326 = scmp.lt.s32.totalorder %s20, 0
        %s327 = scalar_select %p326, %s20, 0
        %s328 = sadd.s32 %s327, %s325
        %s329 = smul.addr %s328, 4
        %s330 = scalar_lea.vmem %s1, %s329
        %s331 = smul.u32 48, %s21
        %p332 = scmp.lt.s32.totalorder %s20, 0
        %s333 = scalar_select %p332, %s20, 0
        %s334 = scalar_lea.vmem %s2, %s333
        %s335 = smul.u32 16, %s19
        %p336 = scmp.lt.s32.totalorder %s335, 15
        %s337 = scalar_select %p336, %s335, 15
        %p338 = scmp.lt.s32.totalorder %s20, 0
        %s339 = scalar_select %p338, %s20, 0
        %s340 = sadd.s32 %s339, %s337
        %s341 = smul.addr %s340, 4
        %s342 = scalar_lea.vmem %s3, %s341
        %s343 = smul.u32 16, %s19
        %p345 = scmp.eq.s32.totalorder %s21, 0
        // Predicated region
        $region59: #{encoder_hr_forward.9} parent=53 // pred_check
          %p346 = pneg %p345
        $region60: #{encoder_hr_forward.9} parent=53 // pred_check_branch
          %348 = sbr.rel (%p346) target = $region62
        $region61: #{encoder_hr_forward.9} parent=53 // pred_region
          %349 = vst [vmem:[#allocation2] sm:$0xff] 0.0
          %350 = vst [vmem:[#allocation2 + $0x8] sm:$0xff] 0.0
          %351 = vst [vmem:[#allocation2 + $0x10] sm:$0xff] 0.0
          %352 = vst [vmem:[#allocation2 + $0x18] sm:$0xff] 0.0
          %353 = vst [vmem:[#allocation2 + $0x20] sm:$0xff] 0.0
          %354 = vst [vmem:[#allocation2 + $0x28] sm:$0xff] 0.0
          %355 = vst [vmem:[#allocation2 + $0x30] sm:$0xff] 0.0
          %356 = vst [vmem:[#allocation2 + $0x38] sm:$0xff] 0.0
          %357 = vst [vmem:[#allocation2 + $0x40] sm:$0xff] 0.0
          %358 = vst [vmem:[#allocation2 + $0x48] sm:$0xff] 0.0
          %359 = vst [vmem:[#allocation2 + $0x50] sm:$0xff] 0.0
          %360 = vst [vmem:[#allocation2 + $0x58] sm:$0xff] 0.0
          %361 = vst [vmem:[#allocation2 + $0x60] sm:$0xff] 0.0
          %362 = vst [vmem:[#allocation2 + $0x68] sm:$0xff] 0.0
          %363 = vst [vmem:[#allocation2 + $0x70] sm:$0xff] 0.0
          %364 = vst [vmem:[#allocation2 + $0x78] sm:$0xff] 0.0
        $region62: #{encoder_hr_forward.9} parent=53 // pred_fallthru
          _
        %v365 = vld [vmem:[#allocation2] sm:$0xff]
        %v366 = vld [vmem:[#allocation2 + $0x8] sm:$0xff]
        %v367 = vld [vmem:[#allocation2 + $0x10] sm:$0xff]
        %v368 = vld [vmem:[#allocation2 + $0x18] sm:$0xff]
        %v369 = vld [vmem:[#allocation2 + $0x20] sm:$0xff]
        %v370 = vld [vmem:[#allocation2 + $0x28] sm:$0xff]
        %v371 = vld [vmem:[#allocation2 + $0x30] sm:$0xff]
        %v372 = vld [vmem:[#allocation2 + $0x38] sm:$0xff]
        %v373 = vld [vmem:[#allocation2 + $0x40] sm:$0xff]
        %v374 = vld [vmem:[#allocation2 + $0x48] sm:$0xff]
        %v375 = vld [vmem:[#allocation2 + $0x50] sm:$0xff]
        %v376 = vld [vmem:[#allocation2 + $0x58] sm:$0xff]
        %v377 = vld [vmem:[#allocation2 + $0x60] sm:$0xff]
        %v378 = vld [vmem:[#allocation2 + $0x68] sm:$0xff]
        %v379 = vld [vmem:[#allocation2 + $0x70] sm:$0xff]
        %v380 = vld [vmem:[#allocation2 + $0x78] sm:$0xff]
        %v381 = vld [vmem:[%s286] sm:$0xff]
        %v382 = vld [vmem:[%s286 + $0x8] sm:$0xf]
        %v383 = vld [vmem:[%s286 + $0xc] sm:$0xff]
        %v384 = vld [vmem:[%s286 + $0x14] sm:$0xf]
        %v385 = vld [vmem:[%s286 + $0x18] sm:$0xff]
        %v386 = vld [vmem:[%s286 + $0x20] sm:$0xf]
        %v387 = vld [vmem:[%s286 + $0x24] sm:$0xff]
        %v388 = vld [vmem:[%s286 + $0x2c] sm:$0xf]
        %v389 = vld [vmem:[%s286 + $0x30] sm:$0xff]
        %v390 = vld [vmem:[%s286 + $0x38] sm:$0xf]
        %v391 = vld [vmem:[%s286 + $0x3c] sm:$0xff]
        %v392 = vld [vmem:[%s286 + $0x44] sm:$0xf]
        %v393 = vld [vmem:[%s286 + $0x48] sm:$0xff]
        %v394 = vld [vmem:[%s286 + $0x50] sm:$0xf]
        %v395 = vld [vmem:[%s286 + $0x54] sm:$0xff]
        %v396 = vld [vmem:[%s286 + $0x5c] sm:$0xf]
        %v397 = vld [vmem:[%s286 + $0x60] sm:$0xff]
        %v398 = vld [vmem:[%s286 + $0x68] sm:$0xf]
        %v399 = vld [vmem:[%s286 + $0x6c] sm:$0xff]
        %v400 = vld [vmem:[%s286 + $0x74] sm:$0xf]
        %v401 = vld [vmem:[%s286 + $0x78] sm:$0xff]
        %v402 = vld [vmem:[%s286 + $0x80] sm:$0xf]
        %v403 = vld [vmem:[%s286 + $0x84] sm:$0xff]
        %v404 = vld [vmem:[%s286 + $0x8c] sm:$0xf]
        %v405 = vld [vmem:[%s286 + $0x90] sm:$0xff]
        %v406 = vld [vmem:[%s286 + $0x98] sm:$0xf]
        %v407 = vld [vmem:[%s286 + $0x9c] sm:$0xff]
        %v408 = vld [vmem:[%s286 + $0xa4] sm:$0xf]
        %v409 = vld [vmem:[%s286 + $0xa8] sm:$0xff]
        %v410 = vld [vmem:[%s286 + $0xb0] sm:$0xf]
        %v411 = vld [vmem:[%s286 + $0xb4] sm:$0xff]
        %v412 = vld [vmem:[%s286 + $0xbc] sm:$0xf]
        %v413 = vld [vmem:[%s330] sm:$0xf]
        %v414 = vld [vmem:[%s330 + $0x4] sm:$0xf]
        %v415 = vld [vmem:[%s330 + $0x8] sm:$0xf]
        %v416 = vld [vmem:[%s330 + $0xc] sm:$0xf]
        %v417 = vld [vmem:[%s330 + $0x10] sm:$0xf]
        %v418 = vld [vmem:[%s330 + $0x14] sm:$0xf]
        %v419 = vld [vmem:[%s330 + $0x18] sm:$0xf]
        %v420 = vld [vmem:[%s330 + $0x1c] sm:$0xf]
        %v421 = vld [vmem:[%s330 + $0x20] sm:$0xf]
        %v422 = vld [vmem:[%s330 + $0x24] sm:$0xf]
        %v423 = vld [vmem:[%s330 + $0x28] sm:$0xf]
        %v424 = vld [vmem:[%s330 + $0x2c] sm:$0xf]
        %v425 = vld [vmem:[%s330 + $0x30] sm:$0xf]
        %v426 = vld [vmem:[%s330 + $0x34] sm:$0xf]
        %v427 = vld [vmem:[%s330 + $0x38] sm:$0xf]
        %v428 = vld [vmem:[%s330 + $0x3c] sm:$0xf]
        %v429 = vld [vmem:[%s330 + $0x40] sm:$0xf]
        %v430 = vld [vmem:[%s330 + $0x44] sm:$0xf]
        %v431 = vld [vmem:[%s330 + $0x48] sm:$0xf]
        %v432 = vld [vmem:[%s330 + $0x4c] sm:$0xf]
        %v433 = vld [vmem:[%s330 + $0x50] sm:$0xf]
        %v434 = vld [vmem:[%s330 + $0x54] sm:$0xf]
        %v435 = vld [vmem:[%s330 + $0x58] sm:$0xf]
        %v436 = vld [vmem:[%s330 + $0x5c] sm:$0xf]
        %v437 = vld [vmem:[%s330 + $0x60] sm:$0xf]
        %v438 = vld [vmem:[%s330 + $0x64] sm:$0xf]
        %v439 = vld [vmem:[%s330 + $0x68] sm:$0xf]
        %v440 = vld [vmem:[%s330 + $0x6c] sm:$0xf]
        %v441 = vld [vmem:[%s330 + $0x70] sm:$0xf]
        %v442 = vld [vmem:[%s330 + $0x74] sm:$0xf]
        %v443 = vld [vmem:[%s330 + $0x78] sm:$0xf]
        %v444 = vld [vmem:[%s330 + $0x7c] sm:$0xf]
        %v445 = vld [vmem:[%s330 + $0x80] sm:$0xf]
        %v446 = vld [vmem:[%s330 + $0x84] sm:$0xf]
        %v447 = vld [vmem:[%s330 + $0x88] sm:$0xf]
        %v448 = vld [vmem:[%s330 + $0x8c] sm:$0xf]
        %v449 = vld [vmem:[%s330 + $0x90] sm:$0xf]
        %v450 = vld [vmem:[%s330 + $0x94] sm:$0xf]
        %v451 = vld [vmem:[%s330 + $0x98] sm:$0xf]
        %v452 = vld [vmem:[%s330 + $0x9c] sm:$0xf]
        %v453 = vld [vmem:[%s330 + $0xa0] sm:$0xf]
        %v454 = vld [vmem:[%s330 + $0xa4] sm:$0xf]
        %v455 = vld [vmem:[%s330 + $0xa8] sm:$0xf]
        %v456 = vld [vmem:[%s330 + $0xac] sm:$0xf]
        %v457 = vld [vmem:[%s330 + $0xb0] sm:$0xf]
        %v458 = vld [vmem:[%s330 + $0xb4] sm:$0xf]
        %v459 = vld [vmem:[%s330 + $0xb8] sm:$0xf]
        %v460 = vld [vmem:[%s330 + $0xbc] sm:$0xf]
        %v493 = vunpack.c.l.b16 %v381
        %v494 = vunpack.c.h.b16 %v381
        %v495 = vunpack.c.l.b16 %v382
        %v496 = vunpack.c.l.b16 %v383
        %v497 = vunpack.c.h.b16 %v383
        %v498 = vunpack.c.l.b16 %v384
        %v499 = vunpack.c.l.b16 %v385
        %v500 = vunpack.c.h.b16 %v385
        %v501 = vunpack.c.l.b16 %v386
        %v502 = vunpack.c.l.b16 %v387
        %v503 = vunpack.c.h.b16 %v387
        %v504 = vunpack.c.l.b16 %v388
        %v505 = vunpack.c.l.b16 %v389
        %v506 = vunpack.c.h.b16 %v389
        %v507 = vunpack.c.l.b16 %v390
        %v508 = vunpack.c.l.b16 %v391
        %v509 = vunpack.c.h.b16 %v391
        %v510 = vunpack.c.l.b16 %v392
        %v511 = vunpack.c.l.b16 %v393
        %v512 = vunpack.c.h.b16 %v393
        %v513 = vunpack.c.l.b16 %v394
        %v514 = vunpack.c.l.b16 %v395
        %v515 = vunpack.c.h.b16 %v395
        %v516 = vunpack.c.l.b16 %v396
        %v517 = vunpack.c.l.b16 %v397
        %v518 = vunpack.c.h.b16 %v397
        %v519 = vunpack.c.l.b16 %v398
        %v520 = vunpack.c.l.b16 %v399
        %v521 = vunpack.c.h.b16 %v399
        %v522 = vunpack.c.l.b16 %v400
        %v523 = vunpack.c.l.b16 %v401
        %v524 = vunpack.c.h.b16 %v401
        %v525 = vunpack.c.l.b16 %v402
        %v526 = vunpack.c.l.b16 %v403
        %v527 = vunpack.c.h.b16 %v403
        %v528 = vunpack.c.l.b16 %v404
        %v529 = vunpack.c.l.b16 %v405
        %v530 = vunpack.c.h.b16 %v405
        %v531 = vunpack.c.l.b16 %v406
        %v532 = vunpack.c.l.b16 %v407
        %v533 = vunpack.c.h.b16 %v407
        %v534 = vunpack.c.l.b16 %v408
        %v535 = vunpack.c.l.b16 %v409
        %v536 = vunpack.c.h.b16 %v409
        %v537 = vunpack.c.l.b16 %v410
        %v538 = vunpack.c.l.b16 %v411
        %v539 = vunpack.c.h.b16 %v411
        %v540 = vunpack.c.l.b16 %v412
        %v541 = vpack.c.b16 %v496, %v493
        %v542 = vpack.c.b16 %v497, %v494
        %v543 = vpack.c.b16 %v498, %v495
        %v544 = vpack.c.b16 %v502, %v499
        %v545 = vpack.c.b16 %v503, %v500
        %v546 = vpack.c.b16 %v504, %v501
        %v547 = vpack.c.b16 %v508, %v505
        %v548 = vpack.c.b16 %v509, %v506
        %v549 = vpack.c.b16 %v510, %v507
        %v550 = vpack.c.b16 %v514, %v511
        %v551 = vpack.c.b16 %v515, %v512
        %v552 = vpack.c.b16 %v516, %v513
        %v553 = vpack.c.b16 %v520, %v517
        %v554 = vpack.c.b16 %v521, %v518
        %v555 = vpack.c.b16 %v522, %v519
        %v556 = vpack.c.b16 %v526, %v523
        %v557 = vpack.c.b16 %v527, %v524
        %v558 = vpack.c.b16 %v528, %v525
        %v559 = vpack.c.b16 %v532, %v529
        %v560 = vpack.c.b16 %v533, %v530
        %v561 = vpack.c.b16 %v534, %v531
        %v562 = vpack.c.b16 %v538, %v535
        %v563 = vpack.c.b16 %v539, %v536
        %v564 = vpack.c.b16 %v540, %v537
        %v637 = vunpack.c.l.b16 %v413
        %v638 = vunpack.c.l.b16 %v414
        %v639 = vunpack.c.l.b16 %v415
        %v640 = vunpack.c.l.b16 %v416
        %v641 = vunpack.c.l.b16 %v417
        %v642 = vunpack.c.l.b16 %v418
        %v643 = vunpack.c.l.b16 %v419
        %v644 = vunpack.c.l.b16 %v420
        %v645 = vunpack.c.l.b16 %v421
        %v646 = vunpack.c.l.b16 %v422
        %v647 = vunpack.c.l.b16 %v423
        %v648 = vunpack.c.l.b16 %v424
        %v649 = vunpack.c.l.b16 %v425
        %v650 = vunpack.c.l.b16 %v426
        %v651 = vunpack.c.l.b16 %v427
        %v652 = vunpack.c.l.b16 %v428
        %v653 = vunpack.c.l.b16 %v429
        %v654 = vunpack.c.l.b16 %v430
        %v655 = vunpack.c.l.b16 %v431
        %v656 = vunpack.c.l.b16 %v432
        %v657 = vunpack.c.l.b16 %v433
        %v658 = vunpack.c.l.b16 %v434
        %v659 = vunpack.c.l.b16 %v435
        %v660 = vunpack.c.l.b16 %v436
        %v661 = vunpack.c.l.b16 %v437
        %v662 = vunpack.c.l.b16 %v438
        %v663 = vunpack.c.l.b16 %v439
        %v664 = vunpack.c.l.b16 %v440
        %v665 = vunpack.c.l.b16 %v441
        %v666 = vunpack.c.l.b16 %v442
        %v667 = vunpack.c.l.b16 %v443
        %v668 = vunpack.c.l.b16 %v444
        %v669 = vunpack.c.l.b16 %v445
        %v670 = vunpack.c.l.b16 %v446
        %v671 = vunpack.c.l.b16 %v447
        %v672 = vunpack.c.l.b16 %v448
        %v673 = vunpack.c.l.b16 %v449
        %v674 = vunpack.c.l.b16 %v450
        %v675 = vunpack.c.l.b16 %v451
        %v676 = vunpack.c.l.b16 %v452
        %v677 = vunpack.c.l.b16 %v453
        %v678 = vunpack.c.l.b16 %v454
        %v679 = vunpack.c.l.b16 %v455
        %v680 = vunpack.c.l.b16 %v456
        %v681 = vunpack.c.l.b16 %v457
        %v682 = vunpack.c.l.b16 %v458
        %v683 = vunpack.c.l.b16 %v459
        %v684 = vunpack.c.l.b16 %v460
        %v685 = vpack.c.b16 %v638, %v637
        %v686 = vpack.c.b16 %v640, %v639
        %v687 = vpack.c.b16 %v642, %v641
        %v688 = vpack.c.b16 %v644, %v643
        %v689 = vpack.c.b16 %v646, %v645
        %v690 = vpack.c.b16 %v648, %v647
        %v691 = vpack.c.b16 %v650, %v649
        %v692 = vpack.c.b16 %v652, %v651
        %v693 = vpack.c.b16 %v654, %v653
        %v694 = vpack.c.b16 %v656, %v655
        %v695 = vpack.c.b16 %v658, %v657
        %v696 = vpack.c.b16 %v660, %v659
        %v697 = vpack.c.b16 %v662, %v661
        %v698 = vpack.c.b16 %v664, %v663
        %v699 = vpack.c.b16 %v666, %v665
        %v700 = vpack.c.b16 %v668, %v667
        %v701 = vpack.c.b16 %v670, %v669
        %v702 = vpack.c.b16 %v672, %v671
        %v703 = vpack.c.b16 %v674, %v673
        %v704 = vpack.c.b16 %v676, %v675
        %v705 = vpack.c.b16 %v678, %v677
        %v706 = vpack.c.b16 %v680, %v679
        %v707 = vpack.c.b16 %v682, %v681
        %v708 = vpack.c.b16 %v684, %v683
        %733 = vmatprep.subr.bf16.mxu0 0
        %734 = vmatpush1.bf16.msra.mxu0 %v685
        %735 = vmatprep.subr.bf16.mxu0 0
        %736 = vmatpush1.bf16.msra.mxu0 %v686
        %737 = vmatprep.subr.bf16.mxu0 0
        %738 = vmatpush1.bf16.msra.mxu0 %v687
        %739 = vmatprep.subr.bf16.mxu0 0
        %740 = vmatpush1.bf16.msra.mxu0 %v688
        %741 = vmatprep.subr.bf16.mxu0 0
        %742 = vmatpush1.bf16.msra.mxu0 %v689
        %743 = vmatprep.subr.bf16.mxu0 0
        %744 = vmatpush1.bf16.msra.mxu0 %v690
        %745 = vmatprep.subr.bf16.mxu0 0
        %746 = vmatpush1.bf16.msra.mxu0 %v691
        %747 = vmatprep.subr.bf16.mxu0 0
        %748 = vmatpush1.bf16.msra.mxu0 %v692
        %749 = vmatprep.subr.bf16.mxu0 0
        %750 = vmatpush1.bf16.msra.mxu0 %v693
        %751 = vmatprep.subr.bf16.mxu0 0
        %752 = vmatpush1.bf16.msra.mxu0 %v694
        %753 = vmatprep.subr.bf16.mxu0 0
        %754 = vmatpush1.bf16.msra.mxu0 %v695
        %755 = vmatprep.subr.bf16.mxu0 0
        %756 = vmatpush1.bf16.msra.mxu0 %v696
        %757 = vmatprep.subr.bf16.mxu0 0
        %758 = vmatpush1.bf16.msra.mxu0 %v697
        %759 = vmatprep.subr.bf16.mxu0 0
        %760 = vmatpush1.bf16.msra.mxu0 %v698
        %761 = vmatprep.subr.bf16.mxu0 0
        %762 = vmatpush1.bf16.msra.mxu0 %v699
        %763 = vmatprep.subr.bf16.mxu0 0
        %764 = vmatpush1.bf16.msra.mxu0 %v700
        %765 = vmatprep.mubr.bf16.mxu0 %v542
        %766 = vmatmul.mubr.bf16.gmra.mrb[0].mxu0 %v541
        %v767 = vpop.f32.mrb[0].mxu0
        %v768 = vadd.f32 0.0, %v767
        %v769 = vpop.f32.mrb[0].mxu0
        %v770 = vpop.f32.mrb[0].mxu0
        %v771 = vadd.f32 0.0, %v770
        %v772 = vpop.f32.mrb[0].mxu0
        %773 = vmatprep.mubr.bf16.mxu0 %v545
        %774 = vmatmul.mubr.bf16.gmra.mrb[0].mxu0 %v544
        %v775 = vpop.f32.mrb[0].mxu0
        %v776 = vadd.f32 0.0, %v775
        %v777 = vpop.f32.mrb[0].mxu0
        %v778 = vpop.f32.mrb[0].mxu0
        %v779 = vadd.f32 0.0, %v778
        %v780 = vpop.f32.mrb[0].mxu0
        %781 = vmatprep.mubr.bf16.mxu0 %v548
        %782 = vmatmul.mubr.bf16.gmra.mrb[0].mxu0 %v547
        %v783 = vpop.f32.mrb[0].mxu0
        %v784 = vadd.f32 0.0, %v783
        %v785 = vpop.f32.mrb[0].mxu0
        %v786 = vpop.f32.mrb[0].mxu0
        %v787 = vadd.f32 0.0, %v786
        %v788 = vpop.f32.mrb[0].mxu0
        %789 = vmatprep.mubr.bf16.mxu0 %v551
        %790 = vmatmul.mubr.bf16.gmra.mrb[0].mxu0 %v550
        %v791 = vpop.f32.mrb[0].mxu0
        %v792 = vadd.f32 0.0, %v791
        %v793 = vpop.f32.mrb[0].mxu0
        %v794 = vpop.f32.mrb[0].mxu0
        %v795 = vadd.f32 0.0, %v794
        %v796 = vpop.f32.mrb[0].mxu0
        %797 = vmatprep.mubr.bf16.mxu0 %v554
        %798 = vmatmul.mubr.bf16.gmra.mrb[0].mxu0 %v553
        %v799 = vpop.f32.mrb[0].mxu0
        %v800 = vadd.f32 0.0, %v799
        %v801 = vpop.f32.mrb[0].mxu0
        %v802 = vpop.f32.mrb[0].mxu0
        %v803 = vadd.f32 0.0, %v802
        %v804 = vpop.f32.mrb[0].mxu0
        %805 = vmatprep.mubr.bf16.mxu0 %v557
        %806 = vmatmul.mubr.bf16.gmra.mrb[0].mxu0 %v556
        %v807 = vpop.f32.mrb[0].mxu0
        %v808 = vadd.f32 0.0, %v807
        %v809 = vpop.f32.mrb[0].mxu0
        %v810 = vpop.f32.mrb[0].mxu0
        %v811 = vadd.f32 0.0, %v810
        %v812 = vpop.f32.mrb[0].mxu0
        %813 = vmatprep.mubr.bf16.mxu0 %v560
        %814 = vmatmul.mubr.bf16.gmra.mrb[0].mxu0 %v559
        %v815 = vpop.f32.mrb[0].mxu0
        %v816 = vadd.f32 0.0, %v815
        %v817 = vpop.f32.mrb[0].mxu0
        %v818 = vpop.f32.mrb[0].mxu0
        %v819 = vadd.f32 0.0, %v818
        %v820 = vpop.f32.mrb[0].mxu0
        %821 = vmatprep.mubr.bf16.mxu0 %v563
        %822 = vmatmul.mubr.bf16.gmra.mrb[0].mxu0 %v562
        %v823 = vpop.f32.mrb[0].mxu0
        %v824 = vadd.f32 0.0, %v823
        %v825 = vpop.f32.mrb[0].mxu0
        %v826 = vpop.f32.mrb[0].mxu0
        %v827 = vadd.f32 0.0, %v826
        %v828 = vpop.f32.mrb[0].mxu0
        %829 = vdwg.mxu0
        %830 = vmatprep.subr.bf16.mxu0 0
        %831 = vmatpush1.bf16.msra.mxu0 %v701
        %832 = vmatprep.subr.bf16.mxu0 0
        %833 = vmatpush1.bf16.msra.mxu0 %v702
        %834 = vmatprep.subr.bf16.mxu0 0
        %835 = vmatpush1.bf16.msra.mxu0 %v703
        %836 = vmatprep.subr.bf16.mxu0 0
        %837 = vmatpush1.bf16.msra.mxu0 %v704
        %838 = vmatprep.subr.bf16.mxu0 0
        %839 = vmatpush1.bf16.msra.mxu0 %v705
        %840 = vmatprep.subr.bf16.mxu0 0
        %841 = vmatpush1.bf16.msra.mxu0 %v706
        %842 = vmatprep.subr.bf16.mxu0 0
        %843 = vmatpush1.bf16.msra.mxu0 %v707
        %844 = vmatprep.subr.bf16.mxu0 0
        %845 = vmatpush1.bf16.msra.mxu0 %v708
        %846 = vmatprep.subr.bf16.mxu0 0
        %847 = vmatpush1.bf16.msra.mxu0 0
        %848 = vmatprep.subr.bf16.mxu0 0
        %849 = vmatpush1.bf16.msra.mxu0 0
        %850 = vmatprep.subr.bf16.mxu0 0
        %851 = vmatpush1.bf16.msra.mxu0 0
        %852 = vmatprep.subr.bf16.mxu0 0
        %853 = vmatpush1.bf16.msra.mxu0 0
        %854 = vmatprep.subr.bf16.mxu0 0
        %855 = vmatpush1.bf16.msra.mxu0 0
        %856 = vmatprep.subr.bf16.mxu0 0
        %857 = vmatpush1.bf16.msra.mxu0 0
        %858 = vmatprep.subr.bf16.mxu0 0
        %859 = vmatpush1.bf16.msra.mxu0 0
        %860 = vmatprep.subr.bf16.mxu0 0
        %861 = vmatpush1.bf16.msra.mxu0 0
        %862 = vmatprep.mubr.bf16.mxu0 0
        %863 = vmatmul.mubr.bf16.gmra.mrb[0].mxu0 %v543
        %v864 = vpop.f32.mrb[0].mxu0
        %v865 = vadd.f32 %v768, %v864
        %v866 = vpop.f32.mrb[0].mxu0
        %v867 = vpop.f32.mrb[0].mxu0
        %v868 = vadd.f32 %v771, %v867
        %v869 = vpop.f32.mrb[0].mxu0
        %870 = vmatprep.mubr.bf16.mxu0 0
        %871 = vmatmul.mubr.bf16.gmra.mrb[0].mxu0 %v546
        %v872 = vpop.f32.mrb[0].mxu0
        %v873 = vadd.f32 %v776, %v872
        %v874 = vpop.f32.mrb[0].mxu0
        %v875 = vpop.f32.mrb[0].mxu0
        %v876 = vadd.f32 %v779, %v875
        %v877 = vpop.f32.mrb[0].mxu0
        %878 = vmatprep.mubr.bf16.mxu0 0
        %879 = vmatmul.mubr.bf16.gmra.mrb[0].mxu0 %v549
        %v880 = vpop.f32.mrb[0].mxu0
        %v881 = vadd.f32 %v784, %v880
        %v882 = vpop.f32.mrb[0].mxu0
        %v883 = vpop.f32.mrb[0].mxu0
        %v884 = vadd.f32 %v787, %v883
        %v885 = vpop.f32.mrb[0].mxu0
        %886 = vmatprep.mubr.bf16.mxu0 0
        %887 = vmatmul.mubr.bf16.gmra.mrb[0].mxu0 %v552
        %v888 = vpop.f32.mrb[0].mxu0
        %v889 = vadd.f32 %v792, %v888
        %v890 = vpop.f32.mrb[0].mxu0
        %v891 = vpop.f32.mrb[0].mxu0
        %v892 = vadd.f32 %v795, %v891
        %v893 = vpop.f32.mrb[0].mxu0
        %894 = vmatprep.mubr.bf16.mxu0 0
        %895 = vmatmul.mubr.bf16.gmra.mrb[0].mxu0 %v555
        %v896 = vpop.f32.mrb[0].mxu0
        %v897 = vadd.f32 %v800, %v896
        %v898 = vpop.f32.mrb[0].mxu0
        %v899 = vpop.f32.mrb[0].mxu0
        %v900 = vadd.f32 %v803, %v899
        %v901 = vpop.f32.mrb[0].mxu0
        %902 = vmatprep.mubr.bf16.mxu0 0
        %903 = vmatmul.mubr.bf16.gmra.mrb[0].mxu0 %v558
        %v904 = vpop.f32.mrb[0].mxu0
        %v905 = vadd.f32 %v808, %v904
        %v906 = vpop.f32.mrb[0].mxu0
        %v907 = vpop.f32.mrb[0].mxu0
        %v908 = vadd.f32 %v811, %v907
        %v909 = vpop.f32.mrb[0].mxu0
        %910 = vmatprep.mubr.bf16.mxu0 0
        %911 = vmatmul.mubr.bf16.gmra.mrb[0].mxu0 %v561
        %v912 = vpop.f32.mrb[0].mxu0
        %v913 = vadd.f32 %v816, %v912
        %v914 = vpop.f32.mrb[0].mxu0
        %v915 = vpop.f32.mrb[0].mxu0
        %v916 = vadd.f32 %v819, %v915
        %v917 = vpop.f32.mrb[0].mxu0
        %918 = vmatprep.mubr.bf16.mxu0 0
        %919 = vmatmul.mubr.bf16.gmra.mrb[0].mxu0 %v564
        %v920 = vpop.f32.mrb[0].mxu0
        %v921 = vadd.f32 %v824, %v920
        %v922 = vpop.f32.mrb[0].mxu0
        %v923 = vpop.f32.mrb[0].mxu0
        %v924 = vadd.f32 %v827, %v923
        %v925 = vpop.f32.mrb[0].mxu0
        %926 = vdwg.mxu0
        %v927 = vadd.f32 %v365, %v865
        %v928 = vadd.f32 %v366, %v868
        %v929 = vadd.f32 %v367, %v873
        %v930 = vadd.f32 %v368, %v876
        %v931 = vadd.f32 %v369, %v881
        %v932 = vadd.f32 %v370, %v884
        %v933 = vadd.f32 %v371, %v889
        %v934 = vadd.f32 %v372, %v892
        %v935 = vadd.f32 %v373, %v897
        %v936 = vadd.f32 %v374, %v900
        %v937 = vadd.f32 %v375, %v905
        %v938 = vadd.f32 %v376, %v908
        %v939 = vadd.f32 %v377, %v913
        %v940 = vadd.f32 %v378, %v916
        %v941 = vadd.f32 %v379, %v921
        %v942 = vadd.f32 %v380, %v924
        %943 = vst [vmem:[#allocation2] sm:$0xff] %v927
        %944 = vst [vmem:[#allocation2 + $0x8] sm:$0xff] %v928
        %945 = vst [vmem:[#allocation2 + $0x10] sm:$0xff] %v929
        %946 = vst [vmem:[#allocation2 + $0x18] sm:$0xff] %v930
        %947 = vst [vmem:[#allocation2 + $0x20] sm:$0xff] %v931
        %948 = vst [vmem:[#allocation2 + $0x28] sm:$0xff] %v932
        %949 = vst [vmem:[#allocation2 + $0x30] sm:$0xff] %v933
        %950 = vst [vmem:[#allocation2 + $0x38] sm:$0xff] %v934
        %951 = vst [vmem:[#allocation2 + $0x40] sm:$0xff] %v935
        %952 = vst [vmem:[#allocation2 + $0x48] sm:$0xff] %v936
        %953 = vst [vmem:[#allocation2 + $0x50] sm:$0xff] %v937
        %954 = vst [vmem:[#allocation2 + $0x58] sm:$0xff] %v938
        %955 = vst [vmem:[#allocation2 + $0x60] sm:$0xff] %v939
        %956 = vst [vmem:[#allocation2 + $0x68] sm:$0xff] %v940
        %957 = vst [vmem:[#allocation2 + $0x70] sm:$0xff] %v941
        %958 = vst [vmem:[#allocation2 + $0x78] sm:$0xff] %v942
        %p959 = scmp.eq.s32.totalorder %s21, 2
        // Predicated region
        $region63: #{encoder_hr_forward.9} parent=53 // pred_check
          %p960 = pneg %p959
        $region64: #{encoder_hr_forward.9} parent=53 // pred_check_branch
          %962 = sbr.rel (%p960) target = $region66
        $region65: #{encoder_hr_forward.9} parent=53 // pred_region
          %v963 = vld [vmem:[#allocation2] sm:$0xff]
          %v964 = vld [vmem:[#allocation2 + $0x8] sm:$0xff]
          %v965 = vld [vmem:[#allocation2 + $0x10] sm:$0xff]
          %v966 = vld [vmem:[#allocation2 + $0x18] sm:$0xff]
          %v967 = vld [vmem:[#allocation2 + $0x20] sm:$0xff]
          %v968 = vld [vmem:[#allocation2 + $0x28] sm:$0xff]
          %v969 = vld [vmem:[#allocation2 + $0x30] sm:$0xff]
          %v970 = vld [vmem:[#allocation2 + $0x38] sm:$0xff]
          %v971 = vld [vmem:[#allocation2 + $0x40] sm:$0xff]
          %v972 = vld [vmem:[#allocation2 + $0x48] sm:$0xff]
          %v973 = vld [vmem:[#allocation2 + $0x50] sm:$0xff]
          %v974 = vld [vmem:[#allocation2 + $0x58] sm:$0xff]
          %v975 = vld [vmem:[#allocation2 + $0x60] sm:$0xff]
          %v976 = vld [vmem:[#allocation2 + $0x68] sm:$0xff]
          %v977 = vld [vmem:[#allocation2 + $0x70] sm:$0xff]
          %v978 = vld [vmem:[#allocation2 + $0x78] sm:$0xff]
          %v979 = vld [vmem:[%s334] sm:$0x1]
          %v981 = vlaneseq
          %v982 = vshrl.u32 %v981, 7
          %v983 = vsub.s32 0, %v982
          %v984 = vrot.slane %v979, %v983
          %v986 = vadd.f32 %v963, %v984
          %v987 = vadd.f32 %v964, %v984
          %v988 = vadd.f32 %v965, %v984
          %v989 = vadd.f32 %v966, %v984
          %v990 = vadd.f32 %v967, %v984
          %v991 = vadd.f32 %v968, %v984
          %v992 = vadd.f32 %v969, %v984
          %v993 = vadd.f32 %v970, %v984
          %v994 = vadd.f32 %v971, %v984
          %v995 = vadd.f32 %v972, %v984
          %v996 = vadd.f32 %v973, %v984
          %v997 = vadd.f32 %v974, %v984
          %v998 = vadd.f32 %v975, %v984
          %v999 = vadd.f32 %v976, %v984
          %v1000 = vadd.f32 %v977, %v984
          %v1001 = vadd.f32 %v978, %v984
          %vm1002 = vcmp.ge.f32.partialorder %v986, 0.0
          %vm1003 = vcmp.ge.f32.partialorder %v987, 0.0
          %vm1004 = vcmp.ge.f32.partialorder %v988, 0.0
          %vm1005 = vcmp.ge.f32.partialorder %v989, 0.0
          %vm1006 = vcmp.ge.f32.partialorder %v990, 0.0
          %vm1007 = vcmp.ge.f32.partialorder %v991, 0.0
          %vm1008 = vcmp.ge.f32.partialorder %v992, 0.0
          %vm1009 = vcmp.ge.f32.partialorder %v993, 0.0
          %vm1010 = vcmp.ge.f32.partialorder %v994, 0.0
          %vm1011 = vcmp.ge.f32.partialorder %v995, 0.0
          %vm1012 = vcmp.ge.f32.partialorder %v996, 0.0
          %vm1013 = vcmp.ge.f32.partialorder %v997, 0.0
          %vm1014 = vcmp.ge.f32.partialorder %v998, 0.0
          %vm1015 = vcmp.ge.f32.partialorder %v999, 0.0
          %vm1016 = vcmp.ge.f32.partialorder %v1000, 0.0
          %vm1017 = vcmp.ge.f32.partialorder %v1001, 0.0
          %v1018 = vmul.f32 %v986, 0.1
          %v1019 = vmul.f32 %v987, 0.1
          %v1020 = vmul.f32 %v988, 0.1
          %v1021 = vmul.f32 %v989, 0.1
          %v1022 = vmul.f32 %v990, 0.1
          %v1023 = vmul.f32 %v991, 0.1
          %v1024 = vmul.f32 %v992, 0.1
          %v1025 = vmul.f32 %v993, 0.1
          %v1026 = vmul.f32 %v994, 0.1
          %v1027 = vmul.f32 %v995, 0.1
          %v1028 = vmul.f32 %v996, 0.1
          %v1029 = vmul.f32 %v997, 0.1
          %v1030 = vmul.f32 %v998, 0.1
          %v1031 = vmul.f32 %v999, 0.1
          %v1032 = vmul.f32 %v1000, 0.1
          %v1033 = vmul.f32 %v1001, 0.1
          %v1034 = vsel %vm1002, %v986, %v1018
          %v1035 = vsel %vm1003, %v987, %v1019
          %v1036 = vsel %vm1004, %v988, %v1020
          %v1037 = vsel %vm1005, %v989, %v1021
          %v1038 = vsel %vm1006, %v990, %v1022
          %v1039 = vsel %vm1007, %v991, %v1023
          %v1040 = vsel %vm1008, %v992, %v1024
          %v1041 = vsel %vm1009, %v993, %v1025
          %v1042 = vsel %vm1010, %v994, %v1026
          %v1043 = vsel %vm1011, %v995, %v1027
          %v1044 = vsel %vm1012, %v996, %v1028
          %v1045 = vsel %vm1013, %v997, %v1029
          %v1046 = vsel %vm1014, %v998, %v1030
          %v1047 = vsel %vm1015, %v999, %v1031
          %v1048 = vsel %vm1016, %v1000, %v1032
          %v1049 = vsel %vm1017, %v1001, %v1033
          %v1050 = vpack.c.bf16 %v1035, %v1034
          %v1051 = vpack.c.bf16 %v1037, %v1036
          %v1052 = vpack.c.bf16 %v1039, %v1038
          %v1053 = vpack.c.bf16 %v1041, %v1040
          %v1054 = vpack.c.bf16 %v1043, %v1042
          %v1055 = vpack.c.bf16 %v1045, %v1044
          %v1056 = vpack.c.bf16 %v1047, %v1046
          %v1057 = vpack.c.bf16 %v1049, %v1048
          %v1066 = vunpack.c.l.b16 %v1050
          %v1067 = vunpack.c.h.b16 %v1050
          %v1068 = vunpack.c.l.b16 %v1051
          %v1069 = vunpack.c.h.b16 %v1051
          %v1070 = vunpack.c.l.b16 %v1052
          %v1071 = vunpack.c.h.b16 %v1052
          %v1072 = vunpack.c.l.b16 %v1053
          %v1073 = vunpack.c.h.b16 %v1053
          %v1074 = vunpack.c.l.b16 %v1054
          %v1075 = vunpack.c.h.b16 %v1054
          %v1076 = vunpack.c.l.b16 %v1055
          %v1077 = vunpack.c.h.b16 %v1055
          %v1078 = vunpack.c.l.b16 %v1056
          %v1079 = vunpack.c.h.b16 %v1056
          %v1080 = vunpack.c.l.b16 %v1057
          %v1081 = vunpack.c.h.b16 %v1057
          %v1082 = vpack.c.b16 %v1066, %v1066
          %v1083 = vpack.c.b16 %v1067, %v1067
          %v1084 = vpack.c.b16 %v1068, %v1068
          %v1085 = vpack.c.b16 %v1069, %v1069
          %v1086 = vpack.c.b16 %v1070, %v1070
          %v1087 = vpack.c.b16 %v1071, %v1071
          %v1088 = vpack.c.b16 %v1072, %v1072
          %v1089 = vpack.c.b16 %v1073, %v1073
          %v1090 = vpack.c.b16 %v1074, %v1074
          %v1091 = vpack.c.b16 %v1075, %v1075
          %v1092 = vpack.c.b16 %v1076, %v1076
          %v1093 = vpack.c.b16 %v1077, %v1077
          %v1094 = vpack.c.b16 %v1078, %v1078
          %v1095 = vpack.c.b16 %v1079, %v1079
          %v1096 = vpack.c.b16 %v1080, %v1080
          %v1097 = vpack.c.b16 %v1081, %v1081
          %1114 = vst [vmem:[%s342] sm:$0xf] %v1082
          %1115 = vst [vmem:[%s342 + $0x4] sm:$0xf] %v1083
          %1116 = vst [vmem:[%s342 + $0x8] sm:$0xf] %v1084
          %1117 = vst [vmem:[%s342 + $0xc] sm:$0xf] %v1085
          %1118 = vst [vmem:[%s342 + $0x10] sm:$0xf] %v1086
          %1119 = vst [vmem:[%s342 + $0x14] sm:$0xf] %v1087
          %1120 = vst [vmem:[%s342 + $0x18] sm:$0xf] %v1088
          %1121 = vst [vmem:[%s342 + $0x1c] sm:$0xf] %v1089
          %1122 = vst [vmem:[%s342 + $0x20] sm:$0xf] %v1090
          %1123 = vst [vmem:[%s342 + $0x24] sm:$0xf] %v1091
          %1124 = vst [vmem:[%s342 + $0x28] sm:$0xf] %v1092
          %1125 = vst [vmem:[%s342 + $0x2c] sm:$0xf] %v1093
          %1126 = vst [vmem:[%s342 + $0x30] sm:$0xf] %v1094
          %1127 = vst [vmem:[%s342 + $0x34] sm:$0xf] %v1095
          %1128 = vst [vmem:[%s342 + $0x38] sm:$0xf] %v1096
          %1129 = vst [vmem:[%s342 + $0x3c] sm:$0xf] %v1097
        $region66: #{encoder_hr_forward.9} parent=53 // pred_fallthru
          _
        %s1130 = smul.u32 16, %s19
        %p1131 = scmp.lt.s32.totalorder %s1130, 15
        %s1132 = scalar_select %p1131, %s1130, 15
        %p1133 = scmp.lt.s32.totalorder %s20, 0
        %s1134 = scalar_select %p1133, %s20, 0
        %s1135 = sadd.s32 %s1134, %s1132
        %s1136 = smul.addr %s1135, 4
        %s1137 = scalar_lea.vmem %s3, %s1136
        // Predicated region
        $region67: #{encoder_hr_forward.9} parent=53 // pred_check
          %p1138 = pneg %p135
        $region68: #{encoder_hr_forward.9} parent=53 // pred_check_branch
          %1140 = sbr.rel (%p1138) target = $region70
        $region69: #{encoder_hr_forward.9} parent=53 // pred_region
          %s1141 = smul.u32 16, %s19
        $region70: #{encoder_hr_forward.9} parent=53 // pred_fallthru
          _
        // Predicated region
        $region71: #{encoder_hr_forward.9} parent=53 // pred_check
          %p1142 = pneg %p135
        $region72: #{encoder_hr_forward.9} parent=53 // pred_check_branch
          %1144 = sbr.rel (%p1142) target = $region74
        $region73: #{encoder_hr_forward.9} parent=53 // pred_region
          %s1145 = smul.u32 16, %s19
          %p1146 = scmp.lt.s32.totalorder %s1145, 15
          %s1147 = scalar_select %p1146, %s1145, 15
          %p1148 = scmp.lt.s32.totalorder %s20, 0
          %s1149 = scalar_select %p1148, %s20, 0
          %s1150 = sadd.s32 %s1149, %s1147
          %s1151 = smul.addr %s1150, 4
          %s1152 = scalar_lea.vmem %s3, %s1151
        $region74: #{encoder_hr_forward.9} parent=53 // pred_fallthru
          _
      $region54: #{encoder_hr_forward.9} parent=5 // pred_fallthru
        _
      %p1153 = scmp.le.s32.totalorder 2, %s9
      // Predicated region
      $region75: #{encoder_hr_forward.9} parent=5 // pred_check
        %p1154 = pneg %p1153
      $region76: #{encoder_hr_forward.9} parent=5 // pred_check_branch
        %1156 = sbr.rel (%p1154) target = $region78
      $region77: #{encoder_hr_forward.9} parent=5 // pred_region
        %s1157 = ssub.s32 %s9, 2
      $region78: #{encoder_hr_forward.9} parent=5 // pred_fallthru
        _
    $region6: #{encoder_hr_forward.9} parent=1 // loop_footer
      %s13 = sadd.s32 1, %s9
    $region7: #{encoder_hr_forward.9} parent=1 // loop_footer_branch
      %8 = sbr.rel target = $region3
    $region8: #{encoder_hr_forward.9} parent=1 // loop_exit
      _

// kernel: encoder_hr_forward.11
$region0: #{encoder_hr_forward.11}
  #allocation0 [shape = 'u32[]', space=smem, size = 0x4, offset = 0x4, fixed_abs, tag = 'smem constant byte address 0x4 - core index']
  #allocation1 [shape = 'u32[144,128]{1,0:T(1,128)}', space=vmem, size = 0x12000, scoped, tag = 'internal scratch']
  #allocation2 [shape = 'f32[32,128]{1,0:T(8,128)}', space=vmem, size = 0x4000, scoped, tag = 'scratch operand']
  %s0 = inlined_call_operand.vmem [shape: bf16[32,1152], index: 0, kind: input, shape index: {}]
  %s1 = inlined_call_operand.vmem [shape: bf16[1152,256], index: 1, kind: input, shape index: {}]
  %s2 = inlined_call_operand.vmem [shape: f32[1,256], index: 2, kind: input, shape index: {}]
  %s3 = inlined_call_operand.vmem [shape: bf16[32,256], index: 3, kind: output, shape index: {}]
  %s4 = sld [smem:[#allocation0]]
  $region157: #{encoder_hr_forward.11} parent=0
    _
  %s6 = ssub.s32 1, %s4
  %s7 = scalar_select 0, %s6, %s4
  $region1: #{encoder_hr_forward.11} parent=0
    #allocation3 [shape = 'u8[49152]{0}', space=vmem, size = 0xc000, scoped, tag = 'input window, operand 0']
    #allocation4 [shape = 'u8[196608]{0}', space=vmem, size = 0x30000, scoped, tag = 'input window, operand 1']
    #allocation5 [shape = 'u8[16384]{0}', space=vmem, size = 0x4000, scoped, tag = 'output window, operand 0']
    loop: start=0, step=1, limit=8
    $region2: #{encoder_hr_forward.11} parent=1 // loop_pre_header
      _
    $region3: #{encoder_hr_forward.11} parent=1 // loop_header
      %s9 = sphi 0, %s13
      %p10 = scmp.ge.s32.totalorder %s9, 8
      %s16 = sphi 0, %s35
      %s17 = sphi 0, %s31
      %s18 = sphi 0, %s27
      %s19 = sphi 0, %s16
      %s20 = sphi 0, %s17
      %s21 = sphi 0, %s18
      %s22 = sphi 0, %s19
      %s23 = sphi 0, %s20
      %s24 = sphi 0, %s21
      %s40 = sphi 0, %s42
      %s43 = sphi 0, %s40
      %s44 = sphi 0, %s43
      %s60 = sphi 0, %s44
      %s68 = sphi 0, %s70
      %s71 = sphi 0, %s68
      %s72 = sphi 0, %s71
      %s88 = sphi 0, %s72
      %s94 = sphi 0, %s96
      %s97 = sphi 0, %s94
      %s98 = sphi 0, %s97
      %s114 = sphi 0, %s98
      %s122 = sphi 0, %s124
      %s125 = sphi 0, %s122
      %s126 = sphi 0, %s125
      %s142 = sphi 0, %s126
    $region4: #{encoder_hr_forward.11} parent=1 // loop_header_branch
      %12 = sbr.rel (%p10) target = $region8
    $region5: #{encoder_hr_forward.11} parent=1 // loop_body
      %s14 = ssub.s32 %s9, 1
      %s15 = ssub.s32 %s9, 2
      %s25 = sadd.s32 1, %s18
      %p26 = scmp.ge.s32.totalorder %s25, 3
      %s27 = scalar_select %p26, 0, %s25
      %s28 = sadd.s32 1, %s17
      %s29 = scalar_select %p26, %s28, %s17
      %p30 = scmp.ge.s32.totalorder %s29, 2
      %s31 = scalar_select %p30, 0, %s29
      %s32 = sadd.s32 1, %s16
      %s33 = scalar_select %p30, %s32, %s16
      %p34 = scmp.ge.s32.totalorder %s33, 1
      %s35 = scalar_select %p34, 0, %s33
      %s36 = ssub.s32 %s16, %s35
      %s37 = ssub.s32 %s18, %s27
      %s38 = sor.u32 %s36, %s37
      %p39 = scmp.eq.s32.totalorder %s38, 0
      %s41 = sadd.s32 %s40, 1
      %s42 = scalar_select %p39, %s40, %s41
      %p45 = pneg %p39
      %p46 = scmp.eq.s32.totalorder %s9, 5
      %p47 = por %p45, %p46
      %p48 = scmp.ne.s32.totalorder %s40, %s43
      %p49 = scmp.eq.s32.totalorder %s9, 0
      %p50 = por %p48, %p49
      %p51 = scmp.ne.s32.totalorder %s40, %s43
      %p52 = scmp.eq.s32.totalorder %s14, 5
      %p53 = por %p51, %p52
      %p54 = scmp.ne.s32.totalorder %s43, %s44
      %p55 = scmp.eq.s32.totalorder %s14, 0
      %p56 = por %p54, %p55
      %p57 = scmp.ne.s32.totalorder %s43, %s44
      %p58 = scmp.eq.s32.totalorder %s15, 5
      %p59 = por %p57, %p58
      %p61 = scmp.ne.s32.totalorder %s44, %s60
      %p62 = scmp.eq.s32.totalorder %s15, 0
      %p63 = por %p61, %p62
      %s64 = ssub.s32 %s18, %s27
      %s65 = ssub.s32 %s17, %s31
      %s66 = sor.u32 %s64, %s65
      %p67 = scmp.eq.s32.totalorder %s66, 0
      %s69 = sadd.s32 %s68, 1
      %s70 = scalar_select %p67, %s68, %s69
      %p73 = pneg %p67
      %p74 = scmp.eq.s32.totalorder %s9, 5
      %p75 = por %p73, %p74
      %p76 = scmp.ne.s32.totalorder %s68, %s71
      %p77 = scmp.eq.s32.totalorder %s9, 0
      %p78 = por %p76, %p77
      %p79 = scmp.ne.s32.totalorder %s68, %s71
      %p80 = scmp.eq.s32.totalorder %s14, 5
      %p81 = por %p79, %p80
      %p82 = scmp.ne.s32.totalorder %s71, %s72
      %p83 = scmp.eq.s32.totalorder %s14, 0
      %p84 = por %p82, %p83
      %p85 = scmp.ne.s32.totalorder %s71, %s72
      %p86 = scmp.eq.s32.totalorder %s15, 5
      %p87 = por %p85, %p86
      %p89 = scmp.ne.s32.totalorder %s72, %s88
      %p90 = scmp.eq.s32.totalorder %s15, 0
      %p91 = por %p89, %p90
      %s92 = ssub.s32 %s17, %s31
      %p93 = scmp.eq.s32.totalorder %s92, 0
      %s95 = sadd.s32 %s94, 1
      %s96 = scalar_select %p93, %s94, %s95
      %p99 = pneg %p93
      %p100 = scmp.eq.s32.totalorder %s9, 5
      %p101 = por %p99, %p100
      %p102 = scmp.ne.s32.totalorder %s94, %s97
      %p103 = scmp.eq.s32.totalorder %s9, 0
      %p104 = por %p102, %p103
      %p105 = scmp.ne.s32.totalorder %s94, %s97
      %p106 = scmp.eq.s32.totalorder %s14, 5
      %p107 = por %p105, %p106
      %p108 = scmp.ne.s32.totalorder %s97, %s98
      %p109 = scmp.eq.s32.totalorder %s14, 0
      %p110 = por %p108, %p109
      %p111 = scmp.ne.s32.totalorder %s97, %s98
      %p112 = scmp.eq.s32.totalorder %s15, 5
      %p113 = por %p111, %p112
      %p115 = scmp.ne.s32.totalorder %s98, %s114
      %p116 = scmp.eq.s32.totalorder %s15, 0
      %p117 = por %p115, %p116
      %s118 = ssub.s32 %s16, %s35
      %s119 = ssub.s32 %s17, %s31
      %s120 = sor.u32 %s118, %s119
      %p121 = scmp.eq.s32.totalorder %s120, 0
      %s123 = sadd.s32 %s122, 1
      %s124 = scalar_select %p121, %s122, %s123
      %p127 = pneg %p121
      %p128 = scmp.eq.s32.totalorder %s9, 5
      %p129 = por %p127, %p128
      %p130 = scmp.ne.s32.totalorder %s122, %s125
      %p131 = scmp.eq.s32.totalorder %s9, 0
      %p132 = por %p130, %p131
      %p133 = scmp.ne.s32.totalorder %s122, %s125
      %p134 = scmp.eq.s32.totalorder %s14, 5
      %p135 = por %p133, %p134
      %p136 = scmp.ne.s32.totalorder %s125, %s126
      %p137 = scmp.eq.s32.totalorder %s14, 0
      %p138 = por %p136, %p137
      %p139 = scmp.ne.s32.totalorder %s125, %s126
      %p140 = scmp.eq.s32.totalorder %s15, 5
      %p141 = por %p139, %p140
      %p143 = scmp.ne.s32.totalorder %s126, %s142
      %p144 = scmp.eq.s32.totalorder %s15, 0
      %p145 = por %p143, %p144
      %p146 = scmp.le.s32.totalorder 1, %s9
      %p147 = scmp.lt.s32.totalorder %s9, 7
      %p148 = pnand %p146, %p147
      %p149 = pneg %p148
      // Predicated region
      $region9: #{encoder_hr_forward.11} parent=5 // pred_check
        _
      $region10: #{encoder_hr_forward.11} parent=5 // pred_check_branch
        %151 = sbr.rel (%p148) target = $region12
      $region11: #{encoder_hr_forward.11} parent=5 // pred_region
        %s152 = ssub.s32 %s9, 1
      $region12: #{encoder_hr_forward.11} parent=5 // pred_fallthru
        _
      %p153 = scmp.lt.s32.totalorder %s9, 6
      // Predicated region
      $region13: #{encoder_hr_forward.11} parent=5 // pred_check
        %p154 = pneg %p153
      $region14: #{encoder_hr_forward.11} parent=5 // pred_check_branch
        %156 = sbr.rel (%p154) target = $region16
      $region15: #{encoder_hr_forward.11} parent=5 // pred_region
        // Predicated region
        $region17: #{encoder_hr_forward.11} parent=15 // pred_check
          %p157 = pneg %p50
        $region18: #{encoder_hr_forward.11} parent=15 // pred_check_branch
          %159 = sbr.rel (%p157) target = $region20
        $region19: #{encoder_hr_forward.11} parent=15 // pred_region
          %s160 = sand.u32 %s40, 1
          %s161 = sand.u32 %s40, 1
          %s162 = smul.addr %s161, 48
          %s163 = scalar_lea.vmem [#allocation3], %s162
          %s164 = smul.u32 4, %s16
          %s165 = smul.u32 3, %s18
          %s166 = smul.addr %s164, 9
          %s167 = sadd.s32 %s165, %s166
          %s168 = smul.addr %s167, 4
          %s169 = scalar_lea.vmem %s0, %s168
          // Predicated region
          $region21: #{encoder_hr_forward.11} parent=19 // pred_check
            _
          $region22: #{encoder_hr_forward.11} parent=19 // pred_check_branch
            %171 = sbr.rel (0) target = $region24
          $region23: #{encoder_hr_forward.11} parent=19 // pred_region
            // Predicated region
            $region25: #{encoder_hr_forward.11} parent=23 // pred_check
              _
            $region26: #{encoder_hr_forward.11} parent=23 // pred_check_branch
              %173 = sbr.rel (0) target = $region28
            $region27: #{encoder_hr_forward.11} parent=23 // pred_region
              %s174 = scalar_lea.vmem %s169, 8
              %s175 = scalar_lea.vmem %s163, 8 [#allocation3]
              loop: start=0, step=1, limit=1
              $region29: #{encoder_hr_forward.11} parent=27 // loop_pre_header
                _
              $region30: #{encoder_hr_forward.11} parent=27 // loop_header
                %s177 = sphi 0, %s181
                %p178 = scmp.ge.s32.totalorder %s177, 1
                %s182 = sphi %s169, %s169
                %s183 = sphi %s163, %s163
              $region31: #{encoder_hr_forward.11} parent=27 // loop_header_branch
                %180 = sbr.rel (%p178) target = $region35
              $region32: #{encoder_hr_forward.11} parent=27 // loop_body
                %v184 = vld [vmem:[%s182] sm:$0xff]
                %185 = vst [vmem:[%s183] sm:$0xff] %v184
                %v186 = vld [vmem:[%s182 + $0x24] sm:$0xff]
                %187 = vst [vmem:[%s183 + $0xc] sm:$0xff] %v186
                %v188 = vld [vmem:[%s182 + $0x48] sm:$0xff]
                %189 = vst [vmem:[%s183 + $0x18] sm:$0xff] %v188
                %v190 = vld [vmem:[%s182 + $0x6c] sm:$0xff]
                %191 = vst [vmem:[%s183 + $0x24] sm:$0xff] %v190
              $region33: #{encoder_hr_forward.11} parent=27 // loop_footer
                %s181 = sadd.s32 1, %s177
              $region34: #{encoder_hr_forward.11} parent=27 // loop_footer_branch
                %176 = sbr.rel target = $region30
              $region35: #{encoder_hr_forward.11} parent=27 // loop_exit
                _
              loop: start=0, step=1, limit=1
              $region36: #{encoder_hr_forward.11} parent=27 // loop_pre_header
                _
              $region37: #{encoder_hr_forward.11} parent=27 // loop_header
                %s194 = sphi 0, %s198
                %p195 = scmp.ge.s32.totalorder %s194, 1
                %s199 = sphi %s174, %s174
                %s200 = sphi %s175, %s175
              $region38: #{encoder_hr_forward.11} parent=27 // loop_header_branch
                %197 = sbr.rel (%p195) target = $region42
              $region39: #{encoder_hr_forward.11} parent=27 // loop_body
                %v201 = vld [vmem:[%s199] sm:$0xf]
                %202 = vst [vmem:[%s200] sm:$0xf] %v201
                %v203 = vld [vmem:[%s199 + $0x24] sm:$0xf]
                %204 = vst [vmem:[%s200 + $0xc] sm:$0xf] %v203
                %v205 = vld [vmem:[%s199 + $0x48] sm:$0xf]
                %206 = vst [vmem:[%s200 + $0x18] sm:$0xf] %v205
                %v207 = vld [vmem:[%s199 + $0x6c] sm:$0xf]
                %208 = vst [vmem:[%s200 + $0x24] sm:$0xf] %v207
              $region40: #{encoder_hr_forward.11} parent=27 // loop_footer
                %s198 = sadd.s32 1, %s194
              $region41: #{encoder_hr_forward.11} parent=27 // loop_footer_branch
                %193 = sbr.rel target = $region37
              $region42: #{encoder_hr_forward.11} parent=27 // loop_exit
                _
            $region28: #{encoder_hr_forward.11} parent=23 // pred_fallthru
              _
          $region24: #{encoder_hr_forward.11} parent=19 // pred_fallthru
            _
          %209 = vnop
        $region20: #{encoder_hr_forward.11} parent=15 // pred_fallthru
          _
        // Predicated region
        $region43: #{encoder_hr_forward.11} parent=15 // pred_check
          %p210 = pneg %p78
        $region44: #{encoder_hr_forward.11} parent=15 // pred_check_branch
          %212 = sbr.rel (%p210) target = $region46
        $region45: #{encoder_hr_forward.11} parent=15 // pred_region
          %s213 = sand.u32 %s68, 1
          %s214 = sand.u32 %s68, 1
          %s215 = smul.addr %s214, 192
          %s216 = scalar_lea.vmem [#allocation4], %s215
          %s217 = smul.u32 48, %s18
          %s218 = smul.addr %s217, 2
          %s219 = sadd.s32 %s17, %s218
          %s220 = smul.addr %s219, 4
          %s221 = scalar_lea.vmem %s1, %s220
          // Predicated region
          $region47: #{encoder_hr_forward.11} parent=45 // pred_check
            _
          $region48: #{encoder_hr_forward.11} parent=45 // pred_check_branch
            %223 = sbr.rel (0) target = $region50
          $region49: #{encoder_hr_forward.11} parent=45 // pred_region
            // Predicated region
            $region51: #{encoder_hr_forward.11} parent=49 // pred_check
              _
            $region52: #{encoder_hr_forward.11} parent=49 // pred_check_branch
              %225 = sbr.rel target = $region54
            $region53: #{encoder_hr_forward.11} parent=49 // pred_region
              // Predicated region
              $region66: #{encoder_hr_forward.11} parent=53 // pred_check
                _
              $region67: #{encoder_hr_forward.11} parent=53 // pred_check_branch
                %334 = sbr.rel (0) target = $region69
              $region68: #{encoder_hr_forward.11} parent=53 // pred_region
                loop: start=0, step=1, limit=1
                $region70: #{encoder_hr_forward.11} parent=68 // loop_pre_header
                  _
                $region71: #{encoder_hr_forward.11} parent=68 // loop_header
                  %s336 = sphi 0, %s340
                  %p337 = scmp.ge.s32.totalorder %s336, 1
                  %s341 = sphi %s221, %s221
                  %s342 = sphi %s216, %s216
                $region72: #{encoder_hr_forward.11} parent=68 // loop_header_branch
                  %339 = sbr.rel (%p337) target = $region76
                $region73: #{encoder_hr_forward.11} parent=68 // loop_body
                  _
                $region74: #{encoder_hr_forward.11} parent=68 // loop_footer
                  %s340 = sadd.s32 1, %s336
                $region75: #{encoder_hr_forward.11} parent=68 // loop_footer_branch
                  %335 = sbr.rel target = $region71
                $region76: #{encoder_hr_forward.11} parent=68 // loop_exit
                  _
                loop: start=0, step=1, limit=1
                $region77: #{encoder_hr_forward.11} parent=68 // loop_pre_header
                  _
                $region78: #{encoder_hr_forward.11} parent=68 // loop_header
                  %s345 = sphi 0, %s349
                  %p346 = scmp.ge.s32.totalorder %s345, 1
                  %s350 = sphi %s221, %s221
                  %s351 = sphi %s216, %s216
                $region79: #{encoder_hr_forward.11} parent=68 // loop_header_branch
                  %348 = sbr.rel (%p346) target = $region83
                $region80: #{encoder_hr_forward.11} parent=68 // loop_body
                  %v352 = vld [vmem:[%s350] sm:$0xf]
                  %353 = vst [vmem:[%s351] sm:$0xf] %v352
                  %v354 = vld [vmem:[%s350 + $0x8] sm:$0xf]
                  %355 = vst [vmem:[%s351 + $0x4] sm:$0xf] %v354
                  %v356 = vld [vmem:[%s350 + $0x10] sm:$0xf]
                  %357 = vst [vmem:[%s351 + $0x8] sm:$0xf] %v356
                  %v358 = vld [vmem:[%s350 + $0x18] sm:$0xf]
                  %359 = vst [vmem:[%s351 + $0xc] sm:$0xf] %v358
                  %v360 = vld [vmem:[%s350 + $0x20] sm:$0xf]
                  %361 = vst [vmem:[%s351 + $0x10] sm:$0xf] %v360
                  %v362 = vld [vmem:[%s350 + $0x28] sm:$0xf]
                  %363 = vst [vmem:[%s351 + $0x14] sm:$0xf] %v362
                  %v364 = vld [vmem:[%s350 + $0x30] sm:$0xf]
                  %365 = vst [vmem:[%s351 + $0x18] sm:$0xf] %v364
                  %v366 = vld [vmem:[%s350 + $0x38] sm:$0xf]
                  %367 = vst [vmem:[%s351 + $0x1c] sm:$0xf] %v366
                  %v368 = vld [vmem:[%s350 + $0x40] sm:$0xf]
                  %369 = vst [vmem:[%s351 + $0x20] sm:$0xf] %v368
                  %v370 = vld [vmem:[%s350 + $0x48] sm:$0xf]
                  %371 = vst [vmem:[%s351 + $0x24] sm:$0xf] %v370
                  %v372 = vld [vmem:[%s350 + $0x50] sm:$0xf]
                  %373 = vst [vmem:[%s351 + $0x28] sm:$0xf] %v372
                  %v374 = vld [vmem:[%s350 + $0x58] sm:$0xf]
                  %375 = vst [vmem:[%s351 + $0x2c] sm:$0xf] %v374
                  %v376 = vld [vmem:[%s350 + $0x60] sm:$0xf]
                  %377 = vst [vmem:[%s351 + $0x30] sm:$0xf] %v376
                  %v378 = vld [vmem:[%s350 + $0x68] sm:$0xf]
                  %379 = vst [vmem:[%s351 + $0x34] sm:$0xf] %v378
                  %v380 = vld [vmem:[%s350 + $0x70] sm:$0xf]
                  %381 = vst [vmem:[%s351 + $0x38] sm:$0xf] %v380
                  %v382 = vld [vmem:[%s350 + $0x78] sm:$0xf]
                  %383 = vst [vmem:[%s351 + $0x3c] sm:$0xf] %v382
                  %v384 = vld [vmem:[%s350 + $0x80] sm:$0xf]
                  %385 = vst [vmem:[%s351 + $0x40] sm:$0xf] %v384
                  %v386 = vld [vmem:[%s350 + $0x88] sm:$0xf]
                  %387 = vst [vmem:[%s351 + $0x44] sm:$0xf] %v386
                  %v388 = vld [vmem:[%s350 + $0x90] sm:$0xf]
                  %389 = vst [vmem:[%s351 + $0x48] sm:$0xf] %v388
                  %v390 = vld [vmem:[%s350 + $0x98] sm:$0xf]
                  %391 = vst [vmem:[%s351 + $0x4c] sm:$0xf] %v390
                  %v392 = vld [vmem:[%s350 + $0xa0] sm:$0xf]
                  %393 = vst [vmem:[%s351 + $0x50] sm:$0xf] %v392
                  %v394 = vld [vmem:[%s350 + $0xa8] sm:$0xf]
                  %395 = vst [vmem:[%s351 + $0x54] sm:$0xf] %v394
                  %v396 = vld [vmem:[%s350 + $0xb0] sm:$0xf]
                  %397 = vst [vmem:[%s351 + $0x58] sm:$0xf] %v396
                  %v398 = vld [vmem:[%s350 + $0xb8] sm:$0xf]
                  %399 = vst [vmem:[%s351 + $0x5c] sm:$0xf] %v398
                  %v400 = vld [vmem:[%s350 + $0xc0] sm:$0xf]
                  %401 = vst [vmem:[%s351 + $0x60] sm:$0xf] %v400
                  %v402 = vld [vmem:[%s350 + $0xc8] sm:$0xf]
                  %403 = vst [vmem:[%s351 + $0x64] sm:$0xf] %v402
                  %v404 = vld [vmem:[%s350 + $0xd0] sm:$0xf]
                  %405 = vst [vmem:[%s351 + $0x68] sm:$0xf] %v404
                  %v406 = vld [vmem:[%s350 + $0xd8] sm:$0xf]
                  %407 = vst [vmem:[%s351 + $0x6c] sm:$0xf] %v406
                  %v408 = vld [vmem:[%s350 + $0xe0] sm:$0xf]
                  %409 = vst [vmem:[%s351 + $0x70] sm:$0xf] %v408
                  %v410 = vld [vmem:[%s350 + $0xe8] sm:$0xf]
                  %411 = vst [vmem:[%s351 + $0x74] sm:$0xf] %v410
                  %v412 = vld [vmem:[%s350 + $0xf0] sm:$0xf]
                  %413 = vst [vmem:[%s351 + $0x78] sm:$0xf] %v412
                  %v414 = vld [vmem:[%s350 + $0xf8] sm:$0xf]
                  %415 = vst [vmem:[%s351 + $0x7c] sm:$0xf] %v414
                  %v416 = vld [vmem:[%s350 + $0x100] sm:$0xf]
                  %417 = vst [vmem:[%s351 + $0x80] sm:$0xf] %v416
                  %v418 = vld [vmem:[%s350 + $0x108] sm:$0xf]
                  %419 = vst [vmem:[%s351 + $0x84] sm:$0xf] %v418
                  %v420 = vld [vmem:[%s350 + $0x110] sm:$0xf]
                  %421 = vst [vmem:[%s351 + $0x88] sm:$0xf] %v420
                  %v422 = vld [vmem:[%s350 + $0x118] sm:$0xf]
                  %423 = vst [vmem:[%s351 + $0x8c] sm:$0xf] %v422
                  %v424 = vld [vmem:[%s350 + $0x120] sm:$0xf]
                  %425 = vst [vmem:[%s351 + $0x90] sm:$0xf] %v424
                  %v426 = vld [vmem:[%s350 + $0x128] sm:$0xf]
                  %427 = vst [vmem:[%s351 + $0x94] sm:$0xf] %v426
                  %v428 = vld [vmem:[%s350 + $0x130] sm:$0xf]
                  %429 = vst [vmem:[%s351 + $0x98] sm:$0xf] %v428
                  %v430 = vld [vmem:[%s350 + $0x138] sm:$0xf]
                  %431 = vst [vmem:[%s351 + $0x9c] sm:$0xf] %v430
                  %v432 = vld [vmem:[%s350 + $0x140] sm:$0xf]
                  %433 = vst [vmem:[%s351 + $0xa0] sm:$0xf] %v432
                  %v434 = vld [vmem:[%s350 + $0x148] sm:$0xf]
                  %435 = vst [vmem:[%s351 + $0xa4] sm:$0xf] %v434
                  %v436 = vld [vmem:[%s350 + $0x150] sm:$0xf]
                  %437 = vst [vmem:[%s351 + $0xa8] sm:$0xf] %v436
                  %v438 = vld [vmem:[%s350 + $0x158] sm:$0xf]
                  %439 = vst [vmem:[%s351 + $0xac] sm:$0xf] %v438
                  %v440 = vld [vmem:[%s350 + $0x160] sm:$0xf]
                  %441 = vst [vmem:[%s351 + $0xb0] sm:$0xf] %v440
                  %v442 = vld [vmem:[%s350 + $0x168] sm:$0xf]
                  %443 = vst [vmem:[%s351 + $0xb4] sm:$0xf] %v442
                  %v444 = vld [vmem:[%s350 + $0x170] sm:$0xf]
                  %445 = vst [vmem:[%s351 + $0xb8] sm:$0xf] %v444
                  %v446 = vld [vmem:[%s350 + $0x178] sm:$0xf]
                  %447 = vst [vmem:[%s351 + $0xbc] sm:$0xf] %v446
                $region81: #{encoder_hr_forward.11} parent=68 // loop_footer
                  %s349 = sadd.s32 1, %s345
                $region82: #{encoder_hr_forward.11} parent=68 // loop_footer_branch
                  %344 = sbr.rel target = $region78
                $region83: #{encoder_hr_forward.11} parent=68 // loop_exit
                  _
              $region69: #{encoder_hr_forward.11} parent=53 // pred_fallthru
                _
            $region54: #{encoder_hr_forward.11} parent=49 // pred_fallthru
              _
            // Predicated region
            $region55: #{encoder_hr_forward.11} parent=49 // pred_check
              _
            $region56: #{encoder_hr_forward.11} parent=49 // pred_check_branch
              %227 = sbr.rel (0) target = $region58
            $region57: #{encoder_hr_forward.11} parent=49 // pred_region
              loop: start=0, step=1, limit=1
              $region59: #{encoder_hr_forward.11} parent=57 // loop_pre_header
                _
              $region60: #{encoder_hr_forward.11} parent=57 // loop_header
                %s230 = sphi 0, %s234
                %p231 = scmp.ge.s32.totalorder %s230, 1
                %s235 = sphi %s221, %s221
                %s236 = sphi %s216, %s216
              $region61: #{encoder_hr_forward.11} parent=57 // loop_header_branch
                %233 = sbr.rel (%p231) target = $region65
              $region62: #{encoder_hr_forward.11} parent=57 // loop_body
                %v237 = vld [vmem:[%s235] sm:$0xf]
                %238 = vst [vmem:[%s236] sm:$0xf] %v237
                %v239 = vld [vmem:[%s235 + $0x8] sm:$0xf]
                %240 = vst [vmem:[%s236 + $0x4] sm:$0xf] %v239
                %v241 = vld [vmem:[%s235 + $0x10] sm:$0xf]
                %242 = vst [vmem:[%s236 + $0x8] sm:$0xf] %v241
                %v243 = vld [vmem:[%s235 + $0x18] sm:$0xf]
                %244 = vst [vmem:[%s236 + $0xc] sm:$0xf] %v243
                %v245 = vld [vmem:[%s235 + $0x20] sm:$0xf]
                %246 = vst [vmem:[%s236 + $0x10] sm:$0xf] %v245
                %v247 = vld [vmem:[%s235 + $0x28] sm:$0xf]
                %248 = vst [vmem:[%s236 + $0x14] sm:$0xf] %v247
                %v249 = vld [vmem:[%s235 + $0x30] sm:$0xf]
                %250 = vst [vmem:[%s236 + $0x18] sm:$0xf] %v249
                %v251 = vld [vmem:[%s235 + $0x38] sm:$0xf]
                %252 = vst [vmem:[%s236 + $0x1c] sm:$0xf] %v251
                %v253 = vld [vmem:[%s235 + $0x40] sm:$0xf]
                %254 = vst [vmem:[%s236 + $0x20] sm:$0xf] %v253
                %v255 = vld [vmem:[%s235 + $0x48] sm:$0xf]
                %256 = vst [vmem:[%s236 + $0x24] sm:$0xf] %v255
                %v257 = vld [vmem:[%s235 + $0x50] sm:$0xf]
                %258 = vst [vmem:[%s236 + $0x28] sm:$0xf] %v257
                %v259 = vld [vmem:[%s235 + $0x58] sm:$0xf]
                %260 = vst [vmem:[%s236 + $0x2c] sm:$0xf] %v259
                %v261 = vld [vmem:[%s235 + $0x60] sm:$0xf]
                %262 = vst [vmem:[%s236 + $0x30] sm:$0xf] %v261
                %v263 = vld [vmem:[%s235 + $0x68] sm:$0xf]
                %264 = vst [vmem:[%s236 + $0x34] sm:$0xf] %v263
                %v265 = vld [vmem:[%s235 + $0x70] sm:$0xf]
                %266 = vst [vmem:[%s236 + $0x38] sm:$0xf] %v265
                %v267 = vld [vmem:[%s235 + $0x78] sm:$0xf]
                %268 = vst [vmem:[%s236 + $0x3c] sm:$0xf] %v267
                %v269 = vld [vmem:[%s235 + $0x80] sm:$0xf]
                %270 = vst [vmem:[%s236 + $0x40] sm:$0xf] %v269
                %v271 = vld [vmem:[%s235 + $0x88] sm:$0xf]
                %272 = vst [vmem:[%s236 + $0x44] sm:$0xf] %v271
                %v273 = vld [vmem:[%s235 + $0x90] sm:$0xf]
                %274 = vst [vmem:[%s236 + $0x48] sm:$0xf] %v273
                %v275 = vld [vmem:[%s235 + $0x98] sm:$0xf]
                %276 = vst [vmem:[%s236 + $0x4c] sm:$0xf] %v275
                %v277 = vld [vmem:[%s235 + $0xa0] sm:$0xf]
                %278 = vst [vmem:[%s236 + $0x50] sm:$0xf] %v277
                %v279 = vld [vmem:[%s235 + $0xa8] sm:$0xf]
                %280 = vst [vmem:[%s236 + $0x54] sm:$0xf] %v279
                %v281 = vld [vmem:[%s235 + $0xb0] sm:$0xf]
                %282 = vst [vmem:[%s236 + $0x58] sm:$0xf] %v281
                %v283 = vld [vmem:[%s235 + $0xb8] sm:$0xf]
                %284 = vst [vmem:[%s236 + $0x5c] sm:$0xf] %v283
                %v285 = vld [vmem:[%s235 + $0xc0] sm:$0xf]
                %286 = vst [vmem:[%s236 + $0x60] sm:$0xf] %v285
                %v287 = vld [vmem:[%s235 + $0xc8] sm:$0xf]
                %288 = vst [vmem:[%s236 + $0x64] sm:$0xf] %v287
                %v289 = vld [vmem:[%s235 + $0xd0] sm:$0xf]
                %290 = vst [vmem:[%s236 + $0x68] sm:$0xf] %v289
                %v291 = vld [vmem:[%s235 + $0xd8] sm:$0xf]
                %292 = vst [vmem:[%s236 + $0x6c] sm:$0xf] %v291
                %v293 = vld [vmem:[%s235 + $0xe0] sm:$0xf]
                %294 = vst [vmem:[%s236 + $0x70] sm:$0xf] %v293
                %v295 = vld [vmem:[%s235 + $0xe8] sm:$0xf]
                %296 = vst [vmem:[%s236 + $0x74] sm:$0xf] %v295
                %v297 = vld [vmem:[%s235 + $0xf0] sm:$0xf]
                %298 = vst [vmem:[%s236 + $0x78] sm:$0xf] %v297
                %v299 = vld [vmem:[%s235 + $0xf8] sm:$0xf]
                %300 = vst [vmem:[%s236 + $0x7c] sm:$0xf] %v299
                %v301 = vld [vmem:[%s235 + $0x100] sm:$0xf]
                %302 = vst [vmem:[%s236 + $0x80] sm:$0xf] %v301
                %v303 = vld [vmem:[%s235 + $0x108] sm:$0xf]
                %304 = vst [vmem:[%s236 + $0x84] sm:$0xf] %v303
                %v305 = vld [vmem:[%s235 + $0x110] sm:$0xf]
                %306 = vst [vmem:[%s236 + $0x88] sm:$0xf] %v305
                %v307 = vld [vmem:[%s235 + $0x118] sm:$0xf]
                %308 = vst [vmem:[%s236 + $0x8c] sm:$0xf] %v307
                %v309 = vld [vmem:[%s235 + $0x120] sm:$0xf]
                %310 = vst [vmem:[%s236 + $0x90] sm:$0xf] %v309
                %v311 = vld [vmem:[%s235 + $0x128] sm:$0xf]
                %312 = vst [vmem:[%s236 + $0x94] sm:$0xf] %v311
                %v313 = vld [vmem:[%s235 + $0x130] sm:$0xf]
                %314 = vst [vmem:[%s236 + $0x98] sm:$0xf] %v313
                %v315 = vld [vmem:[%s235 + $0x138] sm:$0xf]
                %316 = vst [vmem:[%s236 + $0x9c] sm:$0xf] %v315
                %v317 = vld [vmem:[%s235 + $0x140] sm:$0xf]
                %318 = vst [vmem:[%s236 + $0xa0] sm:$0xf] %v317
                %v319 = vld [vmem:[%s235 + $0x148] sm:$0xf]
                %320 = vst [vmem:[%s236 + $0xa4] sm:$0xf] %v319
                %v321 = vld [vmem:[%s235 + $0x150] sm:$0xf]
                %322 = vst [vmem:[%s236 + $0xa8] sm:$0xf] %v321
                %v323 = vld [vmem:[%s235 + $0x158] sm:$0xf]
                %324 = vst [vmem:[%s236 + $0xac] sm:$0xf] %v323
                %v325 = vld [vmem:[%s235 + $0x160] sm:$0xf]
                %326 = vst [vmem:[%s236 + $0xb0] sm:$0xf] %v325
                %v327 = vld [vmem:[%s235 + $0x168] sm:$0xf]
                %328 = vst [vmem:[%s236 + $0xb4] sm:$0xf] %v327
                %v329 = vld [vmem:[%s235 + $0x170] sm:$0xf]
                %330 = vst [vmem:[%s236 + $0xb8] sm:$0xf] %v329
                %v331 = vld [vmem:[%s235 + $0x178] sm:$0xf]
                %332 = vst [vmem:[%s236 + $0xbc] sm:$0xf] %v331
              $region63: #{encoder_hr_forward.11} parent=57 // loop_footer
                %s234 = sadd.s32 1, %s230
              $region64: #{encoder_hr_forward.11} parent=57 // loop_footer_branch
                %229 = sbr.rel target = $region60
              $region65: #{encoder_hr_forward.11} parent=57 // loop_exit
                _
            $region58: #{encoder_hr_forward.11} parent=49 // pred_fallthru
              _
          $region50: #{encoder_hr_forward.11} parent=45 // pred_fallthru
            _
          %448 = vnop
        $region46: #{encoder_hr_forward.11} parent=15 // pred_fallthru
          _
        // Predicated region
        $region84: #{encoder_hr_forward.11} parent=15 // pred_check
          %p449 = pneg %p104
        $region85: #{encoder_hr_forward.11} parent=15 // pred_check_branch
          %451 = sbr.rel (%p449) target = $region87
        $region86: #{encoder_hr_forward.11} parent=15 // pred_region
          %p452 = scmp.lt.s32.totalorder %s17, 1
          %s453 = scalar_select %p452, %s17, 1
          %s454 = scalar_lea.vmem %s2, %s453
        $region87: #{encoder_hr_forward.11} parent=15 // pred_fallthru
          _
      $region16: #{encoder_hr_forward.11} parent=5 // pred_fallthru
        _
      %p455 = scmp.le.s32.totalorder 1, %s9
      %p456 = scmp.lt.s32.totalorder %s9, 7
      %p457 = pnand %p455, %p456
      %p458 = pneg %p457
      // Predicated region
      $region88: #{encoder_hr_forward.11} parent=5 // pred_check
        _
      $region89: #{encoder_hr_forward.11} parent=5 // pred_check_branch
        %460 = sbr.rel (%p457) target = $region91
      $region90: #{encoder_hr_forward.11} parent=5 // pred_region
        %s461 = ssub.s32 %s9, 1
        %s462 = sand.u32 %s43, 1
        %s463 = sand.u32 %s43, 1
        %s464 = smul.addr %s463, 48
        %s465 = scalar_lea.vmem [#allocation3], %s464
        // Predicated region
        $region92: #{encoder_hr_forward.11} parent=90 // pred_check
          %p466 = pneg %p56
        $region93: #{encoder_hr_forward.11} parent=90 // pred_check_branch
          %468 = sbr.rel (%p466) target = $region95
        $region94: #{encoder_hr_forward.11} parent=90 // pred_region
          _
        $region95: #{encoder_hr_forward.11} parent=90 // pred_fallthru
          _
        %s469 = sand.u32 %s71, 1
        %s470 = sand.u32 %s71, 1
        %s471 = smul.addr %s470, 192
        %s472 = scalar_lea.vmem [#allocation4], %s471
        // Predicated region
        $region96: #{encoder_hr_forward.11} parent=90 // pred_check
          %p473 = pneg %p84
        $region97: #{encoder_hr_forward.11} parent=90 // pred_check_branch
          %475 = sbr.rel (%p473) target = $region99
        $region98: #{encoder_hr_forward.11} parent=90 // pred_region
          _
        $region99: #{encoder_hr_forward.11} parent=90 // pred_fallthru
          _
        %s476 = sand.u32 %s43, 1
        %s477 = sand.u32 %s43, 1
        %s478 = smul.addr %s477, 48
        %s479 = scalar_lea.vmem [#allocation3], %s478
        %p480 = pneg %p56
        %p481 = pneg %p53
        %s482 = sand.u32 %s71, 1
        %s483 = sand.u32 %s71, 1
        %s484 = smul.addr %s483, 192
        %s485 = scalar_lea.vmem [#allocation4], %s484
        %p486 = pneg %p84
        %p487 = pneg %p81
        %p488 = scmp.lt.s32.totalorder %s20, 1
        %s489 = scalar_select %p488, %s20, 1
        %s490 = scalar_lea.vmem %s2, %s489
        %p491 = pneg %p110
        %p492 = pneg %p107
        %p493 = pneg %p138
        %p494 = pneg %p135
        %s495 = sand.u32 %s125, 1
        %s496 = sand.u32 %s125, 1
        %s497 = smul.addr %s496, 16
        %s498 = scalar_lea.vmem [#allocation5], %s497
        %s499 = smul.u32 4, %s19
        %s500 = smul.u32 3, %s21
        %s501 = smul.u32 48, %s21
        %p502 = scmp.lt.s32.totalorder %s20, 1
        %s503 = scalar_select %p502, %s20, 1
        %s504 = scalar_lea.vmem %s2, %s503
        %s505 = smul.u32 4, %s19
        %p507 = scmp.eq.s32.totalorder %s21, 0
        // Predicated region
        $region100: #{encoder_hr_forward.11} parent=90 // pred_check
          %p508 = pneg %p507
        $region101: #{encoder_hr_forward.11} parent=90 // pred_check_branch
          %510 = sbr.rel (%p508) target = $region103
        $region102: #{encoder_hr_forward.11} parent=90 // pred_region
          %511 = vst [vmem:[#allocation2] sm:$0xff] 0.0
          %512 = vst [vmem:[#allocation2 + $0x8] sm:$0xff] 0.0
          %513 = vst [vmem:[#allocation2 + $0x10] sm:$0xff] 0.0
          %514 = vst [vmem:[#allocation2 + $0x18] sm:$0xff] 0.0
        $region103: #{encoder_hr_forward.11} parent=90 // pred_fallthru
          _
        %v515 = vld [vmem:[#allocation2] sm:$0xff]
        %v516 = vld [vmem:[#allocation2 + $0x8] sm:$0xff]
        %v517 = vld [vmem:[#allocation2 + $0x10] sm:$0xff]
        %v518 = vld [vmem:[#allocation2 + $0x18] sm:$0xff]
        %v519 = vld [vmem:[%s465] sm:$0xff]
        %v520 = vld [vmem:[%s465 + $0x8] sm:$0xf]
        %v521 = vld [vmem:[%s465 + $0xc] sm:$0xff]
        %v522 = vld [vmem:[%s465 + $0x14] sm:$0xf]
        %v523 = vld [vmem:[%s465 + $0x18] sm:$0xff]
        %v524 = vld [vmem:[%s465 + $0x20] sm:$0xf]
        %v525 = vld [vmem:[%s465 + $0x24] sm:$0xff]
        %v526 = vld [vmem:[%s465 + $0x2c] sm:$0xf]
        %v527 = vld [vmem:[%s472] sm:$0xf]
        %v528 = vld [vmem:[%s472 + $0x4] sm:$0xf]
        %v529 = vld [vmem:[%s472 + $0x8] sm:$0xf]
        %v530 = vld [vmem:[%s472 + $0xc] sm:$0xf]
        %v531 = vld [vmem:[%s472 + $0x10] sm:$0xf]
        %v532 = vld [vmem:[%s472 + $0x14] sm:$0xf]
        %v533 = vld [vmem:[%s472 + $0x18] sm:$0xf]
        %v534 = vld [vmem:[%s472 + $0x1c] sm:$0xf]
        %v535 = vld [vmem:[%s472 + $0x20] sm:$0xf]
        %v536 = vld [vmem:[%s472 + $0x24] sm:$0xf]
        %v537 = vld [vmem:[%s472 + $0x28] sm:$0xf]
        %v538 = vld [vmem:[%s472 + $0x2c] sm:$0xf]
        %v539 = vld [vmem:[%s472 + $0x30] sm:$0xf]
        %v540 = vld [vmem:[%s472 + $0x34] sm:$0xf]
        %v541 = vld [vmem:[%s472 + $0x38] sm:$0xf]
        %v542 = vld [vmem:[%s472 + $0x3c] sm:$0xf]
        %v543 = vld [vmem:[%s472 + $0x40] sm:$0xf]
        %v544 = vld [vmem:[%s472 + $0x44] sm:$0xf]
        %v545 = vld [vmem:[%s472 + $0x48] sm:$0xf]
        %v546 = vld [vmem:[%s472 + $0x4c] sm:$0xf]
        %v547 = vld [vmem:[%s472 + $0x50] sm:$0xf]
        %v548 = vld [vmem:[%s472 + $0x54] sm:$0xf]
        %v549 = vld [vmem:[%s472 + $0x58] sm:$0xf]
        %v550 = vld [vmem:[%s472 + $0x5c] sm:$0xf]
        %v551 = vld [vmem:[%s472 + $0x60] sm:$0xf]
        %v552 = vld [vmem:[%s472 + $0x64] sm:$0xf]
        %v553 = vld [vmem:[%s472 + $0x68] sm:$0xf]
        %v554 = vld [vmem:[%s472 + $0x6c] sm:$0xf]
        %v555 = vld [vmem:[%s472 + $0x70] sm:$0xf]
        %v556 = vld [vmem:[%s472 + $0x74] sm:$0xf]
        %v557 = vld [vmem:[%s472 + $0x78] sm:$0xf]
        %v558 = vld [vmem:[%s472 + $0x7c] sm:$0xf]
        %v559 = vld [vmem:[%s472 + $0x80] sm:$0xf]
        %v560 = vld [vmem:[%s472 + $0x84] sm:$0xf]
        %v561 = vld [vmem:[%s472 + $0x88] sm:$0xf]
        %v562 = vld [vmem:[%s472 + $0x8c] sm:$0xf]
        %v563 = vld [vmem:[%s472 + $0x90] sm:$0xf]
        %v564 = vld [vmem:[%s472 + $0x94] sm:$0xf]
        %v565 = vld [vmem:[%s472 + $0x98] sm:$0xf]
        %v566 = vld [vmem:[%s472 + $0x9c] sm:$0xf]
        %v567 = vld [vmem:[%s472 + $0xa0] sm:$0xf]
        %v568 = vld [vmem:[%s472 + $0xa4] sm:$0xf]
        %v569 = vld [vmem:[%s472 + $0xa8] sm:$0xf]
        %v570 = vld [vmem:[%s472 + $0xac] sm:$0xf]
        %v571 = vld [vmem:[%s472 + $0xb0] sm:$0xf]
        %v572 = vld [vmem:[%s472 + $0xb4] sm:$0xf]
        %v573 = vld [vmem:[%s472 + $0xb8] sm:$0xf]
        %v574 = vld [vmem:[%s472 + $0xbc] sm:$0xf]
        %v583 = vunpack.c.l.b16 %v519
        %v584 = vunpack.c.h.b16 %v519
        %v585 = vunpack.c.l.b16 %v520
        %v586 = vunpack.c.l.b16 %v521
        %v587 = vunpack.c.h.b16 %v521
        %v588 = vunpack.c.l.b16 %v522
        %v589 = vunpack.c.l.b16 %v523
        %v590 = vunpack.c.h.b16 %v523
        %v591 = vunpack.c.l.b16 %v524
        %v592 = vunpack.c.l.b16 %v525
        %v593 = vunpack.c.h.b16 %v525
        %v594 = vunpack.c.l.b16 %v526
        %v595 = vpack.c.b16 %v586, %v583
        %v596 = vpack.c.b16 %v587, %v584
        %v597 = vpack.c.b16 %v588, %v585
        %v598 = vpack.c.b16 %v592, %v589
        %v599 = vpack.c.b16 %v593, %v590
        %v600 = vpack.c.b16 %v594, %v591
        %v655 = vunpack.c.l.b16 %v527
        %v656 = vunpack.c.l.b16 %v528
        %v657 = vunpack.c.l.b16 %v529
        %v658 = vunpack.c.l.b16 %v530
        %v659 = vunpack.c.l.b16 %v531
        %v660 = vunpack.c.l.b16 %v532
        %v661 = vunpack.c.l.b16 %v533
        %v662 = vunpack.c.l.b16 %v534
        %v663 = vunpack.c.l.b16 %v535
        %v664 = vunpack.c.l.b16 %v536
        %v665 = vunpack.c.l.b16 %v537
        %v666 = vunpack.c.l.b16 %v538
        %v667 = vunpack.c.l.b16 %v539
        %v668 = vunpack.c.l.b16 %v540
        %v669 = vunpack.c.l.b16 %v541
        %v670 = vunpack.c.l.b16 %v542
        %v671 = vunpack.c.l.b16 %v543
        %v672 = vunpack.c.l.b16 %v544
        %v673 = vunpack.c.l.b16 %v545
        %v674 = vunpack.c.l.b16 %v546
        %v675 = vunpack.c.l.b16 %v547
        %v676 = vunpack.c.l.b16 %v548
        %v677 = vunpack.c.l.b16 %v549
        %v678 = vunpack.c.l.b16 %v550
        %v679 = vunpack.c.l.b16 %v551
        %v680 = vunpack.c.l.b16 %v552
        %v681 = vunpack.c.l.b16 %v553
        %v682 = vunpack.c.l.b16 %v554
        %v683 = vunpack.c.l.b16 %v555
        %v684 = vunpack.c.l.b16 %v556
        %v685 = vunpack.c.l.b16 %v557
        %v686 = vunpack.c.l.b16 %v558
        %v687 = vunpack.c.l.b16 %v559
        %v688 = vunpack.c.l.b16 %v560
        %v689 = vunpack.c.l.b16 %v561
        %v690 = vunpack.c.l.b16 %v562
        %v691 = vunpack.c.l.b16 %v563
        %v692 = vunpack.c.l.b16 %v564
        %v693 = vunpack.c.l.b16 %v565
        %v694 = vunpack.c.l.b16 %v566
        %v695 = vunpack.c.l.b16 %v567
        %v696 = vunpack.c.l.b16 %v568
        %v697 = vunpack.c.l.b16 %v569
        %v698 = vunpack.c.l.b16 %v570
        %v699 = vunpack.c.l.b16 %v571
        %v700 = vunpack.c.l.b16 %v572
        %v701 = vunpack.c.l.b16 %v573
        %v702 = vunpack.c.l.b16 %v574
        %v703 = vpack.c.b16 %v656, %v655
        %v704 = vpack.c.b16 %v658, %v657
        %v705 = vpack.c.b16 %v660, %v659
        %v706 = vpack.c.b16 %v662, %v661
        %v707 = vpack.c.b16 %v664, %v663
        %v708 = vpack.c.b16 %v666, %v665
        %v709 = vpack.c.b16 %v668, %v667
        %v710 = vpack.c.b16 %v670, %v669
        %v711 = vpack.c.b16 %v672, %v671
        %v712 = vpack.c.b16 %v674, %v673
        %v713 = vpack.c.b16 %v676, %v675
        %v714 = vpack.c.b16 %v678, %v677
        %v715 = vpack.c.b16 %v680, %v679
        %v716 = vpack.c.b16 %v682, %v681
        %v717 = vpack.c.b16 %v684, %v683
        %v718 = vpack.c.b16 %v686, %v685
        %v719 = vpack.c.b16 %v688, %v687
        %v720 = vpack.c.b16 %v690, %v689
        %v721 = vpack.c.b16 %v692, %v691
        %v722 = vpack.c.b16 %v694, %v693
        %v723 = vpack.c.b16 %v696, %v695
        %v724 = vpack.c.b16 %v698, %v697
        %v725 = vpack.c.b16 %v700, %v699
        %v726 = vpack.c.b16 %v702, %v701
        %751 = vmatprep.subr.bf16.mxu0 0
        %752 = vmatpush1.bf16.msra.mxu0 %v703
        %753 = vmatprep.subr.bf16.mxu0 0
        %754 = vmatpush1.bf16.msra.mxu0 %v704
        %755 = vmatprep.subr.bf16.mxu0 0
        %756 = vmatpush1.bf16.msra.mxu0 %v705
        %757 = vmatprep.subr.bf16.mxu0 0
        %758 = vmatpush1.bf16.msra.mxu0 %v706
        %759 = vmatprep.subr.bf16.mxu0 0
        %760 = vmatpush1.bf16.msra.mxu0 %v707
        %761 = vmatprep.subr.bf16.mxu0 0
        %762 = vmatpush1.bf16.msra.mxu0 %v708
        %763 = vmatprep.subr.bf16.mxu0 0
        %764 = vmatpush1.bf16.msra.mxu0 %v709
        %765 = vmatprep.subr.bf16.mxu0 0
        %766 = vmatpush1.bf16.msra.mxu0 %v710
        %767 = vmatprep.subr.bf16.mxu0 0
        %768 = vmatpush1.bf16.msra.mxu0 %v711
        %769 = vmatprep.subr.bf16.mxu0 0
        %770 = vmatpush1.bf16.msra.mxu0 %v712
        %771 = vmatprep.subr.bf16.mxu0 0
        %772 = vmatpush1.bf16.msra.mxu0 %v713
        %773 = vmatprep.subr.bf16.mxu0 0
        %774 = vmatpush1.bf16.msra.mxu0 %v714
        %775 = vmatprep.subr.bf16.mxu0 0
        %776 = vmatpush1.bf16.msra.mxu0 %v715
        %777 = vmatprep.subr.bf16.mxu0 0
        %778 = vmatpush1.bf16.msra.mxu0 %v716
        %779 = vmatprep.subr.bf16.mxu0 0
        %780 = vmatpush1.bf16.msra.mxu0 %v717
        %781 = vmatprep.subr.bf16.mxu0 0
        %782 = vmatpush1.bf16.msra.mxu0 %v718
        %783 = vmatprep.mubr.bf16.mxu0 %v596
        %784 = vmatmul.mubr.bf16.gmra.mrb[0].mxu0 %v595
        %v785 = vpop.f32.mrb[0].mxu0
        %v786 = vadd.f32 0.0, %v785
        %v787 = vpop.f32.mrb[0].mxu0
        %v788 = vpop.f32.mrb[0].mxu0
        %v789 = vadd.f32 0.0, %v788
        %v790 = vpop.f32.mrb[0].mxu0
        %791 = vmatprep.mubr.bf16.mxu0 %v599
        %792 = vmatmul.mubr.bf16.gmra.mrb[0].mxu0 %v598
        %v793 = vpop.f32.mrb[0].mxu0
        %v794 = vadd.f32 0.0, %v793
        %v795 = vpop.f32.mrb[0].mxu0
        %v796 = vpop.f32.mrb[0].mxu0
        %v797 = vadd.f32 0.0, %v796
        %v798 = vpop.f32.mrb[0].mxu0
        %799 = vdwg.mxu0
        %800 = vmatprep.subr.bf16.mxu0 0
        %801 = vmatpush1.bf16.msra.mxu0 %v719
        %802 = vmatprep.subr.bf16.mxu0 0
        %803 = vmatpush1.bf16.msra.mxu0 %v720
        %804 = vmatprep.subr.bf16.mxu0 0
        %805 = vmatpush1.bf16.msra.mxu0 %v721
        %806 = vmatprep.subr.bf16.mxu0 0
        %807 = vmatpush1.bf16.msra.mxu0 %v722
        %808 = vmatprep.subr.bf16.mxu0 0
        %809 = vmatpush1.bf16.msra.mxu0 %v723
        %810 = vmatprep.subr.bf16.mxu0 0
        %811 = vmatpush1.bf16.msra.mxu0 %v724
        %812 = vmatprep.subr.bf16.mxu0 0
        %813 = vmatpush1.bf16.msra.mxu0 %v725
        %814 = vmatprep.subr.bf16.mxu0 0
        %815 = vmatpush1.bf16.msra.mxu0 %v726
        %816 = vmatprep.subr.bf16.mxu0 0
        %817 = vmatpush1.bf16.msra.mxu0 0
        %818 = vmatprep.subr.bf16.mxu0 0
        %819 = vmatpush1.bf16.msra.mxu0 0
        %820 = vmatprep.subr.bf16.mxu0 0
        %821 = vmatpush1.bf16.msra.mxu0 0
        %822 = vmatprep.subr.bf16.mxu0 0
        %823 = vmatpush1.bf16.msra.mxu0 0
        %824 = vmatprep.subr.bf16.mxu0 0
        %825 = vmatpush1.bf16.msra.mxu0 0
        %826 = vmatprep.subr.bf16.mxu0 0
        %827 = vmatpush1.bf16.msra.mxu0 0
        %828 = vmatprep.subr.bf16.mxu0 0
        %829 = vmatpush1.bf16.msra.mxu0 0
        %830 = vmatprep.subr.bf16.mxu0 0
        %831 = vmatpush1.bf16.msra.mxu0 0
        %832 = vmatprep.mubr.bf16.mxu0 0
        %833 = vmatmul.mubr.bf16.gmra.mrb[0].mxu0 %v597
        %v834 = vpop.f32.mrb[0].mxu0
        %v835 = vadd.f32 %v786, %v834
        %v836 = vpop.f32.mrb[0].mxu0
        %v837 = vpop.f32.mrb[0].mxu0
        %v838 = vadd.f32 %v789, %v837
        %v839 = vpop.f32.mrb[0].mxu0
        %840 = vmatprep.mubr.bf16.mxu0 0
        %841 = vmatmul.mubr.bf16.gmra.mrb[0].mxu0 %v600
        %v842 = vpop.f32.mrb[0].mxu0
        %v843 = vadd.f32 %v794, %v842
        %v844 = vpop.f32.mrb[0].mxu0
        %v845 = vpop.f32.mrb[0].mxu0
        %v846 = vadd.f32 %v797, %v845
        %v847 = vpop.f32.mrb[0].mxu0
        %848 = vdwg.mxu0
        %v849 = vadd.f32 %v515, %v835
        %v850 = vadd.f32 %v516, %v838
        %v851 = vadd.f32 %v517, %v843
        %v852 = vadd.f32 %v518, %v846
        %853 = vst [vmem:[#allocation2] sm:$0xff] %v849
        %854 = vst [vmem:[#allocation2 + $0x8] sm:$0xff] %v850
        %855 = vst [vmem:[#allocation2 + $0x10] sm:$0xff] %v851
        %856 = vst [vmem:[#allocation2 + $0x18] sm:$0xff] %v852
        %p857 = scmp.eq.s32.totalorder %s21, 2
        // Predicated region
        $region104: #{encoder_hr_forward.11} parent=90 // pred_check
          %p858 = pneg %p857
        $region105: #{encoder_hr_forward.11} parent=90 // pred_check_branch
          %860 = sbr.rel (%p858) target = $region107
        $region106: #{encoder_hr_forward.11} parent=90 // pred_region
          %v861 = vld [vmem:[#allocation2] sm:$0xff]
          %v862 = vld [vmem:[#allocation2 + $0x8] sm:$0xff]
          %v863 = vld [vmem:[#allocation2 + $0x10] sm:$0xff]
          %v864 = vld [vmem:[#allocation2 + $0x18] sm:$0xff]
          %v865 = vld [vmem:[%s504] sm:$0x1]
          %v867 = vlaneseq
          %v868 = vshrl.u32 %v867, 7
          %v869 = vsub.s32 0, %v868
          %v870 = vrot.slane %v865, %v869
          %v872 = vadd.f32 %v861, %v870
          %v873 = vadd.f32 %v862, %v870
          %v874 = vadd.f32 %v863, %v870
          %v875 = vadd.f32 %v864, %v870
          %vm876 = vcmp.ge.f32.partialorder %v872, 0.0
          %vm877 = vcmp.ge.f32.partialorder %v873, 0.0
          %vm878 = vcmp.ge.f32.partialorder %v874, 0.0
          %vm879 = vcmp.ge.f32.partialorder %v875, 0.0
          %v880 = vmul.f32 %v872, 0.1
          %v881 = vmul.f32 %v873, 0.1
          %v882 = vmul.f32 %v874, 0.1
          %v883 = vmul.f32 %v875, 0.1
          %v884 = vsel %vm876, %v872, %v880
          %v885 = vsel %vm877, %v873, %v881
          %v886 = vsel %vm878, %v874, %v882
          %v887 = vsel %vm879, %v875, %v883
          %v888 = vpack.c.bf16 %v885, %v884
          %v889 = vpack.c.bf16 %v887, %v886
          %v892 = vunpack.c.l.b16 %v888
          %v893 = vunpack.c.h.b16 %v888
          %v894 = vunpack.c.l.b16 %v889
          %v895 = vunpack.c.h.b16 %v889
          %v896 = vpack.c.b16 %v892, %v892
          %v897 = vpack.c.b16 %v893, %v893
          %v898 = vpack.c.b16 %v894, %v894
          %v899 = vpack.c.b16 %v895, %v895
          %904 = vst [vmem:[%s498] sm:$0xf] %v896
          %905 = vst [vmem:[%s498 + $0x4] sm:$0xf] %v897
          %906 = vst [vmem:[%s498 + $0x8] sm:$0xf] %v898
          %907 = vst [vmem:[%s498 + $0xc] sm:$0xf] %v899
        $region107: #{encoder_hr_forward.11} parent=90 // pred_fallthru
          _
        %s908 = sand.u32 %s125, 1
        %s909 = sand.u32 %s125, 1
        %s910 = smul.addr %s909, 16
        %s911 = scalar_lea.vmem [#allocation5], %s910
        // Predicated region
        $region108: #{encoder_hr_forward.11} parent=90 // pred_check
          %p912 = pneg %p135
        $region109: #{encoder_hr_forward.11} parent=90 // pred_check_branch
          %914 = sbr.rel (%p912) target = $region111
        $region110: #{encoder_hr_forward.11} parent=90 // pred_region
          %s915 = smul.u32 4, %s19
          %s916 = smul.addr %s915, 2
          %s917 = sadd.s32 %s20, %s916
          %s918 = smul.addr %s917, 4
          %s919 = scalar_lea.vmem %s3, %s918
          // Predicated region
          $region112: #{encoder_hr_forward.11} parent=110 // pred_check
            _
          $region113: #{encoder_hr_forward.11} parent=110 // pred_check_branch
            %921 = sbr.rel (0) target = $region115
          $region114: #{encoder_hr_forward.11} parent=110 // pred_region
            // Predicated region
            $region116: #{encoder_hr_forward.11} parent=114 // pred_check
              _
            $region117: #{encoder_hr_forward.11} parent=114 // pred_check_branch
              %923 = sbr.rel target = $region119
            $region118: #{encoder_hr_forward.11} parent=114 // pred_region
              // Predicated region
              $region131: #{encoder_hr_forward.11} parent=118 // pred_check
                _
              $region132: #{encoder_hr_forward.11} parent=118 // pred_check_branch
                %944 = sbr.rel (0) target = $region134
              $region133: #{encoder_hr_forward.11} parent=118 // pred_region
                loop: start=0, step=1, limit=1
                $region135: #{encoder_hr_forward.11} parent=133 // loop_pre_header
                  _
                $region136: #{encoder_hr_forward.11} parent=133 // loop_header
                  %s946 = sphi 0, %s950
                  %p947 = scmp.ge.s32.totalorder %s946, 1
                  %s951 = sphi %s911, %s911
                  %s952 = sphi %s919, %s919
                $region137: #{encoder_hr_forward.11} parent=133 // loop_header_branch
                  %949 = sbr.rel (%p947) target = $region141
                $region138: #{encoder_hr_forward.11} parent=133 // loop_body
                  _
                $region139: #{encoder_hr_forward.11} parent=133 // loop_footer
                  %s950 = sadd.s32 1, %s946
                $region140: #{encoder_hr_forward.11} parent=133 // loop_footer_branch
                  %945 = sbr.rel target = $region136
                $region141: #{encoder_hr_forward.11} parent=133 // loop_exit
                  _
                loop: start=0, step=1, limit=1
                $region142: #{encoder_hr_forward.11} parent=133 // loop_pre_header
                  _
                $region143: #{encoder_hr_forward.11} parent=133 // loop_header
                  %s955 = sphi 0, %s959
                  %p956 = scmp.ge.s32.totalorder %s955, 1
                  %s960 = sphi %s911, %s911
                  %s961 = sphi %s919, %s919
                $region144: #{encoder_hr_forward.11} parent=133 // loop_header_branch
                  %958 = sbr.rel (%p956) target = $region148
                $region145: #{encoder_hr_forward.11} parent=133 // loop_body
                  %v962 = vld [vmem:[%s960] sm:$0xf]
                  %963 = vst [vmem:[%s961] sm:$0xf] %v962
                  %v964 = vld [vmem:[%s960 + $0x4] sm:$0xf]
                  %965 = vst [vmem:[%s961 + $0x8] sm:$0xf] %v964
                  %v966 = vld [vmem:[%s960 + $0x8] sm:$0xf]
                  %967 = vst [vmem:[%s961 + $0x10] sm:$0xf] %v966
                  %v968 = vld [vmem:[%s960 + $0xc] sm:$0xf]
                  %969 = vst [vmem:[%s961 + $0x18] sm:$0xf] %v968
                $region146: #{encoder_hr_forward.11} parent=133 // loop_footer
                  %s959 = sadd.s32 1, %s955
                $region147: #{encoder_hr_forward.11} parent=133 // loop_footer_branch
                  %954 = sbr.rel target = $region143
                $region148: #{encoder_hr_forward.11} parent=133 // loop_exit
                  _
              $region134: #{encoder_hr_forward.11} parent=118 // pred_fallthru
                _
            $region119: #{encoder_hr_forward.11} parent=114 // pred_fallthru
              _
            // Predicated region
            $region120: #{encoder_hr_forward.11} parent=114 // pred_check
              _
            $region121: #{encoder_hr_forward.11} parent=114 // pred_check_branch
              %925 = sbr.rel (0) target = $region123
            $region122: #{encoder_hr_forward.11} parent=114 // pred_region
              loop: start=0, step=1, limit=1
              $region124: #{encoder_hr_forward.11} parent=122 // loop_pre_header
                _
              $region125: #{encoder_hr_forward.11} parent=122 // loop_header
                %s928 = sphi 0, %s932
                %p929 = scmp.ge.s32.totalorder %s928, 1
                %s933 = sphi %s911, %s911
                %s934 = sphi %s919, %s919
              $region126: #{encoder_hr_forward.11} parent=122 // loop_header_branch
                %931 = sbr.rel (%p929) target = $region130
              $region127: #{encoder_hr_forward.11} parent=122 // loop_body
                %v935 = vld [vmem:[%s933] sm:$0xf]
                %936 = vst [vmem:[%s934] sm:$0xf] %v935
                %v937 = vld [vmem:[%s933 + $0x4] sm:$0xf]
                %938 = vst [vmem:[%s934 + $0x8] sm:$0xf] %v937
                %v939 = vld [vmem:[%s933 + $0x8] sm:$0xf]
                %940 = vst [vmem:[%s934 + $0x10] sm:$0xf] %v939
                %v941 = vld [vmem:[%s933 + $0xc] sm:$0xf]
                %942 = vst [vmem:[%s934 + $0x18] sm:$0xf] %v941
              $region128: #{encoder_hr_forward.11} parent=122 // loop_footer
                %s932 = sadd.s32 1, %s928
              $region129: #{encoder_hr_forward.11} parent=122 // loop_footer_branch
                %927 = sbr.rel target = $region125
              $region130: #{encoder_hr_forward.11} parent=122 // loop_exit
                _
            $region123: #{encoder_hr_forward.11} parent=114 // pred_fallthru
              _
          $region115: #{encoder_hr_forward.11} parent=110 // pred_fallthru
            _
          %970 = vnop
        $region111: #{encoder_hr_forward.11} parent=90 // pred_fallthru
          _
      $region91: #{encoder_hr_forward.11} parent=5 // pred_fallthru
        _
      %p971 = scmp.le.s32.totalorder 2, %s9
      // Predicated region
      $region149: #{encoder_hr_forward.11} parent=5 // pred_check
        %p972 = pneg %p971
      $region150: #{encoder_hr_forward.11} parent=5 // pred_check_branch
        %974 = sbr.rel (%p972) target = $region152
      $region151: #{encoder_hr_forward.11} parent=5 // pred_region
        %s975 = ssub.s32 %s9, 2
        // Predicated region
        $region153: #{encoder_hr_forward.11} parent=151 // pred_check
          %p976 = pneg %p141
        $region154: #{encoder_hr_forward.11} parent=151 // pred_check_branch
          %978 = sbr.rel (%p976) target = $region156
        $region155: #{encoder_hr_forward.11} parent=151 // pred_region
          %s979 = sand.u32 %s126, 1
          %s980 = sand.u32 %s126, 1
          %s981 = smul.addr %s980, 16
          %s982 = scalar_lea.vmem [#allocation5], %s981
        $region156: #{encoder_hr_forward.11} parent=151 // pred_fallthru
          _
      $region152: #{encoder_hr_forward.11} parent=5 // pred_fallthru
        _
    $region6: #{encoder_hr_forward.11} parent=1 // loop_footer
      %s13 = sadd.s32 1, %s9
    $region7: #{encoder_hr_forward.11} parent=1 // loop_footer_branch
      %8 = sbr.rel target = $region3
    $region8: #{encoder_hr_forward.11} parent=1 // loop_exit
      _

// kernel: encoder_hr_forward.12
$region0: #{encoder_hr_forward.12}
  #allocation0 [shape = 'u32[]', space=smem, size = 0x4, offset = 0x4, fixed_abs, tag = 'smem constant byte address 0x4 - core index']
  #allocation1 [shape = 'u32[144,128]{1,0:T(1,128)}', space=vmem, size = 0x12000, scoped, tag = 'internal scratch']
  #allocation2 [shape = 'f32[32,128]{1,0:T(8,128)}', space=vmem, size = 0x4000, scoped, tag = 'scratch operand']
  %s0 = inlined_call_operand.vmem [shape: bf16[32,2304], index: 0, kind: input, shape index: {}]
  %s1 = inlined_call_operand.vmem [shape: bf16[2304,256], index: 1, kind: input, shape index: {}]
  %s2 = inlined_call_operand.vmem [shape: f32[1,256], index: 2, kind: input, shape index: {}]
  %s3 = inlined_call_operand.vmem [shape: bf16[32,256], index: 3, kind: output, shape index: {}]
  %s4 = sld [smem:[#allocation0]]
  $region157: #{encoder_hr_forward.12} parent=0
    _
  %s6 = ssub.s32 1, %s4
  %s7 = scalar_select 0, %s6, %s4
  $region1: #{encoder_hr_forward.12} parent=0
    #allocation3 [shape = 'u8[49152]{0}', space=vmem, size = 0xc000, scoped, tag = 'input window, operand 0']
    #allocation4 [shape = 'u8[196608]{0}', space=vmem, size = 0x30000, scoped, tag = 'input window, operand 1']
    #allocation5 [shape = 'u8[16384]{0}', space=vmem, size = 0x4000, scoped, tag = 'output window, operand 0']
    loop: start=0, step=1, limit=14
    $region2: #{encoder_hr_forward.12} parent=1 // loop_pre_header
      _
    $region3: #{encoder_hr_forward.12} parent=1 // loop_header
      %s9 = sphi 0, %s13
      %p10 = scmp.ge.s32.totalorder %s9, 14
      %s16 = sphi 0, %s35
      %s17 = sphi 0, %s31
      %s18 = sphi 0, %s27
      %s19 = sphi 0, %s16
      %s20 = sphi 0, %s17
      %s21 = sphi 0, %s18
      %s22 = sphi 0, %s19
      %s23 = sphi 0, %s20
      %s24 = sphi 0, %s21
      %s40 = sphi 0, %s42
      %s43 = sphi 0, %s40
      %s44 = sphi 0, %s43
      %s60 = sphi 0, %s44
      %s68 = sphi 0, %s70
      %s71 = sphi 0, %s68
      %s72 = sphi 0, %s71
      %s88 = sphi 0, %s72
      %s94 = sphi 0, %s96
      %s97 = sphi 0, %s94
      %s98 = sphi 0, %s97
      %s114 = sphi 0, %s98
      %s122 = sphi 0, %s124
      %s125 = sphi 0, %s122
      %s126 = sphi 0, %s125
      %s142 = sphi 0, %s126
    $region4: #{encoder_hr_forward.12} parent=1 // loop_header_branch
      %12 = sbr.rel (%p10) target = $region8
    $region5: #{encoder_hr_forward.12} parent=1 // loop_body
      %s14 = ssub.s32 %s9, 1
      %s15 = ssub.s32 %s9, 2
      %s25 = sadd.s32 1, %s18
      %p26 = scmp.ge.s32.totalorder %s25, 6
      %s27 = scalar_select %p26, 0, %s25
      %s28 = sadd.s32 1, %s17
      %s29 = scalar_select %p26, %s28, %s17
      %p30 = scmp.ge.s32.totalorder %s29, 2
      %s31 = scalar_select %p30, 0, %s29
      %s32 = sadd.s32 1, %s16
      %s33 = scalar_select %p30, %s32, %s16
      %p34 = scmp.ge.s32.totalorder %s33, 1
      %s35 = scalar_select %p34, 0, %s33
      %s36 = ssub.s32 %s16, %s35
      %s37 = ssub.s32 %s18, %s27
      %s38 = sor.u32 %s36, %s37
      %p39 = scmp.eq.s32.totalorder %s38, 0
      %s41 = sadd.s32 %s40, 1
      %s42 = scalar_select %p39, %s40, %s41
      %p45 = pneg %p39
      %p46 = scmp.eq.s32.totalorder %s9, 11
      %p47 = por %p45, %p46
      %p48 = scmp.ne.s32.totalorder %s40, %s43
      %p49 = scmp.eq.s32.totalorder %s9, 0
      %p50 = por %p48, %p49
      %p51 = scmp.ne.s32.totalorder %s40, %s43
      %p52 = scmp.eq.s32.totalorder %s14, 11
      %p53 = por %p51, %p52
      %p54 = scmp.ne.s32.totalorder %s43, %s44
      %p55 = scmp.eq.s32.totalorder %s14, 0
      %p56 = por %p54, %p55
      %p57 = scmp.ne.s32.totalorder %s43, %s44
      %p58 = scmp.eq.s32.totalorder %s15, 11
      %p59 = por %p57, %p58
      %p61 = scmp.ne.s32.totalorder %s44, %s60
      %p62 = scmp.eq.s32.totalorder %s15, 0
      %p63 = por %p61, %p62
      %s64 = ssub.s32 %s18, %s27
      %s65 = ssub.s32 %s17, %s31
      %s66 = sor.u32 %s64, %s65
      %p67 = scmp.eq.s32.totalorder %s66, 0
      %s69 = sadd.s32 %s68, 1
      %s70 = scalar_select %p67, %s68, %s69
      %p73 = pneg %p67
      %p74 = scmp.eq.s32.totalorder %s9, 11
      %p75 = por %p73, %p74
      %p76 = scmp.ne.s32.totalorder %s68, %s71
      %p77 = scmp.eq.s32.totalorder %s9, 0
      %p78 = por %p76, %p77
      %p79 = scmp.ne.s32.totalorder %s68, %s71
      %p80 = scmp.eq.s32.totalorder %s14, 11
      %p81 = por %p79, %p80
      %p82 = scmp.ne.s32.totalorder %s71, %s72
      %p83 = scmp.eq.s32.totalorder %s14, 0
      %p84 = por %p82, %p83
      %p85 = scmp.ne.s32.totalorder %s71, %s72
      %p86 = scmp.eq.s32.totalorder %s15, 11
      %p87 = por %p85, %p86
      %p89 = scmp.ne.s32.totalorder %s72, %s88
      %p90 = scmp.eq.s32.totalorder %s15, 0
      %p91 = por %p89, %p90
      %s92 = ssub.s32 %s17, %s31
      %p93 = scmp.eq.s32.totalorder %s92, 0
      %s95 = sadd.s32 %s94, 1
      %s96 = scalar_select %p93, %s94, %s95
      %p99 = pneg %p93
      %p100 = scmp.eq.s32.totalorder %s9, 11
      %p101 = por %p99, %p100
      %p102 = scmp.ne.s32.totalorder %s94, %s97
      %p103 = scmp.eq.s32.totalorder %s9, 0
      %p104 = por %p102, %p103
      %p105 = scmp.ne.s32.totalorder %s94, %s97
      %p106 = scmp.eq.s32.totalorder %s14, 11
      %p107 = por %p105, %p106
      %p108 = scmp.ne.s32.totalorder %s97, %s98
      %p109 = scmp.eq.s32.totalorder %s14, 0
      %p110 = por %p108, %p109
      %p111 = scmp.ne.s32.totalorder %s97, %s98
      %p112 = scmp.eq.s32.totalorder %s15, 11
      %p113 = por %p111, %p112
      %p115 = scmp.ne.s32.totalorder %s98, %s114
      %p116 = scmp.eq.s32.totalorder %s15, 0
      %p117 = por %p115, %p116
      %s118 = ssub.s32 %s16, %s35
      %s119 = ssub.s32 %s17, %s31
      %s120 = sor.u32 %s118, %s119
      %p121 = scmp.eq.s32.totalorder %s120, 0
      %s123 = sadd.s32 %s122, 1
      %s124 = scalar_select %p121, %s122, %s123
      %p127 = pneg %p121
      %p128 = scmp.eq.s32.totalorder %s9, 11
      %p129 = por %p127, %p128
      %p130 = scmp.ne.s32.totalorder %s122, %s125
      %p131 = scmp.eq.s32.totalorder %s9, 0
      %p132 = por %p130, %p131
      %p133 = scmp.ne.s32.totalorder %s122, %s125
      %p134 = scmp.eq.s32.totalorder %s14, 11
      %p135 = por %p133, %p134
      %p136 = scmp.ne.s32.totalorder %s125, %s126
      %p137 = scmp.eq.s32.totalorder %s14, 0
      %p138 = por %p136, %p137
      %p139 = scmp.ne.s32.totalorder %s125, %s126
      %p140 = scmp.eq.s32.totalorder %s15, 11
      %p141 = por %p139, %p140
      %p143 = scmp.ne.s32.totalorder %s126, %s142
      %p144 = scmp.eq.s32.totalorder %s15, 0
      %p145 = por %p143, %p144
      %p146 = scmp.le.s32.totalorder 1, %s9
      %p147 = scmp.lt.s32.totalorder %s9, 13
      %p148 = pnand %p146, %p147
      %p149 = pneg %p148
      // Predicated region
      $region9: #{encoder_hr_forward.12} parent=5 // pred_check
        _
      $region10: #{encoder_hr_forward.12} parent=5 // pred_check_branch
        %151 = sbr.rel (%p148) target = $region12
      $region11: #{encoder_hr_forward.12} parent=5 // pred_region
        %s152 = ssub.s32 %s9, 1
      $region12: #{encoder_hr_forward.12} parent=5 // pred_fallthru
        _
      %p153 = scmp.lt.s32.totalorder %s9, 12
      // Predicated region
      $region13: #{encoder_hr_forward.12} parent=5 // pred_check
        %p154 = pneg %p153
      $region14: #{encoder_hr_forward.12} parent=5 // pred_check_branch
        %156 = sbr.rel (%p154) target = $region16
      $region15: #{encoder_hr_forward.12} parent=5 // pred_region
        // Predicated region
        $region17: #{encoder_hr_forward.12} parent=15 // pred_check
          %p157 = pneg %p50
        $region18: #{encoder_hr_forward.12} parent=15 // pred_check_branch
          %159 = sbr.rel (%p157) target = $region20
        $region19: #{encoder_hr_forward.12} parent=15 // pred_region
          %s160 = sand.u32 %s40, 1
          %s161 = sand.u32 %s40, 1
          %s162 = smul.addr %s161, 48
          %s163 = scalar_lea.vmem [#allocation3], %s162
          %s164 = smul.u32 4, %s16
          %s165 = smul.u32 3, %s18
          %s166 = smul.addr %s164, 18
          %s167 = sadd.s32 %s165, %s166
          %s168 = smul.addr %s167, 4
          %s169 = scalar_lea.vmem %s0, %s168
          // Predicated region
          $region21: #{encoder_hr_forward.12} parent=19 // pred_check
            _
          $region22: #{encoder_hr_forward.12} parent=19 // pred_check_branch
            %171 = sbr.rel (0) target = $region24
          $region23: #{encoder_hr_forward.12} parent=19 // pred_region
            // Predicated region
            $region25: #{encoder_hr_forward.12} parent=23 // pred_check
              _
            $region26: #{encoder_hr_forward.12} parent=23 // pred_check_branch
              %173 = sbr.rel (0) target = $region28
            $region27: #{encoder_hr_forward.12} parent=23 // pred_region
              %s174 = scalar_lea.vmem %s169, 8
              %s175 = scalar_lea.vmem %s163, 8 [#allocation3]
              loop: start=0, step=1, limit=1
              $region29: #{encoder_hr_forward.12} parent=27 // loop_pre_header
                _
              $region30: #{encoder_hr_forward.12} parent=27 // loop_header
                %s177 = sphi 0, %s181
                %p178 = scmp.ge.s32.totalorder %s177, 1
                %s182 = sphi %s169, %s169
                %s183 = sphi %s163, %s163
              $region31: #{encoder_hr_forward.12} parent=27 // loop_header_branch
                %180 = sbr.rel (%p178) target = $region35
              $region32: #{encoder_hr_forward.12} parent=27 // loop_body
                %v184 = vld [vmem:[%s182] sm:$0xff]
                %185 = vst [vmem:[%s183] sm:$0xff] %v184
                %v186 = vld [vmem:[%s182 + $0x48] sm:$0xff]
                %187 = vst [vmem:[%s183 + $0xc] sm:$0xff] %v186
                %v188 = vld [vmem:[%s182 + $0x90] sm:$0xff]
                %189 = vst [vmem:[%s183 + $0x18] sm:$0xff] %v188
                %v190 = vld [vmem:[%s182 + $0xd8] sm:$0xff]
                %191 = vst [vmem:[%s183 + $0x24] sm:$0xff] %v190
              $region33: #{encoder_hr_forward.12} parent=27 // loop_footer
                %s181 = sadd.s32 1, %s177
              $region34: #{encoder_hr_forward.12} parent=27 // loop_footer_branch
                %176 = sbr.rel target = $region30
              $region35: #{encoder_hr_forward.12} parent=27 // loop_exit
                _
              loop: start=0, step=1, limit=1
              $region36: #{encoder_hr_forward.12} parent=27 // loop_pre_header
                _
              $region37: #{encoder_hr_forward.12} parent=27 // loop_header
                %s194 = sphi 0, %s198
                %p195 = scmp.ge.s32.totalorder %s194, 1
                %s199 = sphi %s174, %s174
                %s200 = sphi %s175, %s175
              $region38: #{encoder_hr_forward.12} parent=27 // loop_header_branch
                %197 = sbr.rel (%p195) target = $region42
              $region39: #{encoder_hr_forward.12} parent=27 // loop_body
                %v201 = vld [vmem:[%s199] sm:$0xf]
                %202 = vst [vmem:[%s200] sm:$0xf] %v201
                %v203 = vld [vmem:[%s199 + $0x48] sm:$0xf]
                %204 = vst [vmem:[%s200 + $0xc] sm:$0xf] %v203
                %v205 = vld [vmem:[%s199 + $0x90] sm:$0xf]
                %206 = vst [vmem:[%s200 + $0x18] sm:$0xf] %v205
                %v207 = vld [vmem:[%s199 + $0xd8] sm:$0xf]
                %208 = vst [vmem:[%s200 + $0x24] sm:$0xf] %v207
              $region40: #{encoder_hr_forward.12} parent=27 // loop_footer
                %s198 = sadd.s32 1, %s194
              $region41: #{encoder_hr_forward.12} parent=27 // loop_footer_branch
                %193 = sbr.rel target = $region37
              $region42: #{encoder_hr_forward.12} parent=27 // loop_exit
                _
            $region28: #{encoder_hr_forward.12} parent=23 // pred_fallthru
              _
          $region24: #{encoder_hr_forward.12} parent=19 // pred_fallthru
            _
          %209 = vnop
        $region20: #{encoder_hr_forward.12} parent=15 // pred_fallthru
          _
        // Predicated region
        $region43: #{encoder_hr_forward.12} parent=15 // pred_check
          %p210 = pneg %p78
        $region44: #{encoder_hr_forward.12} parent=15 // pred_check_branch
          %212 = sbr.rel (%p210) target = $region46
        $region45: #{encoder_hr_forward.12} parent=15 // pred_region
          %s213 = sand.u32 %s68, 1
          %s214 = sand.u32 %s68, 1
          %s215 = smul.addr %s214, 192
          %s216 = scalar_lea.vmem [#allocation4], %s215
          %s217 = smul.u32 48, %s18
          %s218 = smul.addr %s217, 2
          %s219 = sadd.s32 %s17, %s218
          %s220 = smul.addr %s219, 4
          %s221 = scalar_lea.vmem %s1, %s220
          // Predicated region
          $region47: #{encoder_hr_forward.12} parent=45 // pred_check
            _
          $region48: #{encoder_hr_forward.12} parent=45 // pred_check_branch
            %223 = sbr.rel (0) target = $region50
          $region49: #{encoder_hr_forward.12} parent=45 // pred_region
            // Predicated region
            $region51: #{encoder_hr_forward.12} parent=49 // pred_check
              _
            $region52: #{encoder_hr_forward.12} parent=49 // pred_check_branch
              %225 = sbr.rel target = $region54
            $region53: #{encoder_hr_forward.12} parent=49 // pred_region
              // Predicated region
              $region66: #{encoder_hr_forward.12} parent=53 // pred_check
                _
              $region67: #{encoder_hr_forward.12} parent=53 // pred_check_branch
                %334 = sbr.rel (0) target = $region69
              $region68: #{encoder_hr_forward.12} parent=53 // pred_region
                loop: start=0, step=1, limit=1
                $region70: #{encoder_hr_forward.12} parent=68 // loop_pre_header
                  _
                $region71: #{encoder_hr_forward.12} parent=68 // loop_header
                  %s336 = sphi 0, %s340
                  %p337 = scmp.ge.s32.totalorder %s336, 1
                  %s341 = sphi %s221, %s221
                  %s342 = sphi %s216, %s216
                $region72: #{encoder_hr_forward.12} parent=68 // loop_header_branch
                  %339 = sbr.rel (%p337) target = $region76
                $region73: #{encoder_hr_forward.12} parent=68 // loop_body
                  _
                $region74: #{encoder_hr_forward.12} parent=68 // loop_footer
                  %s340 = sadd.s32 1, %s336
                $region75: #{encoder_hr_forward.12} parent=68 // loop_footer_branch
                  %335 = sbr.rel target = $region71
                $region76: #{encoder_hr_forward.12} parent=68 // loop_exit
                  _
                loop: start=0, step=1, limit=1
                $region77: #{encoder_hr_forward.12} parent=68 // loop_pre_header
                  _
                $region78: #{encoder_hr_forward.12} parent=68 // loop_header
                  %s345 = sphi 0, %s349
                  %p346 = scmp.ge.s32.totalorder %s345, 1
                  %s350 = sphi %s221, %s221
                  %s351 = sphi %s216, %s216
                $region79: #{encoder_hr_forward.12} parent=68 // loop_header_branch
                  %348 = sbr.rel (%p346) target = $region83
                $region80: #{encoder_hr_forward.12} parent=68 // loop_body
                  %v352 = vld [vmem:[%s350] sm:$0xf]
                  %353 = vst [vmem:[%s351] sm:$0xf] %v352
                  %v354 = vld [vmem:[%s350 + $0x8] sm:$0xf]
                  %355 = vst [vmem:[%s351 + $0x4] sm:$0xf] %v354
                  %v356 = vld [vmem:[%s350 + $0x10] sm:$0xf]
                  %357 = vst [vmem:[%s351 + $0x8] sm:$0xf] %v356
                  %v358 = vld [vmem:[%s350 + $0x18] sm:$0xf]
                  %359 = vst [vmem:[%s351 + $0xc] sm:$0xf] %v358
                  %v360 = vld [vmem:[%s350 + $0x20] sm:$0xf]
                  %361 = vst [vmem:[%s351 + $0x10] sm:$0xf] %v360
                  %v362 = vld [vmem:[%s350 + $0x28] sm:$0xf]
                  %363 = vst [vmem:[%s351 + $0x14] sm:$0xf] %v362
                  %v364 = vld [vmem:[%s350 + $0x30] sm:$0xf]
                  %365 = vst [vmem:[%s351 + $0x18] sm:$0xf] %v364
                  %v366 = vld [vmem:[%s350 + $0x38] sm:$0xf]
                  %367 = vst [vmem:[%s351 + $0x1c] sm:$0xf] %v366
                  %v368 = vld [vmem:[%s350 + $0x40] sm:$0xf]
                  %369 = vst [vmem:[%s351 + $0x20] sm:$0xf] %v368
                  %v370 = vld [vmem:[%s350 + $0x48] sm:$0xf]
                  %371 = vst [vmem:[%s351 + $0x24] sm:$0xf] %v370
                  %v372 = vld [vmem:[%s350 + $0x50] sm:$0xf]
                  %373 = vst [vmem:[%s351 + $0x28] sm:$0xf] %v372
                  %v374 = vld [vmem:[%s350 + $0x58] sm:$0xf]
                  %375 = vst [vmem:[%s351 + $0x2c] sm:$0xf] %v374
                  %v376 = vld [vmem:[%s350 + $0x60] sm:$0xf]
                  %377 = vst [vmem:[%s351 + $0x30] sm:$0xf] %v376
                  %v378 = vld [vmem:[%s350 + $0x68] sm:$0xf]
                  %379 = vst [vmem:[%s351 + $0x34] sm:$0xf] %v378
                  %v380 = vld [vmem:[%s350 + $0x70] sm:$0xf]
                  %381 = vst [vmem:[%s351 + $0x38] sm:$0xf] %v380
                  %v382 = vld [vmem:[%s350 + $0x78] sm:$0xf]
                  %383 = vst [vmem:[%s351 + $0x3c] sm:$0xf] %v382
                  %v384 = vld [vmem:[%s350 + $0x80] sm:$0xf]
                  %385 = vst [vmem:[%s351 + $0x40] sm:$0xf] %v384
                  %v386 = vld [vmem:[%s350 + $0x88] sm:$0xf]
                  %387 = vst [vmem:[%s351 + $0x44] sm:$0xf] %v386
                  %v388 = vld [vmem:[%s350 + $0x90] sm:$0xf]
                  %389 = vst [vmem:[%s351 + $0x48] sm:$0xf] %v388
                  %v390 = vld [vmem:[%s350 + $0x98] sm:$0xf]
                  %391 = vst [vmem:[%s351 + $0x4c] sm:$0xf] %v390
                  %v392 = vld [vmem:[%s350 + $0xa0] sm:$0xf]
                  %393 = vst [vmem:[%s351 + $0x50] sm:$0xf] %v392
                  %v394 = vld [vmem:[%s350 + $0xa8] sm:$0xf]
                  %395 = vst [vmem:[%s351 + $0x54] sm:$0xf] %v394
                  %v396 = vld [vmem:[%s350 + $0xb0] sm:$0xf]
                  %397 = vst [vmem:[%s351 + $0x58] sm:$0xf] %v396
                  %v398 = vld [vmem:[%s350 + $0xb8] sm:$0xf]
                  %399 = vst [vmem:[%s351 + $0x5c] sm:$0xf] %v398
                  %v400 = vld [vmem:[%s350 + $0xc0] sm:$0xf]
                  %401 = vst [vmem:[%s351 + $0x60] sm:$0xf] %v400
                  %v402 = vld [vmem:[%s350 + $0xc8] sm:$0xf]
                  %403 = vst [vmem:[%s351 + $0x64] sm:$0xf] %v402
                  %v404 = vld [vmem:[%s350 + $0xd0] sm:$0xf]
                  %405 = vst [vmem:[%s351 + $0x68] sm:$0xf] %v404
                  %v406 = vld [vmem:[%s350 + $0xd8] sm:$0xf]
                  %407 = vst [vmem:[%s351 + $0x6c] sm:$0xf] %v406
                  %v408 = vld [vmem:[%s350 + $0xe0] sm:$0xf]
                  %409 = vst [vmem:[%s351 + $0x70] sm:$0xf] %v408
                  %v410 = vld [vmem:[%s350 + $0xe8] sm:$0xf]
                  %411 = vst [vmem:[%s351 + $0x74] sm:$0xf] %v410
                  %v412 = vld [vmem:[%s350 + $0xf0] sm:$0xf]
                  %413 = vst [vmem:[%s351 + $0x78] sm:$0xf] %v412
                  %v414 = vld [vmem:[%s350 + $0xf8] sm:$0xf]
                  %415 = vst [vmem:[%s351 + $0x7c] sm:$0xf] %v414
                  %v416 = vld [vmem:[%s350 + $0x100] sm:$0xf]
                  %417 = vst [vmem:[%s351 + $0x80] sm:$0xf] %v416
                  %v418 = vld [vmem:[%s350 + $0x108] sm:$0xf]
                  %419 = vst [vmem:[%s351 + $0x84] sm:$0xf] %v418
                  %v420 = vld [vmem:[%s350 + $0x110] sm:$0xf]
                  %421 = vst [vmem:[%s351 + $0x88] sm:$0xf] %v420
                  %v422 = vld [vmem:[%s350 + $0x118] sm:$0xf]
                  %423 = vst [vmem:[%s351 + $0x8c] sm:$0xf] %v422
                  %v424 = vld [vmem:[%s350 + $0x120] sm:$0xf]
                  %425 = vst [vmem:[%s351 + $0x90] sm:$0xf] %v424
                  %v426 = vld [vmem:[%s350 + $0x128] sm:$0xf]
                  %427 = vst [vmem:[%s351 + $0x94] sm:$0xf] %v426
                  %v428 = vld [vmem:[%s350 + $0x130] sm:$0xf]
                  %429 = vst [vmem:[%s351 + $0x98] sm:$0xf] %v428
                  %v430 = vld [vmem:[%s350 + $0x138] sm:$0xf]
                  %431 = vst [vmem:[%s351 + $0x9c] sm:$0xf] %v430
                  %v432 = vld [vmem:[%s350 + $0x140] sm:$0xf]
                  %433 = vst [vmem:[%s351 + $0xa0] sm:$0xf] %v432
                  %v434 = vld [vmem:[%s350 + $0x148] sm:$0xf]
                  %435 = vst [vmem:[%s351 + $0xa4] sm:$0xf] %v434
                  %v436 = vld [vmem:[%s350 + $0x150] sm:$0xf]
                  %437 = vst [vmem:[%s351 + $0xa8] sm:$0xf] %v436
                  %v438 = vld [vmem:[%s350 + $0x158] sm:$0xf]
                  %439 = vst [vmem:[%s351 + $0xac] sm:$0xf] %v438
                  %v440 = vld [vmem:[%s350 + $0x160] sm:$0xf]
                  %441 = vst [vmem:[%s351 + $0xb0] sm:$0xf] %v440
                  %v442 = vld [vmem:[%s350 + $0x168] sm:$0xf]
                  %443 = vst [vmem:[%s351 + $0xb4] sm:$0xf] %v442
                  %v444 = vld [vmem:[%s350 + $0x170] sm:$0xf]
                  %445 = vst [vmem:[%s351 + $0xb8] sm:$0xf] %v444
                  %v446 = vld [vmem:[%s350 + $0x178] sm:$0xf]
                  %447 = vst [vmem:[%s351 + $0xbc] sm:$0xf] %v446
                $region81: #{encoder_hr_forward.12} parent=68 // loop_footer
                  %s349 = sadd.s32 1, %s345
                $region82: #{encoder_hr_forward.12} parent=68 // loop_footer_branch
                  %344 = sbr.rel target = $region78
                $region83: #{encoder_hr_forward.12} parent=68 // loop_exit
                  _
              $region69: #{encoder_hr_forward.12} parent=53 // pred_fallthru
                _
            $region54: #{encoder_hr_forward.12} parent=49 // pred_fallthru
              _
            // Predicated region
            $region55: #{encoder_hr_forward.12} parent=49 // pred_check
              _
            $region56: #{encoder_hr_forward.12} parent=49 // pred_check_branch
              %227 = sbr.rel (0) target = $region58
            $region57: #{encoder_hr_forward.12} parent=49 // pred_region
              loop: start=0, step=1, limit=1
              $region59: #{encoder_hr_forward.12} parent=57 // loop_pre_header
                _
              $region60: #{encoder_hr_forward.12} parent=57 // loop_header
                %s230 = sphi 0, %s234
                %p231 = scmp.ge.s32.totalorder %s230, 1
                %s235 = sphi %s221, %s221
                %s236 = sphi %s216, %s216
              $region61: #{encoder_hr_forward.12} parent=57 // loop_header_branch
                %233 = sbr.rel (%p231) target = $region65
              $region62: #{encoder_hr_forward.12} parent=57 // loop_body
                %v237 = vld [vmem:[%s235] sm:$0xf]
                %238 = vst [vmem:[%s236] sm:$0xf] %v237
                %v239 = vld [vmem:[%s235 + $0x8] sm:$0xf]
                %240 = vst [vmem:[%s236 + $0x4] sm:$0xf] %v239
                %v241 = vld [vmem:[%s235 + $0x10] sm:$0xf]
                %242 = vst [vmem:[%s236 + $0x8] sm:$0xf] %v241
                %v243 = vld [vmem:[%s235 + $0x18] sm:$0xf]
                %244 = vst [vmem:[%s236 + $0xc] sm:$0xf] %v243
                %v245 = vld [vmem:[%s235 + $0x20] sm:$0xf]
                %246 = vst [vmem:[%s236 + $0x10] sm:$0xf] %v245
                %v247 = vld [vmem:[%s235 + $0x28] sm:$0xf]
                %248 = vst [vmem:[%s236 + $0x14] sm:$0xf] %v247
                %v249 = vld [vmem:[%s235 + $0x30] sm:$0xf]
                %250 = vst [vmem:[%s236 + $0x18] sm:$0xf] %v249
                %v251 = vld [vmem:[%s235 + $0x38] sm:$0xf]
                %252 = vst [vmem:[%s236 + $0x1c] sm:$0xf] %v251
                %v253 = vld [vmem:[%s235 + $0x40] sm:$0xf]
                %254 = vst [vmem:[%s236 + $0x20] sm:$0xf] %v253
                %v255 = vld [vmem:[%s235 + $0x48] sm:$0xf]
                %256 = vst [vmem:[%s236 + $0x24] sm:$0xf] %v255
                %v257 = vld [vmem:[%s235 + $0x50] sm:$0xf]
                %258 = vst [vmem:[%s236 + $0x28] sm:$0xf] %v257
                %v259 = vld [vmem:[%s235 + $0x58] sm:$0xf]
                %260 = vst [vmem:[%s236 + $0x2c] sm:$0xf] %v259
                %v261 = vld [vmem:[%s235 + $0x60] sm:$0xf]
                %262 = vst [vmem:[%s236 + $0x30] sm:$0xf] %v261
                %v263 = vld [vmem:[%s235 + $0x68] sm:$0xf]
                %264 = vst [vmem:[%s236 + $0x34] sm:$0xf] %v263
                %v265 = vld [vmem:[%s235 + $0x70] sm:$0xf]
                %266 = vst [vmem:[%s236 + $0x38] sm:$0xf] %v265
                %v267 = vld [vmem:[%s235 + $0x78] sm:$0xf]
                %268 = vst [vmem:[%s236 + $0x3c] sm:$0xf] %v267
                %v269 = vld [vmem:[%s235 + $0x80] sm:$0xf]
                %270 = vst [vmem:[%s236 + $0x40] sm:$0xf] %v269
                %v271 = vld [vmem:[%s235 + $0x88] sm:$0xf]
                %272 = vst [vmem:[%s236 + $0x44] sm:$0xf] %v271
                %v273 = vld [vmem:[%s235 + $0x90] sm:$0xf]
                %274 = vst [vmem:[%s236 + $0x48] sm:$0xf] %v273
                %v275 = vld [vmem:[%s235 + $0x98] sm:$0xf]
                %276 = vst [vmem:[%s236 + $0x4c] sm:$0xf] %v275
                %v277 = vld [vmem:[%s235 + $0xa0] sm:$0xf]
                %278 = vst [vmem:[%s236 + $0x50] sm:$0xf] %v277
                %v279 = vld [vmem:[%s235 + $0xa8] sm:$0xf]
                %280 = vst [vmem:[%s236 + $0x54] sm:$0xf] %v279
                %v281 = vld [vmem:[%s235 + $0xb0] sm:$0xf]
                %282 = vst [vmem:[%s236 + $0x58] sm:$0xf] %v281
                %v283 = vld [vmem:[%s235 + $0xb8] sm:$0xf]
                %284 = vst [vmem:[%s236 + $0x5c] sm:$0xf] %v283
                %v285 = vld [vmem:[%s235 + $0xc0] sm:$0xf]
                %286 = vst [vmem:[%s236 + $0x60] sm:$0xf] %v285
                %v287 = vld [vmem:[%s235 + $0xc8] sm:$0xf]
                %288 = vst [vmem:[%s236 + $0x64] sm:$0xf] %v287
                %v289 = vld [vmem:[%s235 + $0xd0] sm:$0xf]
                %290 = vst [vmem:[%s236 + $0x68] sm:$0xf] %v289
                %v291 = vld [vmem:[%s235 + $0xd8] sm:$0xf]
                %292 = vst [vmem:[%s236 + $0x6c] sm:$0xf] %v291
                %v293 = vld [vmem:[%s235 + $0xe0] sm:$0xf]
                %294 = vst [vmem:[%s236 + $0x70] sm:$0xf] %v293
                %v295 = vld [vmem:[%s235 + $0xe8] sm:$0xf]
                %296 = vst [vmem:[%s236 + $0x74] sm:$0xf] %v295
                %v297 = vld [vmem:[%s235 + $0xf0] sm:$0xf]
                %298 = vst [vmem:[%s236 + $0x78] sm:$0xf] %v297
                %v299 = vld [vmem:[%s235 + $0xf8] sm:$0xf]
                %300 = vst [vmem:[%s236 + $0x7c] sm:$0xf] %v299
                %v301 = vld [vmem:[%s235 + $0x100] sm:$0xf]
                %302 = vst [vmem:[%s236 + $0x80] sm:$0xf] %v301
                %v303 = vld [vmem:[%s235 + $0x108] sm:$0xf]
                %304 = vst [vmem:[%s236 + $0x84] sm:$0xf] %v303
                %v305 = vld [vmem:[%s235 + $0x110] sm:$0xf]
                %306 = vst [vmem:[%s236 + $0x88] sm:$0xf] %v305
                %v307 = vld [vmem:[%s235 + $0x118] sm:$0xf]
                %308 = vst [vmem:[%s236 + $0x8c] sm:$0xf] %v307
                %v309 = vld [vmem:[%s235 + $0x120] sm:$0xf]
                %310 = vst [vmem:[%s236 + $0x90] sm:$0xf] %v309
                %v311 = vld [vmem:[%s235 + $0x128] sm:$0xf]
                %312 = vst [vmem:[%s236 + $0x94] sm:$0xf] %v311
                %v313 = vld [vmem:[%s235 + $0x130] sm:$0xf]
                %314 = vst [vmem:[%s236 + $0x98] sm:$0xf] %v313
                %v315 = vld [vmem:[%s235 + $0x138] sm:$0xf]
                %316 = vst [vmem:[%s236 + $0x9c] sm:$0xf] %v315
                %v317 = vld [vmem:[%s235 + $0x140] sm:$0xf]
                %318 = vst [vmem:[%s236 + $0xa0] sm:$0xf] %v317
                %v319 = vld [vmem:[%s235 + $0x148] sm:$0xf]
                %320 = vst [vmem:[%s236 + $0xa4] sm:$0xf] %v319
                %v321 = vld [vmem:[%s235 + $0x150] sm:$0xf]
                %322 = vst [vmem:[%s236 + $0xa8] sm:$0xf] %v321
                %v323 = vld [vmem:[%s235 + $0x158] sm:$0xf]
                %324 = vst [vmem:[%s236 + $0xac] sm:$0xf] %v323
                %v325 = vld [vmem:[%s235 + $0x160] sm:$0xf]
                %326 = vst [vmem:[%s236 + $0xb0] sm:$0xf] %v325
                %v327 = vld [vmem:[%s235 + $0x168] sm:$0xf]
                %328 = vst [vmem:[%s236 + $0xb4] sm:$0xf] %v327
                %v329 = vld [vmem:[%s235 + $0x170] sm:$0xf]
                %330 = vst [vmem:[%s236 + $0xb8] sm:$0xf] %v329
                %v331 = vld [vmem:[%s235 + $0x178] sm:$0xf]
                %332 = vst [vmem:[%s236 + $0xbc] sm:$0xf] %v331
              $region63: #{encoder_hr_forward.12} parent=57 // loop_footer
                %s234 = sadd.s32 1, %s230
              $region64: #{encoder_hr_forward.12} parent=57 // loop_footer_branch
                %229 = sbr.rel target = $region60
              $region65: #{encoder_hr_forward.12} parent=57 // loop_exit
                _
            $region58: #{encoder_hr_forward.12} parent=49 // pred_fallthru
              _
          $region50: #{encoder_hr_forward.12} parent=45 // pred_fallthru
            _
          %448 = vnop
        $region46: #{encoder_hr_forward.12} parent=15 // pred_fallthru
          _
        // Predicated region
        $region84: #{encoder_hr_forward.12} parent=15 // pred_check
          %p449 = pneg %p104
        $region85: #{encoder_hr_forward.12} parent=15 // pred_check_branch
          %451 = sbr.rel (%p449) target = $region87
        $region86: #{encoder_hr_forward.12} parent=15 // pred_region
          %p452 = scmp.lt.s32.totalorder %s17, 1
          %s453 = scalar_select %p452, %s17, 1
          %s454 = scalar_lea.vmem %s2, %s453
        $region87: #{encoder_hr_forward.12} parent=15 // pred_fallthru
          _
      $region16: #{encoder_hr_forward.12} parent=5 // pred_fallthru
        _
      %p455 = scmp.le.s32.totalorder 1, %s9
      %p456 = scmp.lt.s32.totalorder %s9, 13
      %p457 = pnand %p455, %p456
      %p458 = pneg %p457
      // Predicated region
      $region88: #{encoder_hr_forward.12} parent=5 // pred_check
        _
      $region89: #{encoder_hr_forward.12} parent=5 // pred_check_branch
        %460 = sbr.rel (%p457) target = $region91
      $region90: #{encoder_hr_forward.12} parent=5 // pred_region
        %s461 = ssub.s32 %s9, 1
        %s462 = sand.u32 %s43, 1
        %s463 = sand.u32 %s43, 1
        %s464 = smul.addr %s463, 48
        %s465 = scalar_lea.vmem [#allocation3], %s464
        // Predicated region
        $region92: #{encoder_hr_forward.12} parent=90 // pred_check
          %p466 = pneg %p56
        $region93: #{encoder_hr_forward.12} parent=90 // pred_check_branch
          %468 = sbr.rel (%p466) target = $region95
        $region94: #{encoder_hr_forward.12} parent=90 // pred_region
          _
        $region95: #{encoder_hr_forward.12} parent=90 // pred_fallthru
          _
        %s469 = sand.u32 %s71, 1
        %s470 = sand.u32 %s71, 1
        %s471 = smul.addr %s470, 192
        %s472 = scalar_lea.vmem [#allocation4], %s471
        // Predicated region
        $region96: #{encoder_hr_forward.12} parent=90 // pred_check
          %p473 = pneg %p84
        $region97: #{encoder_hr_forward.12} parent=90 // pred_check_branch
          %475 = sbr.rel (%p473) target = $region99
        $region98: #{encoder_hr_forward.12} parent=90 // pred_region
          _
        $region99: #{encoder_hr_forward.12} parent=90 // pred_fallthru
          _
        %s476 = sand.u32 %s43, 1
        %s477 = sand.u32 %s43, 1
        %s478 = smul.addr %s477, 48
        %s479 = scalar_lea.vmem [#allocation3], %s478
        %p480 = pneg %p56
        %p481 = pneg %p53
        %s482 = sand.u32 %s71, 1
        %s483 = sand.u32 %s71, 1
        %s484 = smul.addr %s483, 192
        %s485 = scalar_lea.vmem [#allocation4], %s484
        %p486 = pneg %p84
        %p487 = pneg %p81
        %p488 = scmp.lt.s32.totalorder %s20, 1
        %s489 = scalar_select %p488, %s20, 1
        %s490 = scalar_lea.vmem %s2, %s489
        %p491 = pneg %p110
        %p492 = pneg %p107
        %p493 = pneg %p138
        %p494 = pneg %p135
        %s495 = sand.u32 %s125, 1
        %s496 = sand.u32 %s125, 1
        %s497 = smul.addr %s496, 16
        %s498 = scalar_lea.vmem [#allocation5], %s497
        %s499 = smul.u32 4, %s19
        %s500 = smul.u32 3, %s21
        %s501 = smul.u32 48, %s21
        %p502 = scmp.lt.s32.totalorder %s20, 1
        %s503 = scalar_select %p502, %s20, 1
        %s504 = scalar_lea.vmem %s2, %s503
        %s505 = smul.u32 4, %s19
        %p507 = scmp.eq.s32.totalorder %s21, 0
        // Predicated region
        $region100: #{encoder_hr_forward.12} parent=90 // pred_check
          %p508 = pneg %p507
        $region101: #{encoder_hr_forward.12} parent=90 // pred_check_branch
          %510 = sbr.rel (%p508) target = $region103
        $region102: #{encoder_hr_forward.12} parent=90 // pred_region
          %511 = vst [vmem:[#allocation2] sm:$0xff] 0.0
          %512 = vst [vmem:[#allocation2 + $0x8] sm:$0xff] 0.0
          %513 = vst [vmem:[#allocation2 + $0x10] sm:$0xff] 0.0
          %514 = vst [vmem:[#allocation2 + $0x18] sm:$0xff] 0.0
        $region103: #{encoder_hr_forward.12} parent=90 // pred_fallthru
          _
        %v515 = vld [vmem:[#allocation2] sm:$0xff]
        %v516 = vld [vmem:[#allocation2 + $0x8] sm:$0xff]
        %v517 = vld [vmem:[#allocation2 + $0x10] sm:$0xff]
        %v518 = vld [vmem:[#allocation2 + $0x18] sm:$0xff]
        %v519 = vld [vmem:[%s465] sm:$0xff]
        %v520 = vld [vmem:[%s465 + $0x8] sm:$0xf]
        %v521 = vld [vmem:[%s465 + $0xc] sm:$0xff]
        %v522 = vld [vmem:[%s465 + $0x14] sm:$0xf]
        %v523 = vld [vmem:[%s465 + $0x18] sm:$0xff]
        %v524 = vld [vmem:[%s465 + $0x20] sm:$0xf]
        %v525 = vld [vmem:[%s465 + $0x24] sm:$0xff]
        %v526 = vld [vmem:[%s465 + $0x2c] sm:$0xf]
        %v527 = vld [vmem:[%s472] sm:$0xf]
        %v528 = vld [vmem:[%s472 + $0x4] sm:$0xf]
        %v529 = vld [vmem:[%s472 + $0x8] sm:$0xf]
        %v530 = vld [vmem:[%s472 + $0xc] sm:$0xf]
        %v531 = vld [vmem:[%s472 + $0x10] sm:$0xf]
        %v532 = vld [vmem:[%s472 + $0x14] sm:$0xf]
        %v533 = vld [vmem:[%s472 + $0x18] sm:$0xf]
        %v534 = vld [vmem:[%s472 + $0x1c] sm:$0xf]
        %v535 = vld [vmem:[%s472 + $0x20] sm:$0xf]
        %v536 = vld [vmem:[%s472 + $0x24] sm:$0xf]
        %v537 = vld [vmem:[%s472 + $0x28] sm:$0xf]
        %v538 = vld [vmem:[%s472 + $0x2c] sm:$0xf]
        %v539 = vld [vmem:[%s472 + $0x30] sm:$0xf]
        %v540 = vld [vmem:[%s472 + $0x34] sm:$0xf]
        %v541 = vld [vmem:[%s472 + $0x38] sm:$0xf]
        %v542 = vld [vmem:[%s472 + $0x3c] sm:$0xf]
        %v543 = vld [vmem:[%s472 + $0x40] sm:$0xf]
        %v544 = vld [vmem:[%s472 + $0x44] sm:$0xf]
        %v545 = vld [vmem:[%s472 + $0x48] sm:$0xf]
        %v546 = vld [vmem:[%s472 + $0x4c] sm:$0xf]
        %v547 = vld [vmem:[%s472 + $0x50] sm:$0xf]
        %v548 = vld [vmem:[%s472 + $0x54] sm:$0xf]
        %v549 = vld [vmem:[%s472 + $0x58] sm:$0xf]
        %v550 = vld [vmem:[%s472 + $0x5c] sm:$0xf]
        %v551 = vld [vmem:[%s472 + $0x60] sm:$0xf]
        %v552 = vld [vmem:[%s472 + $0x64] sm:$0xf]
        %v553 = vld [vmem:[%s472 + $0x68] sm:$0xf]
        %v554 = vld [vmem:[%s472 + $0x6c] sm:$0xf]
        %v555 = vld [vmem:[%s472 + $0x70] sm:$0xf]
        %v556 = vld [vmem:[%s472 + $0x74] sm:$0xf]
        %v557 = vld [vmem:[%s472 + $0x78] sm:$0xf]
        %v558 = vld [vmem:[%s472 + $0x7c] sm:$0xf]
        %v559 = vld [vmem:[%s472 + $0x80] sm:$0xf]
        %v560 = vld [vmem:[%s472 + $0x84] sm:$0xf]
        %v561 = vld [vmem:[%s472 + $0x88] sm:$0xf]
        %v562 = vld [vmem:[%s472 + $0x8c] sm:$0xf]
        %v563 = vld [vmem:[%s472 + $0x90] sm:$0xf]
        %v564 = vld [vmem:[%s472 + $0x94] sm:$0xf]
        %v565 = vld [vmem:[%s472 + $0x98] sm:$0xf]
        %v566 = vld [vmem:[%s472 + $0x9c] sm:$0xf]
        %v567 = vld [vmem:[%s472 + $0xa0] sm:$0xf]
        %v568 = vld [vmem:[%s472 + $0xa4] sm:$0xf]
        %v569 = vld [vmem:[%s472 + $0xa8] sm:$0xf]
        %v570 = vld [vmem:[%s472 + $0xac] sm:$0xf]
        %v571 = vld [vmem:[%s472 + $0xb0] sm:$0xf]
        %v572 = vld [vmem:[%s472 + $0xb4] sm:$0xf]
        %v573 = vld [vmem:[%s472 + $0xb8] sm:$0xf]
        %v574 = vld [vmem:[%s472 + $0xbc] sm:$0xf]
        %v583 = vunpack.c.l.b16 %v519
        %v584 = vunpack.c.h.b16 %v519
        %v585 = vunpack.c.l.b16 %v520
        %v586 = vunpack.c.l.b16 %v521
        %v587 = vunpack.c.h.b16 %v521
        %v588 = vunpack.c.l.b16 %v522
        %v589 = vunpack.c.l.b16 %v523
        %v590 = vunpack.c.h.b16 %v523
        %v591 = vunpack.c.l.b16 %v524
        %v592 = vunpack.c.l.b16 %v525
        %v593 = vunpack.c.h.b16 %v525
        %v594 = vunpack.c.l.b16 %v526
        %v595 = vpack.c.b16 %v586, %v583
        %v596 = vpack.c.b16 %v587, %v584
        %v597 = vpack.c.b16 %v588, %v585
        %v598 = vpack.c.b16 %v592, %v589
        %v599 = vpack.c.b16 %v593, %v590
        %v600 = vpack.c.b16 %v594, %v591
        %v655 = vunpack.c.l.b16 %v527
        %v656 = vunpack.c.l.b16 %v528
        %v657 = vunpack.c.l.b16 %v529
        %v658 = vunpack.c.l.b16 %v530
        %v659 = vunpack.c.l.b16 %v531
        %v660 = vunpack.c.l.b16 %v532
        %v661 = vunpack.c.l.b16 %v533
        %v662 = vunpack.c.l.b16 %v534
        %v663 = vunpack.c.l.b16 %v535
        %v664 = vunpack.c.l.b16 %v536
        %v665 = vunpack.c.l.b16 %v537
        %v666 = vunpack.c.l.b16 %v538
        %v667 = vunpack.c.l.b16 %v539
        %v668 = vunpack.c.l.b16 %v540
        %v669 = vunpack.c.l.b16 %v541
        %v670 = vunpack.c.l.b16 %v542
        %v671 = vunpack.c.l.b16 %v543
        %v672 = vunpack.c.l.b16 %v544
        %v673 = vunpack.c.l.b16 %v545
        %v674 = vunpack.c.l.b16 %v546
        %v675 = vunpack.c.l.b16 %v547
        %v676 = vunpack.c.l.b16 %v548
        %v677 = vunpack.c.l.b16 %v549
        %v678 = vunpack.c.l.b16 %v550
        %v679 = vunpack.c.l.b16 %v551
        %v680 = vunpack.c.l.b16 %v552
        %v681 = vunpack.c.l.b16 %v553
        %v682 = vunpack.c.l.b16 %v554
        %v683 = vunpack.c.l.b16 %v555
        %v684 = vunpack.c.l.b16 %v556
        %v685 = vunpack.c.l.b16 %v557
        %v686 = vunpack.c.l.b16 %v558
        %v687 = vunpack.c.l.b16 %v559
        %v688 = vunpack.c.l.b16 %v560
        %v689 = vunpack.c.l.b16 %v561
        %v690 = vunpack.c.l.b16 %v562
        %v691 = vunpack.c.l.b16 %v563
        %v692 = vunpack.c.l.b16 %v564
        %v693 = vunpack.c.l.b16 %v565
        %v694 = vunpack.c.l.b16 %v566
        %v695 = vunpack.c.l.b16 %v567
        %v696 = vunpack.c.l.b16 %v568
        %v697 = vunpack.c.l.b16 %v569
        %v698 = vunpack.c.l.b16 %v570
        %v699 = vunpack.c.l.b16 %v571
        %v700 = vunpack.c.l.b16 %v572
        %v701 = vunpack.c.l.b16 %v573
        %v702 = vunpack.c.l.b16 %v574
        %v703 = vpack.c.b16 %v656, %v655
        %v704 = vpack.c.b16 %v658, %v657
        %v705 = vpack.c.b16 %v660, %v659
        %v706 = vpack.c.b16 %v662, %v661
        %v707 = vpack.c.b16 %v664, %v663
        %v708 = vpack.c.b16 %v666, %v665
        %v709 = vpack.c.b16 %v668, %v667
        %v710 = vpack.c.b16 %v670, %v669
        %v711 = vpack.c.b16 %v672, %v671
        %v712 = vpack.c.b16 %v674, %v673
        %v713 = vpack.c.b16 %v676, %v675
        %v714 = vpack.c.b16 %v678, %v677
        %v715 = vpack.c.b16 %v680, %v679
        %v716 = vpack.c.b16 %v682, %v681
        %v717 = vpack.c.b16 %v684, %v683
        %v718 = vpack.c.b16 %v686, %v685
        %v719 = vpack.c.b16 %v688, %v687
        %v720 = vpack.c.b16 %v690, %v689
        %v721 = vpack.c.b16 %v692, %v691
        %v722 = vpack.c.b16 %v694, %v693
        %v723 = vpack.c.b16 %v696, %v695
        %v724 = vpack.c.b16 %v698, %v697
        %v725 = vpack.c.b16 %v700, %v699
        %v726 = vpack.c.b16 %v702, %v701
        %751 = vmatprep.subr.bf16.mxu0 0
        %752 = vmatpush1.bf16.msra.mxu0 %v703
        %753 = vmatprep.subr.bf16.mxu0 0
        %754 = vmatpush1.bf16.msra.mxu0 %v704
        %755 = vmatprep.subr.bf16.mxu0 0
        %756 = vmatpush1.bf16.msra.mxu0 %v705
        %757 = vmatprep.subr.bf16.mxu0 0
        %758 = vmatpush1.bf16.msra.mxu0 %v706
        %759 = vmatprep.subr.bf16.mxu0 0
        %760 = vmatpush1.bf16.msra.mxu0 %v707
        %761 = vmatprep.subr.bf16.mxu0 0
        %762 = vmatpush1.bf16.msra.mxu0 %v708
        %763 = vmatprep.subr.bf16.mxu0 0
        %764 = vmatpush1.bf16.msra.mxu0 %v709
        %765 = vmatprep.subr.bf16.mxu0 0
        %766 = vmatpush1.bf16.msra.mxu0 %v710
        %767 = vmatprep.subr.bf16.mxu0 0
        %768 = vmatpush1.bf16.msra.mxu0 %v711
        %769 = vmatprep.subr.bf16.mxu0 0
        %770 = vmatpush1.bf16.msra.mxu0 %v712
        %771 = vmatprep.subr.bf16.mxu0 0
        %772 = vmatpush1.bf16.msra.mxu0 %v713
        %773 = vmatprep.subr.bf16.mxu0 0
        %774 = vmatpush1.bf16.msra.mxu0 %v714
        %775 = vmatprep.subr.bf16.mxu0 0
        %776 = vmatpush1.bf16.msra.mxu0 %v715
        %777 = vmatprep.subr.bf16.mxu0 0
        %778 = vmatpush1.bf16.msra.mxu0 %v716
        %779 = vmatprep.subr.bf16.mxu0 0
        %780 = vmatpush1.bf16.msra.mxu0 %v717
        %781 = vmatprep.subr.bf16.mxu0 0
        %782 = vmatpush1.bf16.msra.mxu0 %v718
        %783 = vmatprep.mubr.bf16.mxu0 %v596
        %784 = vmatmul.mubr.bf16.gmra.mrb[0].mxu0 %v595
        %v785 = vpop.f32.mrb[0].mxu0
        %v786 = vadd.f32 0.0, %v785
        %v787 = vpop.f32.mrb[0].mxu0
        %v788 = vpop.f32.mrb[0].mxu0
        %v789 = vadd.f32 0.0, %v788
        %v790 = vpop.f32.mrb[0].mxu0
        %791 = vmatprep.mubr.bf16.mxu0 %v599
        %792 = vmatmul.mubr.bf16.gmra.mrb[0].mxu0 %v598
        %v793 = vpop.f32.mrb[0].mxu0
        %v794 = vadd.f32 0.0, %v793
        %v795 = vpop.f32.mrb[0].mxu0
        %v796 = vpop.f32.mrb[0].mxu0
        %v797 = vadd.f32 0.0, %v796
        %v798 = vpop.f32.mrb[0].mxu0
        %799 = vdwg.mxu0
        %800 = vmatprep.subr.bf16.mxu0 0
        %801 = vmatpush1.bf16.msra.mxu0 %v719
        %802 = vmatprep.subr.bf16.mxu0 0
        %803 = vmatpush1.bf16.msra.mxu0 %v720
        %804 = vmatprep.subr.bf16.mxu0 0
        %805 = vmatpush1.bf16.msra.mxu0 %v721
        %806 = vmatprep.subr.bf16.mxu0 0
        %807 = vmatpush1.bf16.msra.mxu0 %v722
        %808 = vmatprep.subr.bf16.mxu0 0
        %809 = vmatpush1.bf16.msra.mxu0 %v723
        %810 = vmatprep.subr.bf16.mxu0 0
        %811 = vmatpush1.bf16.msra.mxu0 %v724
        %812 = vmatprep.subr.bf16.mxu0 0
        %813 = vmatpush1.bf16.msra.mxu0 %v725
        %814 = vmatprep.subr.bf16.mxu0 0
        %815 = vmatpush1.bf16.msra.mxu0 %v726
        %816 = vmatprep.subr.bf16.mxu0 0
        %817 = vmatpush1.bf16.msra.mxu0 0
        %818 = vmatprep.subr.bf16.mxu0 0
        %819 = vmatpush1.bf16.msra.mxu0 0
        %820 = vmatprep.subr.bf16.mxu0 0
        %821 = vmatpush1.bf16.msra.mxu0 0
        %822 = vmatprep.subr.bf16.mxu0 0
        %823 = vmatpush1.bf16.msra.mxu0 0
        %824 = vmatprep.subr.bf16.mxu0 0
        %825 = vmatpush1.bf16.msra.mxu0 0
        %826 = vmatprep.subr.bf16.mxu0 0
        %827 = vmatpush1.bf16.msra.mxu0 0
        %828 = vmatprep.subr.bf16.mxu0 0
        %829 = vmatpush1.bf16.msra.mxu0 0
        %830 = vmatprep.subr.bf16.mxu0 0
        %831 = vmatpush1.bf16.msra.mxu0 0
        %832 = vmatprep.mubr.bf16.mxu0 0
        %833 = vmatmul.mubr.bf16.gmra.mrb[0].mxu0 %v597
        %v834 = vpop.f32.mrb[0].mxu0
        %v835 = vadd.f32 %v786, %v834
        %v836 = vpop.f32.mrb[0].mxu0
        %v837 = vpop.f32.mrb[0].mxu0
        %v838 = vadd.f32 %v789, %v837
        %v839 = vpop.f32.mrb[0].mxu0
        %840 = vmatprep.mubr.bf16.mxu0 0
        %841 = vmatmul.mubr.bf16.gmra.mrb[0].mxu0 %v600
        %v842 = vpop.f32.mrb[0].mxu0
        %v843 = vadd.f32 %v794, %v842
        %v844 = vpop.f32.mrb[0].mxu0
        %v845 = vpop.f32.mrb[0].mxu0
        %v846 = vadd.f32 %v797, %v845
        %v847 = vpop.f32.mrb[0].mxu0
        %848 = vdwg.mxu0
        %v849 = vadd.f32 %v515, %v835
        %v850 = vadd.f32 %v516, %v838
        %v851 = vadd.f32 %v517, %v843
        %v852 = vadd.f32 %v518, %v846
        %853 = vst [vmem:[#allocation2] sm:$0xff] %v849
        %854 = vst [vmem:[#allocation2 + $0x8] sm:$0xff] %v850
        %855 = vst [vmem:[#allocation2 + $0x10] sm:$0xff] %v851
        %856 = vst [vmem:[#allocation2 + $0x18] sm:$0xff] %v852
        %p857 = scmp.eq.s32.totalorder %s21, 5
        // Predicated region
        $region104: #{encoder_hr_forward.12} parent=90 // pred_check
          %p858 = pneg %p857
        $region105: #{encoder_hr_forward.12} parent=90 // pred_check_branch
          %860 = sbr.rel (%p858) target = $region107
        $region106: #{encoder_hr_forward.12} parent=90 // pred_region
          %v861 = vld [vmem:[#allocation2] sm:$0xff]
          %v862 = vld [vmem:[#allocation2 + $0x8] sm:$0xff]
          %v863 = vld [vmem:[#allocation2 + $0x10] sm:$0xff]
          %v864 = vld [vmem:[#allocation2 + $0x18] sm:$0xff]
          %v865 = vld [vmem:[%s504] sm:$0x1]
          %v867 = vlaneseq
          %v868 = vshrl.u32 %v867, 7
          %v869 = vsub.s32 0, %v868
          %v870 = vrot.slane %v865, %v869
          %v872 = vadd.f32 %v861, %v870
          %v873 = vadd.f32 %v862, %v870
          %v874 = vadd.f32 %v863, %v870
          %v875 = vadd.f32 %v864, %v870
          %vm876 = vcmp.ge.f32.partialorder %v872, 0.0
          %vm877 = vcmp.ge.f32.partialorder %v873, 0.0
          %vm878 = vcmp.ge.f32.partialorder %v874, 0.0
          %vm879 = vcmp.ge.f32.partialorder %v875, 0.0
          %v880 = vmul.f32 %v872, 0.1
          %v881 = vmul.f32 %v873, 0.1
          %v882 = vmul.f32 %v874, 0.1
          %v883 = vmul.f32 %v875, 0.1
          %v884 = vsel %vm876, %v872, %v880
          %v885 = vsel %vm877, %v873, %v881
          %v886 = vsel %vm878, %v874, %v882
          %v887 = vsel %vm879, %v875, %v883
          %v888 = vpack.c.bf16 %v885, %v884
          %v889 = vpack.c.bf16 %v887, %v886
          %v892 = vunpack.c.l.b16 %v888
          %v893 = vunpack.c.h.b16 %v888
          %v894 = vunpack.c.l.b16 %v889
          %v895 = vunpack.c.h.b16 %v889
          %v896 = vpack.c.b16 %v892, %v892
          %v897 = vpack.c.b16 %v893, %v893
          %v898 = vpack.c.b16 %v894, %v894
          %v899 = vpack.c.b16 %v895, %v895
          %904 = vst [vmem:[%s498] sm:$0xf] %v896
          %905 = vst [vmem:[%s498 + $0x4] sm:$0xf] %v897
          %906 = vst [vmem:[%s498 + $0x8] sm:$0xf] %v898
          %907 = vst [vmem:[%s498 + $0xc] sm:$0xf] %v899
        $region107: #{encoder_hr_forward.12} parent=90 // pred_fallthru
          _
        %s908 = sand.u32 %s125, 1
        %s909 = sand.u32 %s125, 1
        %s910 = smul.addr %s909, 16
        %s911 = scalar_lea.vmem [#allocation5], %s910
        // Predicated region
        $region108: #{encoder_hr_forward.12} parent=90 // pred_check
          %p912 = pneg %p135
        $region109: #{encoder_hr_forward.12} parent=90 // pred_check_branch
          %914 = sbr.rel (%p912) target = $region111
        $region110: #{encoder_hr_forward.12} parent=90 // pred_region
          %s915 = smul.u32 4, %s19
          %s916 = smul.addr %s915, 2
          %s917 = sadd.s32 %s20, %s916
          %s918 = smul.addr %s917, 4
          %s919 = scalar_lea.vmem %s3, %s918
          // Predicated region
          $region112: #{encoder_hr_forward.12} parent=110 // pred_check
            _
          $region113: #{encoder_hr_forward.12} parent=110 // pred_check_branch
            %921 = sbr.rel (0) target = $region115
          $region114: #{encoder_hr_forward.12} parent=110 // pred_region
            // Predicated region
            $region116: #{encoder_hr_forward.12} parent=114 // pred_check
              _
            $region117: #{encoder_hr_forward.12} parent=114 // pred_check_branch
              %923 = sbr.rel target = $region119
            $region118: #{encoder_hr_forward.12} parent=114 // pred_region
              // Predicated region
              $region131: #{encoder_hr_forward.12} parent=118 // pred_check
                _
              $region132: #{encoder_hr_forward.12} parent=118 // pred_check_branch
                %944 = sbr.rel (0) target = $region134
              $region133: #{encoder_hr_forward.12} parent=118 // pred_region
                loop: start=0, step=1, limit=1
                $region135: #{encoder_hr_forward.12} parent=133 // loop_pre_header
                  _
                $region136: #{encoder_hr_forward.12} parent=133 // loop_header
                  %s946 = sphi 0, %s950
                  %p947 = scmp.ge.s32.totalorder %s946, 1
                  %s951 = sphi %s911, %s911
                  %s952 = sphi %s919, %s919
                $region137: #{encoder_hr_forward.12} parent=133 // loop_header_branch
                  %949 = sbr.rel (%p947) target = $region141
                $region138: #{encoder_hr_forward.12} parent=133 // loop_body
                  _
                $region139: #{encoder_hr_forward.12} parent=133 // loop_footer
                  %s950 = sadd.s32 1, %s946
                $region140: #{encoder_hr_forward.12} parent=133 // loop_footer_branch
                  %945 = sbr.rel target = $region136
                $region141: #{encoder_hr_forward.12} parent=133 // loop_exit
                  _
                loop: start=0, step=1, limit=1
                $region142: #{encoder_hr_forward.12} parent=133 // loop_pre_header
                  _
                $region143: #{encoder_hr_forward.12} parent=133 // loop_header
                  %s955 = sphi 0, %s959
                  %p956 = scmp.ge.s32.totalorder %s955, 1
                  %s960 = sphi %s911, %s911
                  %s961 = sphi %s919, %s919
                $region144: #{encoder_hr_forward.12} parent=133 // loop_header_branch
                  %958 = sbr.rel (%p956) target = $region148
                $region145: #{encoder_hr_forward.12} parent=133 // loop_body
                  %v962 = vld [vmem:[%s960] sm:$0xf]
                  %963 = vst [vmem:[%s961] sm:$0xf] %v962
                  %v964 = vld [vmem:[%s960 + $0x4] sm:$0xf]
                  %965 = vst [vmem:[%s961 + $0x8] sm:$0xf] %v964
                  %v966 = vld [vmem:[%s960 + $0x8] sm:$0xf]
                  %967 = vst [vmem:[%s961 + $0x10] sm:$0xf] %v966
                  %v968 = vld [vmem:[%s960 + $0xc] sm:$0xf]
                  %969 = vst [vmem:[%s961 + $0x18] sm:$0xf] %v968
                $region146: #{encoder_hr_forward.12} parent=133 // loop_footer
                  %s959 = sadd.s32 1, %s955
                $region147: #{encoder_hr_forward.12} parent=133 // loop_footer_branch
                  %954 = sbr.rel target = $region143
                $region148: #{encoder_hr_forward.12} parent=133 // loop_exit
                  _
              $region134: #{encoder_hr_forward.12} parent=118 // pred_fallthru
                _
            $region119: #{encoder_hr_forward.12} parent=114 // pred_fallthru
              _
            // Predicated region
            $region120: #{encoder_hr_forward.12} parent=114 // pred_check
              _
            $region121: #{encoder_hr_forward.12} parent=114 // pred_check_branch
              %925 = sbr.rel (0) target = $region123
            $region122: #{encoder_hr_forward.12} parent=114 // pred_region
              loop: start=0, step=1, limit=1
              $region124: #{encoder_hr_forward.12} parent=122 // loop_pre_header
                _
              $region125: #{encoder_hr_forward.12} parent=122 // loop_header
                %s928 = sphi 0, %s932
                %p929 = scmp.ge.s32.totalorder %s928, 1
                %s933 = sphi %s911, %s911
                %s934 = sphi %s919, %s919
              $region126: #{encoder_hr_forward.12} parent=122 // loop_header_branch
                %931 = sbr.rel (%p929) target = $region130
              $region127: #{encoder_hr_forward.12} parent=122 // loop_body
                %v935 = vld [vmem:[%s933] sm:$0xf]
                %936 = vst [vmem:[%s934] sm:$0xf] %v935
                %v937 = vld [vmem:[%s933 + $0x4] sm:$0xf]
                %938 = vst [vmem:[%s934 + $0x8] sm:$0xf] %v937
                %v939 = vld [vmem:[%s933 + $0x8] sm:$0xf]
                %940 = vst [vmem:[%s934 + $0x10] sm:$0xf] %v939
                %v941 = vld [vmem:[%s933 + $0xc] sm:$0xf]
                %942 = vst [vmem:[%s934 + $0x18] sm:$0xf] %v941
              $region128: #{encoder_hr_forward.12} parent=122 // loop_footer
                %s932 = sadd.s32 1, %s928
              $region129: #{encoder_hr_forward.12} parent=122 // loop_footer_branch
                %927 = sbr.rel target = $region125
              $region130: #{encoder_hr_forward.12} parent=122 // loop_exit
                _
            $region123: #{encoder_hr_forward.12} parent=114 // pred_fallthru
              _
          $region115: #{encoder_hr_forward.12} parent=110 // pred_fallthru
            _
          %970 = vnop
        $region111: #{encoder_hr_forward.12} parent=90 // pred_fallthru
          _
      $region91: #{encoder_hr_forward.12} parent=5 // pred_fallthru
        _
      %p971 = scmp.le.s32.totalorder 2, %s9
      // Predicated region
      $region149: #{encoder_hr_forward.12} parent=5 // pred_check
        %p972 = pneg %p971
      $region150: #{encoder_hr_forward.12} parent=5 // pred_check_branch
        %974 = sbr.rel (%p972) target = $region152
      $region151: #{encoder_hr_forward.12} parent=5 // pred_region
        %s975 = ssub.s32 %s9, 2
        // Predicated region
        $region153: #{encoder_hr_forward.12} parent=151 // pred_check
          %p976 = pneg %p141
        $region154: #{encoder_hr_forward.12} parent=151 // pred_check_branch
          %978 = sbr.rel (%p976) target = $region156
        $region155: #{encoder_hr_forward.12} parent=151 // pred_region
          %s979 = sand.u32 %s126, 1
          %s980 = sand.u32 %s126, 1
          %s981 = smul.addr %s980, 16
          %s982 = scalar_lea.vmem [#allocation5], %s981
        $region156: #{encoder_hr_forward.12} parent=151 // pred_fallthru
          _
      $region152: #{encoder_hr_forward.12} parent=5 // pred_fallthru
        _
    $region6: #{encoder_hr_forward.12} parent=1 // loop_footer
      %s13 = sadd.s32 1, %s9
    $region7: #{encoder_hr_forward.12} parent=1 // loop_footer_branch
      %8 = sbr.rel target = $region3
    $region8: #{encoder_hr_forward.12} parent=1 // loop_exit
      _

// kernel: encoder_hr_forward.13
$region0: #{encoder_hr_forward.13}
  #allocation0 [shape = 'u32[]', space=smem, size = 0x4, offset = 0x4, fixed_abs, tag = 'smem constant byte address 0x4 - core index']
  #allocation1 [shape = 'u32[144,128]{1,0:T(1,128)}', space=vmem, size = 0x12000, scoped, tag = 'internal scratch']
  #allocation2 [shape = 'f32[2,256]{1,0:T(2,128)}', space=vmem, size = 0x800, scoped, tag = 'scratch operand']
  %s0 = inlined_call_operand.vmem [shape: bf16[2,16,256], index: 0, kind: input, shape index: {}]
  %s1 = inlined_call_operand.vmem [shape: f32[256,256], index: 1, kind: input, shape index: {}]
  %s2 = inlined_call_operand.vmem [shape: f32[1,256], index: 2, kind: input, shape index: {}]
  %s3 = inlined_call_operand.vmem [shape: f32[256,256], index: 3, kind: input, shape index: {}]
  %s4 = inlined_call_operand.vmem [shape: f32[1,256], index: 4, kind: input, shape index: {}]
  %s5 = inlined_call_operand.hbm [shape: f32[2,256], index: 5, kind: output, shape index: {}]
  %s6 = sld [smem:[#allocation0]]
  $region38: #{encoder_hr_forward.13} parent=0
    _
  %s8 = ssub.s32 1, %s6
  %s9 = scalar_select 0, %s8, %s6
  $region1: #{encoder_hr_forward.13} parent=0
    #allocation3 [shape = 'u8[2048]{0}', space=vmem, size = 0x800, scoped, tag = 'output window, operand 0, single buffered']
    #allocation4 [shape = 's32[1]{0}', space=sflag, size = 0x4, scoped, tag = 'scoped memory for encoder_hr_forward.13']
    %10 = vsyncpa [#allocation4], 0
    // Predicated region
    $region2: #{encoder_hr_forward.13} parent=1 // pred_check
      _
    $region3: #{encoder_hr_forward.13} parent=1 // pred_check_branch
      %12 = sbr.rel (0) target = $region5
    $region4: #{encoder_hr_forward.13} parent=1 // pred_region
      _
    $region5: #{encoder_hr_forward.13} parent=1 // pred_fallthru
      _
    // Predicated region
    $region6: #{encoder_hr_forward.13} parent=1 // pred_check
      _
    $region7: #{encoder_hr_forward.13} parent=1 // pred_check_branch
      %14 = sbr.rel (0) target = $region9
    $region8: #{encoder_hr_forward.13} parent=1 // pred_region
      _
    $region9: #{encoder_hr_forward.13} parent=1 // pred_fallthru
      _
    // Predicated region
    $region10: #{encoder_hr_forward.13} parent=1 // pred_check
      _
    $region11: #{encoder_hr_forward.13} parent=1 // pred_check_branch
      %16 = sbr.rel (0) target = $region13
    $region12: #{encoder_hr_forward.13} parent=1 // pred_region
      _
    $region13: #{encoder_hr_forward.13} parent=1 // pred_fallthru
      _
    // Predicated region
    $region14: #{encoder_hr_forward.13} parent=1 // pred_check
      _
    $region15: #{encoder_hr_forward.13} parent=1 // pred_check_branch
      %18 = sbr.rel (0) target = $region17
    $region16: #{encoder_hr_forward.13} parent=1 // pred_region
      _
    $region17: #{encoder_hr_forward.13} parent=1 // pred_fallthru
      _
    // Predicated region
    $region18: #{encoder_hr_forward.13} parent=1 // pred_check
      _
    $region19: #{encoder_hr_forward.13} parent=1 // pred_check_branch
      %20 = sbr.rel (0) target = $region21
    $region20: #{encoder_hr_forward.13} parent=1 // pred_region
      _
    $region21: #{encoder_hr_forward.13} parent=1 // pred_fallthru
      _
    %p21 = scmp.eq.s32.totalorder 0, 0
    // Predicated region
    $region22: #{encoder_hr_forward.13} parent=1 // pred_check
      %p22 = pneg %p21
    $region23: #{encoder_hr_forward.13} parent=1 // pred_check_branch
      %24 = sbr.rel (%p22) target = $region25
    $region24: #{encoder_hr_forward.13} parent=1 // pred_region
      %25 = vst [vmem:[#allocation2] sm:$0xf] 0.0
    $region25: #{encoder_hr_forward.13} parent=1 // pred_fallthru
      _
    %v26 = vld [vmem:[#allocation2] sm:$0xf]
    %v27 = vld [vmem:[%s0] sm:$0xff]
    %v28 = vld [vmem:[%s0 + $0x8] sm:$0xff]
    %v29 = vld [vmem:[%s0 + $0x10] sm:$0xff]
    %v30 = vld [vmem:[%s0 + $0x18] sm:$0xff]
    %v31 = vunpack.c.l.bf16 %v27
    %v32 = vunpack.c.h.bf16 %v27
    %v33 = vunpack.c.l.bf16 %v28
    %v34 = vunpack.c.h.bf16 %v28
    %v35 = vunpack.c.l.bf16 %v29
    %v36 = vunpack.c.h.bf16 %v29
    %v37 = vunpack.c.l.bf16 %v30
    %v38 = vunpack.c.h.bf16 %v30
    %v39 = vadd.f32 %v31, %v33
    %v40 = vrot.slane %v39, 4
    %v41 = vadd.f32 %v39, %v40
    %v42 = vrot.slane %v41, 2
    %v43 = vadd.f32 %v41, %v42
    %v44 = vrot.slane %v43, 1
    %v45 = vadd.f32 %v43, %v44
    %v46 = vadd.f32 %v32, %v34
    %v47 = vrot.slane %v46, 4
    %v48 = vadd.f32 %v46, %v47
    %v49 = vrot.slane %v48, 2
    %v50 = vadd.f32 %v48, %v49
    %v51 = vrot.slane %v50, 1
    %v52 = vadd.f32 %v50, %v51
    %v53 = vadd.f32 %v35, %v37
    %v54 = vrot.slane %v53, 4
    %v55 = vadd.f32 %v53, %v54
    %v56 = vrot.slane %v55, 2
    %v57 = vadd.f32 %v55, %v56
    %v58 = vrot.slane %v57, 1
    %v59 = vadd.f32 %v57, %v58
    %v60 = vadd.f32 %v36, %v38
    %v61 = vrot.slane %v60, 4
    %v62 = vadd.f32 %v60, %v61
    %v63 = vrot.slane %v62, 2
    %v64 = vadd.f32 %v62, %v63
    %v65 = vrot.slane %v64, 1
    %v66 = vadd.f32 %v64, %v65
    %v71 = vcombine.low %v45, %v52
    %v73 = vunpack.c.l.s4 1983009808
    %v74 = vunpack.c.0.s8 %v73
    %v75 = vlaneseq
    %v76 = vshrl.u32 %v75, 7
    %v77 = vsub.s32 %v74, %v76
    %v78 = vrot.slane %v71, %v77
    %v79 = vcombine.low %v59, %v66
    %v81 = vunpack.c.l.s4 1983009808
    %v82 = vunpack.c.0.s8 %v81
    %v83 = vlaneseq
    %v84 = vshrl.u32 %v83, 7
    %v85 = vsub.s32 %v82, %v84
    %v86 = vrot.slane %v79, %v85
    %vm87 = vcmask 1044484
    %v88 = vsel %vm87, %v78, %v78
    %vm89 = vcmask 1046534
    %v90 = vsel %vm89, %v78, %v88
    %v91 = vrot.slane %v86, 7
    %vm92 = vcmask 1041409
    %v93 = vsel %vm92, %v91, %v90
    %vm94 = vcmask 1043459
    %v95 = vsel %vm94, %v91, %v93
    %vm96 = vcmask 1045509
    %v97 = vsel %vm96, %v91, %v95
    %vm98 = vcmask 1047559
    %v99 = vsel %vm98, %v91, %v97
    %v101 = vadd.f32 %v26, %v99
    %102 = vst [vmem:[#allocation2] sm:$0xf] %v101
    // Predicated region
    $region26: #{encoder_hr_forward.13} parent=1 // pred_check
      %p103 = pneg %p21
    $region27: #{encoder_hr_forward.13} parent=1 // pred_check_branch
      %105 = sbr.rel (%p103) target = $region29
    $region28: #{encoder_hr_forward.13} parent=1 // pred_region
      %v106 = vld [vmem:[#allocation2] sm:$0xf]
      %v107 = vmul.f32 %v106, 0.0625
      %v108 = vld [vmem:[%s1] sm:$0xff]
      %v109 = vld [vmem:[%s1 + $0x8] sm:$0xff]
      %v110 = vld [vmem:[%s1 + $0x10] sm:$0xff]
      %v111 = vld [vmem:[%s1 + $0x18] sm:$0xff]
      %v112 = vld [vmem:[%s1 + $0x20] sm:$0xff]
      %v113 = vld [vmem:[%s1 + $0x28] sm:$0xff]
      %v114 = vld [vmem:[%s1 + $0x30] sm:$0xff]
      %v115 = vld [vmem:[%s1 + $0x38] sm:$0xff]
      %v116 = vld [vmem:[%s1 + $0x40] sm:$0xff]
      %v117 = vld [vmem:[%s1 + $0x48] sm:$0xff]
      %v118 = vld [vmem:[%s1 + $0x50] sm:$0xff]
      %v119 = vld [vmem:[%s1 + $0x58] sm:$0xff]
      %v120 = vld [vmem:[%s1 + $0x60] sm:$0xff]
      %v121 = vld [vmem:[%s1 + $0x68] sm:$0xff]
      %v122 = vld [vmem:[%s1 + $0x70] sm:$0xff]
      %v123 = vld [vmem:[%s1 + $0x78] sm:$0xff]
      %v124 = vld [vmem:[%s1 + $0x80] sm:$0xff]
      %v125 = vld [vmem:[%s1 + $0x88] sm:$0xff]
      %v126 = vld [vmem:[%s1 + $0x90] sm:$0xff]
      %v127 = vld [vmem:[%s1 + $0x98] sm:$0xff]
      %v128 = vld [vmem:[%s1 + $0xa0] sm:$0xff]
      %v129 = vld [vmem:[%s1 + $0xa8] sm:$0xff]
      %v130 = vld [vmem:[%s1 + $0xb0] sm:$0xff]
      %v131 = vld [vmem:[%s1 + $0xb8] sm:$0xff]
      %v132 = vld [vmem:[%s1 + $0xc0] sm:$0xff]
      %v133 = vld [vmem:[%s1 + $0xc8] sm:$0xff]
      %v134 = vld [vmem:[%s1 + $0xd0] sm:$0xff]
      %v135 = vld [vmem:[%s1 + $0xd8] sm:$0xff]
      %v136 = vld [vmem:[%s1 + $0xe0] sm:$0xff]
      %v137 = vld [vmem:[%s1 + $0xe8] sm:$0xff]
      %v138 = vld [vmem:[%s1 + $0xf0] sm:$0xff]
      %v139 = vld [vmem:[%s1 + $0xf8] sm:$0xff]
      %v140 = vld [vmem:[%s1 + $0x100] sm:$0xff]
      %v141 = vld [vmem:[%s1 + $0x108] sm:$0xff]
      %v142 = vld [vmem:[%s1 + $0x110] sm:$0xff]
      %v143 = vld [vmem:[%s1 + $0x118] sm:$0xff]
      %v144 = vld [vmem:[%s1 + $0x120] sm:$0xff]
      %v145 = vld [vmem:[%s1 + $0x128] sm:$0xff]
      %v146 = vld [vmem:[%s1 + $0x130] sm:$0xff]
      %v147 = vld [vmem:[%s1 + $0x138] sm:$0xff]
      %v148 = vld [vmem:[%s1 + $0x140] sm:$0xff]
      %v149 = vld [vmem:[%s1 + $0x148] sm:$0xff]
      %v150 = vld [vmem:[%s1 + $0x150] sm:$0xff]
      %v151 = vld [vmem:[%s1 + $0x158] sm:$0xff]
      %v152 = vld [vmem:[%s1 + $0x160] sm:$0xff]
      %v153 = vld [vmem:[%s1 + $0x168] sm:$0xff]
      %v154 = vld [vmem:[%s1 + $0x170] sm:$0xff]
      %v155 = vld [vmem:[%s1 + $0x178] sm:$0xff]
      %v156 = vld [vmem:[%s1 + $0x180] sm:$0xff]
      %v157 = vld [vmem:[%s1 + $0x188] sm:$0xff]
      %v158 = vld [vmem:[%s1 + $0x190] sm:$0xff]
      %v159 = vld [vmem:[%s1 + $0x198] sm:$0xff]
      %v160 = vld [vmem:[%s1 + $0x1a0] sm:$0xff]
      %v161 = vld [vmem:[%s1 + $0x1a8] sm:$0xff]
      %v162 = vld [vmem:[%s1 + $0x1b0] sm:$0xff]
      %v163 = vld [vmem:[%s1 + $0x1b8] sm:$0xff]
      %v164 = vld [vmem:[%s1 + $0x1c0] sm:$0xff]
      %v165 = vld [vmem:[%s1 + $0x1c8] sm:$0xff]
      %v166 = vld [vmem:[%s1 + $0x1d0] sm:$0xff]
      %v167 = vld [vmem:[%s1 + $0x1d8] sm:$0xff]
      %v168 = vld [vmem:[%s1 + $0x1e0] sm:$0xff]
      %v169 = vld [vmem:[%s1 + $0x1e8] sm:$0xff]
      %v170 = vld [vmem:[%s1 + $0x1f0] sm:$0xff]
      %v171 = vld [vmem:[%s1 + $0x1f8] sm:$0xff]
      %v172 = vld [vmem:[%s2] sm:$0x3]
      %v174 = vlaneseq
      %v175 = vshrl.u32 %v174, 7
      %v176 = vsub.s32 0, %v175
      %v177 = vrot.slane %v172, %v176
      %v178 = vlaneseq
      %v179 = vshrl.u32 %v178, 7
      %v180 = vsub.s32 1, %v179
      %v181 = vrot.slane %v172, %v180
      %v186 = vunpack.c.l.s4 1983009808
      %v187 = vunpack.c.0.s8 %v186
      %v188 = vlaneseq
      %v189 = vshrl.u32 %v188, 7
      %v190 = vsub.s32 %v187, %v189
      %v191 = vrot.slane %v107, %v190
      %v192 = vcombine.high %v191, %v191
      %195 = vmatprep.subr.mxu0 %v109
      %196 = vmatpush1.msra.mxu0 %v108
      %197 = vmatprep.subr.mxu0 %v111
      %198 = vmatpush1.msra.mxu0 %v110
      %199 = vmatprep.subr.mxu0 %v113
      %200 = vmatpush1.msra.mxu0 %v112
      %201 = vmatprep.subr.mxu0 %v115
      %202 = vmatpush1.msra.mxu0 %v114
      %203 = vmatprep.subr.mxu0 %v117
      %204 = vmatpush1.msra.mxu0 %v116
      %205 = vmatprep.subr.mxu0 %v119
      %206 = vmatpush1.msra.mxu0 %v118
      %207 = vmatprep.subr.mxu0 %v121
      %208 = vmatpush1.msra.mxu0 %v120
      %209 = vmatprep.subr.mxu0 %v123
      %210 = vmatpush1.msra.mxu0 %v122
      %211 = vmatprep.subr.mxu0 %v125
      %212 = vmatpush1.msra.mxu0 %v124
      %213 = vmatprep.subr.mxu0 %v127
      %214 = vmatpush1.msra.mxu0 %v126
      %215 = vmatprep.subr.mxu0 %v129
      %216 = vmatpush1.msra.mxu0 %v128
      %217 = vmatprep.subr.mxu0 %v131
      %218 = vmatpush1.msra.mxu0 %v130
      %219 = vmatprep.subr.mxu0 %v133
      %220 = vmatpush1.msra.mxu0 %v132
      %221 = vmatprep.subr.mxu0 %v135
      %222 = vmatpush1.msra.mxu0 %v134
      %223 = vmatprep.subr.mxu0 %v137
      %224 = vmatpush1.msra.mxu0 %v136
      %225 = vmatprep.subr.mxu0 %v139
      %226 = vmatpush1.msra.mxu0 %v138
      %227 = vmatprep.subr.mxu0 %v141
      %228 = vmatpush1.msra.mxu0 %v140
      %229 = vmatprep.subr.mxu0 %v143
      %230 = vmatpush1.msra.mxu0 %v142
      %231 = vmatprep.subr.mxu0 %v145
      %232 = vmatpush1.msra.mxu0 %v144
      %233 = vmatprep.subr.mxu0 %v147
      %234 = vmatpush1.msra.mxu0 %v146
      %235 = vmatprep.subr.mxu0 %v149
      %236 = vmatpush1.msra.mxu0 %v148
      %237 = vmatprep.subr.mxu0 %v151
      %238 = vmatpush1.msra.mxu0 %v150
      %239 = vmatprep.subr.mxu0 %v153
      %240 = vmatpush1.msra.mxu0 %v152
      %241 = vmatprep.subr.mxu0 %v155
      %242 = vmatpush1.msra.mxu0 %v154
      %243 = vmatprep.subr.mxu0 %v157
      %244 = vmatpush1.msra.mxu0 %v156
      %245 = vmatprep.subr.mxu0 %v159
      %246 = vmatpush1.msra.mxu0 %v158
      %247 = vmatprep.subr.mxu0 %v161
      %248 = vmatpush1.msra.mxu0 %v160
      %249 = vmatprep.subr.mxu0 %v163
      %250 = vmatpush1.msra.mxu0 %v162
      %251 = vmatprep.subr.mxu0 %v165
      %252 = vmatpush1.msra.mxu0 %v164
      %253 = vmatprep.subr.mxu0 %v167
      %254 = vmatpush1.msra.mxu0 %v166
      %255 = vmatprep.subr.mxu0 %v169
      %256 = vmatpush1.msra.mxu0 %v168
      %257 = vmatprep.subr.mxu0 %v171
      %258 = vmatpush1.msra.mxu0 %v170
      %259 = vmatprep.mubr.f32.mxu0 %v192
      %260 = vmatmul.mubr.f32.gmra.mrb[0].mxu0 %v191
      %v261 = vpop.f32.mrb[0].mxu0
      %v262 = vadd.f32 %v177, %v261
      %v263 = vpop.f32.mrb[0].mxu0
      %v264 = vadd.f32 %v181, %v263
      %265 = vdwg.mxu0
      %vm266 = vcmp.ge.f32.partialorder %v262, 0.0
      %vm267 = vcmp.ge.f32.partialorder %v264, 0.0
      %v268 = vmul.f32 %v262, 0.1
      %v269 = vmul.f32 %v264, 0.1
      %v270 = vsel %vm266, %v262, %v268
      %v271 = vsel %vm267, %v264, %v269
      %v272 = vld [vmem:[%s3] sm:$0xff]
      %v273 = vld [vmem:[%s3 + $0x8] sm:$0xff]
      %v274 = vld [vmem:[%s3 + $0x10] sm:$0xff]
      %v275 = vld [vmem:[%s3 + $0x18] sm:$0xff]
      %v276 = vld [vmem:[%s3 + $0x20] sm:$0xff]
      %v277 = vld [vmem:[%s3 + $0x28] sm:$0xff]
      %v278 = vld [vmem:[%s3 + $0x30] sm:$0xff]
      %v279 = vld [vmem:[%s3 + $0x38] sm:$0xff]
      %v280 = vld [vmem:[%s3 + $0x40] sm:$0xff]
      %v281 = vld [vmem:[%s3 + $0x48] sm:$0xff]
      %v282 = vld [vmem:[%s3 + $0x50] sm:$0xff]
      %v283 = vld [vmem:[%s3 + $0x58] sm:$0xff]
      %v284 = vld [vmem:[%s3 + $0x60] sm:$0xff]
      %v285 = vld [vmem:[%s3 + $0x68] sm:$0xff]
      %v286 = vld [vmem:[%s3 + $0x70] sm:$0xff]
      %v287 = vld [vmem:[%s3 + $0x78] sm:$0xff]
      %v288 = vld [vmem:[%s3 + $0x80] sm:$0xff]
      %v289 = vld [vmem:[%s3 + $0x88] sm:$0xff]
      %v290 = vld [vmem:[%s3 + $0x90] sm:$0xff]
      %v291 = vld [vmem:[%s3 + $0x98] sm:$0xff]
      %v292 = vld [vmem:[%s3 + $0xa0] sm:$0xff]
      %v293 = vld [vmem:[%s3 + $0xa8] sm:$0xff]
      %v294 = vld [vmem:[%s3 + $0xb0] sm:$0xff]
      %v295 = vld [vmem:[%s3 + $0xb8] sm:$0xff]
      %v296 = vld [vmem:[%s3 + $0xc0] sm:$0xff]
      %v297 = vld [vmem:[%s3 + $0xc8] sm:$0xff]
      %v298 = vld [vmem:[%s3 + $0xd0] sm:$0xff]
      %v299 = vld [vmem:[%s3 + $0xd8] sm:$0xff]
      %v300 = vld [vmem:[%s3 + $0xe0] sm:$0xff]
      %v301 = vld [vmem:[%s3 + $0xe8] sm:$0xff]
      %v302 = vld [vmem:[%s3 + $0xf0] sm:$0xff]
      %v303 = vld [vmem:[%s3 + $0xf8] sm:$0xff]
      %v304 = vld [vmem:[%s3 + $0x100] sm:$0xff]
      %v305 = vld [vmem:[%s3 + $0x108] sm:$0xff]
      %v306 = vld [vmem:[%s3 + $0x110] sm:$0xff]
      %v307 = vld [vmem:[%s3 + $0x118] sm:$0xff]
      %v308 = vld [vmem:[%s3 + $0x120] sm:$0xff]
      %v309 = vld [vmem:[%s3 + $0x128] sm:$0xff]
      %v310 = vld [vmem:[%s3 + $0x130] sm:$0xff]
      %v311 = vld [vmem:[%s3 + $0x138] sm:$0xff]
      %v312 = vld [vmem:[%s3 + $0x140] sm:$0xff]
      %v313 = vld [vmem:[%s3 + $0x148] sm:$0xff]
      %v314 = vld [vmem:[%s3 + $0x150] sm:$0xff]
      %v315 = vld [vmem:[%s3 + $0x158] sm:$0xff]
      %v316 = vld [vmem:[%s3 + $0x160] sm:$0xff]
      %v317 = vld [vmem:[%s3 + $0x168] sm:$0xff]
      %v318 = vld [vmem:[%s3 + $0x170] sm:$0xff]
      %v319 = vld [vmem:[%s3 + $0x178] sm:$0xff]
      %v320 = vld [vmem:[%s3 + $0x180] sm:$0xff]
      %v321 = vld [vmem:[%s3 + $0x188] sm:$0xff]
      %v322 = vld [vmem:[%s3 + $0x190] sm:$0xff]
      %v323 = vld [vmem:[%s3 + $0x198] sm:$0xff]
      %v324 = vld [vmem:[%s3 + $0x1a0] sm:$0xff]
      %v325 = vld [vmem:[%s3 + $0x1a8] sm:$0xff]
      %v326 = vld [vmem:[%s3 + $0x1b0] sm:$0xff]
      %v327 = vld [vmem:[%s3 + $0x1b8] sm:$0xff]
      %v328 = vld [vmem:[%s3 + $0x1c0] sm:$0xff]
      %v329 = vld [vmem:[%s3 + $0x1c8] sm:$0xff]
      %v330 = vld [vmem:[%s3 + $0x1d0] sm:$0xff]
      %v331 = vld [vmem:[%s3 + $0x1d8] sm:$0xff]
      %v332 = vld [vmem:[%s3 + $0x1e0] sm:$0xff]
      %v333 = vld [vmem:[%s3 + $0x1e8] sm:$0xff]
      %v334 = vld [vmem:[%s3 + $0x1f0] sm:$0xff]
      %v335 = vld [vmem:[%s3 + $0x1f8] sm:$0xff]
      %v336 = vld [vmem:[%s4] sm:$0x3]
      %v338 = vlaneseq
      %v339 = vshrl.u32 %v338, 7
      %v340 = vsub.s32 0, %v339
      %v341 = vrot.slane %v336, %v340
      %v342 = vlaneseq
      %v343 = vshrl.u32 %v342, 7
      %v344 = vsub.s32 1, %v343
      %v345 = vrot.slane %v336, %v344
      %348 = vmatprep.subr.mxu0 %v273
      %349 = vmatpush1.msra.mxu0 %v272
      %350 = vmatprep.subr.mxu0 %v275
      %351 = vmatpush1.msra.mxu0 %v274
      %352 = vmatprep.subr.mxu0 %v277
      %353 = vmatpush1.msra.mxu0 %v276
      %354 = vmatprep.subr.mxu0 %v279
      %355 = vmatpush1.msra.mxu0 %v278
      %356 = vmatprep.subr.mxu0 %v281
      %357 = vmatpush1.msra.mxu0 %v280
      %358 = vmatprep.subr.mxu0 %v283
      %359 = vmatpush1.msra.mxu0 %v282
      %360 = vmatprep.subr.mxu0 %v285
      %361 = vmatpush1.msra.mxu0 %v284
      %362 = vmatprep.subr.mxu0 %v287
      %363 = vmatpush1.msra.mxu0 %v286
      %364 = vmatprep.subr.mxu0 %v289
      %365 = vmatpush1.msra.mxu0 %v288
      %366 = vmatprep.subr.mxu0 %v291
      %367 = vmatpush1.msra.mxu0 %v290
      %368 = vmatprep.subr.mxu0 %v293
      %369 = vmatpush1.msra.mxu0 %v292
      %370 = vmatprep.subr.mxu0 %v295
      %371 = vmatpush1.msra.mxu0 %v294
      %372 = vmatprep.subr.mxu0 %v297
      %373 = vmatpush1.msra.mxu0 %v296
      %374 = vmatprep.subr.mxu0 %v299
      %375 = vmatpush1.msra.mxu0 %v298
      %376 = vmatprep.subr.mxu0 %v301
      %377 = vmatpush1.msra.mxu0 %v300
      %378 = vmatprep.subr.mxu0 %v303
      %379 = vmatpush1.msra.mxu0 %v302
      %380 = vmatprep.subr.mxu0 %v305
      %381 = vmatpush1.msra.mxu0 %v304
      %382 = vmatprep.subr.mxu0 %v307
      %383 = vmatpush1.msra.mxu0 %v306
      %384 = vmatprep.subr.mxu0 %v309
      %385 = vmatpush1.msra.mxu0 %v308
      %386 = vmatprep.subr.mxu0 %v311
      %387 = vmatpush1.msra.mxu0 %v310
      %388 = vmatprep.subr.mxu0 %v313
      %389 = vmatpush1.msra.mxu0 %v312
      %390 = vmatprep.subr.mxu0 %v315
      %391 = vmatpush1.msra.mxu0 %v314
      %392 = vmatprep.subr.mxu0 %v317
      %393 = vmatpush1.msra.mxu0 %v316
      %394 = vmatprep.subr.mxu0 %v319
      %395 = vmatpush1.msra.mxu0 %v318
      %396 = vmatprep.subr.mxu0 %v321
      %397 = vmatpush1.msra.mxu0 %v320
      %398 = vmatprep.subr.mxu0 %v323
      %399 = vmatpush1.msra.mxu0 %v322
      %400 = vmatprep.subr.mxu0 %v325
      %401 = vmatpush1.msra.mxu0 %v324
      %402 = vmatprep.subr.mxu0 %v327
      %403 = vmatpush1.msra.mxu0 %v326
      %404 = vmatprep.subr.mxu0 %v329
      %405 = vmatpush1.msra.mxu0 %v328
      %406 = vmatprep.subr.mxu0 %v331
      %407 = vmatpush1.msra.mxu0 %v330
      %408 = vmatprep.subr.mxu0 %v333
      %409 = vmatpush1.msra.mxu0 %v332
      %410 = vmatprep.subr.mxu0 %v335
      %411 = vmatpush1.msra.mxu0 %v334
      %412 = vmatprep.mubr.f32.mxu0 %v271
      %413 = vmatmul.mubr.f32.gmra.mrb[0].mxu0 %v270
      %v414 = vpop.f32.mrb[0].mxu0
      %v415 = vadd.f32 %v341, %v414
      %v416 = vpop.f32.mrb[0].mxu0
      %v417 = vadd.f32 %v345, %v416
      %418 = vdwg.mxu0
      %v421 = vcombine.low %v415, %v417
      %v423 = vunpack.c.l.s4 1983009808
      %v424 = vunpack.c.0.s8 %v423
      %v425 = vlaneseq
      %v426 = vshrl.u32 %v425, 7
      %v427 = vsub.s32 %v424, %v426
      %v428 = vrot.slane %v421, %v427
      %430 = vst [vmem:[#allocation3] sm:$0xf] %v428
    $region29: #{encoder_hr_forward.13} parent=1 // pred_fallthru
      _
    // Predicated region
    $region30: #{encoder_hr_forward.13} parent=1 // pred_check
      _
    $region31: #{encoder_hr_forward.13} parent=1 // pred_check_branch
      %432 = sbr.rel (0) target = $region33
    $region32: #{encoder_hr_forward.13} parent=1 // pred_region
      %s434 = ssub.s32 64, 64
      %435 = vsyncadd [#allocation4], %s434
      %s437 = sshll.u32 [#allocation3], 4
      %s438 = int_to_ptr.vmem [resolvable:$true] %s437
      %440 = dma.vmem_to_hbm [thread:$0]  %s438, 64, %s5, [#allocation4]
    $region33: #{encoder_hr_forward.13} parent=1 // pred_fallthru
      _
    // Predicated region
    $region34: #{encoder_hr_forward.13} parent=1 // pred_check
      _
    $region35: #{encoder_hr_forward.13} parent=1 // pred_check_branch
      %442 = sbr.rel (0) target = $region37
    $region36: #{encoder_hr_forward.13} parent=1 // pred_region
      %443 = dma.done [#allocation4], 64
    $region37: #{encoder_hr_forward.13} parent=1 // pred_fallthru
      _
    %444 = vsyncpa [#allocation4], 1

</llo_original>
